<compile_context>
chip_gen: v7x
topology: tpu7x:2x2x1
jax: 0.10.0
libtpu: 0.0.40
codegen_flags: <defaults>
</compile_context>

<pallas_src>
import jax
import jax.numpy as jnp
from jax.experimental import pallas as pl
from jax.experimental.pallas import tpu as pltpu


# ----------------------------------------------------------------------------
# Per-layer constant layout (shared by the wrapper and the kernel unpacker).
# ----------------------------------------------------------------------------
def _const_names(layer):
    names = ["bw1x"]
    if layer["dual"]:
        names.append("bw1r")
    names += ["b1", "bwsx"]
    if layer["dual"]:
        names.append("bwsr")
    names += ["bw2", "b2", "U"]
    if layer["epilogue"] == "pool":
        names += ["SW", "PH"]
    elif layer["epilogue"] == "convt":
        names += ["G", "bt", "PI"]
    return names


# ----------------------------------------------------------------------------
# The single fused UNet kernel (one grid step == one batch element).
# ----------------------------------------------------------------------------
def _make_unet_kernel(prep):
    down_layers = prep["down"]
    bottom = prep["bottom"]
    up_layers = prep["up"]
    layers = down_layers + [bottom] + up_layers

    f32 = jnp.float32
    bf16 = jnp.bfloat16

    def kernel(*refs):
        x_ref = refs[0]
        out_ref = refs[-1]
        const_refs = refs[1:-1]

        # Unpack constant refs per layer (trace-time bookkeeping only).
        it = iter(const_refs)
        layer_refs = [{name: next(it) for name in _const_names(layer)}
                      for layer in layers]

        def conv3x3(a_bf16, bw_ref, u_ref):
            # out = sum_dy  ShiftRows_dy @ (a @ BandedW_dy)
            acc = None
            for dy in range(3):
                t = jnp.dot(a_bf16, bw_ref[dy], preferred_element_type=f32)
                if dy != 1:  # dy == 1 is the identity shift
                    t = jnp.dot(u_ref[dy], t, preferred_element_type=f32)
                acc = t if acc is None else acc + t
            return acc

        def resblock(layer, r, x, residual=None):
            h1 = conv3x3(x, r["bw1x"], r["U"])
            skip = jnp.dot(x, r["bwsx"][...], preferred_element_type=f32)
            if layer["dual"]:
                h1 = h1 + conv3x3(residual, r["bw1r"], r["U"])
                skip = skip + jnp.dot(residual, r["bwsr"][...],
                                      preferred_element_type=f32)
            h1 = jnp.maximum(h1 + r["b1"][...], 0.0).astype(bf16)
            y = conv3x3(h1, r["bw2"], r["U"]) + r["b2"][...] + skip
            return jnp.maximum(y, 0.0)                   # (H, W*Cout) f32

        def maxpool2x2(r, y):
            # 2x2 max-pool via exact 0/1 selection matmuls + maxes.
            pe = jnp.dot(y, r["SW"][0], preferred_element_type=f32)
            po = jnp.dot(y, r["SW"][1], preferred_element_type=f32)
            pw = jnp.maximum(pe, po)                     # max over dx
            re_ = jnp.dot(r["PH"][0], pw, preferred_element_type=f32)
            ro_ = jnp.dot(r["PH"][1], pw, preferred_element_type=f32)
            return jnp.maximum(re_, ro_)                 # max over dy

        def conv_transpose2x2(r, y):
            # ConvTranspose2d(k=2, s=2): block-diagonal matmul per output-row
            # parity, then exact row-interleave via 0/1 selection matmuls.
            yb = y.astype(bf16)
            z0 = jnp.dot(yb, r["G"][0], preferred_element_type=f32)
            z1 = jnp.dot(yb, r["G"][1], preferred_element_type=f32)
            return (jnp.dot(r["PI"][0], z0, preferred_element_type=f32)
                    + jnp.dot(r["PI"][1], z1, preferred_element_type=f32)
                    + r["bt"][...])                      # (2H, W*2*Ct)

        cur = x_ref[...]                                 # (H, W*Cin) bf16
        idx = 0

        # DownBlock: ResBlock + MaxPool per level; residuals stay in VMEM.
        residuals = []
        for layer in down_layers:
            r = layer_refs[idx]; idx += 1
            y = resblock(layer, r, cur)
            residuals.append(y.astype(bf16))
            cur = maxpool2x2(r, y).astype(bf16)

        # bottom_conv: ResBlock + ConvTranspose.
        r = layer_refs[idx]; idx += 1
        y = resblock(bottom, r, cur)
        cur = conv_transpose2x2(r, y).astype(bf16)

        # UpBlock: residual crop + dual-input ResBlock (+ ConvTranspose).
        for i, layer in enumerate(up_layers):
            r = layer_refs[idx]; idx += 1
            res = residuals[-(i + 1)]
            Hl, WCr = layer["H"], layer["W"] * layer["cr"]
            if res.shape != (Hl, WCr):
                # torch: residual[:, :, :h, :w]  (no-op for power-of-two input)
                res = res[:Hl, :WCr]
            y = resblock(layer, r, cur, residual=res)
            if layer["epilogue"] == "convt":
                cur = conv_transpose2x2(r, y).astype(bf16)
            else:
                cur = y                                  # final layer, f32

        out_ref[...] = cur.astype(out_ref.dtype)

    return kernel


# ----------------------------------------------------------------------------
# Parameter preparation: raw conv weights -> banded / block-diagonal matrices.
# ----------------------------------------------------------------------------
def _banded3x3(w, Wl):
    """(3, 3, Cin, Cout) -> (3, Wl*Cin, Wl*Cout) banded matrices (one per dy)."""
    mats = []
    for dy in range(3):
        m = None
        for dx in range(3):
            k = jnp.kron(jnp.eye(Wl, k=1 - dx, dtype=jnp.float32), w[dy, dx])
            m = k if m is None else m + k
        mats.append(m)
    return jnp.stack(mats).astype(jnp.bfloat16)


def _blockdiag(w, Wl):
    """(Cin, Cout) -> (Wl*Cin, Wl*Cout) block-diagonal (per-pixel 1x1 conv)."""
    return jnp.kron(jnp.eye(Wl, dtype=jnp.float32), w).astype(jnp.bfloat16)


def _tile_bias(b, reps):
    return jnp.tile(b, reps).reshape(1, -1).astype(jnp.float32)


def _shift_mats(Hl):
    """Row-shift matrices implementing the dy = 0/1/2 taps with zero padding."""
    return jnp.stack([jnp.eye(Hl, k=-1, dtype=jnp.float32),
                      jnp.eye(Hl, dtype=jnp.float32),
                      jnp.eye(Hl, k=1, dtype=jnp.float32)]).astype(jnp.float32)


def _pool_col_select(Wl, c):
    """0/1 matrices selecting even / odd w-columns of a (H, Wl*c) slab."""
    w2 = jnp.arange(Wl // 2)
    cc = jnp.arange(c)
    cols = (w2[:, None] * c + cc[None, :]).reshape(-1)
    rows_e = (2 * w2[:, None] * c + cc[None, :]).reshape(-1)
    rows_o = ((2 * w2[:, None] + 1) * c + cc[None, :]).reshape(-1)
    s = jnp.zeros((2, Wl * c, (Wl // 2) * c), jnp.float32)
    s = s.at[0, rows_e, cols].set(1.0)
    s = s.at[1, rows_o, cols].set(1.0)
    return s


def _pool_row_select(Hl):
    h2 = jnp.arange(Hl // 2)
    p = jnp.zeros((2, Hl // 2, Hl), jnp.float32)
    p = p.at[0, h2, 2 * h2].set(1.0)
    p = p.at[1, h2, 2 * h2 + 1].set(1.0)
    return p


def _interleave_rows(Hl):
    """PI[dy][2h+dy, h] = 1 : interleaves two H-row slabs into 2H rows."""
    h = jnp.arange(Hl)
    p = jnp.zeros((2, 2 * Hl, Hl), jnp.float32)
    p = p.at[0, 2 * h, h].set(1.0)
    p = p.at[1, 2 * h + 1, h].set(1.0)
    return p


def _convt_blockdiag(wt, Wl):
    """(2, 2, Cin, Ct) -> (2, Wl*Cin, Wl*2*Ct) block-diagonal per output dy."""
    cin, ct = wt.shape[2], wt.shape[3]
    mats = []
    for dy in range(2):
        blk = jnp.transpose(wt[dy], (1, 0, 2)).reshape(cin, 2 * ct)
        mats.append(jnp.kron(jnp.eye(Wl, dtype=jnp.float32), blk))
    return jnp.stack(mats).astype(jnp.bfloat16)


def _init_raw_resblock(keys, cin, cout):
    k1, k2, k3, k4, k5, k6 = keys
    s1 = 1.0 / jnp.sqrt(9.0 * cin)
    s2 = 1.0 / jnp.sqrt(9.0 * cout)
    ss = 1.0 / jnp.sqrt(float(cin))
    if cin != cout:
        ws = jax.random.normal(k5, (cin, cout), jnp.float32) * ss
        bs = jax.random.normal(k6, (cout,), jnp.float32) * 0.01
    else:  # identity skip expressed as an identity 1x1 projection
        ws = jnp.eye(cin, dtype=jnp.float32)
        bs = jnp.zeros((cout,), jnp.float32)
    return {
        "w1": jax.random.normal(k1, (3, 3, cin, cout), jnp.float32) * s1,
        "b1": jax.random.normal(k2, (cout,), jnp.float32) * 0.01,
        "w2": jax.random.normal(k3, (3, 3, cout, cout), jnp.float32) * s2,
        "b2": jax.random.normal(k4, (cout,), jnp.float32) * 0.01,
        "ws": ws,
        "bs": bs,
    }


def _init_raw_convt(keys, cin, cout):
    k1, k2 = keys
    s = 1.0 / jnp.sqrt(4.0 * cin)
    return {"w": jax.random.normal(k1, (2, 2, cin, cout), jnp.float32) * s,
            "b": jax.random.normal(k2, (cout,), jnp.float32) * 0.01}


def _prep_single(rb, Hl, Wl, cin, cout, epilogue, convt=None, ct=None):
    layer = {
        "epilogue": epilogue, "dual": False,
        "H": Hl, "W": Wl, "cx": cin, "cout": cout,
        "bw1x": _banded3x3(rb["w1"], Wl),
        "b1": _tile_bias(rb["b1"], Wl),
        "bwsx": _blockdiag(rb["ws"], Wl),
        # fold the skip-projection bias into the second-conv bias
        "bw2": _banded3x3(rb["w2"], Wl),
        "b2": _tile_bias(rb["b2"], Wl) + _tile_bias(rb["bs"], Wl),
        "U": _shift_mats(Hl),
    }
    if epilogue == "pool":
        layer["SW"] = _pool_col_select(Wl, cout)
        layer["PH"] = _pool_row_select(Hl)
    elif epilogue == "convt":
        layer["G"] = _convt_blockdiag(convt["w"], Wl)
        layer["bt"] = _tile_bias(convt["b"], 2 * Wl)
        layer["PI"] = _interleave_rows(Hl)
        layer["ct"] = ct
    return layer


def _prep_dual(rb, Hl, Wl, cx, cr, cout, epilogue, convt=None, ct=None):
    # torch.cat([x, residual], dim=1): first cx input channels belong to x.
    layer = {
        "epilogue": epilogue, "dual": True,
        "H": Hl, "W": Wl, "cx": cx, "cr": cr, "cout": cout,
        "bw1x": _banded3x3(rb["w1"][:, :, :cx, :], Wl),
        "bw1r": _banded3x3(rb["w1"][:, :, cx:, :], Wl),
        "b1": _tile_bias(rb["b1"], Wl),
        "bwsx": _blockdiag(rb["ws"][:cx, :], Wl),
        "bwsr": _blockdiag(rb["ws"][cx:, :], Wl),
        "bw2": _banded3x3(rb["w2"], Wl),
        "b2": _tile_bias(rb["b2"], Wl) + _tile_bias(rb["bs"], Wl),
        "U": _shift_mats(Hl),
    }
    if epilogue == "convt":
        layer["G"] = _convt_blockdiag(convt["w"], Wl)
        layer["bt"] = _tile_bias(convt["b"], 2 * Wl)
        layer["PI"] = _interleave_rows(Hl)
        layer["ct"] = ct
    return layer


def init_unet_params(key, down_filters, in_channels, H, W):
    keys = iter(jax.random.split(key, 256))

    def take(n):
        return [next(keys) for _ in range(n)]

    prep = {"down": [], "up": []}
    Hl, Wl = H, W

    # DownBlock: ResBlock(in, f0), ResBlock(f_{i-1}, f_i), each + MaxPool2x2.
    prev = in_channels
    for f in down_filters:
        rb = _init_raw_resblock(take(6), prev, f)
        prep["down"].append(_prep_single(rb, Hl, Wl, prev, f, "pool"))
        prev = f
        Hl //= 2
        Wl //= 2

    # bottom_conv: ResBlock(f_last, 2*f_last) + ConvTranspose(2*f_last, f_last).
    f_last = down_filters[-1]
    rb = _init_raw_resblock(take(6), f_last, 2 * f_last)
    ctp = _init_raw_convt(take(2), 2 * f_last, f_last)
    prep["bottom"] = _prep_single(rb, Hl, Wl, f_last, 2 * f_last, "convt",
                                  convt=ctp, ct=f_last)
    Hl *= 2
    Wl *= 2

    # UpBlock: filters = [2*f_last] + reversed(down_filters).
    up_filters = [2 * f_last] + list(reversed(down_filters))
    rev = list(reversed(down_filters))
    cx = f_last
    for i in range(len(up_filters) - 2):
        cr = rev[i]
        assert cx + cr == up_filters[i]
        rb = _init_raw_resblock(take(6), up_filters[i], up_filters[i + 1])
        ct_out = up_filters[i + 1] // 2
        ctp = _init_raw_convt(take(2), up_filters[i + 1], ct_out)
        prep["up"].append(_prep_dual(rb, Hl, Wl, cx, cr, up_filters[i + 1],
                                     "convt", convt=ctp, ct=ct_out))
        cx = ct_out
        Hl *= 2
        Wl *= 2
    cr = rev[len(up_filters) - 2]
    assert cx + cr == up_filters[-2]
    rb = _init_raw_resblock(take(6), up_filters[-2], up_filters[-1])
    prep["up"].append(_prep_dual(rb, Hl, Wl, cx, cr, up_filters[-1], "none"))
    return prep


# ----------------------------------------------------------------------------
# Forward pass: a single fused pallas_call over the whole UNet.
# ----------------------------------------------------------------------------
def unet_forward(prep, x_nchw):
    N, C, H, W = x_nchw.shape
    # NCHW -> (N, H, W*C) bf16  (byte-identical to NHWC)
    x = jnp.transpose(x_nchw, (0, 2, 3, 1)).reshape(N, H, W * C)
    x = x.astype(jnp.bfloat16)

    layers = prep["down"] + [prep["bottom"]] + prep["up"]
    consts = []
    for layer in layers:
        consts += [layer[name] for name in _const_names(layer)]

    last = prep["up"][-1]
    HL, WL, CL = last["H"], last["W"], last["cout"]

    def act_spec(arr):
        return pl.BlockSpec((None,) + arr.shape[1:], lambda n: (n, 0, 0))

    def const_spec(arr):
        nd = arr.ndim
        return pl.BlockSpec(arr.shape, lambda n, _nd=nd: (0,) * _nd)

    out = pl.pallas_call(
        _make_unet_kernel(prep),
        out_shape=jax.ShapeDtypeStruct((N, HL, WL * CL), jnp.float32),
        grid_spec=pltpu.PrefetchScalarGridSpec(
            num_scalar_prefetch=0,
            grid=(N,),
            in_specs=[act_spec(x)] + [const_spec(c) for c in consts],
            out_specs=pl.BlockSpec((None, HL, WL * CL), lambda n: (n, 0, 0))),
        compiler_params=pltpu.CompilerParams(
            dimension_semantics=("parallel",),
            vmem_limit_bytes=32 * 1024 * 1024),
    )(x, *consts)

    out = out.reshape(N, HL, WL, CL)                 # NHWC, f32
    return jnp.transpose(out, (0, 3, 1, 2))          # NCHW, f32


# ----------------------------------------------------------------------------
if __name__ == "__main__":
    key = jax.random.PRNGKey(0)
    k_params, k_x = jax.random.split(key)

    down_filters = [8, 16]
    in_channels = 4
    N, H, W = 2, 16, 16

    x = jax.random.normal(k_x, (N, in_channels, H, W), jnp.float32)
    params = init_unet_params(k_params, down_filters, in_channels, H, W)

    fwd = jax.jit(lambda inp: unet_forward(params, inp))
    out = fwd(x)
    out = jax.block_until_ready(out)

    assert out.shape == (N, down_filters[0], H, W), out.shape
    assert out.dtype == jnp.float32
    assert bool(jnp.all(jnp.isfinite(out)))
    print("KERNEL_OK")
</pallas_src>

<mosaic_0001>
module attributes {stable_mosaic.version = 11 : i64} {
  func.func @kernel(%arg0: i32, %arg1: memref<1x16x64xbf16, #tpu.memory_space<vmem>>, %arg2: memref<3x64x128xbf16, #tpu.memory_space<vmem>>, %arg3: memref<1x128xf32, #tpu.memory_space<vmem>>, %arg4: memref<64x128xbf16, #tpu.memory_space<vmem>>, %arg5: memref<3x128x128xbf16, #tpu.memory_space<vmem>>, %arg6: memref<1x128xf32, #tpu.memory_space<vmem>>, %arg7: memref<3x16x16xf32, #tpu.memory_space<vmem>>, %arg8: memref<2x128x64xf32, #tpu.memory_space<vmem>>, %arg9: memref<2x8x16xf32, #tpu.memory_space<vmem>>, %arg10: memref<3x64x128xbf16, #tpu.memory_space<vmem>>, %arg11: memref<1x128xf32, #tpu.memory_space<vmem>>, %arg12: memref<64x128xbf16, #tpu.memory_space<vmem>>, %arg13: memref<3x128x128xbf16, #tpu.memory_space<vmem>>, %arg14: memref<1x128xf32, #tpu.memory_space<vmem>>, %arg15: memref<3x8x8xf32, #tpu.memory_space<vmem>>, %arg16: memref<2x128x64xf32, #tpu.memory_space<vmem>>, %arg17: memref<2x4x8xf32, #tpu.memory_space<vmem>>, %arg18: memref<3x64x128xbf16, #tpu.memory_space<vmem>>, %arg19: memref<1x128xf32, #tpu.memory_space<vmem>>, %arg20: memref<64x128xbf16, #tpu.memory_space<vmem>>, %arg21: memref<3x128x128xbf16, #tpu.memory_space<vmem>>, %arg22: memref<1x128xf32, #tpu.memory_space<vmem>>, %arg23: memref<3x4x4xf32, #tpu.memory_space<vmem>>, %arg24: memref<2x128x128xbf16, #tpu.memory_space<vmem>>, %arg25: memref<1x128xf32, #tpu.memory_space<vmem>>, %arg26: memref<2x8x4xf32, #tpu.memory_space<vmem>>, %arg27: memref<3x128x128xbf16, #tpu.memory_space<vmem>>, %arg28: memref<3x128x128xbf16, #tpu.memory_space<vmem>>, %arg29: memref<1x128xf32, #tpu.memory_space<vmem>>, %arg30: memref<128x128xbf16, #tpu.memory_space<vmem>>, %arg31: memref<128x128xbf16, #tpu.memory_space<vmem>>, %arg32: memref<3x128x128xbf16, #tpu.memory_space<vmem>>, %arg33: memref<1x128xf32, #tpu.memory_space<vmem>>, %arg34: memref<3x8x8xf32, #tpu.memory_space<vmem>>, %arg35: memref<2x128x128xbf16, #tpu.memory_space<vmem>>, %arg36: memref<1x128xf32, #tpu.memory_space<vmem>>, %arg37: memref<2x16x8xf32, #tpu.memory_space<vmem>>, %arg38: memref<3x128x128xbf16, #tpu.memory_space<vmem>>, %arg39: memref<3x128x128xbf16, #tpu.memory_space<vmem>>, %arg40: memref<1x128xf32, #tpu.memory_space<vmem>>, %arg41: memref<128x128xbf16, #tpu.memory_space<vmem>>, %arg42: memref<128x128xbf16, #tpu.memory_space<vmem>>, %arg43: memref<3x128x128xbf16, #tpu.memory_space<vmem>>, %arg44: memref<1x128xf32, #tpu.memory_space<vmem>>, %arg45: memref<3x16x16xf32, #tpu.memory_space<vmem>>, %arg46: memref<1x16x128xf32, #tpu.memory_space<vmem>>) attributes {dimension_semantics = [#tpu.dimension_semantics<parallel>], iteration_bounds = array<i64: 2>, scalar_prefetch = 0 : i64, scratch_operands = 0 : i64, tpu.core_type = #tpu.core_type<tc>, window_params = [{transform_indices = @transform_0, window_bounds = array<i64: 1, 16, 64>}, {pipeline_mode = #tpu.pipeline_mode<synchronous>, transform_indices = @transform_1, window_bounds = array<i64: 3, 64, 128>}, {pipeline_mode = #tpu.pipeline_mode<synchronous>, transform_indices = @transform_2, window_bounds = array<i64: 1, 128>}, {pipeline_mode = #tpu.pipeline_mode<synchronous>, transform_indices = @transform_3, window_bounds = array<i64: 64, 128>}, {pipeline_mode = #tpu.pipeline_mode<synchronous>, transform_indices = @transform_4, window_bounds = array<i64: 3, 128, 128>}, {pipeline_mode = #tpu.pipeline_mode<synchronous>, transform_indices = @transform_5, window_bounds = array<i64: 1, 128>}, {pipeline_mode = #tpu.pipeline_mode<synchronous>, transform_indices = @transform_6, window_bounds = array<i64: 3, 16, 16>}, {pipeline_mode = #tpu.pipeline_mode<synchronous>, transform_indices = @transform_7, window_bounds = array<i64: 2, 128, 64>}, {pipeline_mode = #tpu.pipeline_mode<synchronous>, transform_indices = @transform_8, window_bounds = array<i64: 2, 8, 16>}, {pipeline_mode = #tpu.pipeline_mode<synchronous>, transform_indices = @transform_9, window_bounds = array<i64: 3, 64, 128>}, {pipeline_mode = #tpu.pipeline_mode<synchronous>, transform_indices = @transform_10, window_bounds = array<i64: 1, 128>}, {pipeline_mode = #tpu.pipeline_mode<synchronous>, transform_indices = @transform_11, window_bounds = array<i64: 64, 128>}, {pipeline_mode = #tpu.pipeline_mode<synchronous>, transform_indices = @transform_12, window_bounds = array<i64: 3, 128, 128>}, {pipeline_mode = #tpu.pipeline_mode<synchronous>, transform_indices = @transform_13, window_bounds = array<i64: 1, 128>}, {pipeline_mode = #tpu.pipeline_mode<synchronous>, transform_indices = @transform_14, window_bounds = array<i64: 3, 8, 8>}, {pipeline_mode = #tpu.pipeline_mode<synchronous>, transform_indices = @transform_15, window_bounds = array<i64: 2, 128, 64>}, {pipeline_mode = #tpu.pipeline_mode<synchronous>, transform_indices = @transform_16, window_bounds = array<i64: 2, 4, 8>}, {pipeline_mode = #tpu.pipeline_mode<synchronous>, transform_indices = @transform_17, window_bounds = array<i64: 3, 64, 128>}, {pipeline_mode = #tpu.pipeline_mode<synchronous>, transform_indices = @transform_18, window_bounds = array<i64: 1, 128>}, {pipeline_mode = #tpu.pipeline_mode<synchronous>, transform_indices = @transform_19, window_bounds = array<i64: 64, 128>}, {pipeline_mode = #tpu.pipeline_mode<synchronous>, transform_indices = @transform_20, window_bounds = array<i64: 3, 128, 128>}, {pipeline_mode = #tpu.pipeline_mode<synchronous>, transform_indices = @transform_21, window_bounds = array<i64: 1, 128>}, {pipeline_mode = #tpu.pipeline_mode<synchronous>, transform_indices = @transform_22, window_bounds = array<i64: 3, 4, 4>}, {pipeline_mode = #tpu.pipeline_mode<synchronous>, transform_indices = @transform_23, window_bounds = array<i64: 2, 128, 128>}, {pipeline_mode = #tpu.pipeline_mode<synchronous>, transform_indices = @transform_24, window_bounds = array<i64: 1, 128>}, {pipeline_mode = #tpu.pipeline_mode<synchronous>, transform_indices = @transform_25, window_bounds = array<i64: 2, 8, 4>}, {pipeline_mode = #tpu.pipeline_mode<synchronous>, transform_indices = @transform_26, window_bounds = array<i64: 3, 128, 128>}, {pipeline_mode = #tpu.pipeline_mode<synchronous>, transform_indices = @transform_27, window_bounds = array<i64: 3, 128, 128>}, {pipeline_mode = #tpu.pipeline_mode<synchronous>, transform_indices = @transform_28, window_bounds = array<i64: 1, 128>}, {pipeline_mode = #tpu.pipeline_mode<synchronous>, transform_indices = @transform_29, window_bounds = array<i64: 128, 128>}, {pipeline_mode = #tpu.pipeline_mode<synchronous>, transform_indices = @transform_30, window_bounds = array<i64: 128, 128>}, {pipeline_mode = #tpu.pipeline_mode<synchronous>, transform_indices = @transform_31, window_bounds = array<i64: 3, 128, 128>}, {pipeline_mode = #tpu.pipeline_mode<synchronous>, transform_indices = @transform_32, window_bounds = array<i64: 1, 128>}, {pipeline_mode = #tpu.pipeline_mode<synchronous>, transform_indices = @transform_33, window_bounds = array<i64: 3, 8, 8>}, {pipeline_mode = #tpu.pipeline_mode<synchronous>, transform_indices = @transform_34, window_bounds = array<i64: 2, 128, 128>}, {pipeline_mode = #tpu.pipeline_mode<synchronous>, transform_indices = @transform_35, window_bounds = array<i64: 1, 128>}, {pipeline_mode = #tpu.pipeline_mode<synchronous>, transform_indices = @transform_36, window_bounds = array<i64: 2, 16, 8>}, {pipeline_mode = #tpu.pipeline_mode<synchronous>, transform_indices = @transform_37, window_bounds = array<i64: 3, 128, 128>}, {pipeline_mode = #tpu.pipeline_mode<synchronous>, transform_indices = @transform_38, window_bounds = array<i64: 3, 128, 128>}, {pipeline_mode = #tpu.pipeline_mode<synchronous>, transform_indices = @transform_39, window_bounds = array<i64: 1, 128>}, {pipeline_mode = #tpu.pipeline_mode<synchronous>, transform_indices = @transform_40, window_bounds = array<i64: 128, 128>}, {pipeline_mode = #tpu.pipeline_mode<synchronous>, transform_indices = @transform_41, window_bounds = array<i64: 128, 128>}, {pipeline_mode = #tpu.pipeline_mode<synchronous>, transform_indices = @transform_42, window_bounds = array<i64: 3, 128, 128>}, {pipeline_mode = #tpu.pipeline_mode<synchronous>, transform_indices = @transform_43, window_bounds = array<i64: 1, 128>}, {pipeline_mode = #tpu.pipeline_mode<synchronous>, transform_indices = @transform_44, window_bounds = array<i64: 3, 16, 16>}, {transform_indices = @transform_45, window_bounds = array<i64: 1, 16, 128>}]} {
    %c0 = arith.constant 0 : index
    %c0_0 = arith.constant 0 : index
    %c0_1 = arith.constant 0 : index
    %0 = vector.load %arg1[%c0, %c0_0, %c0_1] : memref<1x16x64xbf16, #tpu.memory_space<vmem>>, vector<1x16x64xbf16>
    %1 = vector.shape_cast %0 : vector<1x16x64xbf16> to vector<16x64xbf16>
    %c0_2 = arith.constant 0 : index
    %c0_3 = arith.constant 0 : index
    %c0_4 = arith.constant 0 : index
    %2 = vector.load %arg2[%c0_2, %c0_3, %c0_4] : memref<3x64x128xbf16, #tpu.memory_space<vmem>>, vector<1x64x128xbf16>
    %3 = vector.shape_cast %2 : vector<1x64x128xbf16> to vector<64x128xbf16>
    %cst = arith.constant dense<0.000000e+00> : vector<16x128xf32>
    %4 = tpu.matmul %1, %3, %cst {dimension_numbers = #tpu.dot_dimension_numbers<[1], [0], [0], [1], [0, 0, 1, 1], [], []>} : vector<16x64xbf16>, vector<64x128xbf16>, vector<16x128xf32> -> vector<16x128xf32>
    %c0_5 = arith.constant 0 : index
    %c0_6 = arith.constant 0 : index
    %c0_7 = arith.constant 0 : index
    %5 = vector.load %arg7[%c0_5, %c0_6, %c0_7] : memref<3x16x16xf32, #tpu.memory_space<vmem>>, vector<1x16x16xf32>
    %6 = vector.shape_cast %5 : vector<1x16x16xf32> to vector<16x16xf32>
    %cst_8 = arith.constant dense<0.000000e+00> : vector<16x128xf32>
    %7 = tpu.matmul %6, %4, %cst_8 {dimension_numbers = #tpu.dot_dimension_numbers<[1], [0], [0], [1], [0, 0, 1, 1], [], []>} : vector<16x16xf32>, vector<16x128xf32>, vector<16x128xf32> -> vector<16x128xf32>
    %c1 = arith.constant 1 : index
    %c0_9 = arith.constant 0 : index
    %c0_10 = arith.constant 0 : index
    %8 = vector.load %arg2[%c1, %c0_9, %c0_10] : memref<3x64x128xbf16, #tpu.memory_space<vmem>>, vector<1x64x128xbf16>
    %9 = vector.shape_cast %8 : vector<1x64x128xbf16> to vector<64x128xbf16>
    %cst_11 = arith.constant dense<0.000000e+00> : vector<16x128xf32>
    %10 = tpu.matmul %1, %9, %cst_11 {dimension_numbers = #tpu.dot_dimension_numbers<[1], [0], [0], [1], [0, 0, 1, 1], [], []>} : vector<16x64xbf16>, vector<64x128xbf16>, vector<16x128xf32> -> vector<16x128xf32>
    %11 = arith.addf %7, %10 : vector<16x128xf32>
    %c2 = arith.constant 2 : index
    %c0_12 = arith.constant 0 : index
    %c0_13 = arith.constant 0 : index
    %12 = vector.load %arg2[%c2, %c0_12, %c0_13] : memref<3x64x128xbf16, #tpu.memory_space<vmem>>, vector<1x64x128xbf16>
    %13 = vector.shape_cast %12 : vector<1x64x128xbf16> to vector<64x128xbf16>
    %cst_14 = arith.constant dense<0.000000e+00> : vector<16x128xf32>
    %14 = tpu.matmul %1, %13, %cst_14 {dimension_numbers = #tpu.dot_dimension_numbers<[1], [0], [0], [1], [0, 0, 1, 1], [], []>} : vector<16x64xbf16>, vector<64x128xbf16>, vector<16x128xf32> -> vector<16x128xf32>
    %c2_15 = arith.constant 2 : index
    %c0_16 = arith.constant 0 : index
    %c0_17 = arith.constant 0 : index
    %15 = vector.load %arg7[%c2_15, %c0_16, %c0_17] : memref<3x16x16xf32, #tpu.memory_space<vmem>>, vector<1x16x16xf32>
    %16 = vector.shape_cast %15 : vector<1x16x16xf32> to vector<16x16xf32>
    %cst_18 = arith.constant dense<0.000000e+00> : vector<16x128xf32>
    %17 = tpu.matmul %16, %14, %cst_18 {dimension_numbers = #tpu.dot_dimension_numbers<[1], [0], [0], [1], [0, 0, 1, 1], [], []>} : vector<16x16xf32>, vector<16x128xf32>, vector<16x128xf32> -> vector<16x128xf32>
    %18 = arith.addf %11, %17 : vector<16x128xf32>
    %c0_19 = arith.constant 0 : index
    %c0_20 = arith.constant 0 : index
    %19 = vector.load %arg4[%c0_19, %c0_20] : memref<64x128xbf16, #tpu.memory_space<vmem>>, vector<64x128xbf16>
    %cst_21 = arith.constant dense<0.000000e+00> : vector<16x128xf32>
    %20 = tpu.matmul %1, %19, %cst_21 {dimension_numbers = #tpu.dot_dimension_numbers<[1], [0], [0], [1], [0, 0, 1, 1], [], []>} : vector<16x64xbf16>, vector<64x128xbf16>, vector<16x128xf32> -> vector<16x128xf32>
    %c0_22 = arith.constant 0 : index
    %c0_23 = arith.constant 0 : index
    %21 = vector.load %arg3[%c0_22, %c0_23] : memref<1x128xf32, #tpu.memory_space<vmem>>, vector<1x128xf32>
    %22 = vector.broadcast %21 : vector<1x128xf32> to vector<16x128xf32>
    %23 = arith.addf %18, %22 : vector<16x128xf32>
    %cst_24 = arith.constant 0.000000e+00 : f32
    %24 = vector.broadcast %cst_24 : f32 to vector<16x128xf32>
    %25 = arith.maximumf %23, %24 : vector<16x128xf32>
    %26 = arith.truncf %25 : vector<16x128xf32> to vector<16x128xbf16>
    %c0_25 = arith.constant 0 : index
    %c0_26 = arith.constant 0 : index
    %c0_27 = arith.constant 0 : index
    %27 = vector.load %arg5[%c0_25, %c0_26, %c0_27] : memref<3x128x128xbf16, #tpu.memory_space<vmem>>, vector<1x128x128xbf16>
    %28 = vector.shape_cast %27 : vector<1x128x128xbf16> to vector<128x128xbf16>
    %cst_28 = arith.constant dense<0.000000e+00> : vector<16x128xf32>
    %29 = tpu.matmul %26, %28, %cst_28 {dimension_numbers = #tpu.dot_dimension_numbers<[1], [0], [0], [1], [0, 0, 1, 1], [], []>} : vector<16x128xbf16>, vector<128x128xbf16>, vector<16x128xf32> -> vector<16x128xf32>
    %c0_29 = arith.constant 0 : index
    %c0_30 = arith.constant 0 : index
    %c0_31 = arith.constant 0 : index
    %30 = vector.load %arg7[%c0_29, %c0_30, %c0_31] : memref<3x16x16xf32, #tpu.memory_space<vmem>>, vector<1x16x16xf32>
    %31 = vector.shape_cast %30 : vector<1x16x16xf32> to vector<16x16xf32>
    %cst_32 = arith.constant dense<0.000000e+00> : vector<16x128xf32>
    %32 = tpu.matmul %31, %29, %cst_32 {dimension_numbers = #tpu.dot_dimension_numbers<[1], [0], [0], [1], [0, 0, 1, 1], [], []>} : vector<16x16xf32>, vector<16x128xf32>, vector<16x128xf32> -> vector<16x128xf32>
    %c1_33 = arith.constant 1 : index
    %c0_34 = arith.constant 0 : index
    %c0_35 = arith.constant 0 : index
    %33 = vector.load %arg5[%c1_33, %c0_34, %c0_35] : memref<3x128x128xbf16, #tpu.memory_space<vmem>>, vector<1x128x128xbf16>
    %34 = vector.shape_cast %33 : vector<1x128x128xbf16> to vector<128x128xbf16>
    %cst_36 = arith.constant dense<0.000000e+00> : vector<16x128xf32>
    %35 = tpu.matmul %26, %34, %cst_36 {dimension_numbers = #tpu.dot_dimension_numbers<[1], [0], [0], [1], [0, 0, 1, 1], [], []>} : vector<16x128xbf16>, vector<128x128xbf16>, vector<16x128xf32> -> vector<16x128xf32>
    %36 = arith.addf %32, %35 : vector<16x128xf32>
    %c2_37 = arith.constant 2 : index
    %c0_38 = arith.constant 0 : index
    %c0_39 = arith.constant 0 : index
    %37 = vector.load %arg5[%c2_37, %c0_38, %c0_39] : memref<3x128x128xbf16, #tpu.memory_space<vmem>>, vector<1x128x128xbf16>
    %38 = vector.shape_cast %37 : vector<1x128x128xbf16> to vector<128x128xbf16>
    %cst_40 = arith.constant dense<0.000000e+00> : vector<16x128xf32>
    %39 = tpu.matmul %26, %38, %cst_40 {dimension_numbers = #tpu.dot_dimension_numbers<[1], [0], [0], [1], [0, 0, 1, 1], [], []>} : vector<16x128xbf16>, vector<128x128xbf16>, vector<16x128xf32> -> vector<16x128xf32>
    %c2_41 = arith.constant 2 : index
    %c0_42 = arith.constant 0 : index
    %c0_43 = arith.constant 0 : index
    %40 = vector.load %arg7[%c2_41, %c0_42, %c0_43] : memref<3x16x16xf32, #tpu.memory_space<vmem>>, vector<1x16x16xf32>
    %41 = vector.shape_cast %40 : vector<1x16x16xf32> to vector<16x16xf32>
    %cst_44 = arith.constant dense<0.000000e+00> : vector<16x128xf32>
    %42 = tpu.matmul %41, %39, %cst_44 {dimension_numbers = #tpu.dot_dimension_numbers<[1], [0], [0], [1], [0, 0, 1, 1], [], []>} : vector<16x16xf32>, vector<16x128xf32>, vector<16x128xf32> -> vector<16x128xf32>
    %43 = arith.addf %36, %42 : vector<16x128xf32>
    %c0_45 = arith.constant 0 : index
    %c0_46 = arith.constant 0 : index
    %44 = vector.load %arg6[%c0_45, %c0_46] : memref<1x128xf32, #tpu.memory_space<vmem>>, vector<1x128xf32>
    %45 = vector.broadcast %44 : vector<1x128xf32> to vector<16x128xf32>
    %46 = arith.addf %43, %45 : vector<16x128xf32>
    %47 = arith.addf %46, %20 : vector<16x128xf32>
    %cst_47 = arith.constant 0.000000e+00 : f32
    %48 = vector.broadcast %cst_47 : f32 to vector<16x128xf32>
    %49 = arith.maximumf %47, %48 : vector<16x128xf32>
    %50 = arith.truncf %49 : vector<16x128xf32> to vector<16x128xbf16>
    %c0_48 = arith.constant 0 : index
    %c0_49 = arith.constant 0 : index
    %c0_50 = arith.constant 0 : index
    %51 = vector.load %arg8[%c0_48, %c0_49, %c0_50] : memref<2x128x64xf32, #tpu.memory_space<vmem>>, vector<1x128x64xf32>
    %52 = vector.shape_cast %51 : vector<1x128x64xf32> to vector<128x64xf32>
    %cst_51 = arith.constant dense<0.000000e+00> : vector<16x64xf32>
    %53 = tpu.matmul %49, %52, %cst_51 {dimension_numbers = #tpu.dot_dimension_numbers<[1], [0], [0], [1], [0, 0, 1, 1], [], []>} : vector<16x128xf32>, vector<128x64xf32>, vector<16x64xf32> -> vector<16x64xf32>
    %c1_52 = arith.constant 1 : index
    %c0_53 = arith.constant 0 : index
    %c0_54 = arith.constant 0 : index
    %54 = vector.load %arg8[%c1_52, %c0_53, %c0_54] : memref<2x128x64xf32, #tpu.memory_space<vmem>>, vector<1x128x64xf32>
    %55 = vector.shape_cast %54 : vector<1x128x64xf32> to vector<128x64xf32>
    %cst_55 = arith.constant dense<0.000000e+00> : vector<16x64xf32>
    %56 = tpu.matmul %49, %55, %cst_55 {dimension_numbers = #tpu.dot_dimension_numbers<[1], [0], [0], [1], [0, 0, 1, 1], [], []>} : vector<16x128xf32>, vector<128x64xf32>, vector<16x64xf32> -> vector<16x64xf32>
    %57 = arith.maximumf %53, %56 : vector<16x64xf32>
    %c0_56 = arith.constant 0 : index
    %c0_57 = arith.constant 0 : index
    %c0_58 = arith.constant 0 : index
    %58 = vector.load %arg9[%c0_56, %c0_57, %c0_58] : memref<2x8x16xf32, #tpu.memory_space<vmem>>, vector<1x8x16xf32>
    %59 = vector.shape_cast %58 : vector<1x8x16xf32> to vector<8x16xf32>
    %cst_59 = arith.constant dense<0.000000e+00> : vector<8x64xf32>
    %60 = tpu.matmul %59, %57, %cst_59 {dimension_numbers = #tpu.dot_dimension_numbers<[1], [0], [0], [1], [0, 0, 1, 1], [], []>} : vector<8x16xf32>, vector<16x64xf32>, vector<8x64xf32> -> vector<8x64xf32>
    %c1_60 = arith.constant 1 : index
    %c0_61 = arith.constant 0 : index
    %c0_62 = arith.constant 0 : index
    %61 = vector.load %arg9[%c1_60, %c0_61, %c0_62] : memref<2x8x16xf32, #tpu.memory_space<vmem>>, vector<1x8x16xf32>
    %62 = vector.shape_cast %61 : vector<1x8x16xf32> to vector<8x16xf32>
    %cst_63 = arith.constant dense<0.000000e+00> : vector<8x64xf32>
    %63 = tpu.matmul %62, %57, %cst_63 {dimension_numbers = #tpu.dot_dimension_numbers<[1], [0], [0], [1], [0, 0, 1, 1], [], []>} : vector<8x16xf32>, vector<16x64xf32>, vector<8x64xf32> -> vector<8x64xf32>
    %64 = arith.maximumf %60, %63 : vector<8x64xf32>
    %65 = arith.truncf %64 : vector<8x64xf32> to vector<8x64xbf16>
    %c0_64 = arith.constant 0 : index
    %c0_65 = arith.constant 0 : index
    %c0_66 = arith.constant 0 : index
    %66 = vector.load %arg10[%c0_64, %c0_65, %c0_66] : memref<3x64x128xbf16, #tpu.memory_space<vmem>>, vector<1x64x128xbf16>
    %67 = vector.shape_cast %66 : vector<1x64x128xbf16> to vector<64x128xbf16>
    %cst_67 = arith.constant dense<0.000000e+00> : vector<8x128xf32>
    %68 = tpu.matmul %65, %67, %cst_67 {dimension_numbers = #tpu.dot_dimension_numbers<[1], [0], [0], [1], [0, 0, 1, 1], [], []>} : vector<8x64xbf16>, vector<64x128xbf16>, vector<8x128xf32> -> vector<8x128xf32>
    %c0_68 = arith.constant 0 : index
    %c0_69 = arith.constant 0 : index
    %c0_70 = arith.constant 0 : index
    %69 = vector.load %arg15[%c0_68, %c0_69, %c0_70] : memref<3x8x8xf32, #tpu.memory_space<vmem>>, vector<1x8x8xf32>
    %70 = vector.shape_cast %69 : vector<1x8x8xf32> to vector<8x8xf32>
    %cst_71 = arith.constant dense<0.000000e+00> : vector<8x128xf32>
    %71 = tpu.matmul %70, %68, %cst_71 {dimension_numbers = #tpu.dot_dimension_numbers<[1], [0], [0], [1], [0, 0, 1, 1], [], []>} : vector<8x8xf32>, vector<8x128xf32>, vector<8x128xf32> -> vector<8x128xf32>
    %c1_72 = arith.constant 1 : index
    %c0_73 = arith.constant 0 : index
    %c0_74 = arith.constant 0 : index
    %72 = vector.load %arg10[%c1_72, %c0_73, %c0_74] : memref<3x64x128xbf16, #tpu.memory_space<vmem>>, vector<1x64x128xbf16>
    %73 = vector.shape_cast %72 : vector<1x64x128xbf16> to vector<64x128xbf16>
    %cst_75 = arith.constant dense<0.000000e+00> : vector<8x128xf32>
    %74 = tpu.matmul %65, %73, %cst_75 {dimension_numbers = #tpu.dot_dimension_numbers<[1], [0], [0], [1], [0, 0, 1, 1], [], []>} : vector<8x64xbf16>, vector<64x128xbf16>, vector<8x128xf32> -> vector<8x128xf32>
    %75 = arith.addf %71, %74 : vector<8x128xf32>
    %c2_76 = arith.constant 2 : index
    %c0_77 = arith.constant 0 : index
    %c0_78 = arith.constant 0 : index
    %76 = vector.load %arg10[%c2_76, %c0_77, %c0_78] : memref<3x64x128xbf16, #tpu.memory_space<vmem>>, vector<1x64x128xbf16>
    %77 = vector.shape_cast %76 : vector<1x64x128xbf16> to vector<64x128xbf16>
    %cst_79 = arith.constant dense<0.000000e+00> : vector<8x128xf32>
    %78 = tpu.matmul %65, %77, %cst_79 {dimension_numbers = #tpu.dot_dimension_numbers<[1], [0], [0], [1], [0, 0, 1, 1], [], []>} : vector<8x64xbf16>, vector<64x128xbf16>, vector<8x128xf32> -> vector<8x128xf32>
    %c2_80 = arith.constant 2 : index
    %c0_81 = arith.constant 0 : index
    %c0_82 = arith.constant 0 : index
    %79 = vector.load %arg15[%c2_80, %c0_81, %c0_82] : memref<3x8x8xf32, #tpu.memory_space<vmem>>, vector<1x8x8xf32>
    %80 = vector.shape_cast %79 : vector<1x8x8xf32> to vector<8x8xf32>
    %cst_83 = arith.constant dense<0.000000e+00> : vector<8x128xf32>
    %81 = tpu.matmul %80, %78, %cst_83 {dimension_numbers = #tpu.dot_dimension_numbers<[1], [0], [0], [1], [0, 0, 1, 1], [], []>} : vector<8x8xf32>, vector<8x128xf32>, vector<8x128xf32> -> vector<8x128xf32>
    %82 = arith.addf %75, %81 : vector<8x128xf32>
    %c0_84 = arith.constant 0 : index
    %c0_85 = arith.constant 0 : index
    %83 = vector.load %arg12[%c0_84, %c0_85] : memref<64x128xbf16, #tpu.memory_space<vmem>>, vector<64x128xbf16>
    %cst_86 = arith.constant dense<0.000000e+00> : vector<8x128xf32>
    %84 = tpu.matmul %65, %83, %cst_86 {dimension_numbers = #tpu.dot_dimension_numbers<[1], [0], [0], [1], [0, 0, 1, 1], [], []>} : vector<8x64xbf16>, vector<64x128xbf16>, vector<8x128xf32> -> vector<8x128xf32>
    %c0_87 = arith.constant 0 : index
    %c0_88 = arith.constant 0 : index
    %85 = vector.load %arg11[%c0_87, %c0_88] : memref<1x128xf32, #tpu.memory_space<vmem>>, vector<1x128xf32>
    %86 = vector.broadcast %85 : vector<1x128xf32> to vector<8x128xf32>
    %87 = arith.addf %82, %86 : vector<8x128xf32>
    %cst_89 = arith.constant 0.000000e+00 : f32
    %88 = vector.broadcast %cst_89 : f32 to vector<8x128xf32>
    %89 = arith.maximumf %87, %88 : vector<8x128xf32>
    %90 = arith.truncf %89 : vector<8x128xf32> to vector<8x128xbf16>
    %c0_90 = arith.constant 0 : index
    %c0_91 = arith.constant 0 : index
    %c0_92 = arith.constant 0 : index
    %91 = vector.load %arg13[%c0_90, %c0_91, %c0_92] : memref<3x128x128xbf16, #tpu.memory_space<vmem>>, vector<1x128x128xbf16>
    %92 = vector.shape_cast %91 : vector<1x128x128xbf16> to vector<128x128xbf16>
    %cst_93 = arith.constant dense<0.000000e+00> : vector<8x128xf32>
    %93 = tpu.matmul %90, %92, %cst_93 {dimension_numbers = #tpu.dot_dimension_numbers<[1], [0], [0], [1], [0, 0, 1, 1], [], []>} : vector<8x128xbf16>, vector<128x128xbf16>, vector<8x128xf32> -> vector<8x128xf32>
    %c0_94 = arith.constant 0 : index
    %c0_95 = arith.constant 0 : index
    %c0_96 = arith.constant 0 : index
    %94 = vector.load %arg15[%c0_94, %c0_95, %c0_96] : memref<3x8x8xf32, #tpu.memory_space<vmem>>, vector<1x8x8xf32>
    %95 = vector.shape_cast %94 : vector<1x8x8xf32> to vector<8x8xf32>
    %cst_97 = arith.constant dense<0.000000e+00> : vector<8x128xf32>
    %96 = tpu.matmul %95, %93, %cst_97 {dimension_numbers = #tpu.dot_dimension_numbers<[1], [0], [0], [1], [0, 0, 1, 1], [], []>} : vector<8x8xf32>, vector<8x128xf32>, vector<8x128xf32> -> vector<8x128xf32>
    %c1_98 = arith.constant 1 : index
    %c0_99 = arith.constant 0 : index
    %c0_100 = arith.constant 0 : index
    %97 = vector.load %arg13[%c1_98, %c0_99, %c0_100] : memref<3x128x128xbf16, #tpu.memory_space<vmem>>, vector<1x128x128xbf16>
    %98 = vector.shape_cast %97 : vector<1x128x128xbf16> to vector<128x128xbf16>
    %cst_101 = arith.constant dense<0.000000e+00> : vector<8x128xf32>
    %99 = tpu.matmul %90, %98, %cst_101 {dimension_numbers = #tpu.dot_dimension_numbers<[1], [0], [0], [1], [0, 0, 1, 1], [], []>} : vector<8x128xbf16>, vector<128x128xbf16>, vector<8x128xf32> -> vector<8x128xf32>
    %100 = arith.addf %96, %99 : vector<8x128xf32>
    %c2_102 = arith.constant 2 : index
    %c0_103 = arith.constant 0 : index
    %c0_104 = arith.constant 0 : index
    %101 = vector.load %arg13[%c2_102, %c0_103, %c0_104] : memref<3x128x128xbf16, #tpu.memory_space<vmem>>, vector<1x128x128xbf16>
    %102 = vector.shape_cast %101 : vector<1x128x128xbf16> to vector<128x128xbf16>
    %cst_105 = arith.constant dense<0.000000e+00> : vector<8x128xf32>
    %103 = tpu.matmul %90, %102, %cst_105 {dimension_numbers = #tpu.dot_dimension_numbers<[1], [0], [0], [1], [0, 0, 1, 1], [], []>} : vector<8x128xbf16>, vector<128x128xbf16>, vector<8x128xf32> -> vector<8x128xf32>
    %c2_106 = arith.constant 2 : index
    %c0_107 = arith.constant 0 : index
    %c0_108 = arith.constant 0 : index
    %104 = vector.load %arg15[%c2_106, %c0_107, %c0_108] : memref<3x8x8xf32, #tpu.memory_space<vmem>>, vector<1x8x8xf32>
    %105 = vector.shape_cast %104 : vector<1x8x8xf32> to vector<8x8xf32>
    %cst_109 = arith.constant dense<0.000000e+00> : vector<8x128xf32>
    %106 = tpu.matmul %105, %103, %cst_109 {dimension_numbers = #tpu.dot_dimension_numbers<[1], [0], [0], [1], [0, 0, 1, 1], [], []>} : vector<8x8xf32>, vector<8x128xf32>, vector<8x128xf32> -> vector<8x128xf32>
    %107 = arith.addf %100, %106 : vector<8x128xf32>
    %c0_110 = arith.constant 0 : index
    %c0_111 = arith.constant 0 : index
    %108 = vector.load %arg14[%c0_110, %c0_111] : memref<1x128xf32, #tpu.memory_space<vmem>>, vector<1x128xf32>
    %109 = vector.broadcast %108 : vector<1x128xf32> to vector<8x128xf32>
    %110 = arith.addf %107, %109 : vector<8x128xf32>
    %111 = arith.addf %110, %84 : vector<8x128xf32>
    %cst_112 = arith.constant 0.000000e+00 : f32
    %112 = vector.broadcast %cst_112 : f32 to vector<8x128xf32>
    %113 = arith.maximumf %111, %112 : vector<8x128xf32>
    %114 = arith.truncf %113 : vector<8x128xf32> to vector<8x128xbf16>
    %c0_113 = arith.constant 0 : index
    %c0_114 = arith.constant 0 : index
    %c0_115 = arith.constant 0 : index
    %115 = vector.load %arg16[%c0_113, %c0_114, %c0_115] : memref<2x128x64xf32, #tpu.memory_space<vmem>>, vector<1x128x64xf32>
    %116 = vector.shape_cast %115 : vector<1x128x64xf32> to vector<128x64xf32>
    %cst_116 = arith.constant dense<0.000000e+00> : vector<8x64xf32>
    %117 = tpu.matmul %113, %116, %cst_116 {dimension_numbers = #tpu.dot_dimension_numbers<[1], [0], [0], [1], [0, 0, 1, 1], [], []>} : vector<8x128xf32>, vector<128x64xf32>, vector<8x64xf32> -> vector<8x64xf32>
    %c1_117 = arith.constant 1 : index
    %c0_118 = arith.constant 0 : index
    %c0_119 = arith.constant 0 : index
    %118 = vector.load %arg16[%c1_117, %c0_118, %c0_119] : memref<2x128x64xf32, #tpu.memory_space<vmem>>, vector<1x128x64xf32>
    %119 = vector.shape_cast %118 : vector<1x128x64xf32> to vector<128x64xf32>
    %cst_120 = arith.constant dense<0.000000e+00> : vector<8x64xf32>
    %120 = tpu.matmul %113, %119, %cst_120 {dimension_numbers = #tpu.dot_dimension_numbers<[1], [0], [0], [1], [0, 0, 1, 1], [], []>} : vector<8x128xf32>, vector<128x64xf32>, vector<8x64xf32> -> vector<8x64xf32>
    %121 = arith.maximumf %117, %120 : vector<8x64xf32>
    %c0_121 = arith.constant 0 : index
    %c0_122 = arith.constant 0 : index
    %c0_123 = arith.constant 0 : index
    %122 = vector.load %arg17[%c0_121, %c0_122, %c0_123] : memref<2x4x8xf32, #tpu.memory_space<vmem>>, vector<1x4x8xf32>
    %123 = vector.shape_cast %122 : vector<1x4x8xf32> to vector<4x8xf32>
    %cst_124 = arith.constant dense<0.000000e+00> : vector<4x64xf32>
    %124 = tpu.matmul %123, %121, %cst_124 {dimension_numbers = #tpu.dot_dimension_numbers<[1], [0], [0], [1], [0, 0, 1, 1], [], []>} : vector<4x8xf32>, vector<8x64xf32>, vector<4x64xf32> -> vector<4x64xf32>
    %c1_125 = arith.constant 1 : index
    %c0_126 = arith.constant 0 : index
    %c0_127 = arith.constant 0 : index
    %125 = vector.load %arg17[%c1_125, %c0_126, %c0_127] : memref<2x4x8xf32, #tpu.memory_space<vmem>>, vector<1x4x8xf32>
    %126 = vector.shape_cast %125 : vector<1x4x8xf32> to vector<4x8xf32>
    %cst_128 = arith.constant dense<0.000000e+00> : vector<4x64xf32>
    %127 = tpu.matmul %126, %121, %cst_128 {dimension_numbers = #tpu.dot_dimension_numbers<[1], [0], [0], [1], [0, 0, 1, 1], [], []>} : vector<4x8xf32>, vector<8x64xf32>, vector<4x64xf32> -> vector<4x64xf32>
    %128 = arith.maximumf %124, %127 : vector<4x64xf32>
    %129 = arith.truncf %128 : vector<4x64xf32> to vector<4x64xbf16>
    %c0_129 = arith.constant 0 : index
    %c0_130 = arith.constant 0 : index
    %c0_131 = arith.constant 0 : index
    %130 = vector.load %arg18[%c0_129, %c0_130, %c0_131] : memref<3x64x128xbf16, #tpu.memory_space<vmem>>, vector<1x64x128xbf16>
    %131 = vector.shape_cast %130 : vector<1x64x128xbf16> to vector<64x128xbf16>
    %cst_132 = arith.constant dense<0.000000e+00> : vector<4x128xf32>
    %132 = tpu.matmul %129, %131, %cst_132 {dimension_numbers = #tpu.dot_dimension_numbers<[1], [0], [0], [1], [0, 0, 1, 1], [], []>} : vector<4x64xbf16>, vector<64x128xbf16>, vector<4x128xf32> -> vector<4x128xf32>
    %c0_133 = arith.constant 0 : index
    %c0_134 = arith.constant 0 : index
    %c0_135 = arith.constant 0 : index
    %133 = vector.load %arg23[%c0_133, %c0_134, %c0_135] : memref<3x4x4xf32, #tpu.memory_space<vmem>>, vector<1x4x4xf32>
    %134 = vector.shape_cast %133 : vector<1x4x4xf32> to vector<4x4xf32>
    %cst_136 = arith.constant dense<0.000000e+00> : vector<4x128xf32>
    %135 = tpu.matmul %134, %132, %cst_136 {dimension_numbers = #tpu.dot_dimension_numbers<[1], [0], [0], [1], [0, 0, 1, 1], [], []>} : vector<4x4xf32>, vector<4x128xf32>, vector<4x128xf32> -> vector<4x128xf32>
    %c1_137 = arith.constant 1 : index
    %c0_138 = arith.constant 0 : index
    %c0_139 = arith.constant 0 : index
    %136 = vector.load %arg18[%c1_137, %c0_138, %c0_139] : memref<3x64x128xbf16, #tpu.memory_space<vmem>>, vector<1x64x128xbf16>
    %137 = vector.shape_cast %136 : vector<1x64x128xbf16> to vector<64x128xbf16>
    %cst_140 = arith.constant dense<0.000000e+00> : vector<4x128xf32>
    %138 = tpu.matmul %129, %137, %cst_140 {dimension_numbers = #tpu.dot_dimension_numbers<[1], [0], [0], [1], [0, 0, 1, 1], [], []>} : vector<4x64xbf16>, vector<64x128xbf16>, vector<4x128xf32> -> vector<4x128xf32>
    %139 = arith.addf %135, %138 : vector<4x128xf32>
    %c2_141 = arith.constant 2 : index
    %c0_142 = arith.constant 0 : index
    %c0_143 = arith.constant 0 : index
    %140 = vector.load %arg18[%c2_141, %c0_142, %c0_143] : memref<3x64x128xbf16, #tpu.memory_space<vmem>>, vector<1x64x128xbf16>
    %141 = vector.shape_cast %140 : vector<1x64x128xbf16> to vector<64x128xbf16>
    %cst_144 = arith.constant dense<0.000000e+00> : vector<4x128xf32>
    %142 = tpu.matmul %129, %141, %cst_144 {dimension_numbers = #tpu.dot_dimension_numbers<[1], [0], [0], [1], [0, 0, 1, 1], [], []>} : vector<4x64xbf16>, vector<64x128xbf16>, vector<4x128xf32> -> vector<4x128xf32>
    %c2_145 = arith.constant 2 : index
    %c0_146 = arith.constant 0 : index
    %c0_147 = arith.constant 0 : index
    %143 = vector.load %arg23[%c2_145, %c0_146, %c0_147] : memref<3x4x4xf32, #tpu.memory_space<vmem>>, vector<1x4x4xf32>
    %144 = vector.shape_cast %143 : vector<1x4x4xf32> to vector<4x4xf32>
    %cst_148 = arith.constant dense<0.000000e+00> : vector<4x128xf32>
    %145 = tpu.matmul %144, %142, %cst_148 {dimension_numbers = #tpu.dot_dimension_numbers<[1], [0], [0], [1], [0, 0, 1, 1], [], []>} : vector<4x4xf32>, vector<4x128xf32>, vector<4x128xf32> -> vector<4x128xf32>
    %146 = arith.addf %139, %145 : vector<4x128xf32>
    %c0_149 = arith.constant 0 : index
    %c0_150 = arith.constant 0 : index
    %147 = vector.load %arg20[%c0_149, %c0_150] : memref<64x128xbf16, #tpu.memory_space<vmem>>, vector<64x128xbf16>
    %cst_151 = arith.constant dense<0.000000e+00> : vector<4x128xf32>
    %148 = tpu.matmul %129, %147, %cst_151 {dimension_numbers = #tpu.dot_dimension_numbers<[1], [0], [0], [1], [0, 0, 1, 1], [], []>} : vector<4x64xbf16>, vector<64x128xbf16>, vector<4x128xf32> -> vector<4x128xf32>
    %c0_152 = arith.constant 0 : index
    %c0_153 = arith.constant 0 : index
    %149 = vector.load %arg19[%c0_152, %c0_153] : memref<1x128xf32, #tpu.memory_space<vmem>>, vector<1x128xf32>
    %150 = vector.broadcast %149 : vector<1x128xf32> to vector<4x128xf32>
    %151 = arith.addf %146, %150 : vector<4x128xf32>
    %cst_154 = arith.constant 0.000000e+00 : f32
    %152 = vector.broadcast %cst_154 : f32 to vector<4x128xf32>
    %153 = arith.maximumf %151, %152 : vector<4x128xf32>
    %154 = arith.truncf %153 : vector<4x128xf32> to vector<4x128xbf16>
    %c0_155 = arith.constant 0 : index
    %c0_156 = arith.constant 0 : index
    %c0_157 = arith.constant 0 : index
    %155 = vector.load %arg21[%c0_155, %c0_156, %c0_157] : memref<3x128x128xbf16, #tpu.memory_space<vmem>>, vector<1x128x128xbf16>
    %156 = vector.shape_cast %155 : vector<1x128x128xbf16> to vector<128x128xbf16>
    %cst_158 = arith.constant dense<0.000000e+00> : vector<4x128xf32>
    %157 = tpu.matmul %154, %156, %cst_158 {dimension_numbers = #tpu.dot_dimension_numbers<[1], [0], [0], [1], [0, 0, 1, 1], [], []>} : vector<4x128xbf16>, vector<128x128xbf16>, vector<4x128xf32> -> vector<4x128xf32>
    %c0_159 = arith.constant 0 : index
    %c0_160 = arith.constant 0 : index
    %c0_161 = arith.constant 0 : index
    %158 = vector.load %arg23[%c0_159, %c0_160, %c0_161] : memref<3x4x4xf32, #tpu.memory_space<vmem>>, vector<1x4x4xf32>
    %159 = vector.shape_cast %158 : vector<1x4x4xf32> to vector<4x4xf32>
    %cst_162 = arith.constant dense<0.000000e+00> : vector<4x128xf32>
    %160 = tpu.matmul %159, %157, %cst_162 {dimension_numbers = #tpu.dot_dimension_numbers<[1], [0], [0], [1], [0, 0, 1, 1], [], []>} : vector<4x4xf32>, vector<4x128xf32>, vector<4x128xf32> -> vector<4x128xf32>
    %c1_163 = arith.constant 1 : index
    %c0_164 = arith.constant 0 : index
    %c0_165 = arith.constant 0 : index
    %161 = vector.load %arg21[%c1_163, %c0_164, %c0_165] : memref<3x128x128xbf16, #tpu.memory_space<vmem>>, vector<1x128x128xbf16>
    %162 = vector.shape_cast %161 : vector<1x128x128xbf16> to vector<128x128xbf16>
    %cst_166 = arith.constant dense<0.000000e+00> : vector<4x128xf32>
    %163 = tpu.matmul %154, %162, %cst_166 {dimension_numbers = #tpu.dot_dimension_numbers<[1], [0], [0], [1], [0, 0, 1, 1], [], []>} : vector<4x128xbf16>, vector<128x128xbf16>, vector<4x128xf32> -> vector<4x128xf32>
    %164 = arith.addf %160, %163 : vector<4x128xf32>
    %c2_167 = arith.constant 2 : index
    %c0_168 = arith.constant 0 : index
    %c0_169 = arith.constant 0 : index
    %165 = vector.load %arg21[%c2_167, %c0_168, %c0_169] : memref<3x128x128xbf16, #tpu.memory_space<vmem>>, vector<1x128x128xbf16>
    %166 = vector.shape_cast %165 : vector<1x128x128xbf16> to vector<128x128xbf16>
    %cst_170 = arith.constant dense<0.000000e+00> : vector<4x128xf32>
    %167 = tpu.matmul %154, %166, %cst_170 {dimension_numbers = #tpu.dot_dimension_numbers<[1], [0], [0], [1], [0, 0, 1, 1], [], []>} : vector<4x128xbf16>, vector<128x128xbf16>, vector<4x128xf32> -> vector<4x128xf32>
    %c2_171 = arith.constant 2 : index
    %c0_172 = arith.constant 0 : index
    %c0_173 = arith.constant 0 : index
    %168 = vector.load %arg23[%c2_171, %c0_172, %c0_173] : memref<3x4x4xf32, #tpu.memory_space<vmem>>, vector<1x4x4xf32>
    %169 = vector.shape_cast %168 : vector<1x4x4xf32> to vector<4x4xf32>
    %cst_174 = arith.constant dense<0.000000e+00> : vector<4x128xf32>
    %170 = tpu.matmul %169, %167, %cst_174 {dimension_numbers = #tpu.dot_dimension_numbers<[1], [0], [0], [1], [0, 0, 1, 1], [], []>} : vector<4x4xf32>, vector<4x128xf32>, vector<4x128xf32> -> vector<4x128xf32>
    %171 = arith.addf %164, %170 : vector<4x128xf32>
    %c0_175 = arith.constant 0 : index
    %c0_176 = arith.constant 0 : index
    %172 = vector.load %arg22[%c0_175, %c0_176] : memref<1x128xf32, #tpu.memory_space<vmem>>, vector<1x128xf32>
    %173 = vector.broadcast %172 : vector<1x128xf32> to vector<4x128xf32>
    %174 = arith.addf %171, %173 : vector<4x128xf32>
    %175 = arith.addf %174, %148 : vector<4x128xf32>
    %cst_177 = arith.constant 0.000000e+00 : f32
    %176 = vector.broadcast %cst_177 : f32 to vector<4x128xf32>
    %177 = arith.maximumf %175, %176 : vector<4x128xf32>
    %178 = arith.truncf %177 : vector<4x128xf32> to vector<4x128xbf16>
    %c0_178 = arith.constant 0 : index
    %c0_179 = arith.constant 0 : index
    %c0_180 = arith.constant 0 : index
    %179 = vector.load %arg24[%c0_178, %c0_179, %c0_180] : memref<2x128x128xbf16, #tpu.memory_space<vmem>>, vector<1x128x128xbf16>
    %180 = vector.shape_cast %179 : vector<1x128x128xbf16> to vector<128x128xbf16>
    %cst_181 = arith.constant dense<0.000000e+00> : vector<4x128xf32>
    %181 = tpu.matmul %178, %180, %cst_181 {dimension_numbers = #tpu.dot_dimension_numbers<[1], [0], [0], [1], [0, 0, 1, 1], [], []>} : vector<4x128xbf16>, vector<128x128xbf16>, vector<4x128xf32> -> vector<4x128xf32>
    %c1_182 = arith.constant 1 : index
    %c0_183 = arith.constant 0 : index
    %c0_184 = arith.constant 0 : index
    %182 = vector.load %arg24[%c1_182, %c0_183, %c0_184] : memref<2x128x128xbf16, #tpu.memory_space<vmem>>, vector<1x128x128xbf16>
    %183 = vector.shape_cast %182 : vector<1x128x128xbf16> to vector<128x128xbf16>
    %cst_185 = arith.constant dense<0.000000e+00> : vector<4x128xf32>
    %184 = tpu.matmul %178, %183, %cst_185 {dimension_numbers = #tpu.dot_dimension_numbers<[1], [0], [0], [1], [0, 0, 1, 1], [], []>} : vector<4x128xbf16>, vector<128x128xbf16>, vector<4x128xf32> -> vector<4x128xf32>
    %c0_186 = arith.constant 0 : index
    %c0_187 = arith.constant 0 : index
    %c0_188 = arith.constant 0 : index
    %185 = vector.load %arg26[%c0_186, %c0_187, %c0_188] : memref<2x8x4xf32, #tpu.memory_space<vmem>>, vector<1x8x4xf32>
    %186 = vector.shape_cast %185 : vector<1x8x4xf32> to vector<8x4xf32>
    %cst_189 = arith.constant dense<0.000000e+00> : vector<8x128xf32>
    %187 = tpu.matmul %186, %181, %cst_189 {dimension_numbers = #tpu.dot_dimension_numbers<[1], [0], [0], [1], [0, 0, 1, 1], [], []>} : vector<8x4xf32>, vector<4x128xf32>, vector<8x128xf32> -> vector<8x128xf32>
    %c1_190 = arith.constant 1 : index
    %c0_191 = arith.constant 0 : index
    %c0_192 = arith.constant 0 : index
    %188 = vector.load %arg26[%c1_190, %c0_191, %c0_192] : memref<2x8x4xf32, #tpu.memory_space<vmem>>, vector<1x8x4xf32>
    %189 = vector.shape_cast %188 : vector<1x8x4xf32> to vector<8x4xf32>
    %cst_193 = arith.constant dense<0.000000e+00> : vector<8x128xf32>
    %190 = tpu.matmul %189, %184, %cst_193 {dimension_numbers = #tpu.dot_dimension_numbers<[1], [0], [0], [1], [0, 0, 1, 1], [], []>} : vector<8x4xf32>, vector<4x128xf32>, vector<8x128xf32> -> vector<8x128xf32>
    %191 = arith.addf %187, %190 : vector<8x128xf32>
    %c0_194 = arith.constant 0 : index
    %c0_195 = arith.constant 0 : index
    %192 = vector.load %arg25[%c0_194, %c0_195] : memref<1x128xf32, #tpu.memory_space<vmem>>, vector<1x128xf32>
    %193 = vector.broadcast %192 : vector<1x128xf32> to vector<8x128xf32>
    %194 = arith.addf %191, %193 : vector<8x128xf32>
    %195 = arith.truncf %194 : vector<8x128xf32> to vector<8x128xbf16>
    %c0_196 = arith.constant 0 : index
    %c0_197 = arith.constant 0 : index
    %c0_198 = arith.constant 0 : index
    %196 = vector.load %arg27[%c0_196, %c0_197, %c0_198] : memref<3x128x128xbf16, #tpu.memory_space<vmem>>, vector<1x128x128xbf16>
    %197 = vector.shape_cast %196 : vector<1x128x128xbf16> to vector<128x128xbf16>
    %cst_199 = arith.constant dense<0.000000e+00> : vector<8x128xf32>
    %198 = tpu.matmul %195, %197, %cst_199 {dimension_numbers = #tpu.dot_dimension_numbers<[1], [0], [0], [1], [0, 0, 1, 1], [], []>} : vector<8x128xbf16>, vector<128x128xbf16>, vector<8x128xf32> -> vector<8x128xf32>
    %c0_200 = arith.constant 0 : index
    %c0_201 = arith.constant 0 : index
    %c0_202 = arith.constant 0 : index
    %199 = vector.load %arg34[%c0_200, %c0_201, %c0_202] : memref<3x8x8xf32, #tpu.memory_space<vmem>>, vector<1x8x8xf32>
    %200 = vector.shape_cast %199 : vector<1x8x8xf32> to vector<8x8xf32>
    %cst_203 = arith.constant dense<0.000000e+00> : vector<8x128xf32>
    %201 = tpu.matmul %200, %198, %cst_203 {dimension_numbers = #tpu.dot_dimension_numbers<[1], [0], [0], [1], [0, 0, 1, 1], [], []>} : vector<8x8xf32>, vector<8x128xf32>, vector<8x128xf32> -> vector<8x128xf32>
    %c1_204 = arith.constant 1 : index
    %c0_205 = arith.constant 0 : index
    %c0_206 = arith.constant 0 : index
    %202 = vector.load %arg27[%c1_204, %c0_205, %c0_206] : memref<3x128x128xbf16, #tpu.memory_space<vmem>>, vector<1x128x128xbf16>
    %203 = vector.shape_cast %202 : vector<1x128x128xbf16> to vector<128x128xbf16>
    %cst_207 = arith.constant dense<0.000000e+00> : vector<8x128xf32>
    %204 = tpu.matmul %195, %203, %cst_207 {dimension_numbers = #tpu.dot_dimension_numbers<[1], [0], [0], [1], [0, 0, 1, 1], [], []>} : vector<8x128xbf16>, vector<128x128xbf16>, vector<8x128xf32> -> vector<8x128xf32>
    %205 = arith.addf %201, %204 : vector<8x128xf32>
    %c2_208 = arith.constant 2 : index
    %c0_209 = arith.constant 0 : index
    %c0_210 = arith.constant 0 : index
    %206 = vector.load %arg27[%c2_208, %c0_209, %c0_210] : memref<3x128x128xbf16, #tpu.memory_space<vmem>>, vector<1x128x128xbf16>
    %207 = vector.shape_cast %206 : vector<1x128x128xbf16> to vector<128x128xbf16>
    %cst_211 = arith.constant dense<0.000000e+00> : vector<8x128xf32>
    %208 = tpu.matmul %195, %207, %cst_211 {dimension_numbers = #tpu.dot_dimension_numbers<[1], [0], [0], [1], [0, 0, 1, 1], [], []>} : vector<8x128xbf16>, vector<128x128xbf16>, vector<8x128xf32> -> vector<8x128xf32>
    %c2_212 = arith.constant 2 : index
    %c0_213 = arith.constant 0 : index
    %c0_214 = arith.constant 0 : index
    %209 = vector.load %arg34[%c2_212, %c0_213, %c0_214] : memref<3x8x8xf32, #tpu.memory_space<vmem>>, vector<1x8x8xf32>
    %210 = vector.shape_cast %209 : vector<1x8x8xf32> to vector<8x8xf32>
    %cst_215 = arith.constant dense<0.000000e+00> : vector<8x128xf32>
    %211 = tpu.matmul %210, %208, %cst_215 {dimension_numbers = #tpu.dot_dimension_numbers<[1], [0], [0], [1], [0, 0, 1, 1], [], []>} : vector<8x8xf32>, vector<8x128xf32>, vector<8x128xf32> -> vector<8x128xf32>
    %212 = arith.addf %205, %211 : vector<8x128xf32>
    %c0_216 = arith.constant 0 : index
    %c0_217 = arith.constant 0 : index
    %213 = vector.load %arg30[%c0_216, %c0_217] : memref<128x128xbf16, #tpu.memory_space<vmem>>, vector<128x128xbf16>
    %cst_218 = arith.constant dense<0.000000e+00> : vector<8x128xf32>
    %214 = tpu.matmul %195, %213, %cst_218 {dimension_numbers = #tpu.dot_dimension_numbers<[1], [0], [0], [1], [0, 0, 1, 1], [], []>} : vector<8x128xbf16>, vector<128x128xbf16>, vector<8x128xf32> -> vector<8x128xf32>
    %c0_219 = arith.constant 0 : index
    %c0_220 = arith.constant 0 : index
    %c0_221 = arith.constant 0 : index
    %215 = vector.load %arg28[%c0_219, %c0_220, %c0_221] : memref<3x128x128xbf16, #tpu.memory_space<vmem>>, vector<1x128x128xbf16>
    %216 = vector.shape_cast %215 : vector<1x128x128xbf16> to vector<128x128xbf16>
    %cst_222 = arith.constant dense<0.000000e+00> : vector<8x128xf32>
    %217 = tpu.matmul %114, %216, %cst_222 {dimension_numbers = #tpu.dot_dimension_numbers<[1], [0], [0], [1], [0, 0, 1, 1], [], []>} : vector<8x128xbf16>, vector<128x128xbf16>, vector<8x128xf32> -> vector<8x128xf32>
    %c0_223 = arith.constant 0 : index
    %c0_224 = arith.constant 0 : index
    %c0_225 = arith.constant 0 : index
    %218 = vector.load %arg34[%c0_223, %c0_224, %c0_225] : memref<3x8x8xf32, #tpu.memory_space<vmem>>, vector<1x8x8xf32>
    %219 = vector.shape_cast %218 : vector<1x8x8xf32> to vector<8x8xf32>
    %cst_226 = arith.constant dense<0.000000e+00> : vector<8x128xf32>
    %220 = tpu.matmul %219, %217, %cst_226 {dimension_numbers = #tpu.dot_dimension_numbers<[1], [0], [0], [1], [0, 0, 1, 1], [], []>} : vector<8x8xf32>, vector<8x128xf32>, vector<8x128xf32> -> vector<8x128xf32>
    %c1_227 = arith.constant 1 : index
    %c0_228 = arith.constant 0 : index
    %c0_229 = arith.constant 0 : index
    %221 = vector.load %arg28[%c1_227, %c0_228, %c0_229] : memref<3x128x128xbf16, #tpu.memory_space<vmem>>, vector<1x128x128xbf16>
    %222 = vector.shape_cast %221 : vector<1x128x128xbf16> to vector<128x128xbf16>
    %cst_230 = arith.constant dense<0.000000e+00> : vector<8x128xf32>
    %223 = tpu.matmul %114, %222, %cst_230 {dimension_numbers = #tpu.dot_dimension_numbers<[1], [0], [0], [1], [0, 0, 1, 1], [], []>} : vector<8x128xbf16>, vector<128x128xbf16>, vector<8x128xf32> -> vector<8x128xf32>
    %224 = arith.addf %220, %223 : vector<8x128xf32>
    %c2_231 = arith.constant 2 : index
    %c0_232 = arith.constant 0 : index
    %c0_233 = arith.constant 0 : index
    %225 = vector.load %arg28[%c2_231, %c0_232, %c0_233] : memref<3x128x128xbf16, #tpu.memory_space<vmem>>, vector<1x128x128xbf16>
    %226 = vector.shape_cast %225 : vector<1x128x128xbf16> to vector<128x128xbf16>
    %cst_234 = arith.constant dense<0.000000e+00> : vector<8x128xf32>
    %227 = tpu.matmul %114, %226, %cst_234 {dimension_numbers = #tpu.dot_dimension_numbers<[1], [0], [0], [1], [0, 0, 1, 1], [], []>} : vector<8x128xbf16>, vector<128x128xbf16>, vector<8x128xf32> -> vector<8x128xf32>
    %c2_235 = arith.constant 2 : index
    %c0_236 = arith.constant 0 : index
    %c0_237 = arith.constant 0 : index
    %228 = vector.load %arg34[%c2_235, %c0_236, %c0_237] : memref<3x8x8xf32, #tpu.memory_space<vmem>>, vector<1x8x8xf32>
    %229 = vector.shape_cast %228 : vector<1x8x8xf32> to vector<8x8xf32>
    %cst_238 = arith.constant dense<0.000000e+00> : vector<8x128xf32>
    %230 = tpu.matmul %229, %227, %cst_238 {dimension_numbers = #tpu.dot_dimension_numbers<[1], [0], [0], [1], [0, 0, 1, 1], [], []>} : vector<8x8xf32>, vector<8x128xf32>, vector<8x128xf32> -> vector<8x128xf32>
    %231 = arith.addf %224, %230 : vector<8x128xf32>
    %232 = arith.addf %212, %231 : vector<8x128xf32>
    %c0_239 = arith.constant 0 : index
    %c0_240 = arith.constant 0 : index
    %233 = vector.load %arg31[%c0_239, %c0_240] : memref<128x128xbf16, #tpu.memory_space<vmem>>, vector<128x128xbf16>
    %cst_241 = arith.constant dense<0.000000e+00> : vector<8x128xf32>
    %234 = tpu.matmul %114, %233, %cst_241 {dimension_numbers = #tpu.dot_dimension_numbers<[1], [0], [0], [1], [0, 0, 1, 1], [], []>} : vector<8x128xbf16>, vector<128x128xbf16>, vector<8x128xf32> -> vector<8x128xf32>
    %235 = arith.addf %214, %234 : vector<8x128xf32>
    %c0_242 = arith.constant 0 : index
    %c0_243 = arith.constant 0 : index
    %236 = vector.load %arg29[%c0_242, %c0_243] : memref<1x128xf32, #tpu.memory_space<vmem>>, vector<1x128xf32>
    %237 = vector.broadcast %236 : vector<1x128xf32> to vector<8x128xf32>
    %238 = arith.addf %232, %237 : vector<8x128xf32>
    %cst_244 = arith.constant 0.000000e+00 : f32
    %239 = vector.broadcast %cst_244 : f32 to vector<8x128xf32>
    %240 = arith.maximumf %238, %239 : vector<8x128xf32>
    %241 = arith.truncf %240 : vector<8x128xf32> to vector<8x128xbf16>
    %c0_245 = arith.constant 0 : index
    %c0_246 = arith.constant 0 : index
    %c0_247 = arith.constant 0 : index
    %242 = vector.load %arg32[%c0_245, %c0_246, %c0_247] : memref<3x128x128xbf16, #tpu.memory_space<vmem>>, vector<1x128x128xbf16>
    %243 = vector.shape_cast %242 : vector<1x128x128xbf16> to vector<128x128xbf16>
    %cst_248 = arith.constant dense<0.000000e+00> : vector<8x128xf32>
    %244 = tpu.matmul %241, %243, %cst_248 {dimension_numbers = #tpu.dot_dimension_numbers<[1], [0], [0], [1], [0, 0, 1, 1], [], []>} : vector<8x128xbf16>, vector<128x128xbf16>, vector<8x128xf32> -> vector<8x128xf32>
    %c0_249 = arith.constant 0 : index
    %c0_250 = arith.constant 0 : index
    %c0_251 = arith.constant 0 : index
    %245 = vector.load %arg34[%c0_249, %c0_250, %c0_251] : memref<3x8x8xf32, #tpu.memory_space<vmem>>, vector<1x8x8xf32>
    %246 = vector.shape_cast %245 : vector<1x8x8xf32> to vector<8x8xf32>
    %cst_252 = arith.constant dense<0.000000e+00> : vector<8x128xf32>
    %247 = tpu.matmul %246, %244, %cst_252 {dimension_numbers = #tpu.dot_dimension_numbers<[1], [0], [0], [1], [0, 0, 1, 1], [], []>} : vector<8x8xf32>, vector<8x128xf32>, vector<8x128xf32> -> vector<8x128xf32>
    %c1_253 = arith.constant 1 : index
    %c0_254 = arith.constant 0 : index
    %c0_255 = arith.constant 0 : index
    %248 = vector.load %arg32[%c1_253, %c0_254, %c0_255] : memref<3x128x128xbf16, #tpu.memory_space<vmem>>, vector<1x128x128xbf16>
    %249 = vector.shape_cast %248 : vector<1x128x128xbf16> to vector<128x128xbf16>
    %cst_256 = arith.constant dense<0.000000e+00> : vector<8x128xf32>
    %250 = tpu.matmul %241, %249, %cst_256 {dimension_numbers = #tpu.dot_dimension_numbers<[1], [0], [0], [1], [0, 0, 1, 1], [], []>} : vector<8x128xbf16>, vector<128x128xbf16>, vector<8x128xf32> -> vector<8x128xf32>
    %251 = arith.addf %247, %250 : vector<8x128xf32>
    %c2_257 = arith.constant 2 : index
    %c0_258 = arith.constant 0 : index
    %c0_259 = arith.constant 0 : index
    %252 = vector.load %arg32[%c2_257, %c0_258, %c0_259] : memref<3x128x128xbf16, #tpu.memory_space<vmem>>, vector<1x128x128xbf16>
    %253 = vector.shape_cast %252 : vector<1x128x128xbf16> to vector<128x128xbf16>
    %cst_260 = arith.constant dense<0.000000e+00> : vector<8x128xf32>
    %254 = tpu.matmul %241, %253, %cst_260 {dimension_numbers = #tpu.dot_dimension_numbers<[1], [0], [0], [1], [0, 0, 1, 1], [], []>} : vector<8x128xbf16>, vector<128x128xbf16>, vector<8x128xf32> -> vector<8x128xf32>
    %c2_261 = arith.constant 2 : index
    %c0_262 = arith.constant 0 : index
    %c0_263 = arith.constant 0 : index
    %255 = vector.load %arg34[%c2_261, %c0_262, %c0_263] : memref<3x8x8xf32, #tpu.memory_space<vmem>>, vector<1x8x8xf32>
    %256 = vector.shape_cast %255 : vector<1x8x8xf32> to vector<8x8xf32>
    %cst_264 = arith.constant dense<0.000000e+00> : vector<8x128xf32>
    %257 = tpu.matmul %256, %254, %cst_264 {dimension_numbers = #tpu.dot_dimension_numbers<[1], [0], [0], [1], [0, 0, 1, 1], [], []>} : vector<8x8xf32>, vector<8x128xf32>, vector<8x128xf32> -> vector<8x128xf32>
    %258 = arith.addf %251, %257 : vector<8x128xf32>
    %c0_265 = arith.constant 0 : index
    %c0_266 = arith.constant 0 : index
    %259 = vector.load %arg33[%c0_265, %c0_266] : memref<1x128xf32, #tpu.memory_space<vmem>>, vector<1x128xf32>
    %260 = vector.broadcast %259 : vector<1x128xf32> to vector<8x128xf32>
    %261 = arith.addf %258, %260 : vector<8x128xf32>
    %262 = arith.addf %261, %235 : vector<8x128xf32>
    %cst_267 = arith.constant 0.000000e+00 : f32
    %263 = vector.broadcast %cst_267 : f32 to vector<8x128xf32>
    %264 = arith.maximumf %262, %263 : vector<8x128xf32>
    %265 = arith.truncf %264 : vector<8x128xf32> to vector<8x128xbf16>
    %c0_268 = arith.constant 0 : index
    %c0_269 = arith.constant 0 : index
    %c0_270 = arith.constant 0 : index
    %266 = vector.load %arg35[%c0_268, %c0_269, %c0_270] : memref<2x128x128xbf16, #tpu.memory_space<vmem>>, vector<1x128x128xbf16>
    %267 = vector.shape_cast %266 : vector<1x128x128xbf16> to vector<128x128xbf16>
    %cst_271 = arith.constant dense<0.000000e+00> : vector<8x128xf32>
    %268 = tpu.matmul %265, %267, %cst_271 {dimension_numbers = #tpu.dot_dimension_numbers<[1], [0], [0], [1], [0, 0, 1, 1], [], []>} : vector<8x128xbf16>, vector<128x128xbf16>, vector<8x128xf32> -> vector<8x128xf32>
    %c1_272 = arith.constant 1 : index
    %c0_273 = arith.constant 0 : index
    %c0_274 = arith.constant 0 : index
    %269 = vector.load %arg35[%c1_272, %c0_273, %c0_274] : memref<2x128x128xbf16, #tpu.memory_space<vmem>>, vector<1x128x128xbf16>
    %270 = vector.shape_cast %269 : vector<1x128x128xbf16> to vector<128x128xbf16>
    %cst_275 = arith.constant dense<0.000000e+00> : vector<8x128xf32>
    %271 = tpu.matmul %265, %270, %cst_275 {dimension_numbers = #tpu.dot_dimension_numbers<[1], [0], [0], [1], [0, 0, 1, 1], [], []>} : vector<8x128xbf16>, vector<128x128xbf16>, vector<8x128xf32> -> vector<8x128xf32>
    %c0_276 = arith.constant 0 : index
    %c0_277 = arith.constant 0 : index
    %c0_278 = arith.constant 0 : index
    %272 = vector.load %arg37[%c0_276, %c0_277, %c0_278] : memref<2x16x8xf32, #tpu.memory_space<vmem>>, vector<1x16x8xf32>
    %273 = vector.shape_cast %272 : vector<1x16x8xf32> to vector<16x8xf32>
    %cst_279 = arith.constant dense<0.000000e+00> : vector<16x128xf32>
    %274 = tpu.matmul %273, %268, %cst_279 {dimension_numbers = #tpu.dot_dimension_numbers<[1], [0], [0], [1], [0, 0, 1, 1], [], []>} : vector<16x8xf32>, vector<8x128xf32>, vector<16x128xf32> -> vector<16x128xf32>
    %c1_280 = arith.constant 1 : index
    %c0_281 = arith.constant 0 : index
    %c0_282 = arith.constant 0 : index
    %275 = vector.load %arg37[%c1_280, %c0_281, %c0_282] : memref<2x16x8xf32, #tpu.memory_space<vmem>>, vector<1x16x8xf32>
    %276 = vector.shape_cast %275 : vector<1x16x8xf32> to vector<16x8xf32>
    %cst_283 = arith.constant dense<0.000000e+00> : vector<16x128xf32>
    %277 = tpu.matmul %276, %271, %cst_283 {dimension_numbers = #tpu.dot_dimension_numbers<[1], [0], [0], [1], [0, 0, 1, 1], [], []>} : vector<16x8xf32>, vector<8x128xf32>, vector<16x128xf32> -> vector<16x128xf32>
    %278 = arith.addf %274, %277 : vector<16x128xf32>
    %c0_284 = arith.constant 0 : index
    %c0_285 = arith.constant 0 : index
    %279 = vector.load %arg36[%c0_284, %c0_285] : memref<1x128xf32, #tpu.memory_space<vmem>>, vector<1x128xf32>
    %280 = vector.broadcast %279 : vector<1x128xf32> to vector<16x128xf32>
    %281 = arith.addf %278, %280 : vector<16x128xf32>
    %282 = arith.truncf %281 : vector<16x128xf32> to vector<16x128xbf16>
    %c0_286 = arith.constant 0 : index
    %c0_287 = arith.constant 0 : index
    %c0_288 = arith.constant 0 : index
    %283 = vector.load %arg38[%c0_286, %c0_287, %c0_288] : memref<3x128x128xbf16, #tpu.memory_space<vmem>>, vector<1x128x128xbf16>
    %284 = vector.shape_cast %283 : vector<1x128x128xbf16> to vector<128x128xbf16>
    %cst_289 = arith.constant dense<0.000000e+00> : vector<16x128xf32>
    %285 = tpu.matmul %282, %284, %cst_289 {dimension_numbers = #tpu.dot_dimension_numbers<[1], [0], [0], [1], [0, 0, 1, 1], [], []>} : vector<16x128xbf16>, vector<128x128xbf16>, vector<16x128xf32> -> vector<16x128xf32>
    %c0_290 = arith.constant 0 : index
    %c0_291 = arith.constant 0 : index
    %c0_292 = arith.constant 0 : index
    %286 = vector.load %arg45[%c0_290, %c0_291, %c0_292] : memref<3x16x16xf32, #tpu.memory_space<vmem>>, vector<1x16x16xf32>
    %287 = vector.shape_cast %286 : vector<1x16x16xf32> to vector<16x16xf32>
    %cst_293 = arith.constant dense<0.000000e+00> : vector<16x128xf32>
    %288 = tpu.matmul %287, %285, %cst_293 {dimension_numbers = #tpu.dot_dimension_numbers<[1], [0], [0], [1], [0, 0, 1, 1], [], []>} : vector<16x16xf32>, vector<16x128xf32>, vector<16x128xf32> -> vector<16x128xf32>
    %c1_294 = arith.constant 1 : index
    %c0_295 = arith.constant 0 : index
    %c0_296 = arith.constant 0 : index
    %289 = vector.load %arg38[%c1_294, %c0_295, %c0_296] : memref<3x128x128xbf16, #tpu.memory_space<vmem>>, vector<1x128x128xbf16>
    %290 = vector.shape_cast %289 : vector<1x128x128xbf16> to vector<128x128xbf16>
    %cst_297 = arith.constant dense<0.000000e+00> : vector<16x128xf32>
    %291 = tpu.matmul %282, %290, %cst_297 {dimension_numbers = #tpu.dot_dimension_numbers<[1], [0], [0], [1], [0, 0, 1, 1], [], []>} : vector<16x128xbf16>, vector<128x128xbf16>, vector<16x128xf32> -> vector<16x128xf32>
    %292 = arith.addf %288, %291 : vector<16x128xf32>
    %c2_298 = arith.constant 2 : index
    %c0_299 = arith.constant 0 : index
    %c0_300 = arith.constant 0 : index
    %293 = vector.load %arg38[%c2_298, %c0_299, %c0_300] : memref<3x128x128xbf16, #tpu.memory_space<vmem>>, vector<1x128x128xbf16>
    %294 = vector.shape_cast %293 : vector<1x128x128xbf16> to vector<128x128xbf16>
    %cst_301 = arith.constant dense<0.000000e+00> : vector<16x128xf32>
    %295 = tpu.matmul %282, %294, %cst_301 {dimension_numbers = #tpu.dot_dimension_numbers<[1], [0], [0], [1], [0, 0, 1, 1], [], []>} : vector<16x128xbf16>, vector<128x128xbf16>, vector<16x128xf32> -> vector<16x128xf32>
    %c2_302 = arith.constant 2 : index
    %c0_303 = arith.constant 0 : index
    %c0_304 = arith.constant 0 : index
    %296 = vector.load %arg45[%c2_302, %c0_303, %c0_304] : memref<3x16x16xf32, #tpu.memory_space<vmem>>, vector<1x16x16xf32>
    %297 = vector.shape_cast %296 : vector<1x16x16xf32> to vector<16x16xf32>
    %cst_305 = arith.constant dense<0.000000e+00> : vector<16x128xf32>
    %298 = tpu.matmul %297, %295, %cst_305 {dimension_numbers = #tpu.dot_dimension_numbers<[1], [0], [0], [1], [0, 0, 1, 1], [], []>} : vector<16x16xf32>, vector<16x128xf32>, vector<16x128xf32> -> vector<16x128xf32>
    %299 = arith.addf %292, %298 : vector<16x128xf32>
    %c0_306 = arith.constant 0 : index
    %c0_307 = arith.constant 0 : index
    %300 = vector.load %arg41[%c0_306, %c0_307] : memref<128x128xbf16, #tpu.memory_space<vmem>>, vector<128x128xbf16>
    %cst_308 = arith.constant dense<0.000000e+00> : vector<16x128xf32>
    %301 = tpu.matmul %282, %300, %cst_308 {dimension_numbers = #tpu.dot_dimension_numbers<[1], [0], [0], [1], [0, 0, 1, 1], [], []>} : vector<16x128xbf16>, vector<128x128xbf16>, vector<16x128xf32> -> vector<16x128xf32>
    %c0_309 = arith.constant 0 : index
    %c0_310 = arith.constant 0 : index
    %c0_311 = arith.constant 0 : index
    %302 = vector.load %arg39[%c0_309, %c0_310, %c0_311] : memref<3x128x128xbf16, #tpu.memory_space<vmem>>, vector<1x128x128xbf16>
    %303 = vector.shape_cast %302 : vector<1x128x128xbf16> to vector<128x128xbf16>
    %cst_312 = arith.constant dense<0.000000e+00> : vector<16x128xf32>
    %304 = tpu.matmul %50, %303, %cst_312 {dimension_numbers = #tpu.dot_dimension_numbers<[1], [0], [0], [1], [0, 0, 1, 1], [], []>} : vector<16x128xbf16>, vector<128x128xbf16>, vector<16x128xf32> -> vector<16x128xf32>
    %c0_313 = arith.constant 0 : index
    %c0_314 = arith.constant 0 : index
    %c0_315 = arith.constant 0 : index
    %305 = vector.load %arg45[%c0_313, %c0_314, %c0_315] : memref<3x16x16xf32, #tpu.memory_space<vmem>>, vector<1x16x16xf32>
    %306 = vector.shape_cast %305 : vector<1x16x16xf32> to vector<16x16xf32>
    %cst_316 = arith.constant dense<0.000000e+00> : vector<16x128xf32>
    %307 = tpu.matmul %306, %304, %cst_316 {dimension_numbers = #tpu.dot_dimension_numbers<[1], [0], [0], [1], [0, 0, 1, 1], [], []>} : vector<16x16xf32>, vector<16x128xf32>, vector<16x128xf32> -> vector<16x128xf32>
    %c1_317 = arith.constant 1 : index
    %c0_318 = arith.constant 0 : index
    %c0_319 = arith.constant 0 : index
    %308 = vector.load %arg39[%c1_317, %c0_318, %c0_319] : memref<3x128x128xbf16, #tpu.memory_space<vmem>>, vector<1x128x128xbf16>
    %309 = vector.shape_cast %308 : vector<1x128x128xbf16> to vector<128x128xbf16>
    %cst_320 = arith.constant dense<0.000000e+00> : vector<16x128xf32>
    %310 = tpu.matmul %50, %309, %cst_320 {dimension_numbers = #tpu.dot_dimension_numbers<[1], [0], [0], [1], [0, 0, 1, 1], [], []>} : vector<16x128xbf16>, vector<128x128xbf16>, vector<16x128xf32> -> vector<16x128xf32>
    %311 = arith.addf %307, %310 : vector<16x128xf32>
    %c2_321 = arith.constant 2 : index
    %c0_322 = arith.constant 0 : index
    %c0_323 = arith.constant 0 : index
    %312 = vector.load %arg39[%c2_321, %c0_322, %c0_323] : memref<3x128x128xbf16, #tpu.memory_space<vmem>>, vector<1x128x128xbf16>
    %313 = vector.shape_cast %312 : vector<1x128x128xbf16> to vector<128x128xbf16>
    %cst_324 = arith.constant dense<0.000000e+00> : vector<16x128xf32>
    %314 = tpu.matmul %50, %313, %cst_324 {dimension_numbers = #tpu.dot_dimension_numbers<[1], [0], [0], [1], [0, 0, 1, 1], [], []>} : vector<16x128xbf16>, vector<128x128xbf16>, vector<16x128xf32> -> vector<16x128xf32>
    %c2_325 = arith.constant 2 : index
    %c0_326 = arith.constant 0 : index
    %c0_327 = arith.constant 0 : index
    %315 = vector.load %arg45[%c2_325, %c0_326, %c0_327] : memref<3x16x16xf32, #tpu.memory_space<vmem>>, vector<1x16x16xf32>
    %316 = vector.shape_cast %315 : vector<1x16x16xf32> to vector<16x16xf32>
    %cst_328 = arith.constant dense<0.000000e+00> : vector<16x128xf32>
    %317 = tpu.matmul %316, %314, %cst_328 {dimension_numbers = #tpu.dot_dimension_numbers<[1], [0], [0], [1], [0, 0, 1, 1], [], []>} : vector<16x16xf32>, vector<16x128xf32>, vector<16x128xf32> -> vector<16x128xf32>
    %318 = arith.addf %311, %317 : vector<16x128xf32>
    %319 = arith.addf %299, %318 : vector<16x128xf32>
    %c0_329 = arith.constant 0 : index
    %c0_330 = arith.constant 0 : index
    %320 = vector.load %arg42[%c0_329, %c0_330] : memref<128x128xbf16, #tpu.memory_space<vmem>>, vector<128x128xbf16>
    %cst_331 = arith.constant dense<0.000000e+00> : vector<16x128xf32>
    %321 = tpu.matmul %50, %320, %cst_331 {dimension_numbers = #tpu.dot_dimension_numbers<[1], [0], [0], [1], [0, 0, 1, 1], [], []>} : vector<16x128xbf16>, vector<128x128xbf16>, vector<16x128xf32> -> vector<16x128xf32>
    %322 = arith.addf %301, %321 : vector<16x128xf32>
    %c0_332 = arith.constant 0 : index
    %c0_333 = arith.constant 0 : index
    %323 = vector.load %arg40[%c0_332, %c0_333] : memref<1x128xf32, #tpu.memory_space<vmem>>, vector<1x128xf32>
    %324 = vector.broadcast %323 : vector<1x128xf32> to vector<16x128xf32>
    %325 = arith.addf %319, %324 : vector<16x128xf32>
    %cst_334 = arith.constant 0.000000e+00 : f32
    %326 = vector.broadcast %cst_334 : f32 to vector<16x128xf32>
    %327 = arith.maximumf %325, %326 : vector<16x128xf32>
    %328 = arith.truncf %327 : vector<16x128xf32> to vector<16x128xbf16>
    %c0_335 = arith.constant 0 : index
    %c0_336 = arith.constant 0 : index
    %c0_337 = arith.constant 0 : index
    %329 = vector.load %arg43[%c0_335, %c0_336, %c0_337] : memref<3x128x128xbf16, #tpu.memory_space<vmem>>, vector<1x128x128xbf16>
    %330 = vector.shape_cast %329 : vector<1x128x128xbf16> to vector<128x128xbf16>
    %cst_338 = arith.constant dense<0.000000e+00> : vector<16x128xf32>
    %331 = tpu.matmul %328, %330, %cst_338 {dimension_numbers = #tpu.dot_dimension_numbers<[1], [0], [0], [1], [0, 0, 1, 1], [], []>} : vector<16x128xbf16>, vector<128x128xbf16>, vector<16x128xf32> -> vector<16x128xf32>
    %c0_339 = arith.constant 0 : index
    %c0_340 = arith.constant 0 : index
    %c0_341 = arith.constant 0 : index
    %332 = vector.load %arg45[%c0_339, %c0_340, %c0_341] : memref<3x16x16xf32, #tpu.memory_space<vmem>>, vector<1x16x16xf32>
    %333 = vector.shape_cast %332 : vector<1x16x16xf32> to vector<16x16xf32>
    %cst_342 = arith.constant dense<0.000000e+00> : vector<16x128xf32>
    %334 = tpu.matmul %333, %331, %cst_342 {dimension_numbers = #tpu.dot_dimension_numbers<[1], [0], [0], [1], [0, 0, 1, 1], [], []>} : vector<16x16xf32>, vector<16x128xf32>, vector<16x128xf32> -> vector<16x128xf32>
    %c1_343 = arith.constant 1 : index
    %c0_344 = arith.constant 0 : index
    %c0_345 = arith.constant 0 : index
    %335 = vector.load %arg43[%c1_343, %c0_344, %c0_345] : memref<3x128x128xbf16, #tpu.memory_space<vmem>>, vector<1x128x128xbf16>
    %336 = vector.shape_cast %335 : vector<1x128x128xbf16> to vector<128x128xbf16>
    %cst_346 = arith.constant dense<0.000000e+00> : vector<16x128xf32>
    %337 = tpu.matmul %328, %336, %cst_346 {dimension_numbers = #tpu.dot_dimension_numbers<[1], [0], [0], [1], [0, 0, 1, 1], [], []>} : vector<16x128xbf16>, vector<128x128xbf16>, vector<16x128xf32> -> vector<16x128xf32>
    %338 = arith.addf %334, %337 : vector<16x128xf32>
    %c2_347 = arith.constant 2 : index
    %c0_348 = arith.constant 0 : index
    %c0_349 = arith.constant 0 : index
    %339 = vector.load %arg43[%c2_347, %c0_348, %c0_349] : memref<3x128x128xbf16, #tpu.memory_space<vmem>>, vector<1x128x128xbf16>
    %340 = vector.shape_cast %339 : vector<1x128x128xbf16> to vector<128x128xbf16>
    %cst_350 = arith.constant dense<0.000000e+00> : vector<16x128xf32>
    %341 = tpu.matmul %328, %340, %cst_350 {dimension_numbers = #tpu.dot_dimension_numbers<[1], [0], [0], [1], [0, 0, 1, 1], [], []>} : vector<16x128xbf16>, vector<128x128xbf16>, vector<16x128xf32> -> vector<16x128xf32>
    %c2_351 = arith.constant 2 : index
    %c0_352 = arith.constant 0 : index
    %c0_353 = arith.constant 0 : index
    %342 = vector.load %arg45[%c2_351, %c0_352, %c0_353] : memref<3x16x16xf32, #tpu.memory_space<vmem>>, vector<1x16x16xf32>
    %343 = vector.shape_cast %342 : vector<1x16x16xf32> to vector<16x16xf32>
    %cst_354 = arith.constant dense<0.000000e+00> : vector<16x128xf32>
    %344 = tpu.matmul %343, %341, %cst_354 {dimension_numbers = #tpu.dot_dimension_numbers<[1], [0], [0], [1], [0, 0, 1, 1], [], []>} : vector<16x16xf32>, vector<16x128xf32>, vector<16x128xf32> -> vector<16x128xf32>
    %345 = arith.addf %338, %344 : vector<16x128xf32>
    %c0_355 = arith.constant 0 : index
    %c0_356 = arith.constant 0 : index
    %346 = vector.load %arg44[%c0_355, %c0_356] : memref<1x128xf32, #tpu.memory_space<vmem>>, vector<1x128xf32>
    %347 = vector.broadcast %346 : vector<1x128xf32> to vector<16x128xf32>
    %348 = arith.addf %345, %347 : vector<16x128xf32>
    %349 = arith.addf %348, %322 : vector<16x128xf32>
    %cst_357 = arith.constant 0.000000e+00 : f32
    %350 = vector.broadcast %cst_357 : f32 to vector<16x128xf32>
    %351 = arith.maximumf %349, %350 : vector<16x128xf32>
    %c0_358 = arith.constant 0 : index
    %c0_359 = arith.constant 0 : index
    %c0_360 = arith.constant 0 : index
    %352 = vector.load %arg46[%c0_358, %c0_359, %c0_360] : memref<1x16x128xf32, #tpu.memory_space<vmem>>, vector<1x16x128xf32>
    %353 = vector.shape_cast %352 : vector<1x16x128xf32> to vector<16x128xf32>
    %354 = vector.shape_cast %351 : vector<16x128xf32> to vector<1x16x128xf32>
    tpu.vector_store %arg46[%c0_358, %c0_359, %c0_360], %354 {strides = array<i32>} : memref<1x16x128xf32, #tpu.memory_space<vmem>>, vector<1x16x128xf32>,
    return
  }
  func.func @transform_0(%arg0: i32) -> (i32, i32, i32) {
    %c0_i32 = arith.constant 0 : i32
    %c0_i32_0 = arith.constant 0 : i32
    %c0_i32_1 = arith.constant 0 : i32
    return %arg0, %c0_i32, %c0_i32_0 : i32, i32, i32
  }
  func.func @transform_1(%arg0: i32) -> (i32, i32, i32) {
    %c0_i32 = arith.constant 0 : i32
    %c0_i32_0 = arith.constant 0 : i32
    %c0_i32_1 = arith.constant 0 : i32
    %c0_i32_2 = arith.constant 0 : i32
    return %c0_i32, %c0_i32_0, %c0_i32_1 : i32, i32, i32
  }
  func.func @transform_2(%arg0: i32) -> (i32, i32) {
    %c0_i32 = arith.constant 0 : i32
    %c0_i32_0 = arith.constant 0 : i32
    %c0_i32_1 = arith.constant 0 : i32
    return %c0_i32, %c0_i32_0 : i32, i32
  }
  func.func @transform_3(%arg0: i32) -> (i32, i32) {
    %c0_i32 = arith.constant 0 : i32
    %c0_i32_0 = arith.constant 0 : i32
    %c0_i32_1 = arith.constant 0 : i32
    return %c0_i32, %c0_i32_0 : i32, i32
  }
  func.func @transform_4(%arg0: i32) -> (i32, i32, i32) {
    %c0_i32 = arith.constant 0 : i32
    %c0_i32_0 = arith.constant 0 : i32
    %c0_i32_1 = arith.constant 0 : i32
    %c0_i32_2 = arith.constant 0 : i32
    return %c0_i32, %c0_i32_0, %c0_i32_1 : i32, i32, i32
  }
  func.func @transform_5(%arg0: i32) -> (i32, i32) {
    %c0_i32 = arith.constant 0 : i32
    %c0_i32_0 = arith.constant 0 : i32
    %c0_i32_1 = arith.constant 0 : i32
    return %c0_i32, %c0_i32_0 : i32, i32
  }
  func.func @transform_6(%arg0: i32) -> (i32, i32, i32) {
    %c0_i32 = arith.constant 0 : i32
    %c0_i32_0 = arith.constant 0 : i32
    %c0_i32_1 = arith.constant 0 : i32
    %c0_i32_2 = arith.constant 0 : i32
    return %c0_i32, %c0_i32_0, %c0_i32_1 : i32, i32, i32
  }
  func.func @transform_7(%arg0: i32) -> (i32, i32, i32) {
    %c0_i32 = arith.constant 0 : i32
    %c0_i32_0 = arith.constant 0 : i32
    %c0_i32_1 = arith.constant 0 : i32
    %c0_i32_2 = arith.constant 0 : i32
    return %c0_i32, %c0_i32_0, %c0_i32_1 : i32, i32, i32
  }
  func.func @transform_8(%arg0: i32) -> (i32, i32, i32) {
    %c0_i32 = arith.constant 0 : i32
    %c0_i32_0 = arith.constant 0 : i32
    %c0_i32_1 = arith.constant 0 : i32
    %c0_i32_2 = arith.constant 0 : i32
    return %c0_i32, %c0_i32_0, %c0_i32_1 : i32, i32, i32
  }
  func.func @transform_9(%arg0: i32) -> (i32, i32, i32) {
    %c0_i32 = arith.constant 0 : i32
    %c0_i32_0 = arith.constant 0 : i32
    %c0_i32_1 = arith.constant 0 : i32
    %c0_i32_2 = arith.constant 0 : i32
    return %c0_i32, %c0_i32_0, %c0_i32_1 : i32, i32, i32
  }
  func.func @transform_10(%arg0: i32) -> (i32, i32) {
    %c0_i32 = arith.constant 0 : i32
    %c0_i32_0 = arith.constant 0 : i32
    %c0_i32_1 = arith.constant 0 : i32
    return %c0_i32, %c0_i32_0 : i32, i32
  }
  func.func @transform_11(%arg0: i32) -> (i32, i32) {
    %c0_i32 = arith.constant 0 : i32
    %c0_i32_0 = arith.constant 0 : i32
    %c0_i32_1 = arith.constant 0 : i32
    return %c0_i32, %c0_i32_0 : i32, i32
  }
  func.func @transform_12(%arg0: i32) -> (i32, i32, i32) {
    %c0_i32 = arith.constant 0 : i32
    %c0_i32_0 = arith.constant 0 : i32
    %c0_i32_1 = arith.constant 0 : i32
    %c0_i32_2 = arith.constant 0 : i32
    return %c0_i32, %c0_i32_0, %c0_i32_1 : i32, i32, i32
  }
  func.func @transform_13(%arg0: i32) -> (i32, i32) {
    %c0_i32 = arith.constant 0 : i32
    %c0_i32_0 = arith.constant 0 : i32
    %c0_i32_1 = arith.constant 0 : i32
    return %c0_i32, %c0_i32_0 : i32, i32
  }
  func.func @transform_14(%arg0: i32) -> (i32, i32, i32) {
    %c0_i32 = arith.constant 0 : i32
    %c0_i32_0 = arith.constant 0 : i32
    %c0_i32_1 = arith.constant 0 : i32
    %c0_i32_2 = arith.constant 0 : i32
    return %c0_i32, %c0_i32_0, %c0_i32_1 : i32, i32, i32
  }
  func.func @transform_15(%arg0: i32) -> (i32, i32, i32) {
    %c0_i32 = arith.constant 0 : i32
    %c0_i32_0 = arith.constant 0 : i32
    %c0_i32_1 = arith.constant 0 : i32
    %c0_i32_2 = arith.constant 0 : i32
    return %c0_i32, %c0_i32_0, %c0_i32_1 : i32, i32, i32
  }
  func.func @transform_16(%arg0: i32) -> (i32, i32, i32) {
    %c0_i32 = arith.constant 0 : i32
    %c0_i32_0 = arith.constant 0 : i32
    %c0_i32_1 = arith.constant 0 : i32
    %c0_i32_2 = arith.constant 0 : i32
    return %c0_i32, %c0_i32_0, %c0_i32_1 : i32, i32, i32
  }
  func.func @transform_17(%arg0: i32) -> (i32, i32, i32) {
    %c0_i32 = arith.constant 0 : i32
    %c0_i32_0 = arith.constant 0 : i32
    %c0_i32_1 = arith.constant 0 : i32
    %c0_i32_2 = arith.constant 0 : i32
    return %c0_i32, %c0_i32_0, %c0_i32_1 : i32, i32, i32
  }
  func.func @transform_18(%arg0: i32) -> (i32, i32) {
    %c0_i32 = arith.constant 0 : i32
    %c0_i32_0 = arith.constant 0 : i32
    %c0_i32_1 = arith.constant 0 : i32
    return %c0_i32, %c0_i32_0 : i32, i32
  }
  func.func @transform_19(%arg0: i32) -> (i32, i32) {
    %c0_i32 = arith.constant 0 : i32
    %c0_i32_0 = arith.constant 0 : i32
    %c0_i32_1 = arith.constant 0 : i32
    return %c0_i32, %c0_i32_0 : i32, i32
  }
  func.func @transform_20(%arg0: i32) -> (i32, i32, i32) {
    %c0_i32 = arith.constant 0 : i32
    %c0_i32_0 = arith.constant 0 : i32
    %c0_i32_1 = arith.constant 0 : i32
    %c0_i32_2 = arith.constant 0 : i32
    return %c0_i32, %c0_i32_0, %c0_i32_1 : i32, i32, i32
  }
  func.func @transform_21(%arg0: i32) -> (i32, i32) {
    %c0_i32 = arith.constant 0 : i32
    %c0_i32_0 = arith.constant 0 : i32
    %c0_i32_1 = arith.constant 0 : i32
    return %c0_i32, %c0_i32_0 : i32, i32
  }
  func.func @transform_22(%arg0: i32) -> (i32, i32, i32) {
    %c0_i32 = arith.constant 0 : i32
    %c0_i32_0 = arith.constant 0 : i32
    %c0_i32_1 = arith.constant 0 : i32
    %c0_i32_2 = arith.constant 0 : i32
    return %c0_i32, %c0_i32_0, %c0_i32_1 : i32, i32, i32
  }
  func.func @transform_23(%arg0: i32) -> (i32, i32, i32) {
    %c0_i32 = arith.constant 0 : i32
    %c0_i32_0 = arith.constant 0 : i32
    %c0_i32_1 = arith.constant 0 : i32
    %c0_i32_2 = arith.constant 0 : i32
    return %c0_i32, %c0_i32_0, %c0_i32_1 : i32, i32, i32
  }
  func.func @transform_24(%arg0: i32) -> (i32, i32) {
    %c0_i32 = arith.constant 0 : i32
    %c0_i32_0 = arith.constant 0 : i32
    %c0_i32_1 = arith.constant 0 : i32
    return %c0_i32, %c0_i32_0 : i32, i32
  }
  func.func @transform_25(%arg0: i32) -> (i32, i32, i32) {
    %c0_i32 = arith.constant 0 : i32
    %c0_i32_0 = arith.constant 0 : i32
    %c0_i32_1 = arith.constant 0 : i32
    %c0_i32_2 = arith.constant 0 : i32
    return %c0_i32, %c0_i32_0, %c0_i32_1 : i32, i32, i32
  }
  func.func @transform_26(%arg0: i32) -> (i32, i32, i32) {
    %c0_i32 = arith.constant 0 : i32
    %c0_i32_0 = arith.constant 0 : i32
    %c0_i32_1 = arith.constant 0 : i32
    %c0_i32_2 = arith.constant 0 : i32
    return %c0_i32, %c0_i32_0, %c0_i32_1 : i32, i32, i32
  }
  func.func @transform_27(%arg0: i32) -> (i32, i32, i32) {
    %c0_i32 = arith.constant 0 : i32
    %c0_i32_0 = arith.constant 0 : i32
    %c0_i32_1 = arith.constant 0 : i32
    %c0_i32_2 = arith.constant 0 : i32
    return %c0_i32, %c0_i32_0, %c0_i32_1 : i32, i32, i32
  }
  func.func @transform_28(%arg0: i32) -> (i32, i32) {
    %c0_i32 = arith.constant 0 : i32
    %c0_i32_0 = arith.constant 0 : i32
    %c0_i32_1 = arith.constant 0 : i32
    return %c0_i32, %c0_i32_0 : i32, i32
  }
  func.func @transform_29(%arg0: i32) -> (i32, i32) {
    %c0_i32 = arith.constant 0 : i32
    %c0_i32_0 = arith.constant 0 : i32
    %c0_i32_1 = arith.constant 0 : i32
    return %c0_i32, %c0_i32_0 : i32, i32
  }
  func.func @transform_30(%arg0: i32) -> (i32, i32) {
    %c0_i32 = arith.constant 0 : i32
    %c0_i32_0 = arith.constant 0 : i32
    %c0_i32_1 = arith.constant 0 : i32
    return %c0_i32, %c0_i32_0 : i32, i32
  }
  func.func @transform_31(%arg0: i32) -> (i32, i32, i32) {
    %c0_i32 = arith.constant 0 : i32
    %c0_i32_0 = arith.constant 0 : i32
    %c0_i32_1 = arith.constant 0 : i32
    %c0_i32_2 = arith.constant 0 : i32
    return %c0_i32, %c0_i32_0, %c0_i32_1 : i32, i32, i32
  }
  func.func @transform_32(%arg0: i32) -> (i32, i32) {
    %c0_i32 = arith.constant 0 : i32
    %c0_i32_0 = arith.constant 0 : i32
    %c0_i32_1 = arith.constant 0 : i32
    return %c0_i32, %c0_i32_0 : i32, i32
  }
  func.func @transform_33(%arg0: i32) -> (i32, i32, i32) {
    %c0_i32 = arith.constant 0 : i32
    %c0_i32_0 = arith.constant 0 : i32
    %c0_i32_1 = arith.constant 0 : i32
    %c0_i32_2 = arith.constant 0 : i32
    return %c0_i32, %c0_i32_0, %c0_i32_1 : i32, i32, i32
  }
  func.func @transform_34(%arg0: i32) -> (i32, i32, i32) {
    %c0_i32 = arith.constant 0 : i32
    %c0_i32_0 = arith.constant 0 : i32
    %c0_i32_1 = arith.constant 0 : i32
    %c0_i32_2 = arith.constant 0 : i32
    return %c0_i32, %c0_i32_0, %c0_i32_1 : i32, i32, i32
  }
  func.func @transform_35(%arg0: i32) -> (i32, i32) {
    %c0_i32 = arith.constant 0 : i32
    %c0_i32_0 = arith.constant 0 : i32
    %c0_i32_1 = arith.constant 0 : i32
    return %c0_i32, %c0_i32_0 : i32, i32
  }
  func.func @transform_36(%arg0: i32) -> (i32, i32, i32) {
    %c0_i32 = arith.constant 0 : i32
    %c0_i32_0 = arith.constant 0 : i32
    %c0_i32_1 = arith.constant 0 : i32
    %c0_i32_2 = arith.constant 0 : i32
    return %c0_i32, %c0_i32_0, %c0_i32_1 : i32, i32, i32
  }
  func.func @transform_37(%arg0: i32) -> (i32, i32, i32) {
    %c0_i32 = arith.constant 0 : i32
    %c0_i32_0 = arith.constant 0 : i32
    %c0_i32_1 = arith.constant 0 : i32
    %c0_i32_2 = arith.constant 0 : i32
    return %c0_i32, %c0_i32_0, %c0_i32_1 : i32, i32, i32
  }
  func.func @transform_38(%arg0: i32) -> (i32, i32, i32) {
    %c0_i32 = arith.constant 0 : i32
    %c0_i32_0 = arith.constant 0 : i32
    %c0_i32_1 = arith.constant 0 : i32
    %c0_i32_2 = arith.constant 0 : i32
    return %c0_i32, %c0_i32_0, %c0_i32_1 : i32, i32, i32
  }
  func.func @transform_39(%arg0: i32) -> (i32, i32) {
    %c0_i32 = arith.constant 0 : i32
    %c0_i32_0 = arith.constant 0 : i32
    %c0_i32_1 = arith.constant 0 : i32
    return %c0_i32, %c0_i32_0 : i32, i32
  }
  func.func @transform_40(%arg0: i32) -> (i32, i32) {
    %c0_i32 = arith.constant 0 : i32
    %c0_i32_0 = arith.constant 0 : i32
    %c0_i32_1 = arith.constant 0 : i32
    return %c0_i32, %c0_i32_0 : i32, i32
  }
  func.func @transform_41(%arg0: i32) -> (i32, i32) {
    %c0_i32 = arith.constant 0 : i32
    %c0_i32_0 = arith.constant 0 : i32
    %c0_i32_1 = arith.constant 0 : i32
    return %c0_i32, %c0_i32_0 : i32, i32
  }
  func.func @transform_42(%arg0: i32) -> (i32, i32, i32) {
    %c0_i32 = arith.constant 0 : i32
    %c0_i32_0 = arith.constant 0 : i32
    %c0_i32_1 = arith.constant 0 : i32
    %c0_i32_2 = arith.constant 0 : i32
    return %c0_i32, %c0_i32_0, %c0_i32_1 : i32, i32, i32
  }
  func.func @transform_43(%arg0: i32) -> (i32, i32) {
    %c0_i32 = arith.constant 0 : i32
    %c0_i32_0 = arith.constant 0 : i32
    %c0_i32_1 = arith.constant 0 : i32
    return %c0_i32, %c0_i32_0 : i32, i32
  }
  func.func @transform_44(%arg0: i32) -> (i32, i32, i32) {
    %c0_i32 = arith.constant 0 : i32
    %c0_i32_0 = arith.constant 0 : i32
    %c0_i32_1 = arith.constant 0 : i32
    %c0_i32_2 = arith.constant 0 : i32
    return %c0_i32, %c0_i32_0, %c0_i32_1 : i32, i32, i32
  }
  func.func @transform_45(%arg0: i32) -> (i32, i32, i32) {
    %c0_i32 = arith.constant 0 : i32
    %c0_i32_0 = arith.constant 0 : i32
    %c0_i32_1 = arith.constant 0 : i32
    return %arg0, %c0_i32, %c0_i32_0 : i32, i32, i32
  }
}

</mosaic_0001>

<llo_original>
// kernel: _lambda_.1
$region0: #{_lambda_.1}
  #allocation0 [shape = 'u32[]', space=smem, size = 0x4, offset = 0x4, fixed_abs, tag = 'smem constant byte address 0x4 - core index']
  #allocation1 [shape = 'u32[144,128]{1,0:T(1,128)}', space=vmem, size = 0x12000, scoped, tag = 'internal scratch']
  %s0 = inlined_call_operand.smem [shape: u32[46], index: -1, kind: input, shape index: {}]
  %s1 = sld [smem:[%s0]]
  %s2 = scalar_lea.smem %s0, 1
  %s3 = sld [smem:[%s2]]
  %s4 = scalar_lea.smem %s0, 2
  %s5 = sld [smem:[%s4]]
  %s6 = scalar_lea.smem %s0, 3
  %s7 = sld [smem:[%s6]]
  %s8 = scalar_lea.smem %s0, 4
  %s9 = sld [smem:[%s8]]
  %s10 = scalar_lea.smem %s0, 5
  %s11 = sld [smem:[%s10]]
  %s12 = scalar_lea.smem %s0, 6
  %s13 = sld [smem:[%s12]]
  %s14 = scalar_lea.smem %s0, 7
  %s15 = sld [smem:[%s14]]
  %s16 = scalar_lea.smem %s0, 8
  %s17 = sld [smem:[%s16]]
  %s18 = scalar_lea.smem %s0, 9
  %s19 = sld [smem:[%s18]]
  %s20 = scalar_lea.smem %s0, 10
  %s21 = sld [smem:[%s20]]
  %s22 = scalar_lea.smem %s0, 11
  %s23 = sld [smem:[%s22]]
  %s24 = scalar_lea.smem %s0, 12
  %s25 = sld [smem:[%s24]]
  %s26 = scalar_lea.smem %s0, 13
  %s27 = sld [smem:[%s26]]
  %s28 = scalar_lea.smem %s0, 14
  %s29 = sld [smem:[%s28]]
  %s30 = scalar_lea.smem %s0, 15
  %s31 = sld [smem:[%s30]]
  %s32 = scalar_lea.smem %s0, 16
  %s33 = sld [smem:[%s32]]
  %s34 = scalar_lea.smem %s0, 17
  %s35 = sld [smem:[%s34]]
  %s36 = scalar_lea.smem %s0, 18
  %s37 = sld [smem:[%s36]]
  %s38 = scalar_lea.smem %s0, 19
  %s39 = sld [smem:[%s38]]
  %s40 = scalar_lea.smem %s0, 20
  %s41 = sld [smem:[%s40]]
  %s42 = scalar_lea.smem %s0, 21
  %s43 = sld [smem:[%s42]]
  %s44 = scalar_lea.smem %s0, 22
  %s45 = sld [smem:[%s44]]
  %s46 = scalar_lea.smem %s0, 23
  %s47 = sld [smem:[%s46]]
  %s48 = scalar_lea.smem %s0, 24
  %s49 = sld [smem:[%s48]]
  %s50 = scalar_lea.smem %s0, 25
  %s51 = sld [smem:[%s50]]
  %s52 = scalar_lea.smem %s0, 26
  %s53 = sld [smem:[%s52]]
  %s54 = scalar_lea.smem %s0, 27
  %s55 = sld [smem:[%s54]]
  %s56 = scalar_lea.smem %s0, 28
  %s57 = sld [smem:[%s56]]
  %s58 = scalar_lea.smem %s0, 29
  %s59 = sld [smem:[%s58]]
  %s60 = scalar_lea.smem %s0, 30
  %s61 = sld [smem:[%s60]]
  %s62 = scalar_lea.smem %s0, 31
  %s63 = sld [smem:[%s62]]
  %s64 = scalar_lea.smem %s0, 32
  %s65 = sld [smem:[%s64]]
  %s66 = scalar_lea.smem %s0, 33
  %s67 = sld [smem:[%s66]]
  %s68 = scalar_lea.smem %s0, 34
  %s69 = sld [smem:[%s68]]
  %s70 = scalar_lea.smem %s0, 35
  %s71 = sld [smem:[%s70]]
  %s72 = scalar_lea.smem %s0, 36
  %s73 = sld [smem:[%s72]]
  %s74 = scalar_lea.smem %s0, 37
  %s75 = sld [smem:[%s74]]
  %s76 = scalar_lea.smem %s0, 38
  %s77 = sld [smem:[%s76]]
  %s78 = scalar_lea.smem %s0, 39
  %s79 = sld [smem:[%s78]]
  %s80 = scalar_lea.smem %s0, 40
  %s81 = sld [smem:[%s80]]
  %s82 = scalar_lea.smem %s0, 41
  %s83 = sld [smem:[%s82]]
  %s84 = scalar_lea.smem %s0, 42
  %s85 = sld [smem:[%s84]]
  %s86 = scalar_lea.smem %s0, 43
  %s87 = sld [smem:[%s86]]
  %s88 = scalar_lea.smem %s0, 44
  %s89 = sld [smem:[%s88]]
  %s90 = scalar_lea.smem %s0, 45
  %s91 = sld [smem:[%s90]]
  %s92 = sld [smem:[#allocation0]]
  $region373: #{_lambda_.1} parent=0
    _
  %s94 = ssub.s32 1, %s92
  %s95 = scalar_select 0, %s94, %s92
  $region1: #{_lambda_.1} parent=0
    #allocation2 [shape = 'u8[49152]{0}', space=vmem, size = 0xc000, scoped, tag = 'input window, operand 1, single buffered']
    #allocation3 [shape = 's32[2]{0}', space=sflag, size = 0x8, scoped, tag = 'scoped memory for _lambda_.1']
    #allocation4 [shape = 'u8[512]{0}', space=vmem, size = 0x400, scoped, tag = 'input window, operand 2, single buffered']
    #allocation5 [shape = 's32[1]{0}', space=sflag, size = 0x4, scoped, tag = 'scoped memory for _lambda_.1']
    #allocation6 [shape = 'u8[16384]{0}', space=vmem, size = 0x4000, scoped, tag = 'input window, operand 3, single buffered']
    #allocation7 [shape = 'u8[98304]{0}', space=vmem, size = 0x18000, scoped, tag = 'input window, operand 4, single buffered']
    #allocation8 [shape = 's32[1]{0}', space=sflag, size = 0x4, scoped, tag = 'scoped memory for _lambda_.1']
    #allocation9 [shape = 'u8[512]{0}', space=vmem, size = 0x400, scoped, tag = 'input window, operand 5, single buffered']
    #allocation10 [shape = 'u8[24576]{0}', space=vmem, size = 0x6000, scoped, tag = 'input window, operand 6, single buffered']
    #allocation11 [shape = 's32[1]{0}', space=sflag, size = 0x4, scoped, tag = 'scoped memory for _lambda_.1']
    #allocation12 [shape = 'u8[8192]{0}', space=vmem, size = 0x2000, scoped, tag = 'input window, operand 8, single buffered']
    #allocation13 [shape = 'u8[49152]{0}', space=vmem, size = 0xc000, scoped, tag = 'input window, operand 9, single buffered']
    #allocation14 [shape = 's32[1]{0}', space=sflag, size = 0x4, scoped, tag = 'scoped memory for _lambda_.1']
    #allocation15 [shape = 'u8[512]{0}', space=vmem, size = 0x400, scoped, tag = 'input window, operand 10, single buffered']
    #allocation16 [shape = 'u8[16384]{0}', space=vmem, size = 0x4000, scoped, tag = 'input window, operand 11, single buffered']
    #allocation17 [shape = 's32[1]{0}', space=sflag, size = 0x4, scoped, tag = 'scoped memory for _lambda_.1']
    #allocation18 [shape = 'u8[98304]{0}', space=vmem, size = 0x18000, scoped, tag = 'input window, operand 12, single buffered']
    #allocation19 [shape = 'u8[512]{0}', space=vmem, size = 0x400, scoped, tag = 'input window, operand 13, single buffered']
    #allocation20 [shape = 's32[1]{0}', space=sflag, size = 0x4, scoped, tag = 'scoped memory for _lambda_.1']
    #allocation21 [shape = 'u8[12288]{0}', space=vmem, size = 0x3000, scoped, tag = 'input window, operand 14, single buffered']
    #allocation22 [shape = 'u8[4096]{0}', space=vmem, size = 0x1000, scoped, tag = 'input window, operand 16, single buffered']
    #allocation23 [shape = 's32[1]{0}', space=sflag, size = 0x4, scoped, tag = 'scoped memory for _lambda_.1']
    #allocation24 [shape = 'u8[49152]{0}', space=vmem, size = 0xc000, scoped, tag = 'input window, operand 17, single buffered']
    #allocation25 [shape = 'u8[512]{0}', space=vmem, size = 0x400, scoped, tag = 'input window, operand 18, single buffered']
    #allocation26 [shape = 's32[1]{0}', space=sflag, size = 0x4, scoped, tag = 'scoped memory for _lambda_.1']
    #allocation27 [shape = 'u8[16384]{0}', space=vmem, size = 0x4000, scoped, tag = 'input window, operand 19, single buffered']
    #allocation28 [shape = 'u8[98304]{0}', space=vmem, size = 0x18000, scoped, tag = 'input window, operand 20, single buffered']
    #allocation29 [shape = 's32[1]{0}', space=sflag, size = 0x4, scoped, tag = 'scoped memory for _lambda_.1']
    #allocation30 [shape = 'u8[512]{0}', space=vmem, size = 0x400, scoped, tag = 'input window, operand 21, single buffered']
    #allocation31 [shape = 'u8[6144]{0}', space=vmem, size = 0x1800, scoped, tag = 'input window, operand 22, single buffered']
    #allocation32 [shape = 's32[1]{0}', space=sflag, size = 0x4, scoped, tag = 'scoped memory for _lambda_.1']
    #allocation33 [shape = 'u8[65536]{0}', space=vmem, size = 0x10000, scoped, tag = 'input window, operand 23, single buffered']
    #allocation34 [shape = 'u8[512]{0}', space=vmem, size = 0x400, scoped, tag = 'input window, operand 24, single buffered']
    #allocation35 [shape = 's32[1]{0}', space=sflag, size = 0x4, scoped, tag = 'scoped memory for _lambda_.1']
    #allocation36 [shape = 'u8[8192]{0}', space=vmem, size = 0x2000, scoped, tag = 'input window, operand 25, single buffered']
    #allocation37 [shape = 'u8[98304]{0}', space=vmem, size = 0x18000, scoped, tag = 'input window, operand 26, single buffered']
    #allocation38 [shape = 's32[1]{0}', space=sflag, size = 0x4, scoped, tag = 'scoped memory for _lambda_.1']
    #allocation39 [shape = 'u8[98304]{0}', space=vmem, size = 0x18000, scoped, tag = 'input window, operand 27, single buffered']
    #allocation40 [shape = 'u8[512]{0}', space=vmem, size = 0x400, scoped, tag = 'input window, operand 28, single buffered']
    #allocation41 [shape = 's32[1]{0}', space=sflag, size = 0x4, scoped, tag = 'scoped memory for _lambda_.1']
    #allocation42 [shape = 'u8[32768]{0}', space=vmem, size = 0x8000, scoped, tag = 'input window, operand 29, single buffered']
    #allocation43 [shape = 'u8[32768]{0}', space=vmem, size = 0x8000, scoped, tag = 'input window, operand 30, single buffered']
    #allocation44 [shape = 's32[1]{0}', space=sflag, size = 0x4, scoped, tag = 'scoped memory for _lambda_.1']
    #allocation45 [shape = 'u8[98304]{0}', space=vmem, size = 0x18000, scoped, tag = 'input window, operand 31, single buffered']
    #allocation46 [shape = 'u8[512]{0}', space=vmem, size = 0x400, scoped, tag = 'input window, operand 32, single buffered']
    #allocation47 [shape = 's32[1]{0}', space=sflag, size = 0x4, scoped, tag = 'scoped memory for _lambda_.1']
    #allocation48 [shape = 'u8[12288]{0}', space=vmem, size = 0x3000, scoped, tag = 'input window, operand 33, single buffered']
    #allocation49 [shape = 'u8[65536]{0}', space=vmem, size = 0x10000, scoped, tag = 'input window, operand 34, single buffered']
    #allocation50 [shape = 's32[1]{0}', space=sflag, size = 0x4, scoped, tag = 'scoped memory for _lambda_.1']
    #allocation51 [shape = 'u8[512]{0}', space=vmem, size = 0x400, scoped, tag = 'input window, operand 35, single buffered']
    #allocation52 [shape = 'u8[16384]{0}', space=vmem, size = 0x4000, scoped, tag = 'input window, operand 36, single buffered']
    #allocation53 [shape = 's32[1]{0}', space=sflag, size = 0x4, scoped, tag = 'scoped memory for _lambda_.1']
    #allocation54 [shape = 'u8[98304]{0}', space=vmem, size = 0x18000, scoped, tag = 'input window, operand 37, single buffered']
    #allocation55 [shape = 'u8[98304]{0}', space=vmem, size = 0x18000, scoped, tag = 'input window, operand 38, single buffered']
    #allocation56 [shape = 's32[1]{0}', space=sflag, size = 0x4, scoped, tag = 'scoped memory for _lambda_.1']
    #allocation57 [shape = 'u8[512]{0}', space=vmem, size = 0x400, scoped, tag = 'input window, operand 39, single buffered']
    #allocation58 [shape = 'u8[32768]{0}', space=vmem, size = 0x8000, scoped, tag = 'input window, operand 40, single buffered']
    #allocation59 [shape = 's32[1]{0}', space=sflag, size = 0x4, scoped, tag = 'scoped memory for _lambda_.1']
    #allocation60 [shape = 'u8[98304]{0}', space=vmem, size = 0x18000, scoped, tag = 'input window, operand 42, single buffered']
    #allocation61 [shape = 'u8[24576]{0}', space=vmem, size = 0x6000, scoped, tag = 'input window, operand 44, single buffered']
    #allocation62 [shape = 's32[1]{0}', space=sflag, size = 0x4, scoped, tag = 'scoped memory for _lambda_.1']
    %96 = vsyncpa [#allocation3], 0
    %97 = vsyncpa [#allocation5], 0
    %98 = vsyncpa [#allocation8], 0
    %99 = vsyncpa [#allocation11], 0
    %100 = vsyncpa [#allocation14], 0
    %101 = vsyncpa [#allocation17], 0
    %102 = vsyncpa [#allocation20], 0
    %103 = vsyncpa [#allocation23], 0
    %104 = vsyncpa [#allocation26], 0
    %105 = vsyncpa [#allocation29], 0
    %106 = vsyncpa [#allocation32], 0
    %107 = vsyncpa [#allocation35], 0
    %108 = vsyncpa [#allocation38], 0
    %109 = vsyncpa [#allocation41], 0
    %110 = vsyncpa [#allocation44], 0
    %111 = vsyncpa [#allocation47], 0
    %112 = vsyncpa [#allocation50], 0
    %113 = vsyncpa [#allocation53], 0
    %114 = vsyncpa [#allocation56], 0
    %115 = vsyncpa [#allocation59], 0
    %116 = vsyncpa [#allocation62], 0
    loop: start=0, step=1, limit=4
    $region2: #{_lambda_.1} parent=1 // loop_pre_header
      _
    $region3: #{_lambda_.1} parent=1 // loop_header
      %s118 = sphi 0, %s122
      %p119 = scmp.ge.s32.totalorder %s118, 4
      %s128 = sphi 0, %s130
      %s131 = sphi 0, %s128
      %s132 = sphi 0, %s131
      %s148 = sphi 0, %s132
      %s152 = sphi 0, %s152
      %s154 = sphi 0, %s152
      %s155 = sphi 0, %s154
      %s169 = sphi 0, %s155
      %s173 = sphi 0, %s173
      %s175 = sphi 0, %s173
      %s176 = sphi 0, %s175
      %s190 = sphi 0, %s176
      %s194 = sphi 0, %s194
      %s196 = sphi 0, %s194
      %s197 = sphi 0, %s196
      %s211 = sphi 0, %s197
      %s215 = sphi 0, %s215
      %s217 = sphi 0, %s215
      %s218 = sphi 0, %s217
      %s232 = sphi 0, %s218
      %s236 = sphi 0, %s236
      %s238 = sphi 0, %s236
      %s239 = sphi 0, %s238
      %s253 = sphi 0, %s239
      %s257 = sphi 0, %s257
      %s259 = sphi 0, %s257
      %s260 = sphi 0, %s259
      %s274 = sphi 0, %s260
      %s278 = sphi 0, %s278
      %s280 = sphi 0, %s278
      %s281 = sphi 0, %s280
      %s295 = sphi 0, %s281
      %s299 = sphi 0, %s299
      %s301 = sphi 0, %s299
      %s302 = sphi 0, %s301
      %s316 = sphi 0, %s302
      %s320 = sphi 0, %s320
      %s322 = sphi 0, %s320
      %s323 = sphi 0, %s322
      %s337 = sphi 0, %s323
      %s341 = sphi 0, %s341
      %s343 = sphi 0, %s341
      %s344 = sphi 0, %s343
      %s358 = sphi 0, %s344
      %s362 = sphi 0, %s362
      %s364 = sphi 0, %s362
      %s365 = sphi 0, %s364
      %s379 = sphi 0, %s365
      %s383 = sphi 0, %s383
      %s385 = sphi 0, %s383
      %s386 = sphi 0, %s385
      %s400 = sphi 0, %s386
      %s404 = sphi 0, %s404
      %s406 = sphi 0, %s404
      %s407 = sphi 0, %s406
      %s421 = sphi 0, %s407
      %s425 = sphi 0, %s425
      %s427 = sphi 0, %s425
      %s428 = sphi 0, %s427
      %s442 = sphi 0, %s428
      %s446 = sphi 0, %s446
      %s448 = sphi 0, %s446
      %s449 = sphi 0, %s448
      %s463 = sphi 0, %s449
      %s467 = sphi 0, %s467
      %s469 = sphi 0, %s467
      %s470 = sphi 0, %s469
      %s484 = sphi 0, %s470
      %s488 = sphi 0, %s488
      %s490 = sphi 0, %s488
      %s491 = sphi 0, %s490
      %s505 = sphi 0, %s491
      %s509 = sphi 0, %s509
      %s511 = sphi 0, %s509
      %s512 = sphi 0, %s511
      %s526 = sphi 0, %s512
      %s530 = sphi 0, %s530
      %s532 = sphi 0, %s530
      %s533 = sphi 0, %s532
      %s547 = sphi 0, %s533
      %s551 = sphi 0, %s551
      %s553 = sphi 0, %s551
      %s554 = sphi 0, %s553
      %s568 = sphi 0, %s554
      %s572 = sphi 0, %s572
      %s574 = sphi 0, %s572
      %s575 = sphi 0, %s574
      %s589 = sphi 0, %s575
      %s593 = sphi 0, %s593
      %s595 = sphi 0, %s593
      %s596 = sphi 0, %s595
      %s610 = sphi 0, %s596
      %s614 = sphi 0, %s614
      %s616 = sphi 0, %s614
      %s617 = sphi 0, %s616
      %s631 = sphi 0, %s617
      %s635 = sphi 0, %s635
      %s637 = sphi 0, %s635
      %s638 = sphi 0, %s637
      %s652 = sphi 0, %s638
      %s656 = sphi 0, %s656
      %s658 = sphi 0, %s656
      %s659 = sphi 0, %s658
      %s673 = sphi 0, %s659
      %s677 = sphi 0, %s677
      %s679 = sphi 0, %s677
      %s680 = sphi 0, %s679
      %s694 = sphi 0, %s680
      %s698 = sphi 0, %s698
      %s700 = sphi 0, %s698
      %s701 = sphi 0, %s700
      %s715 = sphi 0, %s701
      %s719 = sphi 0, %s719
      %s721 = sphi 0, %s719
      %s722 = sphi 0, %s721
      %s736 = sphi 0, %s722
      %s740 = sphi 0, %s740
      %s742 = sphi 0, %s740
      %s743 = sphi 0, %s742
      %s757 = sphi 0, %s743
      %s761 = sphi 0, %s761
      %s763 = sphi 0, %s761
      %s764 = sphi 0, %s763
      %s778 = sphi 0, %s764
      %s782 = sphi 0, %s782
      %s784 = sphi 0, %s782
      %s785 = sphi 0, %s784
      %s799 = sphi 0, %s785
      %s803 = sphi 0, %s803
      %s805 = sphi 0, %s803
      %s806 = sphi 0, %s805
      %s820 = sphi 0, %s806
      %s824 = sphi 0, %s824
      %s826 = sphi 0, %s824
      %s827 = sphi 0, %s826
      %s841 = sphi 0, %s827
      %s845 = sphi 0, %s845
      %s847 = sphi 0, %s845
      %s848 = sphi 0, %s847
      %s862 = sphi 0, %s848
      %s866 = sphi 0, %s866
      %s868 = sphi 0, %s866
      %s869 = sphi 0, %s868
      %s883 = sphi 0, %s869
      %s887 = sphi 0, %s887
      %s889 = sphi 0, %s887
      %s890 = sphi 0, %s889
      %s904 = sphi 0, %s890
      %s908 = sphi 0, %s908
      %s910 = sphi 0, %s908
      %s911 = sphi 0, %s910
      %s925 = sphi 0, %s911
      %s929 = sphi 0, %s929
      %s931 = sphi 0, %s929
      %s932 = sphi 0, %s931
      %s946 = sphi 0, %s932
      %s950 = sphi 0, %s950
      %s952 = sphi 0, %s950
      %s953 = sphi 0, %s952
      %s967 = sphi 0, %s953
      %s971 = sphi 0, %s971
      %s973 = sphi 0, %s971
      %s974 = sphi 0, %s973
      %s988 = sphi 0, %s974
      %s992 = sphi 0, %s992
      %s994 = sphi 0, %s992
      %s995 = sphi 0, %s994
      %s1009 = sphi 0, %s995
      %s1013 = sphi 0, %s1013
      %s1015 = sphi 0, %s1013
      %s1016 = sphi 0, %s1015
      %s1030 = sphi 0, %s1016
      %s1034 = sphi 0, %s1034
      %s1036 = sphi 0, %s1034
      %s1037 = sphi 0, %s1036
      %s1051 = sphi 0, %s1037
      %s1055 = sphi 0, %s1055
      %s1057 = sphi 0, %s1055
      %s1058 = sphi 0, %s1057
      %s1072 = sphi 0, %s1058
      %s1078 = sphi 0, %s1080
      %s1081 = sphi 0, %s1078
      %s1082 = sphi 0, %s1081
      %s1098 = sphi 0, %s1082
    $region4: #{_lambda_.1} parent=1 // loop_header_branch
      %121 = sbr.rel (%p119) target = $region8
    $region5: #{_lambda_.1} parent=1 // loop_body
      %s123 = ssub.s32 %s118, 1
      %s124 = ssub.s32 %s118, 2
      %s125 = sadd.s32 %s118, 1
      %s126 = ssub.s32 %s118, %s125
      %p127 = scmp.eq.s32.totalorder %s126, 0
      %s129 = sadd.s32 %s128, 1
      %s130 = scalar_select %p127, %s128, %s129
      %p133 = pneg %p127
      %p134 = scmp.eq.s32.totalorder %s118, 1
      %p135 = por %p133, %p134
      %p136 = scmp.ne.s32.totalorder %s128, %s131
      %p137 = scmp.eq.s32.totalorder %s118, 0
      %p138 = por %p136, %p137
      %p139 = scmp.ne.s32.totalorder %s128, %s131
      %p140 = scmp.eq.s32.totalorder %s123, 1
      %p141 = por %p139, %p140
      %p142 = scmp.ne.s32.totalorder %s131, %s132
      %p143 = scmp.eq.s32.totalorder %s123, 0
      %p144 = por %p142, %p143
      %p145 = scmp.ne.s32.totalorder %s131, %s132
      %p146 = scmp.eq.s32.totalorder %s124, 1
      %p147 = por %p145, %p146
      %p149 = scmp.ne.s32.totalorder %s132, %s148
      %p150 = scmp.eq.s32.totalorder %s124, 0
      %p151 = por %p149, %p150
      %s153 = sadd.s32 %s152, 1
      %p156 = scmp.eq.s32.totalorder %s118, 1
      %p157 = scmp.ne.s32.totalorder %s152, %s154
      %p158 = scmp.eq.s32.totalorder %s118, 0
      %p159 = por %p157, %p158
      %p160 = scmp.ne.s32.totalorder %s152, %s154
      %p161 = scmp.eq.s32.totalorder %s123, 1
      %p162 = por %p160, %p161
      %p163 = scmp.ne.s32.totalorder %s154, %s155
      %p164 = scmp.eq.s32.totalorder %s123, 0
      %p165 = por %p163, %p164
      %p166 = scmp.ne.s32.totalorder %s154, %s155
      %p167 = scmp.eq.s32.totalorder %s124, 1
      %p168 = por %p166, %p167
      %p170 = scmp.ne.s32.totalorder %s155, %s169
      %p171 = scmp.eq.s32.totalorder %s124, 0
      %p172 = por %p170, %p171
      %s174 = sadd.s32 %s173, 1
      %p177 = scmp.eq.s32.totalorder %s118, 1
      %p178 = scmp.ne.s32.totalorder %s173, %s175
      %p179 = scmp.eq.s32.totalorder %s118, 0
      %p180 = por %p178, %p179
      %p181 = scmp.ne.s32.totalorder %s173, %s175
      %p182 = scmp.eq.s32.totalorder %s123, 1
      %p183 = por %p181, %p182
      %p184 = scmp.ne.s32.totalorder %s175, %s176
      %p185 = scmp.eq.s32.totalorder %s123, 0
      %p186 = por %p184, %p185
      %p187 = scmp.ne.s32.totalorder %s175, %s176
      %p188 = scmp.eq.s32.totalorder %s124, 1
      %p189 = por %p187, %p188
      %p191 = scmp.ne.s32.totalorder %s176, %s190
      %p192 = scmp.eq.s32.totalorder %s124, 0
      %p193 = por %p191, %p192
      %s195 = sadd.s32 %s194, 1
      %p198 = scmp.eq.s32.totalorder %s118, 1
      %p199 = scmp.ne.s32.totalorder %s194, %s196
      %p200 = scmp.eq.s32.totalorder %s118, 0
      %p201 = por %p199, %p200
      %p202 = scmp.ne.s32.totalorder %s194, %s196
      %p203 = scmp.eq.s32.totalorder %s123, 1
      %p204 = por %p202, %p203
      %p205 = scmp.ne.s32.totalorder %s196, %s197
      %p206 = scmp.eq.s32.totalorder %s123, 0
      %p207 = por %p205, %p206
      %p208 = scmp.ne.s32.totalorder %s196, %s197
      %p209 = scmp.eq.s32.totalorder %s124, 1
      %p210 = por %p208, %p209
      %p212 = scmp.ne.s32.totalorder %s197, %s211
      %p213 = scmp.eq.s32.totalorder %s124, 0
      %p214 = por %p212, %p213
      %s216 = sadd.s32 %s215, 1
      %p219 = scmp.eq.s32.totalorder %s118, 1
      %p220 = scmp.ne.s32.totalorder %s215, %s217
      %p221 = scmp.eq.s32.totalorder %s118, 0
      %p222 = por %p220, %p221
      %p223 = scmp.ne.s32.totalorder %s215, %s217
      %p224 = scmp.eq.s32.totalorder %s123, 1
      %p225 = por %p223, %p224
      %p226 = scmp.ne.s32.totalorder %s217, %s218
      %p227 = scmp.eq.s32.totalorder %s123, 0
      %p228 = por %p226, %p227
      %p229 = scmp.ne.s32.totalorder %s217, %s218
      %p230 = scmp.eq.s32.totalorder %s124, 1
      %p231 = por %p229, %p230
      %p233 = scmp.ne.s32.totalorder %s218, %s232
      %p234 = scmp.eq.s32.totalorder %s124, 0
      %p235 = por %p233, %p234
      %s237 = sadd.s32 %s236, 1
      %p240 = scmp.eq.s32.totalorder %s118, 1
      %p241 = scmp.ne.s32.totalorder %s236, %s238
      %p242 = scmp.eq.s32.totalorder %s118, 0
      %p243 = por %p241, %p242
      %p244 = scmp.ne.s32.totalorder %s236, %s238
      %p245 = scmp.eq.s32.totalorder %s123, 1
      %p246 = por %p244, %p245
      %p247 = scmp.ne.s32.totalorder %s238, %s239
      %p248 = scmp.eq.s32.totalorder %s123, 0
      %p249 = por %p247, %p248
      %p250 = scmp.ne.s32.totalorder %s238, %s239
      %p251 = scmp.eq.s32.totalorder %s124, 1
      %p252 = por %p250, %p251
      %p254 = scmp.ne.s32.totalorder %s239, %s253
      %p255 = scmp.eq.s32.totalorder %s124, 0
      %p256 = por %p254, %p255
      %s258 = sadd.s32 %s257, 1
      %p261 = scmp.eq.s32.totalorder %s118, 1
      %p262 = scmp.ne.s32.totalorder %s257, %s259
      %p263 = scmp.eq.s32.totalorder %s118, 0
      %p264 = por %p262, %p263
      %p265 = scmp.ne.s32.totalorder %s257, %s259
      %p266 = scmp.eq.s32.totalorder %s123, 1
      %p267 = por %p265, %p266
      %p268 = scmp.ne.s32.totalorder %s259, %s260
      %p269 = scmp.eq.s32.totalorder %s123, 0
      %p270 = por %p268, %p269
      %p271 = scmp.ne.s32.totalorder %s259, %s260
      %p272 = scmp.eq.s32.totalorder %s124, 1
      %p273 = por %p271, %p272
      %p275 = scmp.ne.s32.totalorder %s260, %s274
      %p276 = scmp.eq.s32.totalorder %s124, 0
      %p277 = por %p275, %p276
      %s279 = sadd.s32 %s278, 1
      %p282 = scmp.eq.s32.totalorder %s118, 1
      %p283 = scmp.ne.s32.totalorder %s278, %s280
      %p284 = scmp.eq.s32.totalorder %s118, 0
      %p285 = por %p283, %p284
      %p286 = scmp.ne.s32.totalorder %s278, %s280
      %p287 = scmp.eq.s32.totalorder %s123, 1
      %p288 = por %p286, %p287
      %p289 = scmp.ne.s32.totalorder %s280, %s281
      %p290 = scmp.eq.s32.totalorder %s123, 0
      %p291 = por %p289, %p290
      %p292 = scmp.ne.s32.totalorder %s280, %s281
      %p293 = scmp.eq.s32.totalorder %s124, 1
      %p294 = por %p292, %p293
      %p296 = scmp.ne.s32.totalorder %s281, %s295
      %p297 = scmp.eq.s32.totalorder %s124, 0
      %p298 = por %p296, %p297
      %s300 = sadd.s32 %s299, 1
      %p303 = scmp.eq.s32.totalorder %s118, 1
      %p304 = scmp.ne.s32.totalorder %s299, %s301
      %p305 = scmp.eq.s32.totalorder %s118, 0
      %p306 = por %p304, %p305
      %p307 = scmp.ne.s32.totalorder %s299, %s301
      %p308 = scmp.eq.s32.totalorder %s123, 1
      %p309 = por %p307, %p308
      %p310 = scmp.ne.s32.totalorder %s301, %s302
      %p311 = scmp.eq.s32.totalorder %s123, 0
      %p312 = por %p310, %p311
      %p313 = scmp.ne.s32.totalorder %s301, %s302
      %p314 = scmp.eq.s32.totalorder %s124, 1
      %p315 = por %p313, %p314
      %p317 = scmp.ne.s32.totalorder %s302, %s316
      %p318 = scmp.eq.s32.totalorder %s124, 0
      %p319 = por %p317, %p318
      %s321 = sadd.s32 %s320, 1
      %p324 = scmp.eq.s32.totalorder %s118, 1
      %p325 = scmp.ne.s32.totalorder %s320, %s322
      %p326 = scmp.eq.s32.totalorder %s118, 0
      %p327 = por %p325, %p326
      %p328 = scmp.ne.s32.totalorder %s320, %s322
      %p329 = scmp.eq.s32.totalorder %s123, 1
      %p330 = por %p328, %p329
      %p331 = scmp.ne.s32.totalorder %s322, %s323
      %p332 = scmp.eq.s32.totalorder %s123, 0
      %p333 = por %p331, %p332
      %p334 = scmp.ne.s32.totalorder %s322, %s323
      %p335 = scmp.eq.s32.totalorder %s124, 1
      %p336 = por %p334, %p335
      %p338 = scmp.ne.s32.totalorder %s323, %s337
      %p339 = scmp.eq.s32.totalorder %s124, 0
      %p340 = por %p338, %p339
      %s342 = sadd.s32 %s341, 1
      %p345 = scmp.eq.s32.totalorder %s118, 1
      %p346 = scmp.ne.s32.totalorder %s341, %s343
      %p347 = scmp.eq.s32.totalorder %s118, 0
      %p348 = por %p346, %p347
      %p349 = scmp.ne.s32.totalorder %s341, %s343
      %p350 = scmp.eq.s32.totalorder %s123, 1
      %p351 = por %p349, %p350
      %p352 = scmp.ne.s32.totalorder %s343, %s344
      %p353 = scmp.eq.s32.totalorder %s123, 0
      %p354 = por %p352, %p353
      %p355 = scmp.ne.s32.totalorder %s343, %s344
      %p356 = scmp.eq.s32.totalorder %s124, 1
      %p357 = por %p355, %p356
      %p359 = scmp.ne.s32.totalorder %s344, %s358
      %p360 = scmp.eq.s32.totalorder %s124, 0
      %p361 = por %p359, %p360
      %s363 = sadd.s32 %s362, 1
      %p366 = scmp.eq.s32.totalorder %s118, 1
      %p367 = scmp.ne.s32.totalorder %s362, %s364
      %p368 = scmp.eq.s32.totalorder %s118, 0
      %p369 = por %p367, %p368
      %p370 = scmp.ne.s32.totalorder %s362, %s364
      %p371 = scmp.eq.s32.totalorder %s123, 1
      %p372 = por %p370, %p371
      %p373 = scmp.ne.s32.totalorder %s364, %s365
      %p374 = scmp.eq.s32.totalorder %s123, 0
      %p375 = por %p373, %p374
      %p376 = scmp.ne.s32.totalorder %s364, %s365
      %p377 = scmp.eq.s32.totalorder %s124, 1
      %p378 = por %p376, %p377
      %p380 = scmp.ne.s32.totalorder %s365, %s379
      %p381 = scmp.eq.s32.totalorder %s124, 0
      %p382 = por %p380, %p381
      %s384 = sadd.s32 %s383, 1
      %p387 = scmp.eq.s32.totalorder %s118, 1
      %p388 = scmp.ne.s32.totalorder %s383, %s385
      %p389 = scmp.eq.s32.totalorder %s118, 0
      %p390 = por %p388, %p389
      %p391 = scmp.ne.s32.totalorder %s383, %s385
      %p392 = scmp.eq.s32.totalorder %s123, 1
      %p393 = por %p391, %p392
      %p394 = scmp.ne.s32.totalorder %s385, %s386
      %p395 = scmp.eq.s32.totalorder %s123, 0
      %p396 = por %p394, %p395
      %p397 = scmp.ne.s32.totalorder %s385, %s386
      %p398 = scmp.eq.s32.totalorder %s124, 1
      %p399 = por %p397, %p398
      %p401 = scmp.ne.s32.totalorder %s386, %s400
      %p402 = scmp.eq.s32.totalorder %s124, 0
      %p403 = por %p401, %p402
      %s405 = sadd.s32 %s404, 1
      %p408 = scmp.eq.s32.totalorder %s118, 1
      %p409 = scmp.ne.s32.totalorder %s404, %s406
      %p410 = scmp.eq.s32.totalorder %s118, 0
      %p411 = por %p409, %p410
      %p412 = scmp.ne.s32.totalorder %s404, %s406
      %p413 = scmp.eq.s32.totalorder %s123, 1
      %p414 = por %p412, %p413
      %p415 = scmp.ne.s32.totalorder %s406, %s407
      %p416 = scmp.eq.s32.totalorder %s123, 0
      %p417 = por %p415, %p416
      %p418 = scmp.ne.s32.totalorder %s406, %s407
      %p419 = scmp.eq.s32.totalorder %s124, 1
      %p420 = por %p418, %p419
      %p422 = scmp.ne.s32.totalorder %s407, %s421
      %p423 = scmp.eq.s32.totalorder %s124, 0
      %p424 = por %p422, %p423
      %s426 = sadd.s32 %s425, 1
      %p429 = scmp.eq.s32.totalorder %s118, 1
      %p430 = scmp.ne.s32.totalorder %s425, %s427
      %p431 = scmp.eq.s32.totalorder %s118, 0
      %p432 = por %p430, %p431
      %p433 = scmp.ne.s32.totalorder %s425, %s427
      %p434 = scmp.eq.s32.totalorder %s123, 1
      %p435 = por %p433, %p434
      %p436 = scmp.ne.s32.totalorder %s427, %s428
      %p437 = scmp.eq.s32.totalorder %s123, 0
      %p438 = por %p436, %p437
      %p439 = scmp.ne.s32.totalorder %s427, %s428
      %p440 = scmp.eq.s32.totalorder %s124, 1
      %p441 = por %p439, %p440
      %p443 = scmp.ne.s32.totalorder %s428, %s442
      %p444 = scmp.eq.s32.totalorder %s124, 0
      %p445 = por %p443, %p444
      %s447 = sadd.s32 %s446, 1
      %p450 = scmp.eq.s32.totalorder %s118, 1
      %p451 = scmp.ne.s32.totalorder %s446, %s448
      %p452 = scmp.eq.s32.totalorder %s118, 0
      %p453 = por %p451, %p452
      %p454 = scmp.ne.s32.totalorder %s446, %s448
      %p455 = scmp.eq.s32.totalorder %s123, 1
      %p456 = por %p454, %p455
      %p457 = scmp.ne.s32.totalorder %s448, %s449
      %p458 = scmp.eq.s32.totalorder %s123, 0
      %p459 = por %p457, %p458
      %p460 = scmp.ne.s32.totalorder %s448, %s449
      %p461 = scmp.eq.s32.totalorder %s124, 1
      %p462 = por %p460, %p461
      %p464 = scmp.ne.s32.totalorder %s449, %s463
      %p465 = scmp.eq.s32.totalorder %s124, 0
      %p466 = por %p464, %p465
      %s468 = sadd.s32 %s467, 1
      %p471 = scmp.eq.s32.totalorder %s118, 1
      %p472 = scmp.ne.s32.totalorder %s467, %s469
      %p473 = scmp.eq.s32.totalorder %s118, 0
      %p474 = por %p472, %p473
      %p475 = scmp.ne.s32.totalorder %s467, %s469
      %p476 = scmp.eq.s32.totalorder %s123, 1
      %p477 = por %p475, %p476
      %p478 = scmp.ne.s32.totalorder %s469, %s470
      %p479 = scmp.eq.s32.totalorder %s123, 0
      %p480 = por %p478, %p479
      %p481 = scmp.ne.s32.totalorder %s469, %s470
      %p482 = scmp.eq.s32.totalorder %s124, 1
      %p483 = por %p481, %p482
      %p485 = scmp.ne.s32.totalorder %s470, %s484
      %p486 = scmp.eq.s32.totalorder %s124, 0
      %p487 = por %p485, %p486
      %s489 = sadd.s32 %s488, 1
      %p492 = scmp.eq.s32.totalorder %s118, 1
      %p493 = scmp.ne.s32.totalorder %s488, %s490
      %p494 = scmp.eq.s32.totalorder %s118, 0
      %p495 = por %p493, %p494
      %p496 = scmp.ne.s32.totalorder %s488, %s490
      %p497 = scmp.eq.s32.totalorder %s123, 1
      %p498 = por %p496, %p497
      %p499 = scmp.ne.s32.totalorder %s490, %s491
      %p500 = scmp.eq.s32.totalorder %s123, 0
      %p501 = por %p499, %p500
      %p502 = scmp.ne.s32.totalorder %s490, %s491
      %p503 = scmp.eq.s32.totalorder %s124, 1
      %p504 = por %p502, %p503
      %p506 = scmp.ne.s32.totalorder %s491, %s505
      %p507 = scmp.eq.s32.totalorder %s124, 0
      %p508 = por %p506, %p507
      %s510 = sadd.s32 %s509, 1
      %p513 = scmp.eq.s32.totalorder %s118, 1
      %p514 = scmp.ne.s32.totalorder %s509, %s511
      %p515 = scmp.eq.s32.totalorder %s118, 0
      %p516 = por %p514, %p515
      %p517 = scmp.ne.s32.totalorder %s509, %s511
      %p518 = scmp.eq.s32.totalorder %s123, 1
      %p519 = por %p517, %p518
      %p520 = scmp.ne.s32.totalorder %s511, %s512
      %p521 = scmp.eq.s32.totalorder %s123, 0
      %p522 = por %p520, %p521
      %p523 = scmp.ne.s32.totalorder %s511, %s512
      %p524 = scmp.eq.s32.totalorder %s124, 1
      %p525 = por %p523, %p524
      %p527 = scmp.ne.s32.totalorder %s512, %s526
      %p528 = scmp.eq.s32.totalorder %s124, 0
      %p529 = por %p527, %p528
      %s531 = sadd.s32 %s530, 1
      %p534 = scmp.eq.s32.totalorder %s118, 1
      %p535 = scmp.ne.s32.totalorder %s530, %s532
      %p536 = scmp.eq.s32.totalorder %s118, 0
      %p537 = por %p535, %p536
      %p538 = scmp.ne.s32.totalorder %s530, %s532
      %p539 = scmp.eq.s32.totalorder %s123, 1
      %p540 = por %p538, %p539
      %p541 = scmp.ne.s32.totalorder %s532, %s533
      %p542 = scmp.eq.s32.totalorder %s123, 0
      %p543 = por %p541, %p542
      %p544 = scmp.ne.s32.totalorder %s532, %s533
      %p545 = scmp.eq.s32.totalorder %s124, 1
      %p546 = por %p544, %p545
      %p548 = scmp.ne.s32.totalorder %s533, %s547
      %p549 = scmp.eq.s32.totalorder %s124, 0
      %p550 = por %p548, %p549
      %s552 = sadd.s32 %s551, 1
      %p555 = scmp.eq.s32.totalorder %s118, 1
      %p556 = scmp.ne.s32.totalorder %s551, %s553
      %p557 = scmp.eq.s32.totalorder %s118, 0
      %p558 = por %p556, %p557
      %p559 = scmp.ne.s32.totalorder %s551, %s553
      %p560 = scmp.eq.s32.totalorder %s123, 1
      %p561 = por %p559, %p560
      %p562 = scmp.ne.s32.totalorder %s553, %s554
      %p563 = scmp.eq.s32.totalorder %s123, 0
      %p564 = por %p562, %p563
      %p565 = scmp.ne.s32.totalorder %s553, %s554
      %p566 = scmp.eq.s32.totalorder %s124, 1
      %p567 = por %p565, %p566
      %p569 = scmp.ne.s32.totalorder %s554, %s568
      %p570 = scmp.eq.s32.totalorder %s124, 0
      %p571 = por %p569, %p570
      %s573 = sadd.s32 %s572, 1
      %p576 = scmp.eq.s32.totalorder %s118, 1
      %p577 = scmp.ne.s32.totalorder %s572, %s574
      %p578 = scmp.eq.s32.totalorder %s118, 0
      %p579 = por %p577, %p578
      %p580 = scmp.ne.s32.totalorder %s572, %s574
      %p581 = scmp.eq.s32.totalorder %s123, 1
      %p582 = por %p580, %p581
      %p583 = scmp.ne.s32.totalorder %s574, %s575
      %p584 = scmp.eq.s32.totalorder %s123, 0
      %p585 = por %p583, %p584
      %p586 = scmp.ne.s32.totalorder %s574, %s575
      %p587 = scmp.eq.s32.totalorder %s124, 1
      %p588 = por %p586, %p587
      %p590 = scmp.ne.s32.totalorder %s575, %s589
      %p591 = scmp.eq.s32.totalorder %s124, 0
      %p592 = por %p590, %p591
      %s594 = sadd.s32 %s593, 1
      %p597 = scmp.eq.s32.totalorder %s118, 1
      %p598 = scmp.ne.s32.totalorder %s593, %s595
      %p599 = scmp.eq.s32.totalorder %s118, 0
      %p600 = por %p598, %p599
      %p601 = scmp.ne.s32.totalorder %s593, %s595
      %p602 = scmp.eq.s32.totalorder %s123, 1
      %p603 = por %p601, %p602
      %p604 = scmp.ne.s32.totalorder %s595, %s596
      %p605 = scmp.eq.s32.totalorder %s123, 0
      %p606 = por %p604, %p605
      %p607 = scmp.ne.s32.totalorder %s595, %s596
      %p608 = scmp.eq.s32.totalorder %s124, 1
      %p609 = por %p607, %p608
      %p611 = scmp.ne.s32.totalorder %s596, %s610
      %p612 = scmp.eq.s32.totalorder %s124, 0
      %p613 = por %p611, %p612
      %s615 = sadd.s32 %s614, 1
      %p618 = scmp.eq.s32.totalorder %s118, 1
      %p619 = scmp.ne.s32.totalorder %s614, %s616
      %p620 = scmp.eq.s32.totalorder %s118, 0
      %p621 = por %p619, %p620
      %p622 = scmp.ne.s32.totalorder %s614, %s616
      %p623 = scmp.eq.s32.totalorder %s123, 1
      %p624 = por %p622, %p623
      %p625 = scmp.ne.s32.totalorder %s616, %s617
      %p626 = scmp.eq.s32.totalorder %s123, 0
      %p627 = por %p625, %p626
      %p628 = scmp.ne.s32.totalorder %s616, %s617
      %p629 = scmp.eq.s32.totalorder %s124, 1
      %p630 = por %p628, %p629
      %p632 = scmp.ne.s32.totalorder %s617, %s631
      %p633 = scmp.eq.s32.totalorder %s124, 0
      %p634 = por %p632, %p633
      %s636 = sadd.s32 %s635, 1
      %p639 = scmp.eq.s32.totalorder %s118, 1
      %p640 = scmp.ne.s32.totalorder %s635, %s637
      %p641 = scmp.eq.s32.totalorder %s118, 0
      %p642 = por %p640, %p641
      %p643 = scmp.ne.s32.totalorder %s635, %s637
      %p644 = scmp.eq.s32.totalorder %s123, 1
      %p645 = por %p643, %p644
      %p646 = scmp.ne.s32.totalorder %s637, %s638
      %p647 = scmp.eq.s32.totalorder %s123, 0
      %p648 = por %p646, %p647
      %p649 = scmp.ne.s32.totalorder %s637, %s638
      %p650 = scmp.eq.s32.totalorder %s124, 1
      %p651 = por %p649, %p650
      %p653 = scmp.ne.s32.totalorder %s638, %s652
      %p654 = scmp.eq.s32.totalorder %s124, 0
      %p655 = por %p653, %p654
      %s657 = sadd.s32 %s656, 1
      %p660 = scmp.eq.s32.totalorder %s118, 1
      %p661 = scmp.ne.s32.totalorder %s656, %s658
      %p662 = scmp.eq.s32.totalorder %s118, 0
      %p663 = por %p661, %p662
      %p664 = scmp.ne.s32.totalorder %s656, %s658
      %p665 = scmp.eq.s32.totalorder %s123, 1
      %p666 = por %p664, %p665
      %p667 = scmp.ne.s32.totalorder %s658, %s659
      %p668 = scmp.eq.s32.totalorder %s123, 0
      %p669 = por %p667, %p668
      %p670 = scmp.ne.s32.totalorder %s658, %s659
      %p671 = scmp.eq.s32.totalorder %s124, 1
      %p672 = por %p670, %p671
      %p674 = scmp.ne.s32.totalorder %s659, %s673
      %p675 = scmp.eq.s32.totalorder %s124, 0
      %p676 = por %p674, %p675
      %s678 = sadd.s32 %s677, 1
      %p681 = scmp.eq.s32.totalorder %s118, 1
      %p682 = scmp.ne.s32.totalorder %s677, %s679
      %p683 = scmp.eq.s32.totalorder %s118, 0
      %p684 = por %p682, %p683
      %p685 = scmp.ne.s32.totalorder %s677, %s679
      %p686 = scmp.eq.s32.totalorder %s123, 1
      %p687 = por %p685, %p686
      %p688 = scmp.ne.s32.totalorder %s679, %s680
      %p689 = scmp.eq.s32.totalorder %s123, 0
      %p690 = por %p688, %p689
      %p691 = scmp.ne.s32.totalorder %s679, %s680
      %p692 = scmp.eq.s32.totalorder %s124, 1
      %p693 = por %p691, %p692
      %p695 = scmp.ne.s32.totalorder %s680, %s694
      %p696 = scmp.eq.s32.totalorder %s124, 0
      %p697 = por %p695, %p696
      %s699 = sadd.s32 %s698, 1
      %p702 = scmp.eq.s32.totalorder %s118, 1
      %p703 = scmp.ne.s32.totalorder %s698, %s700
      %p704 = scmp.eq.s32.totalorder %s118, 0
      %p705 = por %p703, %p704
      %p706 = scmp.ne.s32.totalorder %s698, %s700
      %p707 = scmp.eq.s32.totalorder %s123, 1
      %p708 = por %p706, %p707
      %p709 = scmp.ne.s32.totalorder %s700, %s701
      %p710 = scmp.eq.s32.totalorder %s123, 0
      %p711 = por %p709, %p710
      %p712 = scmp.ne.s32.totalorder %s700, %s701
      %p713 = scmp.eq.s32.totalorder %s124, 1
      %p714 = por %p712, %p713
      %p716 = scmp.ne.s32.totalorder %s701, %s715
      %p717 = scmp.eq.s32.totalorder %s124, 0
      %p718 = por %p716, %p717
      %s720 = sadd.s32 %s719, 1
      %p723 = scmp.eq.s32.totalorder %s118, 1
      %p724 = scmp.ne.s32.totalorder %s719, %s721
      %p725 = scmp.eq.s32.totalorder %s118, 0
      %p726 = por %p724, %p725
      %p727 = scmp.ne.s32.totalorder %s719, %s721
      %p728 = scmp.eq.s32.totalorder %s123, 1
      %p729 = por %p727, %p728
      %p730 = scmp.ne.s32.totalorder %s721, %s722
      %p731 = scmp.eq.s32.totalorder %s123, 0
      %p732 = por %p730, %p731
      %p733 = scmp.ne.s32.totalorder %s721, %s722
      %p734 = scmp.eq.s32.totalorder %s124, 1
      %p735 = por %p733, %p734
      %p737 = scmp.ne.s32.totalorder %s722, %s736
      %p738 = scmp.eq.s32.totalorder %s124, 0
      %p739 = por %p737, %p738
      %s741 = sadd.s32 %s740, 1
      %p744 = scmp.eq.s32.totalorder %s118, 1
      %p745 = scmp.ne.s32.totalorder %s740, %s742
      %p746 = scmp.eq.s32.totalorder %s118, 0
      %p747 = por %p745, %p746
      %p748 = scmp.ne.s32.totalorder %s740, %s742
      %p749 = scmp.eq.s32.totalorder %s123, 1
      %p750 = por %p748, %p749
      %p751 = scmp.ne.s32.totalorder %s742, %s743
      %p752 = scmp.eq.s32.totalorder %s123, 0
      %p753 = por %p751, %p752
      %p754 = scmp.ne.s32.totalorder %s742, %s743
      %p755 = scmp.eq.s32.totalorder %s124, 1
      %p756 = por %p754, %p755
      %p758 = scmp.ne.s32.totalorder %s743, %s757
      %p759 = scmp.eq.s32.totalorder %s124, 0
      %p760 = por %p758, %p759
      %s762 = sadd.s32 %s761, 1
      %p765 = scmp.eq.s32.totalorder %s118, 1
      %p766 = scmp.ne.s32.totalorder %s761, %s763
      %p767 = scmp.eq.s32.totalorder %s118, 0
      %p768 = por %p766, %p767
      %p769 = scmp.ne.s32.totalorder %s761, %s763
      %p770 = scmp.eq.s32.totalorder %s123, 1
      %p771 = por %p769, %p770
      %p772 = scmp.ne.s32.totalorder %s763, %s764
      %p773 = scmp.eq.s32.totalorder %s123, 0
      %p774 = por %p772, %p773
      %p775 = scmp.ne.s32.totalorder %s763, %s764
      %p776 = scmp.eq.s32.totalorder %s124, 1
      %p777 = por %p775, %p776
      %p779 = scmp.ne.s32.totalorder %s764, %s778
      %p780 = scmp.eq.s32.totalorder %s124, 0
      %p781 = por %p779, %p780
      %s783 = sadd.s32 %s782, 1
      %p786 = scmp.eq.s32.totalorder %s118, 1
      %p787 = scmp.ne.s32.totalorder %s782, %s784
      %p788 = scmp.eq.s32.totalorder %s118, 0
      %p789 = por %p787, %p788
      %p790 = scmp.ne.s32.totalorder %s782, %s784
      %p791 = scmp.eq.s32.totalorder %s123, 1
      %p792 = por %p790, %p791
      %p793 = scmp.ne.s32.totalorder %s784, %s785
      %p794 = scmp.eq.s32.totalorder %s123, 0
      %p795 = por %p793, %p794
      %p796 = scmp.ne.s32.totalorder %s784, %s785
      %p797 = scmp.eq.s32.totalorder %s124, 1
      %p798 = por %p796, %p797
      %p800 = scmp.ne.s32.totalorder %s785, %s799
      %p801 = scmp.eq.s32.totalorder %s124, 0
      %p802 = por %p800, %p801
      %s804 = sadd.s32 %s803, 1
      %p807 = scmp.eq.s32.totalorder %s118, 1
      %p808 = scmp.ne.s32.totalorder %s803, %s805
      %p809 = scmp.eq.s32.totalorder %s118, 0
      %p810 = por %p808, %p809
      %p811 = scmp.ne.s32.totalorder %s803, %s805
      %p812 = scmp.eq.s32.totalorder %s123, 1
      %p813 = por %p811, %p812
      %p814 = scmp.ne.s32.totalorder %s805, %s806
      %p815 = scmp.eq.s32.totalorder %s123, 0
      %p816 = por %p814, %p815
      %p817 = scmp.ne.s32.totalorder %s805, %s806
      %p818 = scmp.eq.s32.totalorder %s124, 1
      %p819 = por %p817, %p818
      %p821 = scmp.ne.s32.totalorder %s806, %s820
      %p822 = scmp.eq.s32.totalorder %s124, 0
      %p823 = por %p821, %p822
      %s825 = sadd.s32 %s824, 1
      %p828 = scmp.eq.s32.totalorder %s118, 1
      %p829 = scmp.ne.s32.totalorder %s824, %s826
      %p830 = scmp.eq.s32.totalorder %s118, 0
      %p831 = por %p829, %p830
      %p832 = scmp.ne.s32.totalorder %s824, %s826
      %p833 = scmp.eq.s32.totalorder %s123, 1
      %p834 = por %p832, %p833
      %p835 = scmp.ne.s32.totalorder %s826, %s827
      %p836 = scmp.eq.s32.totalorder %s123, 0
      %p837 = por %p835, %p836
      %p838 = scmp.ne.s32.totalorder %s826, %s827
      %p839 = scmp.eq.s32.totalorder %s124, 1
      %p840 = por %p838, %p839
      %p842 = scmp.ne.s32.totalorder %s827, %s841
      %p843 = scmp.eq.s32.totalorder %s124, 0
      %p844 = por %p842, %p843
      %s846 = sadd.s32 %s845, 1
      %p849 = scmp.eq.s32.totalorder %s118, 1
      %p850 = scmp.ne.s32.totalorder %s845, %s847
      %p851 = scmp.eq.s32.totalorder %s118, 0
      %p852 = por %p850, %p851
      %p853 = scmp.ne.s32.totalorder %s845, %s847
      %p854 = scmp.eq.s32.totalorder %s123, 1
      %p855 = por %p853, %p854
      %p856 = scmp.ne.s32.totalorder %s847, %s848
      %p857 = scmp.eq.s32.totalorder %s123, 0
      %p858 = por %p856, %p857
      %p859 = scmp.ne.s32.totalorder %s847, %s848
      %p860 = scmp.eq.s32.totalorder %s124, 1
      %p861 = por %p859, %p860
      %p863 = scmp.ne.s32.totalorder %s848, %s862
      %p864 = scmp.eq.s32.totalorder %s124, 0
      %p865 = por %p863, %p864
      %s867 = sadd.s32 %s866, 1
      %p870 = scmp.eq.s32.totalorder %s118, 1
      %p871 = scmp.ne.s32.totalorder %s866, %s868
      %p872 = scmp.eq.s32.totalorder %s118, 0
      %p873 = por %p871, %p872
      %p874 = scmp.ne.s32.totalorder %s866, %s868
      %p875 = scmp.eq.s32.totalorder %s123, 1
      %p876 = por %p874, %p875
      %p877 = scmp.ne.s32.totalorder %s868, %s869
      %p878 = scmp.eq.s32.totalorder %s123, 0
      %p879 = por %p877, %p878
      %p880 = scmp.ne.s32.totalorder %s868, %s869
      %p881 = scmp.eq.s32.totalorder %s124, 1
      %p882 = por %p880, %p881
      %p884 = scmp.ne.s32.totalorder %s869, %s883
      %p885 = scmp.eq.s32.totalorder %s124, 0
      %p886 = por %p884, %p885
      %s888 = sadd.s32 %s887, 1
      %p891 = scmp.eq.s32.totalorder %s118, 1
      %p892 = scmp.ne.s32.totalorder %s887, %s889
      %p893 = scmp.eq.s32.totalorder %s118, 0
      %p894 = por %p892, %p893
      %p895 = scmp.ne.s32.totalorder %s887, %s889
      %p896 = scmp.eq.s32.totalorder %s123, 1
      %p897 = por %p895, %p896
      %p898 = scmp.ne.s32.totalorder %s889, %s890
      %p899 = scmp.eq.s32.totalorder %s123, 0
      %p900 = por %p898, %p899
      %p901 = scmp.ne.s32.totalorder %s889, %s890
      %p902 = scmp.eq.s32.totalorder %s124, 1
      %p903 = por %p901, %p902
      %p905 = scmp.ne.s32.totalorder %s890, %s904
      %p906 = scmp.eq.s32.totalorder %s124, 0
      %p907 = por %p905, %p906
      %s909 = sadd.s32 %s908, 1
      %p912 = scmp.eq.s32.totalorder %s118, 1
      %p913 = scmp.ne.s32.totalorder %s908, %s910
      %p914 = scmp.eq.s32.totalorder %s118, 0
      %p915 = por %p913, %p914
      %p916 = scmp.ne.s32.totalorder %s908, %s910
      %p917 = scmp.eq.s32.totalorder %s123, 1
      %p918 = por %p916, %p917
      %p919 = scmp.ne.s32.totalorder %s910, %s911
      %p920 = scmp.eq.s32.totalorder %s123, 0
      %p921 = por %p919, %p920
      %p922 = scmp.ne.s32.totalorder %s910, %s911
      %p923 = scmp.eq.s32.totalorder %s124, 1
      %p924 = por %p922, %p923
      %p926 = scmp.ne.s32.totalorder %s911, %s925
      %p927 = scmp.eq.s32.totalorder %s124, 0
      %p928 = por %p926, %p927
      %s930 = sadd.s32 %s929, 1
      %p933 = scmp.eq.s32.totalorder %s118, 1
      %p934 = scmp.ne.s32.totalorder %s929, %s931
      %p935 = scmp.eq.s32.totalorder %s118, 0
      %p936 = por %p934, %p935
      %p937 = scmp.ne.s32.totalorder %s929, %s931
      %p938 = scmp.eq.s32.totalorder %s123, 1
      %p939 = por %p937, %p938
      %p940 = scmp.ne.s32.totalorder %s931, %s932
      %p941 = scmp.eq.s32.totalorder %s123, 0
      %p942 = por %p940, %p941
      %p943 = scmp.ne.s32.totalorder %s931, %s932
      %p944 = scmp.eq.s32.totalorder %s124, 1
      %p945 = por %p943, %p944
      %p947 = scmp.ne.s32.totalorder %s932, %s946
      %p948 = scmp.eq.s32.totalorder %s124, 0
      %p949 = por %p947, %p948
      %s951 = sadd.s32 %s950, 1
      %p954 = scmp.eq.s32.totalorder %s118, 1
      %p955 = scmp.ne.s32.totalorder %s950, %s952
      %p956 = scmp.eq.s32.totalorder %s118, 0
      %p957 = por %p955, %p956
      %p958 = scmp.ne.s32.totalorder %s950, %s952
      %p959 = scmp.eq.s32.totalorder %s123, 1
      %p960 = por %p958, %p959
      %p961 = scmp.ne.s32.totalorder %s952, %s953
      %p962 = scmp.eq.s32.totalorder %s123, 0
      %p963 = por %p961, %p962
      %p964 = scmp.ne.s32.totalorder %s952, %s953
      %p965 = scmp.eq.s32.totalorder %s124, 1
      %p966 = por %p964, %p965
      %p968 = scmp.ne.s32.totalorder %s953, %s967
      %p969 = scmp.eq.s32.totalorder %s124, 0
      %p970 = por %p968, %p969
      %s972 = sadd.s32 %s971, 1
      %p975 = scmp.eq.s32.totalorder %s118, 1
      %p976 = scmp.ne.s32.totalorder %s971, %s973
      %p977 = scmp.eq.s32.totalorder %s118, 0
      %p978 = por %p976, %p977
      %p979 = scmp.ne.s32.totalorder %s971, %s973
      %p980 = scmp.eq.s32.totalorder %s123, 1
      %p981 = por %p979, %p980
      %p982 = scmp.ne.s32.totalorder %s973, %s974
      %p983 = scmp.eq.s32.totalorder %s123, 0
      %p984 = por %p982, %p983
      %p985 = scmp.ne.s32.totalorder %s973, %s974
      %p986 = scmp.eq.s32.totalorder %s124, 1
      %p987 = por %p985, %p986
      %p989 = scmp.ne.s32.totalorder %s974, %s988
      %p990 = scmp.eq.s32.totalorder %s124, 0
      %p991 = por %p989, %p990
      %s993 = sadd.s32 %s992, 1
      %p996 = scmp.eq.s32.totalorder %s118, 1
      %p997 = scmp.ne.s32.totalorder %s992, %s994
      %p998 = scmp.eq.s32.totalorder %s118, 0
      %p999 = por %p997, %p998
      %p1000 = scmp.ne.s32.totalorder %s992, %s994
      %p1001 = scmp.eq.s32.totalorder %s123, 1
      %p1002 = por %p1000, %p1001
      %p1003 = scmp.ne.s32.totalorder %s994, %s995
      %p1004 = scmp.eq.s32.totalorder %s123, 0
      %p1005 = por %p1003, %p1004
      %p1006 = scmp.ne.s32.totalorder %s994, %s995
      %p1007 = scmp.eq.s32.totalorder %s124, 1
      %p1008 = por %p1006, %p1007
      %p1010 = scmp.ne.s32.totalorder %s995, %s1009
      %p1011 = scmp.eq.s32.totalorder %s124, 0
      %p1012 = por %p1010, %p1011
      %s1014 = sadd.s32 %s1013, 1
      %p1017 = scmp.eq.s32.totalorder %s118, 1
      %p1018 = scmp.ne.s32.totalorder %s1013, %s1015
      %p1019 = scmp.eq.s32.totalorder %s118, 0
      %p1020 = por %p1018, %p1019
      %p1021 = scmp.ne.s32.totalorder %s1013, %s1015
      %p1022 = scmp.eq.s32.totalorder %s123, 1
      %p1023 = por %p1021, %p1022
      %p1024 = scmp.ne.s32.totalorder %s1015, %s1016
      %p1025 = scmp.eq.s32.totalorder %s123, 0
      %p1026 = por %p1024, %p1025
      %p1027 = scmp.ne.s32.totalorder %s1015, %s1016
      %p1028 = scmp.eq.s32.totalorder %s124, 1
      %p1029 = por %p1027, %p1028
      %p1031 = scmp.ne.s32.totalorder %s1016, %s1030
      %p1032 = scmp.eq.s32.totalorder %s124, 0
      %p1033 = por %p1031, %p1032
      %s1035 = sadd.s32 %s1034, 1
      %p1038 = scmp.eq.s32.totalorder %s118, 1
      %p1039 = scmp.ne.s32.totalorder %s1034, %s1036
      %p1040 = scmp.eq.s32.totalorder %s118, 0
      %p1041 = por %p1039, %p1040
      %p1042 = scmp.ne.s32.totalorder %s1034, %s1036
      %p1043 = scmp.eq.s32.totalorder %s123, 1
      %p1044 = por %p1042, %p1043
      %p1045 = scmp.ne.s32.totalorder %s1036, %s1037
      %p1046 = scmp.eq.s32.totalorder %s123, 0
      %p1047 = por %p1045, %p1046
      %p1048 = scmp.ne.s32.totalorder %s1036, %s1037
      %p1049 = scmp.eq.s32.totalorder %s124, 1
      %p1050 = por %p1048, %p1049
      %p1052 = scmp.ne.s32.totalorder %s1037, %s1051
      %p1053 = scmp.eq.s32.totalorder %s124, 0
      %p1054 = por %p1052, %p1053
      %s1056 = sadd.s32 %s1055, 1
      %p1059 = scmp.eq.s32.totalorder %s118, 1
      %p1060 = scmp.ne.s32.totalorder %s1055, %s1057
      %p1061 = scmp.eq.s32.totalorder %s118, 0
      %p1062 = por %p1060, %p1061
      %p1063 = scmp.ne.s32.totalorder %s1055, %s1057
      %p1064 = scmp.eq.s32.totalorder %s123, 1
      %p1065 = por %p1063, %p1064
      %p1066 = scmp.ne.s32.totalorder %s1057, %s1058
      %p1067 = scmp.eq.s32.totalorder %s123, 0
      %p1068 = por %p1066, %p1067
      %p1069 = scmp.ne.s32.totalorder %s1057, %s1058
      %p1070 = scmp.eq.s32.totalorder %s124, 1
      %p1071 = por %p1069, %p1070
      %p1073 = scmp.ne.s32.totalorder %s1058, %s1072
      %p1074 = scmp.eq.s32.totalorder %s124, 0
      %p1075 = por %p1073, %p1074
      %s1076 = ssub.s32 %s118, %s125
      %p1077 = scmp.eq.s32.totalorder %s1076, 0
      %s1079 = sadd.s32 %s1078, 1
      %s1080 = scalar_select %p1077, %s1078, %s1079
      %p1083 = pneg %p1077
      %p1084 = scmp.eq.s32.totalorder %s118, 1
      %p1085 = por %p1083, %p1084
      %p1086 = scmp.ne.s32.totalorder %s1078, %s1081
      %p1087 = scmp.eq.s32.totalorder %s118, 0
      %p1088 = por %p1086, %p1087
      %p1089 = scmp.ne.s32.totalorder %s1078, %s1081
      %p1090 = scmp.eq.s32.totalorder %s123, 1
      %p1091 = por %p1089, %p1090
      %p1092 = scmp.ne.s32.totalorder %s1081, %s1082
      %p1093 = scmp.eq.s32.totalorder %s123, 0
      %p1094 = por %p1092, %p1093
      %p1095 = scmp.ne.s32.totalorder %s1081, %s1082
      %p1096 = scmp.eq.s32.totalorder %s124, 1
      %p1097 = por %p1095, %p1096
      %p1099 = scmp.ne.s32.totalorder %s1082, %s1098
      %p1100 = scmp.eq.s32.totalorder %s124, 0
      %p1101 = por %p1099, %p1100
      %p1102 = scmp.le.s32.totalorder 1, %s118
      %p1103 = scmp.lt.s32.totalorder %s118, 3
      %p1104 = pnand %p1102, %p1103
      %p1105 = pneg %p1104
      // Predicated region
      $region9: #{_lambda_.1} parent=5 // pred_check
        _
      $region10: #{_lambda_.1} parent=5 // pred_check_branch
        %1107 = sbr.rel (%p1104) target = $region12
      $region11: #{_lambda_.1} parent=5 // pred_region
        %s1108 = ssub.s32 %s118, 1
        // Predicated region
        $region13: #{_lambda_.1} parent=11 // pred_check
          %p1109 = pneg %p165
        $region14: #{_lambda_.1} parent=11 // pred_check_branch
          %1111 = sbr.rel (%p1109) target = $region16
        $region15: #{_lambda_.1} parent=11 // pred_region
          %s1113 = ssub.s32 1536, 1536
          %1114 = vsyncadd [#allocation3], %s1113
          %s1115 = sshll.u32 [#allocation2], 4
          %s1116 = int_to_ptr.vmem [resolvable:$true] %s1115
          %1121 = dma.hbm_to_vmem [thread:$0]  %s3, 1536, %s1116, [#allocation3], 64, 64, 4
        $region16: #{_lambda_.1} parent=11 // pred_fallthru
          _
        // Predicated region
        $region17: #{_lambda_.1} parent=11 // pred_check
          %p1122 = pneg %p186
        $region18: #{_lambda_.1} parent=11 // pred_check_branch
          %1124 = sbr.rel (%p1122) target = $region20
        $region19: #{_lambda_.1} parent=11 // pred_region
          %s1126 = ssub.s32 16, 16
          %1127 = vsyncadd [#allocation5], %s1126
          %s1129 = sshll.u32 [#allocation4], 4
          %s1130 = int_to_ptr.vmem [resolvable:$true] %s1129
          %1132 = dma.hbm_to_vmem [thread:$0]  %s5, 16, %s1130, [#allocation5]
        $region20: #{_lambda_.1} parent=11 // pred_fallthru
          _
        // Predicated region
        $region21: #{_lambda_.1} parent=11 // pred_check
          %p1133 = pneg %p207
        $region22: #{_lambda_.1} parent=11 // pred_check_branch
          %1135 = sbr.rel (%p1133) target = $region24
        $region23: #{_lambda_.1} parent=11 // pred_region
          %s1137 = ssub.s32 512, 512
          %1138 = vsyncadd [#allocation5], %s1137
          %s1139 = sshll.u32 [#allocation6], 4
          %s1140 = int_to_ptr.vmem [resolvable:$true] %s1139
          %1145 = dma.hbm_to_vmem [thread:$0]  %s7, 512, %s1140, [#allocation5], 64, 64, 4
        $region24: #{_lambda_.1} parent=11 // pred_fallthru
          _
        // Predicated region
        $region25: #{_lambda_.1} parent=11 // pred_check
          %p1146 = pneg %p228
        $region26: #{_lambda_.1} parent=11 // pred_check_branch
          %1148 = sbr.rel (%p1146) target = $region28
        $region27: #{_lambda_.1} parent=11 // pred_region
          %s1150 = ssub.s32 3072, 3072
          %1151 = vsyncadd [#allocation8], %s1150
          %s1152 = sshll.u32 [#allocation7], 4
          %s1153 = int_to_ptr.vmem [resolvable:$true] %s1152
          %1158 = dma.hbm_to_vmem [thread:$0]  %s9, 3072, %s1153, [#allocation8], 64, 64, 4
        $region28: #{_lambda_.1} parent=11 // pred_fallthru
          _
        // Predicated region
        $region29: #{_lambda_.1} parent=11 // pred_check
          %p1159 = pneg %p249
        $region30: #{_lambda_.1} parent=11 // pred_check_branch
          %1161 = sbr.rel (%p1159) target = $region32
        $region31: #{_lambda_.1} parent=11 // pred_region
          %s1163 = ssub.s32 16, 16
          %1164 = vsyncadd [#allocation8], %s1163
          %s1166 = sshll.u32 [#allocation9], 4
          %s1167 = int_to_ptr.vmem [resolvable:$true] %s1166
          %1169 = dma.hbm_to_vmem [thread:$0]  %s11, 16, %s1167, [#allocation8]
        $region32: #{_lambda_.1} parent=11 // pred_fallthru
          _
        // Predicated region
        $region33: #{_lambda_.1} parent=11 // pred_check
          %p1170 = pneg %p270
        $region34: #{_lambda_.1} parent=11 // pred_check_branch
          %1172 = sbr.rel (%p1170) target = $region36
        $region35: #{_lambda_.1} parent=11 // pred_region
          %s1174 = ssub.s32 768, 768
          %1175 = vsyncadd [#allocation11], %s1174
          %s1176 = sshll.u32 [#allocation10], 4
          %s1177 = int_to_ptr.vmem [resolvable:$true] %s1176
          %1182 = dma.hbm_to_vmem [thread:$0]  %s13, 768, %s1177, [#allocation11], 128, 128, 8
        $region36: #{_lambda_.1} parent=11 // pred_fallthru
          _
        // Predicated region
        $region37: #{_lambda_.1} parent=11 // pred_check
          %p1183 = pneg %p291
        $region38: #{_lambda_.1} parent=11 // pred_check_branch
          %1185 = sbr.rel (%p1183) target = $region40
        $region39: #{_lambda_.1} parent=11 // pred_region
          _
        $region40: #{_lambda_.1} parent=11 // pred_fallthru
          _
        // Predicated region
        $region41: #{_lambda_.1} parent=11 // pred_check
          %p1186 = pneg %p312
        $region42: #{_lambda_.1} parent=11 // pred_check_branch
          %1188 = sbr.rel (%p1186) target = $region44
        $region43: #{_lambda_.1} parent=11 // pred_region
          %s1190 = ssub.s32 256, 256
          %1191 = vsyncadd [#allocation11], %s1190
          %s1192 = sshll.u32 [#allocation12], 4
          %s1193 = int_to_ptr.vmem [resolvable:$true] %s1192
          %1198 = dma.hbm_to_vmem [thread:$0]  %s17, 256, %s1193, [#allocation11], 128, 128, 8
        $region44: #{_lambda_.1} parent=11 // pred_fallthru
          _
        // Predicated region
        $region45: #{_lambda_.1} parent=11 // pred_check
          %p1199 = pneg %p333
        $region46: #{_lambda_.1} parent=11 // pred_check_branch
          %1201 = sbr.rel (%p1199) target = $region48
        $region47: #{_lambda_.1} parent=11 // pred_region
          %s1203 = ssub.s32 1536, 1536
          %1204 = vsyncadd [#allocation14], %s1203
          %s1205 = sshll.u32 [#allocation13], 4
          %s1206 = int_to_ptr.vmem [resolvable:$true] %s1205
          %1211 = dma.hbm_to_vmem [thread:$0]  %s19, 1536, %s1206, [#allocation14], 64, 64, 4
        $region48: #{_lambda_.1} parent=11 // pred_fallthru
          _
        // Predicated region
        $region49: #{_lambda_.1} parent=11 // pred_check
          %p1212 = pneg %p354
        $region50: #{_lambda_.1} parent=11 // pred_check_branch
          %1214 = sbr.rel (%p1212) target = $region52
        $region51: #{_lambda_.1} parent=11 // pred_region
          %s1216 = ssub.s32 16, 16
          %1217 = vsyncadd [#allocation14], %s1216
          %s1219 = sshll.u32 [#allocation15], 4
          %s1220 = int_to_ptr.vmem [resolvable:$true] %s1219
          %1222 = dma.hbm_to_vmem [thread:$0]  %s21, 16, %s1220, [#allocation14]
        $region52: #{_lambda_.1} parent=11 // pred_fallthru
          _
        // Predicated region
        $region53: #{_lambda_.1} parent=11 // pred_check
          %p1223 = pneg %p375
        $region54: #{_lambda_.1} parent=11 // pred_check_branch
          %1225 = sbr.rel (%p1223) target = $region56
        $region55: #{_lambda_.1} parent=11 // pred_region
          %s1227 = ssub.s32 512, 512
          %1228 = vsyncadd [#allocation17], %s1227
          %s1229 = sshll.u32 [#allocation16], 4
          %s1230 = int_to_ptr.vmem [resolvable:$true] %s1229
          %1235 = dma.hbm_to_vmem [thread:$0]  %s23, 512, %s1230, [#allocation17], 64, 64, 4
        $region56: #{_lambda_.1} parent=11 // pred_fallthru
          _
        // Predicated region
        $region57: #{_lambda_.1} parent=11 // pred_check
          %p1236 = pneg %p396
        $region58: #{_lambda_.1} parent=11 // pred_check_branch
          %1238 = sbr.rel (%p1236) target = $region60
        $region59: #{_lambda_.1} parent=11 // pred_region
          %s1240 = ssub.s32 3072, 3072
          %1241 = vsyncadd [#allocation17], %s1240
          %s1242 = sshll.u32 [#allocation18], 4
          %s1243 = int_to_ptr.vmem [resolvable:$true] %s1242
          %1248 = dma.hbm_to_vmem [thread:$0]  %s25, 3072, %s1243, [#allocation17], 64, 64, 4
        $region60: #{_lambda_.1} parent=11 // pred_fallthru
          _
        // Predicated region
        $region61: #{_lambda_.1} parent=11 // pred_check
          %p1249 = pneg %p417
        $region62: #{_lambda_.1} parent=11 // pred_check_branch
          %1251 = sbr.rel (%p1249) target = $region64
        $region63: #{_lambda_.1} parent=11 // pred_region
          %s1253 = ssub.s32 16, 16
          %1254 = vsyncadd [#allocation20], %s1253
          %s1256 = sshll.u32 [#allocation19], 4
          %s1257 = int_to_ptr.vmem [resolvable:$true] %s1256
          %1259 = dma.hbm_to_vmem [thread:$0]  %s27, 16, %s1257, [#allocation20]
        $region64: #{_lambda_.1} parent=11 // pred_fallthru
          _
        // Predicated region
        $region65: #{_lambda_.1} parent=11 // pred_check
          %p1260 = pneg %p438
        $region66: #{_lambda_.1} parent=11 // pred_check_branch
          %1262 = sbr.rel (%p1260) target = $region68
        $region67: #{_lambda_.1} parent=11 // pred_region
          %s1264 = ssub.s32 384, 384
          %1265 = vsyncadd [#allocation20], %s1264
          %s1266 = sshll.u32 [#allocation21], 4
          %s1267 = int_to_ptr.vmem [resolvable:$true] %s1266
          %1272 = dma.hbm_to_vmem [thread:$0]  %s29, 384, %s1267, [#allocation20], 128, 128, 8
        $region68: #{_lambda_.1} parent=11 // pred_fallthru
          _
        // Predicated region
        $region69: #{_lambda_.1} parent=11 // pred_check
          %p1273 = pneg %p459
        $region70: #{_lambda_.1} parent=11 // pred_check_branch
          %1275 = sbr.rel (%p1273) target = $region72
        $region71: #{_lambda_.1} parent=11 // pred_region
          _
        $region72: #{_lambda_.1} parent=11 // pred_fallthru
          _
        // Predicated region
        $region73: #{_lambda_.1} parent=11 // pred_check
          %p1276 = pneg %p480
        $region74: #{_lambda_.1} parent=11 // pred_check_branch
          %1278 = sbr.rel (%p1276) target = $region76
        $region75: #{_lambda_.1} parent=11 // pred_region
          %s1280 = ssub.s32 128, 128
          %1281 = vsyncadd [#allocation23], %s1280
          %s1282 = sshll.u32 [#allocation22], 4
          %s1283 = int_to_ptr.vmem [resolvable:$true] %s1282
          %1288 = dma.hbm_to_vmem [thread:$0]  %s33, 128, %s1283, [#allocation23], 64, 64, 4
        $region76: #{_lambda_.1} parent=11 // pred_fallthru
          _
        // Predicated region
        $region77: #{_lambda_.1} parent=11 // pred_check
          %p1289 = pneg %p501
        $region78: #{_lambda_.1} parent=11 // pred_check_branch
          %1291 = sbr.rel (%p1289) target = $region80
        $region79: #{_lambda_.1} parent=11 // pred_region
          %s1293 = ssub.s32 1536, 1536
          %1294 = vsyncadd [#allocation23], %s1293
          %s1295 = sshll.u32 [#allocation24], 4
          %s1296 = int_to_ptr.vmem [resolvable:$true] %s1295
          %1301 = dma.hbm_to_vmem [thread:$0]  %s35, 1536, %s1296, [#allocation23], 64, 64, 4
        $region80: #{_lambda_.1} parent=11 // pred_fallthru
          _
        // Predicated region
        $region81: #{_lambda_.1} parent=11 // pred_check
          %p1302 = pneg %p522
        $region82: #{_lambda_.1} parent=11 // pred_check_branch
          %1304 = sbr.rel (%p1302) target = $region84
        $region83: #{_lambda_.1} parent=11 // pred_region
          %s1306 = ssub.s32 16, 16
          %1307 = vsyncadd [#allocation26], %s1306
          %s1309 = sshll.u32 [#allocation25], 4
          %s1310 = int_to_ptr.vmem [resolvable:$true] %s1309
          %1312 = dma.hbm_to_vmem [thread:$0]  %s37, 16, %s1310, [#allocation26]
        $region84: #{_lambda_.1} parent=11 // pred_fallthru
          _
        // Predicated region
        $region85: #{_lambda_.1} parent=11 // pred_check
          %p1313 = pneg %p543
        $region86: #{_lambda_.1} parent=11 // pred_check_branch
          %1315 = sbr.rel (%p1313) target = $region88
        $region87: #{_lambda_.1} parent=11 // pred_region
          %s1317 = ssub.s32 512, 512
          %1318 = vsyncadd [#allocation26], %s1317
          %s1319 = sshll.u32 [#allocation27], 4
          %s1320 = int_to_ptr.vmem [resolvable:$true] %s1319
          %1325 = dma.hbm_to_vmem [thread:$0]  %s39, 512, %s1320, [#allocation26], 64, 64, 4
        $region88: #{_lambda_.1} parent=11 // pred_fallthru
          _
        // Predicated region
        $region89: #{_lambda_.1} parent=11 // pred_check
          %p1326 = pneg %p564
        $region90: #{_lambda_.1} parent=11 // pred_check_branch
          %1328 = sbr.rel (%p1326) target = $region92
        $region91: #{_lambda_.1} parent=11 // pred_region
          %s1330 = ssub.s32 3072, 3072
          %1331 = vsyncadd [#allocation29], %s1330
          %s1332 = sshll.u32 [#allocation28], 4
          %s1333 = int_to_ptr.vmem [resolvable:$true] %s1332
          %1338 = dma.hbm_to_vmem [thread:$0]  %s41, 3072, %s1333, [#allocation29], 64, 64, 4
        $region92: #{_lambda_.1} parent=11 // pred_fallthru
          _
        // Predicated region
        $region93: #{_lambda_.1} parent=11 // pred_check
          %p1339 = pneg %p585
        $region94: #{_lambda_.1} parent=11 // pred_check_branch
          %1341 = sbr.rel (%p1339) target = $region96
        $region95: #{_lambda_.1} parent=11 // pred_region
          %s1343 = ssub.s32 16, 16
          %1344 = vsyncadd [#allocation29], %s1343
          %s1346 = sshll.u32 [#allocation30], 4
          %s1347 = int_to_ptr.vmem [resolvable:$true] %s1346
          %1349 = dma.hbm_to_vmem [thread:$0]  %s43, 16, %s1347, [#allocation29]
        $region96: #{_lambda_.1} parent=11 // pred_fallthru
          _
        // Predicated region
        $region97: #{_lambda_.1} parent=11 // pred_check
          %p1350 = pneg %p606
        $region98: #{_lambda_.1} parent=11 // pred_check_branch
          %1352 = sbr.rel (%p1350) target = $region100
        $region99: #{_lambda_.1} parent=11 // pred_region
          %s1354 = ssub.s32 192, 192
          %1355 = vsyncadd [#allocation32], %s1354
          %s1356 = sshll.u32 [#allocation31], 4
          %s1357 = int_to_ptr.vmem [resolvable:$true] %s1356
          %1362 = dma.hbm_to_vmem [thread:$0]  %s45, 192, %s1357, [#allocation32], 64, 64, 4
        $region100: #{_lambda_.1} parent=11 // pred_fallthru
          _
        // Predicated region
        $region101: #{_lambda_.1} parent=11 // pred_check
          %p1363 = pneg %p627
        $region102: #{_lambda_.1} parent=11 // pred_check_branch
          %1365 = sbr.rel (%p1363) target = $region104
        $region103: #{_lambda_.1} parent=11 // pred_region
          %s1367 = ssub.s32 2048, 2048
          %1368 = vsyncadd [#allocation32], %s1367
          %s1369 = sshll.u32 [#allocation33], 4
          %s1370 = int_to_ptr.vmem [resolvable:$true] %s1369
          %1375 = dma.hbm_to_vmem [thread:$0]  %s47, 2048, %s1370, [#allocation32], 64, 64, 4
        $region104: #{_lambda_.1} parent=11 // pred_fallthru
          _
        // Predicated region
        $region105: #{_lambda_.1} parent=11 // pred_check
          %p1376 = pneg %p648
        $region106: #{_lambda_.1} parent=11 // pred_check_branch
          %1378 = sbr.rel (%p1376) target = $region108
        $region107: #{_lambda_.1} parent=11 // pred_region
          %s1380 = ssub.s32 16, 16
          %1381 = vsyncadd [#allocation35], %s1380
          %s1383 = sshll.u32 [#allocation34], 4
          %s1384 = int_to_ptr.vmem [resolvable:$true] %s1383
          %1386 = dma.hbm_to_vmem [thread:$0]  %s49, 16, %s1384, [#allocation35]
        $region108: #{_lambda_.1} parent=11 // pred_fallthru
          _
        // Predicated region
        $region109: #{_lambda_.1} parent=11 // pred_check
          %p1387 = pneg %p669
        $region110: #{_lambda_.1} parent=11 // pred_check_branch
          %1389 = sbr.rel (%p1387) target = $region112
        $region111: #{_lambda_.1} parent=11 // pred_region
          %s1391 = ssub.s32 256, 256
          %1392 = vsyncadd [#allocation35], %s1391
          %s1393 = sshll.u32 [#allocation36], 4
          %s1394 = int_to_ptr.vmem [resolvable:$true] %s1393
          %1399 = dma.hbm_to_vmem [thread:$0]  %s51, 256, %s1394, [#allocation35], 128, 128, 8
        $region112: #{_lambda_.1} parent=11 // pred_fallthru
          _
        // Predicated region
        $region113: #{_lambda_.1} parent=11 // pred_check
          %p1400 = pneg %p690
        $region114: #{_lambda_.1} parent=11 // pred_check_branch
          %1402 = sbr.rel (%p1400) target = $region116
        $region115: #{_lambda_.1} parent=11 // pred_region
          %s1404 = ssub.s32 3072, 3072
          %1405 = vsyncadd [#allocation38], %s1404
          %s1406 = sshll.u32 [#allocation37], 4
          %s1407 = int_to_ptr.vmem [resolvable:$true] %s1406
          %1412 = dma.hbm_to_vmem [thread:$0]  %s53, 3072, %s1407, [#allocation38], 64, 64, 4
        $region116: #{_lambda_.1} parent=11 // pred_fallthru
          _
        // Predicated region
        $region117: #{_lambda_.1} parent=11 // pred_check
          %p1413 = pneg %p711
        $region118: #{_lambda_.1} parent=11 // pred_check_branch
          %1415 = sbr.rel (%p1413) target = $region120
        $region119: #{_lambda_.1} parent=11 // pred_region
          %s1417 = ssub.s32 3072, 3072
          %1418 = vsyncadd [#allocation38], %s1417
          %s1419 = sshll.u32 [#allocation39], 4
          %s1420 = int_to_ptr.vmem [resolvable:$true] %s1419
          %1425 = dma.hbm_to_vmem [thread:$0]  %s55, 3072, %s1420, [#allocation38], 64, 64, 4
        $region120: #{_lambda_.1} parent=11 // pred_fallthru
          _
        // Predicated region
        $region121: #{_lambda_.1} parent=11 // pred_check
          %p1426 = pneg %p732
        $region122: #{_lambda_.1} parent=11 // pred_check_branch
          %1428 = sbr.rel (%p1426) target = $region124
        $region123: #{_lambda_.1} parent=11 // pred_region
          %s1430 = ssub.s32 16, 16
          %1431 = vsyncadd [#allocation41], %s1430
          %s1433 = sshll.u32 [#allocation40], 4
          %s1434 = int_to_ptr.vmem [resolvable:$true] %s1433
          %1436 = dma.hbm_to_vmem [thread:$0]  %s57, 16, %s1434, [#allocation41]
        $region124: #{_lambda_.1} parent=11 // pred_fallthru
          _
        // Predicated region
        $region125: #{_lambda_.1} parent=11 // pred_check
          %p1437 = pneg %p753
        $region126: #{_lambda_.1} parent=11 // pred_check_branch
          %1439 = sbr.rel (%p1437) target = $region128
        $region127: #{_lambda_.1} parent=11 // pred_region
          %s1441 = ssub.s32 1024, 1024
          %1442 = vsyncadd [#allocation41], %s1441
          %s1443 = sshll.u32 [#allocation42], 4
          %s1444 = int_to_ptr.vmem [resolvable:$true] %s1443
          %1449 = dma.hbm_to_vmem [thread:$0]  %s59, 1024, %s1444, [#allocation41], 64, 64, 4
        $region128: #{_lambda_.1} parent=11 // pred_fallthru
          _
        // Predicated region
        $region129: #{_lambda_.1} parent=11 // pred_check
          %p1450 = pneg %p774
        $region130: #{_lambda_.1} parent=11 // pred_check_branch
          %1452 = sbr.rel (%p1450) target = $region132
        $region131: #{_lambda_.1} parent=11 // pred_region
          %s1454 = ssub.s32 1024, 1024
          %1455 = vsyncadd [#allocation44], %s1454
          %s1456 = sshll.u32 [#allocation43], 4
          %s1457 = int_to_ptr.vmem [resolvable:$true] %s1456
          %1462 = dma.hbm_to_vmem [thread:$0]  %s61, 1024, %s1457, [#allocation44], 64, 64, 4
        $region132: #{_lambda_.1} parent=11 // pred_fallthru
          _
        // Predicated region
        $region133: #{_lambda_.1} parent=11 // pred_check
          %p1463 = pneg %p795
        $region134: #{_lambda_.1} parent=11 // pred_check_branch
          %1465 = sbr.rel (%p1463) target = $region136
        $region135: #{_lambda_.1} parent=11 // pred_region
          %s1467 = ssub.s32 3072, 3072
          %1468 = vsyncadd [#allocation44], %s1467
          %s1469 = sshll.u32 [#allocation45], 4
          %s1470 = int_to_ptr.vmem [resolvable:$true] %s1469
          %1475 = dma.hbm_to_vmem [thread:$0]  %s63, 3072, %s1470, [#allocation44], 64, 64, 4
        $region136: #{_lambda_.1} parent=11 // pred_fallthru
          _
        // Predicated region
        $region137: #{_lambda_.1} parent=11 // pred_check
          %p1476 = pneg %p816
        $region138: #{_lambda_.1} parent=11 // pred_check_branch
          %1478 = sbr.rel (%p1476) target = $region140
        $region139: #{_lambda_.1} parent=11 // pred_region
          %s1480 = ssub.s32 16, 16
          %1481 = vsyncadd [#allocation47], %s1480
          %s1483 = sshll.u32 [#allocation46], 4
          %s1484 = int_to_ptr.vmem [resolvable:$true] %s1483
          %1486 = dma.hbm_to_vmem [thread:$0]  %s65, 16, %s1484, [#allocation47]
        $region140: #{_lambda_.1} parent=11 // pred_fallthru
          _
        // Predicated region
        $region141: #{_lambda_.1} parent=11 // pred_check
          %p1487 = pneg %p837
        $region142: #{_lambda_.1} parent=11 // pred_check_branch
          %1489 = sbr.rel (%p1487) target = $region144
        $region143: #{_lambda_.1} parent=11 // pred_region
          %s1491 = ssub.s32 384, 384
          %1492 = vsyncadd [#allocation47], %s1491
          %s1493 = sshll.u32 [#allocation48], 4
          %s1494 = int_to_ptr.vmem [resolvable:$true] %s1493
          %1499 = dma.hbm_to_vmem [thread:$0]  %s67, 384, %s1494, [#allocation47], 128, 128, 8
        $region144: #{_lambda_.1} parent=11 // pred_fallthru
          _
        // Predicated region
        $region145: #{_lambda_.1} parent=11 // pred_check
          %p1500 = pneg %p858
        $region146: #{_lambda_.1} parent=11 // pred_check_branch
          %1502 = sbr.rel (%p1500) target = $region148
        $region147: #{_lambda_.1} parent=11 // pred_region
          %s1504 = ssub.s32 2048, 2048
          %1505 = vsyncadd [#allocation50], %s1504
          %s1506 = sshll.u32 [#allocation49], 4
          %s1507 = int_to_ptr.vmem [resolvable:$true] %s1506
          %1512 = dma.hbm_to_vmem [thread:$0]  %s69, 2048, %s1507, [#allocation50], 64, 64, 4
        $region148: #{_lambda_.1} parent=11 // pred_fallthru
          _
        // Predicated region
        $region149: #{_lambda_.1} parent=11 // pred_check
          %p1513 = pneg %p879
        $region150: #{_lambda_.1} parent=11 // pred_check_branch
          %1515 = sbr.rel (%p1513) target = $region152
        $region151: #{_lambda_.1} parent=11 // pred_region
          %s1517 = ssub.s32 16, 16
          %1518 = vsyncadd [#allocation50], %s1517
          %s1520 = sshll.u32 [#allocation51], 4
          %s1521 = int_to_ptr.vmem [resolvable:$true] %s1520
          %1523 = dma.hbm_to_vmem [thread:$0]  %s71, 16, %s1521, [#allocation50]
        $region152: #{_lambda_.1} parent=11 // pred_fallthru
          _
        // Predicated region
        $region153: #{_lambda_.1} parent=11 // pred_check
          %p1524 = pneg %p900
        $region154: #{_lambda_.1} parent=11 // pred_check_branch
          %1526 = sbr.rel (%p1524) target = $region156
        $region155: #{_lambda_.1} parent=11 // pred_region
          %s1528 = ssub.s32 512, 512
          %1529 = vsyncadd [#allocation53], %s1528
          %s1530 = sshll.u32 [#allocation52], 4
          %s1531 = int_to_ptr.vmem [resolvable:$true] %s1530
          %1536 = dma.hbm_to_vmem [thread:$0]  %s73, 512, %s1531, [#allocation53], 128, 128, 8
        $region156: #{_lambda_.1} parent=11 // pred_fallthru
          _
        // Predicated region
        $region157: #{_lambda_.1} parent=11 // pred_check
          %p1537 = pneg %p921
        $region158: #{_lambda_.1} parent=11 // pred_check_branch
          %1539 = sbr.rel (%p1537) target = $region160
        $region159: #{_lambda_.1} parent=11 // pred_region
          %s1541 = ssub.s32 3072, 3072
          %1542 = vsyncadd [#allocation53], %s1541
          %s1543 = sshll.u32 [#allocation54], 4
          %s1544 = int_to_ptr.vmem [resolvable:$true] %s1543
          %1549 = dma.hbm_to_vmem [thread:$0]  %s75, 3072, %s1544, [#allocation53], 64, 64, 4
        $region160: #{_lambda_.1} parent=11 // pred_fallthru
          _
        // Predicated region
        $region161: #{_lambda_.1} parent=11 // pred_check
          %p1550 = pneg %p942
        $region162: #{_lambda_.1} parent=11 // pred_check_branch
          %1552 = sbr.rel (%p1550) target = $region164
        $region163: #{_lambda_.1} parent=11 // pred_region
          %s1554 = ssub.s32 3072, 3072
          %1555 = vsyncadd [#allocation56], %s1554
          %s1556 = sshll.u32 [#allocation55], 4
          %s1557 = int_to_ptr.vmem [resolvable:$true] %s1556
          %1562 = dma.hbm_to_vmem [thread:$0]  %s77, 3072, %s1557, [#allocation56], 64, 64, 4
        $region164: #{_lambda_.1} parent=11 // pred_fallthru
          _
        // Predicated region
        $region165: #{_lambda_.1} parent=11 // pred_check
          %p1563 = pneg %p963
        $region166: #{_lambda_.1} parent=11 // pred_check_branch
          %1565 = sbr.rel (%p1563) target = $region168
        $region167: #{_lambda_.1} parent=11 // pred_region
          %s1567 = ssub.s32 16, 16
          %1568 = vsyncadd [#allocation56], %s1567
          %s1570 = sshll.u32 [#allocation57], 4
          %s1571 = int_to_ptr.vmem [resolvable:$true] %s1570
          %1573 = dma.hbm_to_vmem [thread:$0]  %s79, 16, %s1571, [#allocation56]
        $region168: #{_lambda_.1} parent=11 // pred_fallthru
          _
        // Predicated region
        $region169: #{_lambda_.1} parent=11 // pred_check
          %p1574 = pneg %p984
        $region170: #{_lambda_.1} parent=11 // pred_check_branch
          %1576 = sbr.rel (%p1574) target = $region172
        $region171: #{_lambda_.1} parent=11 // pred_region
          %s1578 = ssub.s32 1024, 1024
          %1579 = vsyncadd [#allocation59], %s1578
          %s1580 = sshll.u32 [#allocation58], 4
          %s1581 = int_to_ptr.vmem [resolvable:$true] %s1580
          %1586 = dma.hbm_to_vmem [thread:$0]  %s81, 1024, %s1581, [#allocation59], 64, 64, 4
        $region172: #{_lambda_.1} parent=11 // pred_fallthru
          _
        // Predicated region
        $region173: #{_lambda_.1} parent=11 // pred_check
          %p1587 = pneg %p1005
        $region174: #{_lambda_.1} parent=11 // pred_check_branch
          %1589 = sbr.rel (%p1587) target = $region176
        $region175: #{_lambda_.1} parent=11 // pred_region
          _
        $region176: #{_lambda_.1} parent=11 // pred_fallthru
          _
        // Predicated region
        $region177: #{_lambda_.1} parent=11 // pred_check
          %p1590 = pneg %p1026
        $region178: #{_lambda_.1} parent=11 // pred_check_branch
          %1592 = sbr.rel (%p1590) target = $region180
        $region179: #{_lambda_.1} parent=11 // pred_region
          %s1594 = ssub.s32 3072, 3072
          %1595 = vsyncadd [#allocation59], %s1594
          %s1596 = sshll.u32 [#allocation60], 4
          %s1597 = int_to_ptr.vmem [resolvable:$true] %s1596
          %1602 = dma.hbm_to_vmem [thread:$0]  %s85, 3072, %s1597, [#allocation59], 64, 64, 4
        $region180: #{_lambda_.1} parent=11 // pred_fallthru
          _
        // Predicated region
        $region181: #{_lambda_.1} parent=11 // pred_check
          %p1603 = pneg %p1047
        $region182: #{_lambda_.1} parent=11 // pred_check_branch
          %1605 = sbr.rel (%p1603) target = $region184
        $region183: #{_lambda_.1} parent=11 // pred_region
          _
        $region184: #{_lambda_.1} parent=11 // pred_fallthru
          _
        // Predicated region
        $region185: #{_lambda_.1} parent=11 // pred_check
          %p1606 = pneg %p1068
        $region186: #{_lambda_.1} parent=11 // pred_check_branch
          %1608 = sbr.rel (%p1606) target = $region188
        $region187: #{_lambda_.1} parent=11 // pred_region
          %s1610 = ssub.s32 768, 768
          %1611 = vsyncadd [#allocation62], %s1610
          %s1612 = sshll.u32 [#allocation61], 4
          %s1613 = int_to_ptr.vmem [resolvable:$true] %s1612
          %1618 = dma.hbm_to_vmem [thread:$0]  %s89, 768, %s1613, [#allocation62], 128, 128, 8
        $region188: #{_lambda_.1} parent=11 // pred_fallthru
          _
      $region12: #{_lambda_.1} parent=5 // pred_fallthru
        _
      %p1619 = scmp.lt.s32.totalorder %s118, 2
      // Predicated region
      $region189: #{_lambda_.1} parent=5 // pred_check
        %p1620 = pneg %p1619
      $region190: #{_lambda_.1} parent=5 // pred_check_branch
        %1622 = sbr.rel (%p1620) target = $region192
      $region191: #{_lambda_.1} parent=5 // pred_region
        // Predicated region
        $region193: #{_lambda_.1} parent=191 // pred_check
          %p1623 = pneg %p138
        $region194: #{_lambda_.1} parent=191 // pred_check_branch
          %1625 = sbr.rel (%p1623) target = $region196
        $region195: #{_lambda_.1} parent=191 // pred_region
          %p1626 = scmp.lt.s32.totalorder %s118, 1
          %s1627 = scalar_select %p1626, %s118, 1
          %s1628 = smul.addr %s1627, 2
          %s1629 = smul.addr %s1628, 4
          %s1630 = scalar_lea.vmem %s1, %s1629
        $region196: #{_lambda_.1} parent=191 // pred_fallthru
          _
      $region192: #{_lambda_.1} parent=5 // pred_fallthru
        _
      %p1631 = scmp.le.s32.totalorder 1, %s118
      %p1632 = scmp.lt.s32.totalorder %s118, 3
      %p1633 = pnand %p1631, %p1632
      %p1634 = pneg %p1633
      // Predicated region
      $region197: #{_lambda_.1} parent=5 // pred_check
        _
      $region198: #{_lambda_.1} parent=5 // pred_check_branch
        %1636 = sbr.rel (%p1633) target = $region200
      $region199: #{_lambda_.1} parent=5 // pred_region
        %s1637 = ssub.s32 %s118, 1
        // Predicated region
        $region201: #{_lambda_.1} parent=199 // pred_check
          %p1638 = pneg %p165
        $region202: #{_lambda_.1} parent=199 // pred_check_branch
          %1640 = sbr.rel (%p1638) target = $region204
        $region203: #{_lambda_.1} parent=199 // pred_region
          %1641 = dma.done [#allocation3], 1536
        $region204: #{_lambda_.1} parent=199 // pred_fallthru
          _
        // Predicated region
        $region205: #{_lambda_.1} parent=199 // pred_check
          %p1642 = pneg %p186
        $region206: #{_lambda_.1} parent=199 // pred_check_branch
          %1644 = sbr.rel (%p1642) target = $region208
        $region207: #{_lambda_.1} parent=199 // pred_region
          %1645 = dma.done [#allocation5], 16
        $region208: #{_lambda_.1} parent=199 // pred_fallthru
          _
        // Predicated region
        $region209: #{_lambda_.1} parent=199 // pred_check
          %p1646 = pneg %p207
        $region210: #{_lambda_.1} parent=199 // pred_check_branch
          %1648 = sbr.rel (%p1646) target = $region212
        $region211: #{_lambda_.1} parent=199 // pred_region
          %1649 = dma.done [#allocation5], 512
        $region212: #{_lambda_.1} parent=199 // pred_fallthru
          _
        // Predicated region
        $region213: #{_lambda_.1} parent=199 // pred_check
          %p1650 = pneg %p228
        $region214: #{_lambda_.1} parent=199 // pred_check_branch
          %1652 = sbr.rel (%p1650) target = $region216
        $region215: #{_lambda_.1} parent=199 // pred_region
          %1653 = dma.done [#allocation8], 3072
        $region216: #{_lambda_.1} parent=199 // pred_fallthru
          _
        // Predicated region
        $region217: #{_lambda_.1} parent=199 // pred_check
          %p1654 = pneg %p249
        $region218: #{_lambda_.1} parent=199 // pred_check_branch
          %1656 = sbr.rel (%p1654) target = $region220
        $region219: #{_lambda_.1} parent=199 // pred_region
          %1657 = dma.done [#allocation8], 16
        $region220: #{_lambda_.1} parent=199 // pred_fallthru
          _
        // Predicated region
        $region221: #{_lambda_.1} parent=199 // pred_check
          %p1658 = pneg %p270
        $region222: #{_lambda_.1} parent=199 // pred_check_branch
          %1660 = sbr.rel (%p1658) target = $region224
        $region223: #{_lambda_.1} parent=199 // pred_region
          %1661 = dma.done [#allocation11], 768
        $region224: #{_lambda_.1} parent=199 // pred_fallthru
          _
        // Predicated region
        $region225: #{_lambda_.1} parent=199 // pred_check
          %p1662 = pneg %p312
        $region226: #{_lambda_.1} parent=199 // pred_check_branch
          %1664 = sbr.rel (%p1662) target = $region228
        $region227: #{_lambda_.1} parent=199 // pred_region
          %1665 = dma.done [#allocation11], 256
        $region228: #{_lambda_.1} parent=199 // pred_fallthru
          _
        // Predicated region
        $region229: #{_lambda_.1} parent=199 // pred_check
          %p1666 = pneg %p333
        $region230: #{_lambda_.1} parent=199 // pred_check_branch
          %1668 = sbr.rel (%p1666) target = $region232
        $region231: #{_lambda_.1} parent=199 // pred_region
          %1669 = dma.done [#allocation14], 1536
        $region232: #{_lambda_.1} parent=199 // pred_fallthru
          _
        // Predicated region
        $region233: #{_lambda_.1} parent=199 // pred_check
          %p1670 = pneg %p354
        $region234: #{_lambda_.1} parent=199 // pred_check_branch
          %1672 = sbr.rel (%p1670) target = $region236
        $region235: #{_lambda_.1} parent=199 // pred_region
          %1673 = dma.done [#allocation14], 16
        $region236: #{_lambda_.1} parent=199 // pred_fallthru
          _
        // Predicated region
        $region237: #{_lambda_.1} parent=199 // pred_check
          %p1674 = pneg %p375
        $region238: #{_lambda_.1} parent=199 // pred_check_branch
          %1676 = sbr.rel (%p1674) target = $region240
        $region239: #{_lambda_.1} parent=199 // pred_region
          %1677 = dma.done [#allocation17], 512
        $region240: #{_lambda_.1} parent=199 // pred_fallthru
          _
        // Predicated region
        $region241: #{_lambda_.1} parent=199 // pred_check
          %p1678 = pneg %p396
        $region242: #{_lambda_.1} parent=199 // pred_check_branch
          %1680 = sbr.rel (%p1678) target = $region244
        $region243: #{_lambda_.1} parent=199 // pred_region
          %1681 = dma.done [#allocation17], 3072
        $region244: #{_lambda_.1} parent=199 // pred_fallthru
          _
        // Predicated region
        $region245: #{_lambda_.1} parent=199 // pred_check
          %p1682 = pneg %p417
        $region246: #{_lambda_.1} parent=199 // pred_check_branch
          %1684 = sbr.rel (%p1682) target = $region248
        $region247: #{_lambda_.1} parent=199 // pred_region
          %1685 = dma.done [#allocation20], 16
        $region248: #{_lambda_.1} parent=199 // pred_fallthru
          _
        // Predicated region
        $region249: #{_lambda_.1} parent=199 // pred_check
          %p1686 = pneg %p438
        $region250: #{_lambda_.1} parent=199 // pred_check_branch
          %1688 = sbr.rel (%p1686) target = $region252
        $region251: #{_lambda_.1} parent=199 // pred_region
          %1689 = dma.done [#allocation20], 384
        $region252: #{_lambda_.1} parent=199 // pred_fallthru
          _
        // Predicated region
        $region253: #{_lambda_.1} parent=199 // pred_check
          %p1690 = pneg %p480
        $region254: #{_lambda_.1} parent=199 // pred_check_branch
          %1692 = sbr.rel (%p1690) target = $region256
        $region255: #{_lambda_.1} parent=199 // pred_region
          %1693 = dma.done [#allocation23], 128
        $region256: #{_lambda_.1} parent=199 // pred_fallthru
          _
        // Predicated region
        $region257: #{_lambda_.1} parent=199 // pred_check
          %p1694 = pneg %p501
        $region258: #{_lambda_.1} parent=199 // pred_check_branch
          %1696 = sbr.rel (%p1694) target = $region260
        $region259: #{_lambda_.1} parent=199 // pred_region
          %1697 = dma.done [#allocation23], 1536
        $region260: #{_lambda_.1} parent=199 // pred_fallthru
          _
        // Predicated region
        $region261: #{_lambda_.1} parent=199 // pred_check
          %p1698 = pneg %p522
        $region262: #{_lambda_.1} parent=199 // pred_check_branch
          %1700 = sbr.rel (%p1698) target = $region264
        $region263: #{_lambda_.1} parent=199 // pred_region
          %1701 = dma.done [#allocation26], 16
        $region264: #{_lambda_.1} parent=199 // pred_fallthru
          _
        // Predicated region
        $region265: #{_lambda_.1} parent=199 // pred_check
          %p1702 = pneg %p543
        $region266: #{_lambda_.1} parent=199 // pred_check_branch
          %1704 = sbr.rel (%p1702) target = $region268
        $region267: #{_lambda_.1} parent=199 // pred_region
          %1705 = dma.done [#allocation26], 512
        $region268: #{_lambda_.1} parent=199 // pred_fallthru
          _
        // Predicated region
        $region269: #{_lambda_.1} parent=199 // pred_check
          %p1706 = pneg %p564
        $region270: #{_lambda_.1} parent=199 // pred_check_branch
          %1708 = sbr.rel (%p1706) target = $region272
        $region271: #{_lambda_.1} parent=199 // pred_region
          %1709 = dma.done [#allocation29], 3072
        $region272: #{_lambda_.1} parent=199 // pred_fallthru
          _
        // Predicated region
        $region273: #{_lambda_.1} parent=199 // pred_check
          %p1710 = pneg %p585
        $region274: #{_lambda_.1} parent=199 // pred_check_branch
          %1712 = sbr.rel (%p1710) target = $region276
        $region275: #{_lambda_.1} parent=199 // pred_region
          %1713 = dma.done [#allocation29], 16
        $region276: #{_lambda_.1} parent=199 // pred_fallthru
          _
        // Predicated region
        $region277: #{_lambda_.1} parent=199 // pred_check
          %p1714 = pneg %p606
        $region278: #{_lambda_.1} parent=199 // pred_check_branch
          %1716 = sbr.rel (%p1714) target = $region280
        $region279: #{_lambda_.1} parent=199 // pred_region
          %1717 = dma.done [#allocation32], 192
        $region280: #{_lambda_.1} parent=199 // pred_fallthru
          _
        // Predicated region
        $region281: #{_lambda_.1} parent=199 // pred_check
          %p1718 = pneg %p627
        $region282: #{_lambda_.1} parent=199 // pred_check_branch
          %1720 = sbr.rel (%p1718) target = $region284
        $region283: #{_lambda_.1} parent=199 // pred_region
          %1721 = dma.done [#allocation32], 2048
        $region284: #{_lambda_.1} parent=199 // pred_fallthru
          _
        // Predicated region
        $region285: #{_lambda_.1} parent=199 // pred_check
          %p1722 = pneg %p648
        $region286: #{_lambda_.1} parent=199 // pred_check_branch
          %1724 = sbr.rel (%p1722) target = $region288
        $region287: #{_lambda_.1} parent=199 // pred_region
          %1725 = dma.done [#allocation35], 16
        $region288: #{_lambda_.1} parent=199 // pred_fallthru
          _
        // Predicated region
        $region289: #{_lambda_.1} parent=199 // pred_check
          %p1726 = pneg %p669
        $region290: #{_lambda_.1} parent=199 // pred_check_branch
          %1728 = sbr.rel (%p1726) target = $region292
        $region291: #{_lambda_.1} parent=199 // pred_region
          %1729 = dma.done [#allocation35], 256
        $region292: #{_lambda_.1} parent=199 // pred_fallthru
          _
        // Predicated region
        $region293: #{_lambda_.1} parent=199 // pred_check
          %p1730 = pneg %p690
        $region294: #{_lambda_.1} parent=199 // pred_check_branch
          %1732 = sbr.rel (%p1730) target = $region296
        $region295: #{_lambda_.1} parent=199 // pred_region
          %1733 = dma.done [#allocation38], 3072
        $region296: #{_lambda_.1} parent=199 // pred_fallthru
          _
        // Predicated region
        $region297: #{_lambda_.1} parent=199 // pred_check
          %p1734 = pneg %p711
        $region298: #{_lambda_.1} parent=199 // pred_check_branch
          %1736 = sbr.rel (%p1734) target = $region300
        $region299: #{_lambda_.1} parent=199 // pred_region
          %1737 = dma.done [#allocation38], 3072
        $region300: #{_lambda_.1} parent=199 // pred_fallthru
          _
        // Predicated region
        $region301: #{_lambda_.1} parent=199 // pred_check
          %p1738 = pneg %p732
        $region302: #{_lambda_.1} parent=199 // pred_check_branch
          %1740 = sbr.rel (%p1738) target = $region304
        $region303: #{_lambda_.1} parent=199 // pred_region
          %1741 = dma.done [#allocation41], 16
        $region304: #{_lambda_.1} parent=199 // pred_fallthru
          _
        // Predicated region
        $region305: #{_lambda_.1} parent=199 // pred_check
          %p1742 = pneg %p753
        $region306: #{_lambda_.1} parent=199 // pred_check_branch
          %1744 = sbr.rel (%p1742) target = $region308
        $region307: #{_lambda_.1} parent=199 // pred_region
          %1745 = dma.done [#allocation41], 1024
        $region308: #{_lambda_.1} parent=199 // pred_fallthru
          _
        // Predicated region
        $region309: #{_lambda_.1} parent=199 // pred_check
          %p1746 = pneg %p774
        $region310: #{_lambda_.1} parent=199 // pred_check_branch
          %1748 = sbr.rel (%p1746) target = $region312
        $region311: #{_lambda_.1} parent=199 // pred_region
          %1749 = dma.done [#allocation44], 1024
        $region312: #{_lambda_.1} parent=199 // pred_fallthru
          _
        // Predicated region
        $region313: #{_lambda_.1} parent=199 // pred_check
          %p1750 = pneg %p795
        $region314: #{_lambda_.1} parent=199 // pred_check_branch
          %1752 = sbr.rel (%p1750) target = $region316
        $region315: #{_lambda_.1} parent=199 // pred_region
          %1753 = dma.done [#allocation44], 3072
        $region316: #{_lambda_.1} parent=199 // pred_fallthru
          _
        // Predicated region
        $region317: #{_lambda_.1} parent=199 // pred_check
          %p1754 = pneg %p816
        $region318: #{_lambda_.1} parent=199 // pred_check_branch
          %1756 = sbr.rel (%p1754) target = $region320
        $region319: #{_lambda_.1} parent=199 // pred_region
          %1757 = dma.done [#allocation47], 16
        $region320: #{_lambda_.1} parent=199 // pred_fallthru
          _
        // Predicated region
        $region321: #{_lambda_.1} parent=199 // pred_check
          %p1758 = pneg %p837
        $region322: #{_lambda_.1} parent=199 // pred_check_branch
          %1760 = sbr.rel (%p1758) target = $region324
        $region323: #{_lambda_.1} parent=199 // pred_region
          %1761 = dma.done [#allocation47], 384
        $region324: #{_lambda_.1} parent=199 // pred_fallthru
          _
        // Predicated region
        $region325: #{_lambda_.1} parent=199 // pred_check
          %p1762 = pneg %p858
        $region326: #{_lambda_.1} parent=199 // pred_check_branch
          %1764 = sbr.rel (%p1762) target = $region328
        $region327: #{_lambda_.1} parent=199 // pred_region
          %1765 = dma.done [#allocation50], 2048
        $region328: #{_lambda_.1} parent=199 // pred_fallthru
          _
        // Predicated region
        $region329: #{_lambda_.1} parent=199 // pred_check
          %p1766 = pneg %p879
        $region330: #{_lambda_.1} parent=199 // pred_check_branch
          %1768 = sbr.rel (%p1766) target = $region332
        $region331: #{_lambda_.1} parent=199 // pred_region
          %1769 = dma.done [#allocation50], 16
        $region332: #{_lambda_.1} parent=199 // pred_fallthru
          _
        // Predicated region
        $region333: #{_lambda_.1} parent=199 // pred_check
          %p1770 = pneg %p900
        $region334: #{_lambda_.1} parent=199 // pred_check_branch
          %1772 = sbr.rel (%p1770) target = $region336
        $region335: #{_lambda_.1} parent=199 // pred_region
          %1773 = dma.done [#allocation53], 512
        $region336: #{_lambda_.1} parent=199 // pred_fallthru
          _
        // Predicated region
        $region337: #{_lambda_.1} parent=199 // pred_check
          %p1774 = pneg %p921
        $region338: #{_lambda_.1} parent=199 // pred_check_branch
          %1776 = sbr.rel (%p1774) target = $region340
        $region339: #{_lambda_.1} parent=199 // pred_region
          %1777 = dma.done [#allocation53], 3072
        $region340: #{_lambda_.1} parent=199 // pred_fallthru
          _
        // Predicated region
        $region341: #{_lambda_.1} parent=199 // pred_check
          %p1778 = pneg %p942
        $region342: #{_lambda_.1} parent=199 // pred_check_branch
          %1780 = sbr.rel (%p1778) target = $region344
        $region343: #{_lambda_.1} parent=199 // pred_region
          %1781 = dma.done [#allocation56], 3072
        $region344: #{_lambda_.1} parent=199 // pred_fallthru
          _
        // Predicated region
        $region345: #{_lambda_.1} parent=199 // pred_check
          %p1782 = pneg %p963
        $region346: #{_lambda_.1} parent=199 // pred_check_branch
          %1784 = sbr.rel (%p1782) target = $region348
        $region347: #{_lambda_.1} parent=199 // pred_region
          %1785 = dma.done [#allocation56], 16
        $region348: #{_lambda_.1} parent=199 // pred_fallthru
          _
        // Predicated region
        $region349: #{_lambda_.1} parent=199 // pred_check
          %p1786 = pneg %p984
        $region350: #{_lambda_.1} parent=199 // pred_check_branch
          %1788 = sbr.rel (%p1786) target = $region352
        $region351: #{_lambda_.1} parent=199 // pred_region
          %1789 = dma.done [#allocation59], 1024
        $region352: #{_lambda_.1} parent=199 // pred_fallthru
          _
        // Predicated region
        $region353: #{_lambda_.1} parent=199 // pred_check
          %p1790 = pneg %p1026
        $region354: #{_lambda_.1} parent=199 // pred_check_branch
          %1792 = sbr.rel (%p1790) target = $region356
        $region355: #{_lambda_.1} parent=199 // pred_region
          %1793 = dma.done [#allocation59], 3072
        $region356: #{_lambda_.1} parent=199 // pred_fallthru
          _
        // Predicated region
        $region357: #{_lambda_.1} parent=199 // pred_check
          %p1794 = pneg %p1068
        $region358: #{_lambda_.1} parent=199 // pred_check_branch
          %1796 = sbr.rel (%p1794) target = $region360
        $region359: #{_lambda_.1} parent=199 // pred_region
          %1797 = dma.done [#allocation62], 768
        $region360: #{_lambda_.1} parent=199 // pred_fallthru
          _
        %p1798 = scmp.lt.s32.totalorder %s123, 1
        %s1799 = scalar_select %p1798, %s123, 1
        %s1800 = smul.addr %s1799, 2
        %s1801 = smul.addr %s1800, 4
        %s1802 = scalar_lea.vmem %s1, %s1801
        %p1803 = pneg %p144
        %p1804 = pneg %p141
        %p1805 = pneg %p165
        %p1806 = pneg %p162
        %p1807 = pneg %p186
        %p1808 = pneg %p183
        %p1809 = pneg %p207
        %p1810 = pneg %p204
        %p1811 = pneg %p228
        %p1812 = pneg %p225
        %p1813 = pneg %p249
        %p1814 = pneg %p246
        %p1815 = pneg %p270
        %p1816 = pneg %p267
        %p1817 = pneg %p291
        %p1818 = pneg %p288
        %p1819 = pneg %p312
        %p1820 = pneg %p309
        %p1821 = pneg %p333
        %p1822 = pneg %p330
        %p1823 = pneg %p354
        %p1824 = pneg %p351
        %p1825 = pneg %p375
        %p1826 = pneg %p372
        %p1827 = pneg %p396
        %p1828 = pneg %p393
        %p1829 = pneg %p417
        %p1830 = pneg %p414
        %p1831 = pneg %p438
        %p1832 = pneg %p435
        %p1833 = pneg %p459
        %p1834 = pneg %p456
        %p1835 = pneg %p480
        %p1836 = pneg %p477
        %p1837 = pneg %p501
        %p1838 = pneg %p498
        %p1839 = pneg %p522
        %p1840 = pneg %p519
        %p1841 = pneg %p543
        %p1842 = pneg %p540
        %p1843 = pneg %p564
        %p1844 = pneg %p561
        %p1845 = pneg %p585
        %p1846 = pneg %p582
        %p1847 = pneg %p606
        %p1848 = pneg %p603
        %p1849 = pneg %p627
        %p1850 = pneg %p624
        %p1851 = pneg %p648
        %p1852 = pneg %p645
        %p1853 = pneg %p669
        %p1854 = pneg %p666
        %p1855 = pneg %p690
        %p1856 = pneg %p687
        %p1857 = pneg %p711
        %p1858 = pneg %p708
        %p1859 = pneg %p732
        %p1860 = pneg %p729
        %p1861 = pneg %p753
        %p1862 = pneg %p750
        %p1863 = pneg %p774
        %p1864 = pneg %p771
        %p1865 = pneg %p795
        %p1866 = pneg %p792
        %p1867 = pneg %p816
        %p1868 = pneg %p813
        %p1869 = pneg %p837
        %p1870 = pneg %p834
        %p1871 = pneg %p858
        %p1872 = pneg %p855
        %p1873 = pneg %p879
        %p1874 = pneg %p876
        %p1875 = pneg %p900
        %p1876 = pneg %p897
        %p1877 = pneg %p921
        %p1878 = pneg %p918
        %p1879 = pneg %p942
        %p1880 = pneg %p939
        %p1881 = pneg %p963
        %p1882 = pneg %p960
        %p1883 = pneg %p984
        %p1884 = pneg %p981
        %p1885 = pneg %p1005
        %p1886 = pneg %p1002
        %p1887 = pneg %p1026
        %p1888 = pneg %p1023
        %p1889 = pneg %p1047
        %p1890 = pneg %p1044
        %p1891 = pneg %p1068
        %p1892 = pneg %p1065
        %p1893 = pneg %p1094
        %p1894 = pneg %p1091
        %p1895 = scmp.lt.s32.totalorder %s123, 1
        %s1896 = scalar_select %p1895, %s123, 1
        %s1897 = smul.addr %s1896, 2
        %s1898 = smul.addr %s1897, 8
        %s1899 = scalar_lea.vmem %s91, %s1898
        %p1900 = scmp.lt.s32.totalorder %s123, 1
        %s1901 = scalar_select %p1900, %s123, 1
        %s1902 = smul.addr %s1901, 2
        %s1903 = smul.addr %s1902, 4
        %s1904 = scalar_lea.vmem %s1, %s1903
        %p1905 = scmp.lt.s32.totalorder %s123, 1
        %s1906 = scalar_select %p1905, %s123, 1
        %s1907 = smul.addr %s1906, 2
        %s1908 = smul.addr %s1907, 8
        %s1909 = scalar_lea.vmem %s91, %s1908
        %v1911 = vld [vmem:[%s1904] sm:$0xf]
        %v1912 = vld [vmem:[%s1904 + $0x4] sm:$0xf]
        %v1913 = vld [vmem:[#allocation2] sm:$0xf]
        %v1914 = vld [vmem:[#allocation2 + $0x4] sm:$0xf]
        %v1915 = vld [vmem:[#allocation2 + $0x8] sm:$0xf]
        %v1916 = vld [vmem:[#allocation2 + $0xc] sm:$0xf]
        %v1917 = vld [vmem:[#allocation2 + $0x10] sm:$0xf]
        %v1918 = vld [vmem:[#allocation2 + $0x14] sm:$0xf]
        %v1919 = vld [vmem:[#allocation2 + $0x18] sm:$0xf]
        %v1920 = vld [vmem:[#allocation2 + $0x1c] sm:$0xf]
        %v1923 = vunpack.c.l.b16 %v1911
        %v1924 = vunpack.c.l.b16 %v1912
        %v1925 = vpack.c.b16 %v1924, %v1923
        %v1934 = vunpack.c.l.b16 %v1913
        %v1935 = vunpack.c.l.b16 %v1914
        %v1936 = vunpack.c.l.b16 %v1915
        %v1937 = vunpack.c.l.b16 %v1916
        %v1938 = vunpack.c.l.b16 %v1917
        %v1939 = vunpack.c.l.b16 %v1918
        %v1940 = vunpack.c.l.b16 %v1919
        %v1941 = vunpack.c.l.b16 %v1920
        %v1942 = vpack.c.b16 %v1935, %v1934
        %v1943 = vpack.c.b16 %v1937, %v1936
        %v1944 = vpack.c.b16 %v1939, %v1938
        %v1945 = vpack.c.b16 %v1941, %v1940
        %vm1950 = vcmask 523264
        %v1952 = vsel %vm1950, %v1925, 0
        %1954 = vmatprep.subr.bf16.mxu0 0
        %1955 = vmatpush1.bf16.msra.mxu0 %v1942
        %1956 = vmatprep.subr.bf16.mxu0 0
        %1957 = vmatpush1.bf16.msra.mxu0 %v1943
        %1958 = vmatprep.subr.bf16.mxu0 0
        %1959 = vmatpush1.bf16.msra.mxu0 %v1944
        %1960 = vmatprep.subr.bf16.mxu0 0
        %1961 = vmatpush1.bf16.msra.mxu0 %v1945
        %1962 = vmatprep.subr.bf16.mxu0 0
        %1963 = vmatpush1.bf16.msra.mxu0 0
        %1964 = vmatprep.subr.bf16.mxu0 0
        %1965 = vmatpush1.bf16.msra.mxu0 0
        %1966 = vmatprep.subr.bf16.mxu0 0
        %1967 = vmatpush1.bf16.msra.mxu0 0
        %1968 = vmatprep.subr.bf16.mxu0 0
        %1969 = vmatpush1.bf16.msra.mxu0 0
        %1970 = vmatprep.subr.bf16.mxu0 0
        %1971 = vmatpush1.bf16.msra.mxu0 0
        %1972 = vmatprep.subr.bf16.mxu0 0
        %1973 = vmatpush1.bf16.msra.mxu0 0
        %1974 = vmatprep.subr.bf16.mxu0 0
        %1975 = vmatpush1.bf16.msra.mxu0 0
        %1976 = vmatprep.subr.bf16.mxu0 0
        %1977 = vmatpush1.bf16.msra.mxu0 0
        %1978 = vmatprep.subr.bf16.mxu0 0
        %1979 = vmatpush1.bf16.msra.mxu0 0
        %1980 = vmatprep.subr.bf16.mxu0 0
        %1981 = vmatpush1.bf16.msra.mxu0 0
        %1982 = vmatprep.subr.bf16.mxu0 0
        %1983 = vmatpush1.bf16.msra.mxu0 0
        %1984 = vmatprep.subr.bf16.mxu0 0
        %1985 = vmatpush1.bf16.msra.mxu0 0
        %1986 = vmatprep.mubr.bf16.mxu0 0
        %1987 = vmatmul.mubr.bf16.gmra.mrb[0].mxu0 %v1952
        %v1988 = vpop.f32.mrb[0].mxu0
        %v1989 = vadd.f32 0.0, %v1988
        %v1990 = vpop.f32.mrb[0].mxu0
        %v1991 = vpop.f32.mrb[0].mxu0
        %v1992 = vadd.f32 0.0, %v1991
        %v1993 = vpop.f32.mrb[0].mxu0
        %1994 = vdwg.mxu0
        %v1995 = vld [vmem:[#allocation10] sm:$0xff]
        %v1996 = vld [vmem:[#allocation10 + $0x8] sm:$0xff]
        %s1997 = scalar_lea.vmem [#allocation2], 32
        %v1998 = vld [vmem:[%s1997] sm:$0xf]
        %v1999 = vld [vmem:[%s1997 + $0x4] sm:$0xf]
        %v2000 = vld [vmem:[%s1997 + $0x8] sm:$0xf]
        %v2001 = vld [vmem:[%s1997 + $0xc] sm:$0xf]
        %v2002 = vld [vmem:[%s1997 + $0x10] sm:$0xf]
        %v2003 = vld [vmem:[%s1997 + $0x14] sm:$0xf]
        %v2004 = vld [vmem:[%s1997 + $0x18] sm:$0xf]
        %v2005 = vld [vmem:[%s1997 + $0x1c] sm:$0xf]
        %v2014 = vunpack.c.l.b16 %v1998
        %v2015 = vunpack.c.l.b16 %v1999
        %v2016 = vunpack.c.l.b16 %v2000
        %v2017 = vunpack.c.l.b16 %v2001
        %v2018 = vunpack.c.l.b16 %v2002
        %v2019 = vunpack.c.l.b16 %v2003
        %v2020 = vunpack.c.l.b16 %v2004
        %v2021 = vunpack.c.l.b16 %v2005
        %v2022 = vpack.c.b16 %v2015, %v2014
        %v2023 = vpack.c.b16 %v2017, %v2016
        %v2024 = vpack.c.b16 %v2019, %v2018
        %v2025 = vpack.c.b16 %v2021, %v2020
        %2030 = vmatprep.subr.bf16.mxu0 0
        %2031 = vmatpush1.bf16.msra.mxu0 %v2022
        %2032 = vmatprep.subr.bf16.mxu0 0
        %2033 = vmatpush1.bf16.msra.mxu0 %v2023
        %2034 = vmatprep.subr.bf16.mxu0 0
        %2035 = vmatpush1.bf16.msra.mxu0 %v2024
        %2036 = vmatprep.subr.bf16.mxu0 0
        %2037 = vmatpush1.bf16.msra.mxu0 %v2025
        %2038 = vmatprep.subr.bf16.mxu0 0
        %2039 = vmatpush1.bf16.msra.mxu0 0
        %2040 = vmatprep.subr.bf16.mxu0 0
        %2041 = vmatpush1.bf16.msra.mxu0 0
        %2042 = vmatprep.subr.bf16.mxu0 0
        %2043 = vmatpush1.bf16.msra.mxu0 0
        %2044 = vmatprep.subr.bf16.mxu0 0
        %2045 = vmatpush1.bf16.msra.mxu0 0
        %2046 = vmatprep.subr.bf16.mxu0 0
        %2047 = vmatpush1.bf16.msra.mxu0 0
        %2048 = vmatprep.subr.bf16.mxu0 0
        %2049 = vmatpush1.bf16.msra.mxu0 0
        %2050 = vmatprep.subr.bf16.mxu0 0
        %2051 = vmatpush1.bf16.msra.mxu0 0
        %2052 = vmatprep.subr.bf16.mxu0 0
        %2053 = vmatpush1.bf16.msra.mxu0 0
        %2054 = vmatprep.subr.bf16.mxu0 0
        %2055 = vmatpush1.bf16.msra.mxu0 0
        %2056 = vmatprep.subr.bf16.mxu0 0
        %2057 = vmatpush1.bf16.msra.mxu0 0
        %2058 = vmatprep.subr.bf16.mxu0 0
        %2059 = vmatpush1.bf16.msra.mxu0 0
        %2060 = vmatprep.subr.bf16.mxu0 0
        %2061 = vmatpush1.bf16.msra.mxu0 0
        %2062 = vmatprep.mubr.bf16.mxu0 0
        %2063 = vmatmul.mubr.bf16.gmra.mrb[0].mxu0 %v1952
        %v2064 = vpop.f32.mrb[0].mxu0
        %v2065 = vadd.f32 0.0, %v2064
        %v2066 = vpop.f32.mrb[0].mxu0
        %v2067 = vpop.f32.mrb[0].mxu0
        %v2068 = vadd.f32 0.0, %v2067
        %v2069 = vpop.f32.mrb[0].mxu0
        %2070 = vdwg.mxu0
        %vm2071 = vcmask 130048
        %v2073 = vsel %vm2071, %v1995, 0
        %v2076 = vsel %vm2071, %v1996, 0
        %2078 = vmatprep.subr.mxu0 0.0
        %2079 = vmatpush1.msra.mxu0 %v1989
        %2080 = vmatprep.subr.mxu0 0.0
        %2081 = vmatpush1.msra.mxu0 %v1992
        %2082 = vmatprep.subr.mxu0 0.0
        %2083 = vmatpush1.msra.mxu0 0.0
        %2084 = vmatprep.subr.mxu0 0.0
        %2085 = vmatpush1.msra.mxu0 0.0
        %2086 = vmatprep.subr.mxu0 0.0
        %2087 = vmatpush1.msra.mxu0 0.0
        %2088 = vmatprep.subr.mxu0 0.0
        %2089 = vmatpush1.msra.mxu0 0.0
        %2090 = vmatprep.subr.mxu0 0.0
        %2091 = vmatpush1.msra.mxu0 0.0
        %2092 = vmatprep.subr.mxu0 0.0
        %2093 = vmatpush1.msra.mxu0 0.0
        %2094 = vmatprep.subr.mxu0 0.0
        %2095 = vmatpush1.msra.mxu0 0.0
        %2096 = vmatprep.subr.mxu0 0.0
        %2097 = vmatpush1.msra.mxu0 0.0
        %2098 = vmatprep.subr.mxu0 0.0
        %2099 = vmatpush1.msra.mxu0 0.0
        %2100 = vmatprep.subr.mxu0 0.0
        %2101 = vmatpush1.msra.mxu0 0.0
        %2102 = vmatprep.subr.mxu0 0.0
        %2103 = vmatpush1.msra.mxu0 0.0
        %2104 = vmatprep.subr.mxu0 0.0
        %2105 = vmatpush1.msra.mxu0 0.0
        %2106 = vmatprep.subr.mxu0 0.0
        %2107 = vmatpush1.msra.mxu0 0.0
        %2108 = vmatprep.subr.mxu0 0.0
        %2109 = vmatpush1.msra.mxu0 0.0
        %2110 = vmatprep.subr.mxu0 0.0
        %2111 = vmatpush1.msra.mxu0 0.0
        %2112 = vmatprep.subr.mxu0 0.0
        %2113 = vmatpush1.msra.mxu0 0.0
        %2114 = vmatprep.subr.mxu0 0.0
        %2115 = vmatpush1.msra.mxu0 0.0
        %2116 = vmatprep.subr.mxu0 0.0
        %2117 = vmatpush1.msra.mxu0 0.0
        %2118 = vmatprep.subr.mxu0 0.0
        %2119 = vmatpush1.msra.mxu0 0.0
        %2120 = vmatprep.subr.mxu0 0.0
        %2121 = vmatpush1.msra.mxu0 0.0
        %2122 = vmatprep.subr.mxu0 0.0
        %2123 = vmatpush1.msra.mxu0 0.0
        %2124 = vmatprep.subr.mxu0 0.0
        %2125 = vmatpush1.msra.mxu0 0.0
        %2126 = vmatprep.subr.mxu0 0.0
        %2127 = vmatpush1.msra.mxu0 0.0
        %2128 = vmatprep.subr.mxu0 0.0
        %2129 = vmatpush1.msra.mxu0 0.0
        %2130 = vmatprep.subr.mxu0 0.0
        %2131 = vmatpush1.msra.mxu0 0.0
        %2132 = vmatprep.subr.mxu0 0.0
        %2133 = vmatpush1.msra.mxu0 0.0
        %2134 = vmatprep.subr.mxu0 0.0
        %2135 = vmatpush1.msra.mxu0 0.0
        %2136 = vmatprep.subr.mxu0 0.0
        %2137 = vmatpush1.msra.mxu0 0.0
        %2138 = vmatprep.subr.mxu0 0.0
        %2139 = vmatpush1.msra.mxu0 0.0
        %2140 = vmatprep.subr.mxu0 0.0
        %2141 = vmatpush1.msra.mxu0 0.0
        %2142 = vmatprep.mubr.f32.mxu0 0.0
        %2143 = vmatmul.mubr.f32.gmra.mrb[0].mxu0 %v2073
        %v2144 = vpop.f32.mrb[0].mxu0
        %v2145 = vadd.f32 %v2065, %v2144
        %v2146 = vpop.f32.mrb[0].mxu0
        %2147 = vmatprep.mubr.f32.mxu0 0.0
        %2148 = vmatmul.mubr.f32.gmra.mrb[0].mxu0 %v2076
        %v2149 = vpop.f32.mrb[0].mxu0
        %v2150 = vadd.f32 %v2068, %v2149
        %v2151 = vpop.f32.mrb[0].mxu0
        %2152 = vdwg.mxu0
        %s2153 = scalar_lea.vmem [#allocation2], 64
        %v2154 = vld [vmem:[%s2153] sm:$0xf]
        %v2155 = vld [vmem:[%s2153 + $0x4] sm:$0xf]
        %v2156 = vld [vmem:[%s2153 + $0x8] sm:$0xf]
        %v2157 = vld [vmem:[%s2153 + $0xc] sm:$0xf]
        %v2158 = vld [vmem:[%s2153 + $0x10] sm:$0xf]
        %v2159 = vld [vmem:[%s2153 + $0x14] sm:$0xf]
        %v2160 = vld [vmem:[%s2153 + $0x18] sm:$0xf]
        %v2161 = vld [vmem:[%s2153 + $0x1c] sm:$0xf]
        %v2170 = vunpack.c.l.b16 %v2154
        %v2171 = vunpack.c.l.b16 %v2155
        %v2172 = vunpack.c.l.b16 %v2156
        %v2173 = vunpack.c.l.b16 %v2157
        %v2174 = vunpack.c.l.b16 %v2158
        %v2175 = vunpack.c.l.b16 %v2159
        %v2176 = vunpack.c.l.b16 %v2160
        %v2177 = vunpack.c.l.b16 %v2161
        %v2178 = vpack.c.b16 %v2171, %v2170
        %v2179 = vpack.c.b16 %v2173, %v2172
        %v2180 = vpack.c.b16 %v2175, %v2174
        %v2181 = vpack.c.b16 %v2177, %v2176
        %2186 = vmatprep.subr.bf16.mxu0 0
        %2187 = vmatpush1.bf16.msra.mxu0 %v2178
        %2188 = vmatprep.subr.bf16.mxu0 0
        %2189 = vmatpush1.bf16.msra.mxu0 %v2179
        %2190 = vmatprep.subr.bf16.mxu0 0
        %2191 = vmatpush1.bf16.msra.mxu0 %v2180
        %2192 = vmatprep.subr.bf16.mxu0 0
        %2193 = vmatpush1.bf16.msra.mxu0 %v2181
        %2194 = vmatprep.subr.bf16.mxu0 0
        %2195 = vmatpush1.bf16.msra.mxu0 0
        %2196 = vmatprep.subr.bf16.mxu0 0
        %2197 = vmatpush1.bf16.msra.mxu0 0
        %2198 = vmatprep.subr.bf16.mxu0 0
        %2199 = vmatpush1.bf16.msra.mxu0 0
        %2200 = vmatprep.subr.bf16.mxu0 0
        %2201 = vmatpush1.bf16.msra.mxu0 0
        %2202 = vmatprep.subr.bf16.mxu0 0
        %2203 = vmatpush1.bf16.msra.mxu0 0
        %2204 = vmatprep.subr.bf16.mxu0 0
        %2205 = vmatpush1.bf16.msra.mxu0 0
        %2206 = vmatprep.subr.bf16.mxu0 0
        %2207 = vmatpush1.bf16.msra.mxu0 0
        %2208 = vmatprep.subr.bf16.mxu0 0
        %2209 = vmatpush1.bf16.msra.mxu0 0
        %2210 = vmatprep.subr.bf16.mxu0 0
        %2211 = vmatpush1.bf16.msra.mxu0 0
        %2212 = vmatprep.subr.bf16.mxu0 0
        %2213 = vmatpush1.bf16.msra.mxu0 0
        %2214 = vmatprep.subr.bf16.mxu0 0
        %2215 = vmatpush1.bf16.msra.mxu0 0
        %2216 = vmatprep.subr.bf16.mxu0 0
        %2217 = vmatpush1.bf16.msra.mxu0 0
        %2218 = vmatprep.mubr.bf16.mxu0 0
        %2219 = vmatmul.mubr.bf16.gmra.mrb[0].mxu0 %v1952
        %v2220 = vpop.f32.mrb[0].mxu0
        %v2221 = vadd.f32 0.0, %v2220
        %v2222 = vpop.f32.mrb[0].mxu0
        %v2223 = vpop.f32.mrb[0].mxu0
        %v2224 = vadd.f32 0.0, %v2223
        %v2225 = vpop.f32.mrb[0].mxu0
        %2226 = vdwg.mxu0
        %s2227 = scalar_lea.vmem [#allocation10], 32
        %v2228 = vld [vmem:[%s2227] sm:$0xff]
        %v2229 = vld [vmem:[%s2227 + $0x8] sm:$0xff]
        %v2231 = vsel %vm2071, %v2228, 0
        %v2234 = vsel %vm2071, %v2229, 0
        %2236 = vmatprep.subr.mxu0 0.0
        %2237 = vmatpush1.msra.mxu0 %v2221
        %2238 = vmatprep.subr.mxu0 0.0
        %2239 = vmatpush1.msra.mxu0 %v2224
        %2240 = vmatprep.subr.mxu0 0.0
        %2241 = vmatpush1.msra.mxu0 0.0
        %2242 = vmatprep.subr.mxu0 0.0
        %2243 = vmatpush1.msra.mxu0 0.0
        %2244 = vmatprep.subr.mxu0 0.0
        %2245 = vmatpush1.msra.mxu0 0.0
        %2246 = vmatprep.subr.mxu0 0.0
        %2247 = vmatpush1.msra.mxu0 0.0
        %2248 = vmatprep.subr.mxu0 0.0
        %2249 = vmatpush1.msra.mxu0 0.0
        %2250 = vmatprep.subr.mxu0 0.0
        %2251 = vmatpush1.msra.mxu0 0.0
        %2252 = vmatprep.subr.mxu0 0.0
        %2253 = vmatpush1.msra.mxu0 0.0
        %2254 = vmatprep.subr.mxu0 0.0
        %2255 = vmatpush1.msra.mxu0 0.0
        %2256 = vmatprep.subr.mxu0 0.0
        %2257 = vmatpush1.msra.mxu0 0.0
        %2258 = vmatprep.subr.mxu0 0.0
        %2259 = vmatpush1.msra.mxu0 0.0
        %2260 = vmatprep.subr.mxu0 0.0
        %2261 = vmatpush1.msra.mxu0 0.0
        %2262 = vmatprep.subr.mxu0 0.0
        %2263 = vmatpush1.msra.mxu0 0.0
        %2264 = vmatprep.subr.mxu0 0.0
        %2265 = vmatpush1.msra.mxu0 0.0
        %2266 = vmatprep.subr.mxu0 0.0
        %2267 = vmatpush1.msra.mxu0 0.0
        %2268 = vmatprep.subr.mxu0 0.0
        %2269 = vmatpush1.msra.mxu0 0.0
        %2270 = vmatprep.subr.mxu0 0.0
        %2271 = vmatpush1.msra.mxu0 0.0
        %2272 = vmatprep.subr.mxu0 0.0
        %2273 = vmatpush1.msra.mxu0 0.0
        %2274 = vmatprep.subr.mxu0 0.0
        %2275 = vmatpush1.msra.mxu0 0.0
        %2276 = vmatprep.subr.mxu0 0.0
        %2277 = vmatpush1.msra.mxu0 0.0
        %2278 = vmatprep.subr.mxu0 0.0
        %2279 = vmatpush1.msra.mxu0 0.0
        %2280 = vmatprep.subr.mxu0 0.0
        %2281 = vmatpush1.msra.mxu0 0.0
        %2282 = vmatprep.subr.mxu0 0.0
        %2283 = vmatpush1.msra.mxu0 0.0
        %2284 = vmatprep.subr.mxu0 0.0
        %2285 = vmatpush1.msra.mxu0 0.0
        %2286 = vmatprep.subr.mxu0 0.0
        %2287 = vmatpush1.msra.mxu0 0.0
        %2288 = vmatprep.subr.mxu0 0.0
        %2289 = vmatpush1.msra.mxu0 0.0
        %2290 = vmatprep.subr.mxu0 0.0
        %2291 = vmatpush1.msra.mxu0 0.0
        %2292 = vmatprep.subr.mxu0 0.0
        %2293 = vmatpush1.msra.mxu0 0.0
        %2294 = vmatprep.subr.mxu0 0.0
        %2295 = vmatpush1.msra.mxu0 0.0
        %2296 = vmatprep.subr.mxu0 0.0
        %2297 = vmatpush1.msra.mxu0 0.0
        %2298 = vmatprep.subr.mxu0 0.0
        %2299 = vmatpush1.msra.mxu0 0.0
        %2300 = vmatprep.mubr.f32.mxu0 0.0
        %2301 = vmatmul.mubr.f32.gmra.mrb[0].mxu0 %v2231
        %v2302 = vpop.f32.mrb[0].mxu0
        %v2303 = vadd.f32 0.0, %v2302
        %v2304 = vpop.f32.mrb[0].mxu0
        %2305 = vmatprep.mubr.f32.mxu0 0.0
        %2306 = vmatmul.mubr.f32.gmra.mrb[0].mxu0 %v2234
        %v2307 = vpop.f32.mrb[0].mxu0
        %v2308 = vadd.f32 0.0, %v2307
        %v2309 = vpop.f32.mrb[0].mxu0
        %2310 = vdwg.mxu0
        %v2311 = vadd.f32 %v2145, %v2303
        %v2312 = vadd.f32 %v2150, %v2308
        %v2313 = vld [vmem:[#allocation6] sm:$0xf]
        %v2314 = vld [vmem:[#allocation6 + $0x4] sm:$0xf]
        %v2315 = vld [vmem:[#allocation6 + $0x8] sm:$0xf]
        %v2316 = vld [vmem:[#allocation6 + $0xc] sm:$0xf]
        %v2317 = vld [vmem:[#allocation6 + $0x10] sm:$0xf]
        %v2318 = vld [vmem:[#allocation6 + $0x14] sm:$0xf]
        %v2319 = vld [vmem:[#allocation6 + $0x18] sm:$0xf]
        %v2320 = vld [vmem:[#allocation6 + $0x1c] sm:$0xf]
        %v2329 = vunpack.c.l.b16 %v2313
        %v2330 = vunpack.c.l.b16 %v2314
        %v2331 = vunpack.c.l.b16 %v2315
        %v2332 = vunpack.c.l.b16 %v2316
        %v2333 = vunpack.c.l.b16 %v2317
        %v2334 = vunpack.c.l.b16 %v2318
        %v2335 = vunpack.c.l.b16 %v2319
        %v2336 = vunpack.c.l.b16 %v2320
        %v2337 = vpack.c.b16 %v2330, %v2329
        %v2338 = vpack.c.b16 %v2332, %v2331
        %v2339 = vpack.c.b16 %v2334, %v2333
        %v2340 = vpack.c.b16 %v2336, %v2335
        %2345 = vmatprep.subr.bf16.mxu0 0
        %2346 = vmatpush1.bf16.msra.mxu0 %v2337
        %2347 = vmatprep.subr.bf16.mxu0 0
        %2348 = vmatpush1.bf16.msra.mxu0 %v2338
        %2349 = vmatprep.subr.bf16.mxu0 0
        %2350 = vmatpush1.bf16.msra.mxu0 %v2339
        %2351 = vmatprep.subr.bf16.mxu0 0
        %2352 = vmatpush1.bf16.msra.mxu0 %v2340
        %2353 = vmatprep.subr.bf16.mxu0 0
        %2354 = vmatpush1.bf16.msra.mxu0 0
        %2355 = vmatprep.subr.bf16.mxu0 0
        %2356 = vmatpush1.bf16.msra.mxu0 0
        %2357 = vmatprep.subr.bf16.mxu0 0
        %2358 = vmatpush1.bf16.msra.mxu0 0
        %2359 = vmatprep.subr.bf16.mxu0 0
        %2360 = vmatpush1.bf16.msra.mxu0 0
        %2361 = vmatprep.subr.bf16.mxu0 0
        %2362 = vmatpush1.bf16.msra.mxu0 0
        %2363 = vmatprep.subr.bf16.mxu0 0
        %2364 = vmatpush1.bf16.msra.mxu0 0
        %2365 = vmatprep.subr.bf16.mxu0 0
        %2366 = vmatpush1.bf16.msra.mxu0 0
        %2367 = vmatprep.subr.bf16.mxu0 0
        %2368 = vmatpush1.bf16.msra.mxu0 0
        %2369 = vmatprep.subr.bf16.mxu0 0
        %2370 = vmatpush1.bf16.msra.mxu0 0
        %2371 = vmatprep.subr.bf16.mxu0 0
        %2372 = vmatpush1.bf16.msra.mxu0 0
        %2373 = vmatprep.subr.bf16.mxu0 0
        %2374 = vmatpush1.bf16.msra.mxu0 0
        %2375 = vmatprep.subr.bf16.mxu0 0
        %2376 = vmatpush1.bf16.msra.mxu0 0
        %2377 = vmatprep.mubr.bf16.mxu0 0
        %2378 = vmatmul.mubr.bf16.gmra.mrb[0].mxu0 %v1952
        %v2379 = vpop.f32.mrb[0].mxu0
        %v2380 = vadd.f32 0.0, %v2379
        %v2381 = vpop.f32.mrb[0].mxu0
        %v2382 = vpop.f32.mrb[0].mxu0
        %v2383 = vadd.f32 0.0, %v2382
        %v2384 = vpop.f32.mrb[0].mxu0
        %2385 = vdwg.mxu0
        %v2386 = vld [vmem:[#allocation4] sm:$0x1]
        %v2388 = vlaneseq
        %v2389 = vshrl.u32 %v2388, 7
        %v2390 = vsub.s32 0, %v2389
        %v2391 = vrot.slane %v2386, %v2390
        %v2393 = vadd.f32 %v2311, %v2391
        %v2394 = vadd.f32 %v2312, %v2391
        %v2395 = vmax.f32 %v2393, 0.0
        %v2396 = vmax.f32 %v2394, 0.0
        %v2397 = vpack.c.bf16 %v2396, %v2395
        %v2398 = vld [vmem:[#allocation7] sm:$0xf]
        %v2399 = vld [vmem:[#allocation7 + $0x4] sm:$0xf]
        %v2400 = vld [vmem:[#allocation7 + $0x8] sm:$0xf]
        %v2401 = vld [vmem:[#allocation7 + $0xc] sm:$0xf]
        %v2402 = vld [vmem:[#allocation7 + $0x10] sm:$0xf]
        %v2403 = vld [vmem:[#allocation7 + $0x14] sm:$0xf]
        %v2404 = vld [vmem:[#allocation7 + $0x18] sm:$0xf]
        %v2405 = vld [vmem:[#allocation7 + $0x1c] sm:$0xf]
        %v2406 = vld [vmem:[#allocation7 + $0x20] sm:$0xf]
        %v2407 = vld [vmem:[#allocation7 + $0x24] sm:$0xf]
        %v2408 = vld [vmem:[#allocation7 + $0x28] sm:$0xf]
        %v2409 = vld [vmem:[#allocation7 + $0x2c] sm:$0xf]
        %v2410 = vld [vmem:[#allocation7 + $0x30] sm:$0xf]
        %v2411 = vld [vmem:[#allocation7 + $0x34] sm:$0xf]
        %v2412 = vld [vmem:[#allocation7 + $0x38] sm:$0xf]
        %v2413 = vld [vmem:[#allocation7 + $0x3c] sm:$0xf]
        %v2430 = vunpack.c.l.b16 %v2398
        %v2431 = vunpack.c.l.b16 %v2399
        %v2432 = vunpack.c.l.b16 %v2400
        %v2433 = vunpack.c.l.b16 %v2401
        %v2434 = vunpack.c.l.b16 %v2402
        %v2435 = vunpack.c.l.b16 %v2403
        %v2436 = vunpack.c.l.b16 %v2404
        %v2437 = vunpack.c.l.b16 %v2405
        %v2438 = vunpack.c.l.b16 %v2406
        %v2439 = vunpack.c.l.b16 %v2407
        %v2440 = vunpack.c.l.b16 %v2408
        %v2441 = vunpack.c.l.b16 %v2409
        %v2442 = vunpack.c.l.b16 %v2410
        %v2443 = vunpack.c.l.b16 %v2411
        %v2444 = vunpack.c.l.b16 %v2412
        %v2445 = vunpack.c.l.b16 %v2413
        %v2446 = vpack.c.b16 %v2431, %v2430
        %v2447 = vpack.c.b16 %v2433, %v2432
        %v2448 = vpack.c.b16 %v2435, %v2434
        %v2449 = vpack.c.b16 %v2437, %v2436
        %v2450 = vpack.c.b16 %v2439, %v2438
        %v2451 = vpack.c.b16 %v2441, %v2440
        %v2452 = vpack.c.b16 %v2443, %v2442
        %v2453 = vpack.c.b16 %v2445, %v2444
        %2462 = vmatprep.subr.bf16.mxu0 0
        %2463 = vmatpush1.bf16.msra.mxu0 %v2446
        %2464 = vmatprep.subr.bf16.mxu0 0
        %2465 = vmatpush1.bf16.msra.mxu0 %v2447
        %2466 = vmatprep.subr.bf16.mxu0 0
        %2467 = vmatpush1.bf16.msra.mxu0 %v2448
        %2468 = vmatprep.subr.bf16.mxu0 0
        %2469 = vmatpush1.bf16.msra.mxu0 %v2449
        %2470 = vmatprep.subr.bf16.mxu0 0
        %2471 = vmatpush1.bf16.msra.mxu0 %v2450
        %2472 = vmatprep.subr.bf16.mxu0 0
        %2473 = vmatpush1.bf16.msra.mxu0 %v2451
        %2474 = vmatprep.subr.bf16.mxu0 0
        %2475 = vmatpush1.bf16.msra.mxu0 %v2452
        %2476 = vmatprep.subr.bf16.mxu0 0
        %2477 = vmatpush1.bf16.msra.mxu0 %v2453
        %2478 = vmatprep.subr.bf16.mxu0 0
        %2479 = vmatpush1.bf16.msra.mxu0 0
        %2480 = vmatprep.subr.bf16.mxu0 0
        %2481 = vmatpush1.bf16.msra.mxu0 0
        %2482 = vmatprep.subr.bf16.mxu0 0
        %2483 = vmatpush1.bf16.msra.mxu0 0
        %2484 = vmatprep.subr.bf16.mxu0 0
        %2485 = vmatpush1.bf16.msra.mxu0 0
        %2486 = vmatprep.subr.bf16.mxu0 0
        %2487 = vmatpush1.bf16.msra.mxu0 0
        %2488 = vmatprep.subr.bf16.mxu0 0
        %2489 = vmatpush1.bf16.msra.mxu0 0
        %2490 = vmatprep.subr.bf16.mxu0 0
        %2491 = vmatpush1.bf16.msra.mxu0 0
        %2492 = vmatprep.subr.bf16.mxu0 0
        %2493 = vmatpush1.bf16.msra.mxu0 0
        %2494 = vmatprep.mubr.bf16.mxu0 0
        %2495 = vmatmul.mubr.bf16.gmra.mrb[0].mxu0 %v2397
        %v2496 = vpop.f32.mrb[0].mxu0
        %v2497 = vadd.f32 0.0, %v2496
        %v2498 = vpop.f32.mrb[0].mxu0
        %v2499 = vpop.f32.mrb[0].mxu0
        %v2500 = vadd.f32 0.0, %v2499
        %v2501 = vpop.f32.mrb[0].mxu0
        %2502 = vdwg.mxu0
        %s2503 = scalar_lea.vmem [#allocation7], 64
        %v2504 = vld [vmem:[%s2503] sm:$0xf]
        %v2505 = vld [vmem:[%s2503 + $0x4] sm:$0xf]
        %v2506 = vld [vmem:[%s2503 + $0x8] sm:$0xf]
        %v2507 = vld [vmem:[%s2503 + $0xc] sm:$0xf]
        %v2508 = vld [vmem:[%s2503 + $0x10] sm:$0xf]
        %v2509 = vld [vmem:[%s2503 + $0x14] sm:$0xf]
        %v2510 = vld [vmem:[%s2503 + $0x18] sm:$0xf]
        %v2511 = vld [vmem:[%s2503 + $0x1c] sm:$0xf]
        %v2512 = vld [vmem:[%s2503 + $0x20] sm:$0xf]
        %v2513 = vld [vmem:[%s2503 + $0x24] sm:$0xf]
        %v2514 = vld [vmem:[%s2503 + $0x28] sm:$0xf]
        %v2515 = vld [vmem:[%s2503 + $0x2c] sm:$0xf]
        %v2516 = vld [vmem:[%s2503 + $0x30] sm:$0xf]
        %v2517 = vld [vmem:[%s2503 + $0x34] sm:$0xf]
        %v2518 = vld [vmem:[%s2503 + $0x38] sm:$0xf]
        %v2519 = vld [vmem:[%s2503 + $0x3c] sm:$0xf]
        %v2536 = vunpack.c.l.b16 %v2504
        %v2537 = vunpack.c.l.b16 %v2505
        %v2538 = vunpack.c.l.b16 %v2506
        %v2539 = vunpack.c.l.b16 %v2507
        %v2540 = vunpack.c.l.b16 %v2508
        %v2541 = vunpack.c.l.b16 %v2509
        %v2542 = vunpack.c.l.b16 %v2510
        %v2543 = vunpack.c.l.b16 %v2511
        %v2544 = vunpack.c.l.b16 %v2512
        %v2545 = vunpack.c.l.b16 %v2513
        %v2546 = vunpack.c.l.b16 %v2514
        %v2547 = vunpack.c.l.b16 %v2515
        %v2548 = vunpack.c.l.b16 %v2516
        %v2549 = vunpack.c.l.b16 %v2517
        %v2550 = vunpack.c.l.b16 %v2518
        %v2551 = vunpack.c.l.b16 %v2519
        %v2552 = vpack.c.b16 %v2537, %v2536
        %v2553 = vpack.c.b16 %v2539, %v2538
        %v2554 = vpack.c.b16 %v2541, %v2540
        %v2555 = vpack.c.b16 %v2543, %v2542
        %v2556 = vpack.c.b16 %v2545, %v2544
        %v2557 = vpack.c.b16 %v2547, %v2546
        %v2558 = vpack.c.b16 %v2549, %v2548
        %v2559 = vpack.c.b16 %v2551, %v2550
        %2568 = vmatprep.subr.bf16.mxu0 0
        %2569 = vmatpush1.bf16.msra.mxu0 %v2552
        %2570 = vmatprep.subr.bf16.mxu0 0
        %2571 = vmatpush1.bf16.msra.mxu0 %v2553
        %2572 = vmatprep.subr.bf16.mxu0 0
        %2573 = vmatpush1.bf16.msra.mxu0 %v2554
        %2574 = vmatprep.subr.bf16.mxu0 0
        %2575 = vmatpush1.bf16.msra.mxu0 %v2555
        %2576 = vmatprep.subr.bf16.mxu0 0
        %2577 = vmatpush1.bf16.msra.mxu0 %v2556
        %2578 = vmatprep.subr.bf16.mxu0 0
        %2579 = vmatpush1.bf16.msra.mxu0 %v2557
        %2580 = vmatprep.subr.bf16.mxu0 0
        %2581 = vmatpush1.bf16.msra.mxu0 %v2558
        %2582 = vmatprep.subr.bf16.mxu0 0
        %2583 = vmatpush1.bf16.msra.mxu0 %v2559
        %2584 = vmatprep.subr.bf16.mxu0 0
        %2585 = vmatpush1.bf16.msra.mxu0 0
        %2586 = vmatprep.subr.bf16.mxu0 0
        %2587 = vmatpush1.bf16.msra.mxu0 0
        %2588 = vmatprep.subr.bf16.mxu0 0
        %2589 = vmatpush1.bf16.msra.mxu0 0
        %2590 = vmatprep.subr.bf16.mxu0 0
        %2591 = vmatpush1.bf16.msra.mxu0 0
        %2592 = vmatprep.subr.bf16.mxu0 0
        %2593 = vmatpush1.bf16.msra.mxu0 0
        %2594 = vmatprep.subr.bf16.mxu0 0
        %2595 = vmatpush1.bf16.msra.mxu0 0
        %2596 = vmatprep.subr.bf16.mxu0 0
        %2597 = vmatpush1.bf16.msra.mxu0 0
        %2598 = vmatprep.subr.bf16.mxu0 0
        %2599 = vmatpush1.bf16.msra.mxu0 0
        %2600 = vmatprep.mubr.bf16.mxu0 0
        %2601 = vmatmul.mubr.bf16.gmra.mrb[0].mxu0 %v2397
        %v2602 = vpop.f32.mrb[0].mxu0
        %v2603 = vadd.f32 0.0, %v2602
        %v2604 = vpop.f32.mrb[0].mxu0
        %v2605 = vpop.f32.mrb[0].mxu0
        %v2606 = vadd.f32 0.0, %v2605
        %v2607 = vpop.f32.mrb[0].mxu0
        %2608 = vdwg.mxu0
        %2609 = vmatprep.subr.mxu0 0.0
        %2610 = vmatpush1.msra.mxu0 %v2497
        %2611 = vmatprep.subr.mxu0 0.0
        %2612 = vmatpush1.msra.mxu0 %v2500
        %2613 = vmatprep.subr.mxu0 0.0
        %2614 = vmatpush1.msra.mxu0 0.0
        %2615 = vmatprep.subr.mxu0 0.0
        %2616 = vmatpush1.msra.mxu0 0.0
        %2617 = vmatprep.subr.mxu0 0.0
        %2618 = vmatpush1.msra.mxu0 0.0
        %2619 = vmatprep.subr.mxu0 0.0
        %2620 = vmatpush1.msra.mxu0 0.0
        %2621 = vmatprep.subr.mxu0 0.0
        %2622 = vmatpush1.msra.mxu0 0.0
        %2623 = vmatprep.subr.mxu0 0.0
        %2624 = vmatpush1.msra.mxu0 0.0
        %2625 = vmatprep.subr.mxu0 0.0
        %2626 = vmatpush1.msra.mxu0 0.0
        %2627 = vmatprep.subr.mxu0 0.0
        %2628 = vmatpush1.msra.mxu0 0.0
        %2629 = vmatprep.subr.mxu0 0.0
        %2630 = vmatpush1.msra.mxu0 0.0
        %2631 = vmatprep.subr.mxu0 0.0
        %2632 = vmatpush1.msra.mxu0 0.0
        %2633 = vmatprep.subr.mxu0 0.0
        %2634 = vmatpush1.msra.mxu0 0.0
        %2635 = vmatprep.subr.mxu0 0.0
        %2636 = vmatpush1.msra.mxu0 0.0
        %2637 = vmatprep.subr.mxu0 0.0
        %2638 = vmatpush1.msra.mxu0 0.0
        %2639 = vmatprep.subr.mxu0 0.0
        %2640 = vmatpush1.msra.mxu0 0.0
        %2641 = vmatprep.subr.mxu0 0.0
        %2642 = vmatpush1.msra.mxu0 0.0
        %2643 = vmatprep.subr.mxu0 0.0
        %2644 = vmatpush1.msra.mxu0 0.0
        %2645 = vmatprep.subr.mxu0 0.0
        %2646 = vmatpush1.msra.mxu0 0.0
        %2647 = vmatprep.subr.mxu0 0.0
        %2648 = vmatpush1.msra.mxu0 0.0
        %2649 = vmatprep.subr.mxu0 0.0
        %2650 = vmatpush1.msra.mxu0 0.0
        %2651 = vmatprep.subr.mxu0 0.0
        %2652 = vmatpush1.msra.mxu0 0.0
        %2653 = vmatprep.subr.mxu0 0.0
        %2654 = vmatpush1.msra.mxu0 0.0
        %2655 = vmatprep.subr.mxu0 0.0
        %2656 = vmatpush1.msra.mxu0 0.0
        %2657 = vmatprep.subr.mxu0 0.0
        %2658 = vmatpush1.msra.mxu0 0.0
        %2659 = vmatprep.subr.mxu0 0.0
        %2660 = vmatpush1.msra.mxu0 0.0
        %2661 = vmatprep.subr.mxu0 0.0
        %2662 = vmatpush1.msra.mxu0 0.0
        %2663 = vmatprep.subr.mxu0 0.0
        %2664 = vmatpush1.msra.mxu0 0.0
        %2665 = vmatprep.subr.mxu0 0.0
        %2666 = vmatpush1.msra.mxu0 0.0
        %2667 = vmatprep.subr.mxu0 0.0
        %2668 = vmatpush1.msra.mxu0 0.0
        %2669 = vmatprep.subr.mxu0 0.0
        %2670 = vmatpush1.msra.mxu0 0.0
        %2671 = vmatprep.subr.mxu0 0.0
        %2672 = vmatpush1.msra.mxu0 0.0
        %2673 = vmatprep.mubr.f32.mxu0 0.0
        %2674 = vmatmul.mubr.f32.gmra.mrb[0].mxu0 %v2073
        %v2675 = vpop.f32.mrb[0].mxu0
        %v2676 = vadd.f32 %v2603, %v2675
        %v2677 = vpop.f32.mrb[0].mxu0
        %2678 = vmatprep.mubr.f32.mxu0 0.0
        %2679 = vmatmul.mubr.f32.gmra.mrb[0].mxu0 %v2076
        %v2680 = vpop.f32.mrb[0].mxu0
        %v2681 = vadd.f32 %v2606, %v2680
        %v2682 = vpop.f32.mrb[0].mxu0
        %2683 = vdwg.mxu0
        %s2684 = scalar_lea.vmem [#allocation7], 128
        %v2685 = vld [vmem:[%s2684] sm:$0xf]
        %v2686 = vld [vmem:[%s2684 + $0x4] sm:$0xf]
        %v2687 = vld [vmem:[%s2684 + $0x8] sm:$0xf]
        %v2688 = vld [vmem:[%s2684 + $0xc] sm:$0xf]
        %v2689 = vld [vmem:[%s2684 + $0x10] sm:$0xf]
        %v2690 = vld [vmem:[%s2684 + $0x14] sm:$0xf]
        %v2691 = vld [vmem:[%s2684 + $0x18] sm:$0xf]
        %v2692 = vld [vmem:[%s2684 + $0x1c] sm:$0xf]
        %v2693 = vld [vmem:[%s2684 + $0x20] sm:$0xf]
        %v2694 = vld [vmem:[%s2684 + $0x24] sm:$0xf]
        %v2695 = vld [vmem:[%s2684 + $0x28] sm:$0xf]
        %v2696 = vld [vmem:[%s2684 + $0x2c] sm:$0xf]
        %v2697 = vld [vmem:[%s2684 + $0x30] sm:$0xf]
        %v2698 = vld [vmem:[%s2684 + $0x34] sm:$0xf]
        %v2699 = vld [vmem:[%s2684 + $0x38] sm:$0xf]
        %v2700 = vld [vmem:[%s2684 + $0x3c] sm:$0xf]
        %v2717 = vunpack.c.l.b16 %v2685
        %v2718 = vunpack.c.l.b16 %v2686
        %v2719 = vunpack.c.l.b16 %v2687
        %v2720 = vunpack.c.l.b16 %v2688
        %v2721 = vunpack.c.l.b16 %v2689
        %v2722 = vunpack.c.l.b16 %v2690
        %v2723 = vunpack.c.l.b16 %v2691
        %v2724 = vunpack.c.l.b16 %v2692
        %v2725 = vunpack.c.l.b16 %v2693
        %v2726 = vunpack.c.l.b16 %v2694
        %v2727 = vunpack.c.l.b16 %v2695
        %v2728 = vunpack.c.l.b16 %v2696
        %v2729 = vunpack.c.l.b16 %v2697
        %v2730 = vunpack.c.l.b16 %v2698
        %v2731 = vunpack.c.l.b16 %v2699
        %v2732 = vunpack.c.l.b16 %v2700
        %v2733 = vpack.c.b16 %v2718, %v2717
        %v2734 = vpack.c.b16 %v2720, %v2719
        %v2735 = vpack.c.b16 %v2722, %v2721
        %v2736 = vpack.c.b16 %v2724, %v2723
        %v2737 = vpack.c.b16 %v2726, %v2725
        %v2738 = vpack.c.b16 %v2728, %v2727
        %v2739 = vpack.c.b16 %v2730, %v2729
        %v2740 = vpack.c.b16 %v2732, %v2731
        %2749 = vmatprep.subr.bf16.mxu0 0
        %2750 = vmatpush1.bf16.msra.mxu0 %v2733
        %2751 = vmatprep.subr.bf16.mxu0 0
        %2752 = vmatpush1.bf16.msra.mxu0 %v2734
        %2753 = vmatprep.subr.bf16.mxu0 0
        %2754 = vmatpush1.bf16.msra.mxu0 %v2735
        %2755 = vmatprep.subr.bf16.mxu0 0
        %2756 = vmatpush1.bf16.msra.mxu0 %v2736
        %2757 = vmatprep.subr.bf16.mxu0 0
        %2758 = vmatpush1.bf16.msra.mxu0 %v2737
        %2759 = vmatprep.subr.bf16.mxu0 0
        %2760 = vmatpush1.bf16.msra.mxu0 %v2738
        %2761 = vmatprep.subr.bf16.mxu0 0
        %2762 = vmatpush1.bf16.msra.mxu0 %v2739
        %2763 = vmatprep.subr.bf16.mxu0 0
        %2764 = vmatpush1.bf16.msra.mxu0 %v2740
        %2765 = vmatprep.subr.bf16.mxu0 0
        %2766 = vmatpush1.bf16.msra.mxu0 0
        %2767 = vmatprep.subr.bf16.mxu0 0
        %2768 = vmatpush1.bf16.msra.mxu0 0
        %2769 = vmatprep.subr.bf16.mxu0 0
        %2770 = vmatpush1.bf16.msra.mxu0 0
        %2771 = vmatprep.subr.bf16.mxu0 0
        %2772 = vmatpush1.bf16.msra.mxu0 0
        %2773 = vmatprep.subr.bf16.mxu0 0
        %2774 = vmatpush1.bf16.msra.mxu0 0
        %2775 = vmatprep.subr.bf16.mxu0 0
        %2776 = vmatpush1.bf16.msra.mxu0 0
        %2777 = vmatprep.subr.bf16.mxu0 0
        %2778 = vmatpush1.bf16.msra.mxu0 0
        %2779 = vmatprep.subr.bf16.mxu0 0
        %2780 = vmatpush1.bf16.msra.mxu0 0
        %2781 = vmatprep.mubr.bf16.mxu0 0
        %2782 = vmatmul.mubr.bf16.gmra.mrb[0].mxu0 %v2397
        %v2783 = vpop.f32.mrb[0].mxu0
        %v2784 = vadd.f32 0.0, %v2783
        %v2785 = vpop.f32.mrb[0].mxu0
        %v2786 = vpop.f32.mrb[0].mxu0
        %v2787 = vadd.f32 0.0, %v2786
        %v2788 = vpop.f32.mrb[0].mxu0
        %2789 = vdwg.mxu0
        %2790 = vmatprep.subr.mxu0 0.0
        %2791 = vmatpush1.msra.mxu0 %v2784
        %2792 = vmatprep.subr.mxu0 0.0
        %2793 = vmatpush1.msra.mxu0 %v2787
        %2794 = vmatprep.subr.mxu0 0.0
        %2795 = vmatpush1.msra.mxu0 0.0
        %2796 = vmatprep.subr.mxu0 0.0
        %2797 = vmatpush1.msra.mxu0 0.0
        %2798 = vmatprep.subr.mxu0 0.0
        %2799 = vmatpush1.msra.mxu0 0.0
        %2800 = vmatprep.subr.mxu0 0.0
        %2801 = vmatpush1.msra.mxu0 0.0
        %2802 = vmatprep.subr.mxu0 0.0
        %2803 = vmatpush1.msra.mxu0 0.0
        %2804 = vmatprep.subr.mxu0 0.0
        %2805 = vmatpush1.msra.mxu0 0.0
        %2806 = vmatprep.subr.mxu0 0.0
        %2807 = vmatpush1.msra.mxu0 0.0
        %2808 = vmatprep.subr.mxu0 0.0
        %2809 = vmatpush1.msra.mxu0 0.0
        %2810 = vmatprep.subr.mxu0 0.0
        %2811 = vmatpush1.msra.mxu0 0.0
        %2812 = vmatprep.subr.mxu0 0.0
        %2813 = vmatpush1.msra.mxu0 0.0
        %2814 = vmatprep.subr.mxu0 0.0
        %2815 = vmatpush1.msra.mxu0 0.0
        %2816 = vmatprep.subr.mxu0 0.0
        %2817 = vmatpush1.msra.mxu0 0.0
        %2818 = vmatprep.subr.mxu0 0.0
        %2819 = vmatpush1.msra.mxu0 0.0
        %2820 = vmatprep.subr.mxu0 0.0
        %2821 = vmatpush1.msra.mxu0 0.0
        %2822 = vmatprep.subr.mxu0 0.0
        %2823 = vmatpush1.msra.mxu0 0.0
        %2824 = vmatprep.subr.mxu0 0.0
        %2825 = vmatpush1.msra.mxu0 0.0
        %2826 = vmatprep.subr.mxu0 0.0
        %2827 = vmatpush1.msra.mxu0 0.0
        %2828 = vmatprep.subr.mxu0 0.0
        %2829 = vmatpush1.msra.mxu0 0.0
        %2830 = vmatprep.subr.mxu0 0.0
        %2831 = vmatpush1.msra.mxu0 0.0
        %2832 = vmatprep.subr.mxu0 0.0
        %2833 = vmatpush1.msra.mxu0 0.0
        %2834 = vmatprep.subr.mxu0 0.0
        %2835 = vmatpush1.msra.mxu0 0.0
        %2836 = vmatprep.subr.mxu0 0.0
        %2837 = vmatpush1.msra.mxu0 0.0
        %2838 = vmatprep.subr.mxu0 0.0
        %2839 = vmatpush1.msra.mxu0 0.0
        %2840 = vmatprep.subr.mxu0 0.0
        %2841 = vmatpush1.msra.mxu0 0.0
        %2842 = vmatprep.subr.mxu0 0.0
        %2843 = vmatpush1.msra.mxu0 0.0
        %2844 = vmatprep.subr.mxu0 0.0
        %2845 = vmatpush1.msra.mxu0 0.0
        %2846 = vmatprep.subr.mxu0 0.0
        %2847 = vmatpush1.msra.mxu0 0.0
        %2848 = vmatprep.subr.mxu0 0.0
        %2849 = vmatpush1.msra.mxu0 0.0
        %2850 = vmatprep.subr.mxu0 0.0
        %2851 = vmatpush1.msra.mxu0 0.0
        %2852 = vmatprep.subr.mxu0 0.0
        %2853 = vmatpush1.msra.mxu0 0.0
        %2854 = vmatprep.mubr.f32.mxu0 0.0
        %2855 = vmatmul.mubr.f32.gmra.mrb[0].mxu0 %v2231
        %v2856 = vpop.f32.mrb[0].mxu0
        %v2857 = vadd.f32 0.0, %v2856
        %v2858 = vpop.f32.mrb[0].mxu0
        %2859 = vmatprep.mubr.f32.mxu0 0.0
        %2860 = vmatmul.mubr.f32.gmra.mrb[0].mxu0 %v2234
        %v2861 = vpop.f32.mrb[0].mxu0
        %v2862 = vadd.f32 0.0, %v2861
        %v2863 = vpop.f32.mrb[0].mxu0
        %2864 = vdwg.mxu0
        %v2865 = vadd.f32 %v2676, %v2857
        %v2866 = vadd.f32 %v2681, %v2862
        %v2867 = vld [vmem:[#allocation9] sm:$0x1]
        %v2869 = vlaneseq
        %v2870 = vshrl.u32 %v2869, 7
        %v2871 = vsub.s32 0, %v2870
        %v2872 = vrot.slane %v2867, %v2871
        %v2874 = vadd.f32 %v2865, %v2872
        %v2875 = vadd.f32 %v2866, %v2872
        %v2876 = vadd.f32 %v2874, %v2380
        %v2877 = vadd.f32 %v2875, %v2383
        %v2878 = vmax.f32 %v2876, 0.0
        %v2879 = vmax.f32 %v2877, 0.0
        %v2880 = vpack.c.bf16 %v2879, %v2878
        %v2881 = vld [vmem:[%s15] sm:$0xff]
        %v2882 = vld [vmem:[%s15 + $0x8] sm:$0xff]
        %v2883 = vld [vmem:[%s15 + $0x10] sm:$0xff]
        %v2884 = vld [vmem:[%s15 + $0x18] sm:$0xff]
        %v2885 = vld [vmem:[%s15 + $0x20] sm:$0xff]
        %v2886 = vld [vmem:[%s15 + $0x28] sm:$0xff]
        %v2887 = vld [vmem:[%s15 + $0x30] sm:$0xff]
        %v2888 = vld [vmem:[%s15 + $0x38] sm:$0xff]
        %v2889 = vld [vmem:[%s15 + $0x40] sm:$0xff]
        %v2890 = vld [vmem:[%s15 + $0x48] sm:$0xff]
        %v2891 = vld [vmem:[%s15 + $0x50] sm:$0xff]
        %v2892 = vld [vmem:[%s15 + $0x58] sm:$0xff]
        %v2893 = vld [vmem:[%s15 + $0x60] sm:$0xff]
        %v2894 = vld [vmem:[%s15 + $0x68] sm:$0xff]
        %v2895 = vld [vmem:[%s15 + $0x70] sm:$0xff]
        %v2896 = vld [vmem:[%s15 + $0x78] sm:$0xff]
        %2897 = vmatprep.subr.mxu0 0.0
        %2898 = vmatpush1.msra.mxu0 %v2881
        %2899 = vmatprep.subr.mxu0 0.0
        %2900 = vmatpush1.msra.mxu0 %v2882
        %2901 = vmatprep.subr.mxu0 0.0
        %2902 = vmatpush1.msra.mxu0 %v2883
        %2903 = vmatprep.subr.mxu0 0.0
        %2904 = vmatpush1.msra.mxu0 %v2884
        %2905 = vmatprep.subr.mxu0 0.0
        %2906 = vmatpush1.msra.mxu0 %v2885
        %2907 = vmatprep.subr.mxu0 0.0
        %2908 = vmatpush1.msra.mxu0 %v2886
        %2909 = vmatprep.subr.mxu0 0.0
        %2910 = vmatpush1.msra.mxu0 %v2887
        %2911 = vmatprep.subr.mxu0 0.0
        %2912 = vmatpush1.msra.mxu0 %v2888
        %2913 = vmatprep.subr.mxu0 0.0
        %2914 = vmatpush1.msra.mxu0 %v2889
        %2915 = vmatprep.subr.mxu0 0.0
        %2916 = vmatpush1.msra.mxu0 %v2890
        %2917 = vmatprep.subr.mxu0 0.0
        %2918 = vmatpush1.msra.mxu0 %v2891
        %2919 = vmatprep.subr.mxu0 0.0
        %2920 = vmatpush1.msra.mxu0 %v2892
        %2921 = vmatprep.subr.mxu0 0.0
        %2922 = vmatpush1.msra.mxu0 %v2893
        %2923 = vmatprep.subr.mxu0 0.0
        %2924 = vmatpush1.msra.mxu0 %v2894
        %2925 = vmatprep.subr.mxu0 0.0
        %2926 = vmatpush1.msra.mxu0 %v2895
        %2927 = vmatprep.subr.mxu0 0.0
        %2928 = vmatpush1.msra.mxu0 %v2896
        %2929 = vmatprep.subr.mxu0 0.0
        %2930 = vmatpush1.msra.mxu0 0.0
        %2931 = vmatprep.subr.mxu0 0.0
        %2932 = vmatpush1.msra.mxu0 0.0
        %2933 = vmatprep.subr.mxu0 0.0
        %2934 = vmatpush1.msra.mxu0 0.0
        %2935 = vmatprep.subr.mxu0 0.0
        %2936 = vmatpush1.msra.mxu0 0.0
        %2937 = vmatprep.subr.mxu0 0.0
        %2938 = vmatpush1.msra.mxu0 0.0
        %2939 = vmatprep.subr.mxu0 0.0
        %2940 = vmatpush1.msra.mxu0 0.0
        %2941 = vmatprep.subr.mxu0 0.0
        %2942 = vmatpush1.msra.mxu0 0.0
        %2943 = vmatprep.subr.mxu0 0.0
        %2944 = vmatpush1.msra.mxu0 0.0
        %2945 = vmatprep.subr.mxu0 0.0
        %2946 = vmatpush1.msra.mxu0 0.0
        %2947 = vmatprep.subr.mxu0 0.0
        %2948 = vmatpush1.msra.mxu0 0.0
        %2949 = vmatprep.subr.mxu0 0.0
        %2950 = vmatpush1.msra.mxu0 0.0
        %2951 = vmatprep.subr.mxu0 0.0
        %2952 = vmatpush1.msra.mxu0 0.0
        %2953 = vmatprep.subr.mxu0 0.0
        %2954 = vmatpush1.msra.mxu0 0.0
        %2955 = vmatprep.subr.mxu0 0.0
        %2956 = vmatpush1.msra.mxu0 0.0
        %2957 = vmatprep.subr.mxu0 0.0
        %2958 = vmatpush1.msra.mxu0 0.0
        %2959 = vmatprep.subr.mxu0 0.0
        %2960 = vmatpush1.msra.mxu0 0.0
        %2961 = vmatprep.mubr.f32.mxu0 0.0
        %2962 = vmatmul.mubr.f32.gmra.mrb[0].mxu0 %v2878
        %v2963 = vpop.f32.mrb[0].mxu0
        %v2964 = vadd.f32 0.0, %v2963
        %v2965 = vpop.f32.mrb[0].mxu0
        %2966 = vmatprep.mubr.f32.mxu0 0.0
        %2967 = vmatmul.mubr.f32.gmra.mrb[0].mxu0 %v2879
        %v2968 = vpop.f32.mrb[0].mxu0
        %v2969 = vadd.f32 0.0, %v2968
        %v2970 = vpop.f32.mrb[0].mxu0
        %2971 = vdwg.mxu0
        %s2972 = scalar_lea.vmem %s15, 128
        %v2973 = vld [vmem:[%s2972] sm:$0xff]
        %v2974 = vld [vmem:[%s2972 + $0x8] sm:$0xff]
        %v2975 = vld [vmem:[%s2972 + $0x10] sm:$0xff]
        %v2976 = vld [vmem:[%s2972 + $0x18] sm:$0xff]
        %v2977 = vld [vmem:[%s2972 + $0x20] sm:$0xff]
        %v2978 = vld [vmem:[%s2972 + $0x28] sm:$0xff]
        %v2979 = vld [vmem:[%s2972 + $0x30] sm:$0xff]
        %v2980 = vld [vmem:[%s2972 + $0x38] sm:$0xff]
        %v2981 = vld [vmem:[%s2972 + $0x40] sm:$0xff]
        %v2982 = vld [vmem:[%s2972 + $0x48] sm:$0xff]
        %v2983 = vld [vmem:[%s2972 + $0x50] sm:$0xff]
        %v2984 = vld [vmem:[%s2972 + $0x58] sm:$0xff]
        %v2985 = vld [vmem:[%s2972 + $0x60] sm:$0xff]
        %v2986 = vld [vmem:[%s2972 + $0x68] sm:$0xff]
        %v2987 = vld [vmem:[%s2972 + $0x70] sm:$0xff]
        %v2988 = vld [vmem:[%s2972 + $0x78] sm:$0xff]
        %2989 = vmatprep.subr.mxu0 0.0
        %2990 = vmatpush1.msra.mxu0 %v2973
        %2991 = vmatprep.subr.mxu0 0.0
        %2992 = vmatpush1.msra.mxu0 %v2974
        %2993 = vmatprep.subr.mxu0 0.0
        %2994 = vmatpush1.msra.mxu0 %v2975
        %2995 = vmatprep.subr.mxu0 0.0
        %2996 = vmatpush1.msra.mxu0 %v2976
        %2997 = vmatprep.subr.mxu0 0.0
        %2998 = vmatpush1.msra.mxu0 %v2977
        %2999 = vmatprep.subr.mxu0 0.0
        %3000 = vmatpush1.msra.mxu0 %v2978
        %3001 = vmatprep.subr.mxu0 0.0
        %3002 = vmatpush1.msra.mxu0 %v2979
        %3003 = vmatprep.subr.mxu0 0.0
        %3004 = vmatpush1.msra.mxu0 %v2980
        %3005 = vmatprep.subr.mxu0 0.0
        %3006 = vmatpush1.msra.mxu0 %v2981
        %3007 = vmatprep.subr.mxu0 0.0
        %3008 = vmatpush1.msra.mxu0 %v2982
        %3009 = vmatprep.subr.mxu0 0.0
        %3010 = vmatpush1.msra.mxu0 %v2983
        %3011 = vmatprep.subr.mxu0 0.0
        %3012 = vmatpush1.msra.mxu0 %v2984
        %3013 = vmatprep.subr.mxu0 0.0
        %3014 = vmatpush1.msra.mxu0 %v2985
        %3015 = vmatprep.subr.mxu0 0.0
        %3016 = vmatpush1.msra.mxu0 %v2986
        %3017 = vmatprep.subr.mxu0 0.0
        %3018 = vmatpush1.msra.mxu0 %v2987
        %3019 = vmatprep.subr.mxu0 0.0
        %3020 = vmatpush1.msra.mxu0 %v2988
        %3021 = vmatprep.subr.mxu0 0.0
        %3022 = vmatpush1.msra.mxu0 0.0
        %3023 = vmatprep.subr.mxu0 0.0
        %3024 = vmatpush1.msra.mxu0 0.0
        %3025 = vmatprep.subr.mxu0 0.0
        %3026 = vmatpush1.msra.mxu0 0.0
        %3027 = vmatprep.subr.mxu0 0.0
        %3028 = vmatpush1.msra.mxu0 0.0
        %3029 = vmatprep.subr.mxu0 0.0
        %3030 = vmatpush1.msra.mxu0 0.0
        %3031 = vmatprep.subr.mxu0 0.0
        %3032 = vmatpush1.msra.mxu0 0.0
        %3033 = vmatprep.subr.mxu0 0.0
        %3034 = vmatpush1.msra.mxu0 0.0
        %3035 = vmatprep.subr.mxu0 0.0
        %3036 = vmatpush1.msra.mxu0 0.0
        %3037 = vmatprep.subr.mxu0 0.0
        %3038 = vmatpush1.msra.mxu0 0.0
        %3039 = vmatprep.subr.mxu0 0.0
        %3040 = vmatpush1.msra.mxu0 0.0
        %3041 = vmatprep.subr.mxu0 0.0
        %3042 = vmatpush1.msra.mxu0 0.0
        %3043 = vmatprep.subr.mxu0 0.0
        %3044 = vmatpush1.msra.mxu0 0.0
        %3045 = vmatprep.subr.mxu0 0.0
        %3046 = vmatpush1.msra.mxu0 0.0
        %3047 = vmatprep.subr.mxu0 0.0
        %3048 = vmatpush1.msra.mxu0 0.0
        %3049 = vmatprep.subr.mxu0 0.0
        %3050 = vmatpush1.msra.mxu0 0.0
        %3051 = vmatprep.subr.mxu0 0.0
        %3052 = vmatpush1.msra.mxu0 0.0
        %3053 = vmatprep.mubr.f32.mxu0 0.0
        %3054 = vmatmul.mubr.f32.gmra.mrb[0].mxu0 %v2878
        %v3055 = vpop.f32.mrb[0].mxu0
        %v3056 = vadd.f32 0.0, %v3055
        %v3057 = vpop.f32.mrb[0].mxu0
        %3058 = vmatprep.mubr.f32.mxu0 0.0
        %3059 = vmatmul.mubr.f32.gmra.mrb[0].mxu0 %v2879
        %v3060 = vpop.f32.mrb[0].mxu0
        %v3061 = vadd.f32 0.0, %v3060
        %v3062 = vpop.f32.mrb[0].mxu0
        %3063 = vdwg.mxu0
        %v3064 = vmax.f32 %v2964, %v3056
        %v3065 = vmax.f32 %v2969, %v3061
        %v3066 = vld [vmem:[#allocation12] sm:$0xff]
        %v3068 = vsel %vm2071, %v3066, 0
        %3070 = vmatprep.subr.mxu0 0.0
        %3071 = vmatpush1.msra.mxu0 %v3064
        %3072 = vmatprep.subr.mxu0 0.0
        %3073 = vmatpush1.msra.mxu0 %v3065
        %3074 = vmatprep.subr.mxu0 0.0
        %3075 = vmatpush1.msra.mxu0 0.0
        %3076 = vmatprep.subr.mxu0 0.0
        %3077 = vmatpush1.msra.mxu0 0.0
        %3078 = vmatprep.subr.mxu0 0.0
        %3079 = vmatpush1.msra.mxu0 0.0
        %3080 = vmatprep.subr.mxu0 0.0
        %3081 = vmatpush1.msra.mxu0 0.0
        %3082 = vmatprep.subr.mxu0 0.0
        %3083 = vmatpush1.msra.mxu0 0.0
        %3084 = vmatprep.subr.mxu0 0.0
        %3085 = vmatpush1.msra.mxu0 0.0
        %3086 = vmatprep.subr.mxu0 0.0
        %3087 = vmatpush1.msra.mxu0 0.0
        %3088 = vmatprep.subr.mxu0 0.0
        %3089 = vmatpush1.msra.mxu0 0.0
        %3090 = vmatprep.subr.mxu0 0.0
        %3091 = vmatpush1.msra.mxu0 0.0
        %3092 = vmatprep.subr.mxu0 0.0
        %3093 = vmatpush1.msra.mxu0 0.0
        %3094 = vmatprep.subr.mxu0 0.0
        %3095 = vmatpush1.msra.mxu0 0.0
        %3096 = vmatprep.subr.mxu0 0.0
        %3097 = vmatpush1.msra.mxu0 0.0
        %3098 = vmatprep.subr.mxu0 0.0
        %3099 = vmatpush1.msra.mxu0 0.0
        %3100 = vmatprep.subr.mxu0 0.0
        %3101 = vmatpush1.msra.mxu0 0.0
        %3102 = vmatprep.subr.mxu0 0.0
        %3103 = vmatpush1.msra.mxu0 0.0
        %3104 = vmatprep.subr.mxu0 0.0
        %3105 = vmatpush1.msra.mxu0 0.0
        %3106 = vmatprep.subr.mxu0 0.0
        %3107 = vmatpush1.msra.mxu0 0.0
        %3108 = vmatprep.subr.mxu0 0.0
        %3109 = vmatpush1.msra.mxu0 0.0
        %3110 = vmatprep.subr.mxu0 0.0
        %3111 = vmatpush1.msra.mxu0 0.0
        %3112 = vmatprep.subr.mxu0 0.0
        %3113 = vmatpush1.msra.mxu0 0.0
        %3114 = vmatprep.subr.mxu0 0.0
        %3115 = vmatpush1.msra.mxu0 0.0
        %3116 = vmatprep.subr.mxu0 0.0
        %3117 = vmatpush1.msra.mxu0 0.0
        %3118 = vmatprep.subr.mxu0 0.0
        %3119 = vmatpush1.msra.mxu0 0.0
        %3120 = vmatprep.subr.mxu0 0.0
        %3121 = vmatpush1.msra.mxu0 0.0
        %3122 = vmatprep.subr.mxu0 0.0
        %3123 = vmatpush1.msra.mxu0 0.0
        %3124 = vmatprep.subr.mxu0 0.0
        %3125 = vmatpush1.msra.mxu0 0.0
        %3126 = vmatprep.subr.mxu0 0.0
        %3127 = vmatpush1.msra.mxu0 0.0
        %3128 = vmatprep.subr.mxu0 0.0
        %3129 = vmatpush1.msra.mxu0 0.0
        %3130 = vmatprep.subr.mxu0 0.0
        %3131 = vmatpush1.msra.mxu0 0.0
        %3132 = vmatprep.subr.mxu0 0.0
        %3133 = vmatpush1.msra.mxu0 0.0
        %3134 = vmatprep.mubr.f32.mxu0 0.0
        %3135 = vmatmul.mubr.f32.gmra.mrb[0].mxu0 %v3068
        %v3136 = vpop.f32.mrb[0].mxu0
        %v3137 = vadd.f32 0.0, %v3136
        %v3138 = vpop.f32.mrb[0].mxu0
        %3139 = vdwg.mxu0
        %s3140 = scalar_lea.vmem [#allocation12], 8
        %v3141 = vld [vmem:[%s3140] sm:$0xff]
        %v3143 = vsel %vm2071, %v3141, 0
        %3145 = vmatprep.subr.mxu0 0.0
        %3146 = vmatpush1.msra.mxu0 %v3064
        %3147 = vmatprep.subr.mxu0 0.0
        %3148 = vmatpush1.msra.mxu0 %v3065
        %3149 = vmatprep.subr.mxu0 0.0
        %3150 = vmatpush1.msra.mxu0 0.0
        %3151 = vmatprep.subr.mxu0 0.0
        %3152 = vmatpush1.msra.mxu0 0.0
        %3153 = vmatprep.subr.mxu0 0.0
        %3154 = vmatpush1.msra.mxu0 0.0
        %3155 = vmatprep.subr.mxu0 0.0
        %3156 = vmatpush1.msra.mxu0 0.0
        %3157 = vmatprep.subr.mxu0 0.0
        %3158 = vmatpush1.msra.mxu0 0.0
        %3159 = vmatprep.subr.mxu0 0.0
        %3160 = vmatpush1.msra.mxu0 0.0
        %3161 = vmatprep.subr.mxu0 0.0
        %3162 = vmatpush1.msra.mxu0 0.0
        %3163 = vmatprep.subr.mxu0 0.0
        %3164 = vmatpush1.msra.mxu0 0.0
        %3165 = vmatprep.subr.mxu0 0.0
        %3166 = vmatpush1.msra.mxu0 0.0
        %3167 = vmatprep.subr.mxu0 0.0
        %3168 = vmatpush1.msra.mxu0 0.0
        %3169 = vmatprep.subr.mxu0 0.0
        %3170 = vmatpush1.msra.mxu0 0.0
        %3171 = vmatprep.subr.mxu0 0.0
        %3172 = vmatpush1.msra.mxu0 0.0
        %3173 = vmatprep.subr.mxu0 0.0
        %3174 = vmatpush1.msra.mxu0 0.0
        %3175 = vmatprep.subr.mxu0 0.0
        %3176 = vmatpush1.msra.mxu0 0.0
        %3177 = vmatprep.subr.mxu0 0.0
        %3178 = vmatpush1.msra.mxu0 0.0
        %3179 = vmatprep.subr.mxu0 0.0
        %3180 = vmatpush1.msra.mxu0 0.0
        %3181 = vmatprep.subr.mxu0 0.0
        %3182 = vmatpush1.msra.mxu0 0.0
        %3183 = vmatprep.subr.mxu0 0.0
        %3184 = vmatpush1.msra.mxu0 0.0
        %3185 = vmatprep.subr.mxu0 0.0
        %3186 = vmatpush1.msra.mxu0 0.0
        %3187 = vmatprep.subr.mxu0 0.0
        %3188 = vmatpush1.msra.mxu0 0.0
        %3189 = vmatprep.subr.mxu0 0.0
        %3190 = vmatpush1.msra.mxu0 0.0
        %3191 = vmatprep.subr.mxu0 0.0
        %3192 = vmatpush1.msra.mxu0 0.0
        %3193 = vmatprep.subr.mxu0 0.0
        %3194 = vmatpush1.msra.mxu0 0.0
        %3195 = vmatprep.subr.mxu0 0.0
        %3196 = vmatpush1.msra.mxu0 0.0
        %3197 = vmatprep.subr.mxu0 0.0
        %3198 = vmatpush1.msra.mxu0 0.0
        %3199 = vmatprep.subr.mxu0 0.0
        %3200 = vmatpush1.msra.mxu0 0.0
        %3201 = vmatprep.subr.mxu0 0.0
        %3202 = vmatpush1.msra.mxu0 0.0
        %3203 = vmatprep.subr.mxu0 0.0
        %3204 = vmatpush1.msra.mxu0 0.0
        %3205 = vmatprep.subr.mxu0 0.0
        %3206 = vmatpush1.msra.mxu0 0.0
        %3207 = vmatprep.subr.mxu0 0.0
        %3208 = vmatpush1.msra.mxu0 0.0
        %3209 = vmatprep.mubr.f32.mxu0 0.0
        %3210 = vmatmul.mubr.f32.gmra.mrb[0].mxu0 %v3143
        %v3211 = vpop.f32.mrb[0].mxu0
        %v3212 = vadd.f32 0.0, %v3211
        %v3213 = vpop.f32.mrb[0].mxu0
        %3214 = vdwg.mxu0
        %v3215 = vmax.f32 %v3137, %v3212
        %v3216 = vpack.c.bf16 %v3215, %v3215
        %v3217 = vld [vmem:[#allocation13] sm:$0xf]
        %v3218 = vld [vmem:[#allocation13 + $0x4] sm:$0xf]
        %v3219 = vld [vmem:[#allocation13 + $0x8] sm:$0xf]
        %v3220 = vld [vmem:[#allocation13 + $0xc] sm:$0xf]
        %v3221 = vld [vmem:[#allocation13 + $0x10] sm:$0xf]
        %v3222 = vld [vmem:[#allocation13 + $0x14] sm:$0xf]
        %v3223 = vld [vmem:[#allocation13 + $0x18] sm:$0xf]
        %v3224 = vld [vmem:[#allocation13 + $0x1c] sm:$0xf]
        %v3233 = vunpack.c.l.b16 %v3217
        %v3234 = vunpack.c.l.b16 %v3218
        %v3235 = vunpack.c.l.b16 %v3219
        %v3236 = vunpack.c.l.b16 %v3220
        %v3237 = vunpack.c.l.b16 %v3221
        %v3238 = vunpack.c.l.b16 %v3222
        %v3239 = vunpack.c.l.b16 %v3223
        %v3240 = vunpack.c.l.b16 %v3224
        %v3241 = vpack.c.b16 %v3234, %v3233
        %v3242 = vpack.c.b16 %v3236, %v3235
        %v3243 = vpack.c.b16 %v3238, %v3237
        %v3244 = vpack.c.b16 %v3240, %v3239
        %v3250 = vsel %vm1950, %v3216, 0
        %3252 = vmatprep.subr.bf16.mxu0 0
        %3253 = vmatpush1.bf16.msra.mxu0 %v3241
        %3254 = vmatprep.subr.bf16.mxu0 0
        %3255 = vmatpush1.bf16.msra.mxu0 %v3242
        %3256 = vmatprep.subr.bf16.mxu0 0
        %3257 = vmatpush1.bf16.msra.mxu0 %v3243
        %3258 = vmatprep.subr.bf16.mxu0 0
        %3259 = vmatpush1.bf16.msra.mxu0 %v3244
        %3260 = vmatprep.subr.bf16.mxu0 0
        %3261 = vmatpush1.bf16.msra.mxu0 0
        %3262 = vmatprep.subr.bf16.mxu0 0
        %3263 = vmatpush1.bf16.msra.mxu0 0
        %3264 = vmatprep.subr.bf16.mxu0 0
        %3265 = vmatpush1.bf16.msra.mxu0 0
        %3266 = vmatprep.subr.bf16.mxu0 0
        %3267 = vmatpush1.bf16.msra.mxu0 0
        %3268 = vmatprep.subr.bf16.mxu0 0
        %3269 = vmatpush1.bf16.msra.mxu0 0
        %3270 = vmatprep.subr.bf16.mxu0 0
        %3271 = vmatpush1.bf16.msra.mxu0 0
        %3272 = vmatprep.subr.bf16.mxu0 0
        %3273 = vmatpush1.bf16.msra.mxu0 0
        %3274 = vmatprep.subr.bf16.mxu0 0
        %3275 = vmatpush1.bf16.msra.mxu0 0
        %3276 = vmatprep.subr.bf16.mxu0 0
        %3277 = vmatpush1.bf16.msra.mxu0 0
        %3278 = vmatprep.subr.bf16.mxu0 0
        %3279 = vmatpush1.bf16.msra.mxu0 0
        %3280 = vmatprep.subr.bf16.mxu0 0
        %3281 = vmatpush1.bf16.msra.mxu0 0
        %3282 = vmatprep.subr.bf16.mxu0 0
        %3283 = vmatpush1.bf16.msra.mxu0 0
        %3284 = vmatprep.mubr.bf16.mxu0 0
        %3285 = vmatmul.mubr.bf16.gmra.mrb[0].mxu0 %v3250
        %v3286 = vpop.f32.mrb[0].mxu0
        %v3287 = vadd.f32 0.0, %v3286
        %v3288 = vpop.f32.mrb[0].mxu0
        %v3289 = vpop.f32.mrb[0].mxu0
        %v3290 = vpop.f32.mrb[0].mxu0
        %3291 = vdwg.mxu0
        %v3292 = vld [vmem:[#allocation21] sm:$0xff]
        %s3293 = scalar_lea.vmem [#allocation13], 32
        %v3294 = vld [vmem:[%s3293] sm:$0xf]
        %v3295 = vld [vmem:[%s3293 + $0x4] sm:$0xf]
        %v3296 = vld [vmem:[%s3293 + $0x8] sm:$0xf]
        %v3297 = vld [vmem:[%s3293 + $0xc] sm:$0xf]
        %v3298 = vld [vmem:[%s3293 + $0x10] sm:$0xf]
        %v3299 = vld [vmem:[%s3293 + $0x14] sm:$0xf]
        %v3300 = vld [vmem:[%s3293 + $0x18] sm:$0xf]
        %v3301 = vld [vmem:[%s3293 + $0x1c] sm:$0xf]
        %v3310 = vunpack.c.l.b16 %v3294
        %v3311 = vunpack.c.l.b16 %v3295
        %v3312 = vunpack.c.l.b16 %v3296
        %v3313 = vunpack.c.l.b16 %v3297
        %v3314 = vunpack.c.l.b16 %v3298
        %v3315 = vunpack.c.l.b16 %v3299
        %v3316 = vunpack.c.l.b16 %v3300
        %v3317 = vunpack.c.l.b16 %v3301
        %v3318 = vpack.c.b16 %v3311, %v3310
        %v3319 = vpack.c.b16 %v3313, %v3312
        %v3320 = vpack.c.b16 %v3315, %v3314
        %v3321 = vpack.c.b16 %v3317, %v3316
        %3326 = vmatprep.subr.bf16.mxu0 0
        %3327 = vmatpush1.bf16.msra.mxu0 %v3318
        %3328 = vmatprep.subr.bf16.mxu0 0
        %3329 = vmatpush1.bf16.msra.mxu0 %v3319
        %3330 = vmatprep.subr.bf16.mxu0 0
        %3331 = vmatpush1.bf16.msra.mxu0 %v3320
        %3332 = vmatprep.subr.bf16.mxu0 0
        %3333 = vmatpush1.bf16.msra.mxu0 %v3321
        %3334 = vmatprep.subr.bf16.mxu0 0
        %3335 = vmatpush1.bf16.msra.mxu0 0
        %3336 = vmatprep.subr.bf16.mxu0 0
        %3337 = vmatpush1.bf16.msra.mxu0 0
        %3338 = vmatprep.subr.bf16.mxu0 0
        %3339 = vmatpush1.bf16.msra.mxu0 0
        %3340 = vmatprep.subr.bf16.mxu0 0
        %3341 = vmatpush1.bf16.msra.mxu0 0
        %3342 = vmatprep.subr.bf16.mxu0 0
        %3343 = vmatpush1.bf16.msra.mxu0 0
        %3344 = vmatprep.subr.bf16.mxu0 0
        %3345 = vmatpush1.bf16.msra.mxu0 0
        %3346 = vmatprep.subr.bf16.mxu0 0
        %3347 = vmatpush1.bf16.msra.mxu0 0
        %3348 = vmatprep.subr.bf16.mxu0 0
        %3349 = vmatpush1.bf16.msra.mxu0 0
        %3350 = vmatprep.subr.bf16.mxu0 0
        %3351 = vmatpush1.bf16.msra.mxu0 0
        %3352 = vmatprep.subr.bf16.mxu0 0
        %3353 = vmatpush1.bf16.msra.mxu0 0
        %3354 = vmatprep.subr.bf16.mxu0 0
        %3355 = vmatpush1.bf16.msra.mxu0 0
        %3356 = vmatprep.subr.bf16.mxu0 0
        %3357 = vmatpush1.bf16.msra.mxu0 0
        %3358 = vmatprep.mubr.bf16.mxu0 0
        %3359 = vmatmul.mubr.bf16.gmra.mrb[0].mxu0 %v3250
        %v3360 = vpop.f32.mrb[0].mxu0
        %v3361 = vadd.f32 0.0, %v3360
        %v3362 = vpop.f32.mrb[0].mxu0
        %v3363 = vpop.f32.mrb[0].mxu0
        %v3364 = vpop.f32.mrb[0].mxu0
        %3365 = vdwg.mxu0
        %vm3366 = vcmask 64512
        %v3368 = vsel %vm3366, %v3292, 0
        %3370 = vmatprep.subr.mxu0 0.0
        %3371 = vmatpush1.msra.mxu0 %v3287
        %3372 = vmatprep.subr.mxu0 0.0
        %3373 = vmatpush1.msra.mxu0 0.0
        %3374 = vmatprep.subr.mxu0 0.0
        %3375 = vmatpush1.msra.mxu0 0.0
        %3376 = vmatprep.subr.mxu0 0.0
        %3377 = vmatpush1.msra.mxu0 0.0
        %3378 = vmatprep.subr.mxu0 0.0
        %3379 = vmatpush1.msra.mxu0 0.0
        %3380 = vmatprep.subr.mxu0 0.0
        %3381 = vmatpush1.msra.mxu0 0.0
        %3382 = vmatprep.subr.mxu0 0.0
        %3383 = vmatpush1.msra.mxu0 0.0
        %3384 = vmatprep.subr.mxu0 0.0
        %3385 = vmatpush1.msra.mxu0 0.0
        %3386 = vmatprep.subr.mxu0 0.0
        %3387 = vmatpush1.msra.mxu0 0.0
        %3388 = vmatprep.subr.mxu0 0.0
        %3389 = vmatpush1.msra.mxu0 0.0
        %3390 = vmatprep.subr.mxu0 0.0
        %3391 = vmatpush1.msra.mxu0 0.0
        %3392 = vmatprep.subr.mxu0 0.0
        %3393 = vmatpush1.msra.mxu0 0.0
        %3394 = vmatprep.subr.mxu0 0.0
        %3395 = vmatpush1.msra.mxu0 0.0
        %3396 = vmatprep.subr.mxu0 0.0
        %3397 = vmatpush1.msra.mxu0 0.0
        %3398 = vmatprep.subr.mxu0 0.0
        %3399 = vmatpush1.msra.mxu0 0.0
        %3400 = vmatprep.subr.mxu0 0.0
        %3401 = vmatpush1.msra.mxu0 0.0
        %3402 = vmatprep.subr.mxu0 0.0
        %3403 = vmatpush1.msra.mxu0 0.0
        %3404 = vmatprep.subr.mxu0 0.0
        %3405 = vmatpush1.msra.mxu0 0.0
        %3406 = vmatprep.subr.mxu0 0.0
        %3407 = vmatpush1.msra.mxu0 0.0
        %3408 = vmatprep.subr.mxu0 0.0
        %3409 = vmatpush1.msra.mxu0 0.0
        %3410 = vmatprep.subr.mxu0 0.0
        %3411 = vmatpush1.msra.mxu0 0.0
        %3412 = vmatprep.subr.mxu0 0.0
        %3413 = vmatpush1.msra.mxu0 0.0
        %3414 = vmatprep.subr.mxu0 0.0
        %3415 = vmatpush1.msra.mxu0 0.0
        %3416 = vmatprep.subr.mxu0 0.0
        %3417 = vmatpush1.msra.mxu0 0.0
        %3418 = vmatprep.subr.mxu0 0.0
        %3419 = vmatpush1.msra.mxu0 0.0
        %3420 = vmatprep.subr.mxu0 0.0
        %3421 = vmatpush1.msra.mxu0 0.0
        %3422 = vmatprep.subr.mxu0 0.0
        %3423 = vmatpush1.msra.mxu0 0.0
        %3424 = vmatprep.subr.mxu0 0.0
        %3425 = vmatpush1.msra.mxu0 0.0
        %3426 = vmatprep.subr.mxu0 0.0
        %3427 = vmatpush1.msra.mxu0 0.0
        %3428 = vmatprep.subr.mxu0 0.0
        %3429 = vmatpush1.msra.mxu0 0.0
        %3430 = vmatprep.subr.mxu0 0.0
        %3431 = vmatpush1.msra.mxu0 0.0
        %3432 = vmatprep.subr.mxu0 0.0
        %3433 = vmatpush1.msra.mxu0 0.0
        %3434 = vmatprep.mubr.f32.mxu0 0.0
        %3435 = vmatmul.mubr.f32.gmra.mrb[0].mxu0 %v3368
        %v3436 = vpop.f32.mrb[0].mxu0
        %v3437 = vadd.f32 %v3361, %v3436
        %v3438 = vpop.f32.mrb[0].mxu0
        %3439 = vdwg.mxu0
        %s3440 = scalar_lea.vmem [#allocation13], 64
        %v3441 = vld [vmem:[%s3440] sm:$0xf]
        %v3442 = vld [vmem:[%s3440 + $0x4] sm:$0xf]
        %v3443 = vld [vmem:[%s3440 + $0x8] sm:$0xf]
        %v3444 = vld [vmem:[%s3440 + $0xc] sm:$0xf]
        %v3445 = vld [vmem:[%s3440 + $0x10] sm:$0xf]
        %v3446 = vld [vmem:[%s3440 + $0x14] sm:$0xf]
        %v3447 = vld [vmem:[%s3440 + $0x18] sm:$0xf]
        %v3448 = vld [vmem:[%s3440 + $0x1c] sm:$0xf]
        %v3457 = vunpack.c.l.b16 %v3441
        %v3458 = vunpack.c.l.b16 %v3442
        %v3459 = vunpack.c.l.b16 %v3443
        %v3460 = vunpack.c.l.b16 %v3444
        %v3461 = vunpack.c.l.b16 %v3445
        %v3462 = vunpack.c.l.b16 %v3446
        %v3463 = vunpack.c.l.b16 %v3447
        %v3464 = vunpack.c.l.b16 %v3448
        %v3465 = vpack.c.b16 %v3458, %v3457
        %v3466 = vpack.c.b16 %v3460, %v3459
        %v3467 = vpack.c.b16 %v3462, %v3461
        %v3468 = vpack.c.b16 %v3464, %v3463
        %3473 = vmatprep.subr.bf16.mxu0 0
        %3474 = vmatpush1.bf16.msra.mxu0 %v3465
        %3475 = vmatprep.subr.bf16.mxu0 0
        %3476 = vmatpush1.bf16.msra.mxu0 %v3466
        %3477 = vmatprep.subr.bf16.mxu0 0
        %3478 = vmatpush1.bf16.msra.mxu0 %v3467
        %3479 = vmatprep.subr.bf16.mxu0 0
        %3480 = vmatpush1.bf16.msra.mxu0 %v3468
        %3481 = vmatprep.subr.bf16.mxu0 0
        %3482 = vmatpush1.bf16.msra.mxu0 0
        %3483 = vmatprep.subr.bf16.mxu0 0
        %3484 = vmatpush1.bf16.msra.mxu0 0
        %3485 = vmatprep.subr.bf16.mxu0 0
        %3486 = vmatpush1.bf16.msra.mxu0 0
        %3487 = vmatprep.subr.bf16.mxu0 0
        %3488 = vmatpush1.bf16.msra.mxu0 0
        %3489 = vmatprep.subr.bf16.mxu0 0
        %3490 = vmatpush1.bf16.msra.mxu0 0
        %3491 = vmatprep.subr.bf16.mxu0 0
        %3492 = vmatpush1.bf16.msra.mxu0 0
        %3493 = vmatprep.subr.bf16.mxu0 0
        %3494 = vmatpush1.bf16.msra.mxu0 0
        %3495 = vmatprep.subr.bf16.mxu0 0
        %3496 = vmatpush1.bf16.msra.mxu0 0
        %3497 = vmatprep.subr.bf16.mxu0 0
        %3498 = vmatpush1.bf16.msra.mxu0 0
        %3499 = vmatprep.subr.bf16.mxu0 0
        %3500 = vmatpush1.bf16.msra.mxu0 0
        %3501 = vmatprep.subr.bf16.mxu0 0
        %3502 = vmatpush1.bf16.msra.mxu0 0
        %3503 = vmatprep.subr.bf16.mxu0 0
        %3504 = vmatpush1.bf16.msra.mxu0 0
        %3505 = vmatprep.mubr.bf16.mxu0 0
        %3506 = vmatmul.mubr.bf16.gmra.mrb[0].mxu0 %v3250
        %v3507 = vpop.f32.mrb[0].mxu0
        %v3508 = vadd.f32 0.0, %v3507
        %v3509 = vpop.f32.mrb[0].mxu0
        %v3510 = vpop.f32.mrb[0].mxu0
        %v3511 = vpop.f32.mrb[0].mxu0
        %3512 = vdwg.mxu0
        %s3513 = scalar_lea.vmem [#allocation21], 16
        %v3514 = vld [vmem:[%s3513] sm:$0xff]
        %v3516 = vsel %vm3366, %v3514, 0
        %3518 = vmatprep.subr.mxu0 0.0
        %3519 = vmatpush1.msra.mxu0 %v3508
        %3520 = vmatprep.subr.mxu0 0.0
        %3521 = vmatpush1.msra.mxu0 0.0
        %3522 = vmatprep.subr.mxu0 0.0
        %3523 = vmatpush1.msra.mxu0 0.0
        %3524 = vmatprep.subr.mxu0 0.0
        %3525 = vmatpush1.msra.mxu0 0.0
        %3526 = vmatprep.subr.mxu0 0.0
        %3527 = vmatpush1.msra.mxu0 0.0
        %3528 = vmatprep.subr.mxu0 0.0
        %3529 = vmatpush1.msra.mxu0 0.0
        %3530 = vmatprep.subr.mxu0 0.0
        %3531 = vmatpush1.msra.mxu0 0.0
        %3532 = vmatprep.subr.mxu0 0.0
        %3533 = vmatpush1.msra.mxu0 0.0
        %3534 = vmatprep.subr.mxu0 0.0
        %3535 = vmatpush1.msra.mxu0 0.0
        %3536 = vmatprep.subr.mxu0 0.0
        %3537 = vmatpush1.msra.mxu0 0.0
        %3538 = vmatprep.subr.mxu0 0.0
        %3539 = vmatpush1.msra.mxu0 0.0
        %3540 = vmatprep.subr.mxu0 0.0
        %3541 = vmatpush1.msra.mxu0 0.0
        %3542 = vmatprep.subr.mxu0 0.0
        %3543 = vmatpush1.msra.mxu0 0.0
        %3544 = vmatprep.subr.mxu0 0.0
        %3545 = vmatpush1.msra.mxu0 0.0
        %3546 = vmatprep.subr.mxu0 0.0
        %3547 = vmatpush1.msra.mxu0 0.0
        %3548 = vmatprep.subr.mxu0 0.0
        %3549 = vmatpush1.msra.mxu0 0.0
        %3550 = vmatprep.subr.mxu0 0.0
        %3551 = vmatpush1.msra.mxu0 0.0
        %3552 = vmatprep.subr.mxu0 0.0
        %3553 = vmatpush1.msra.mxu0 0.0
        %3554 = vmatprep.subr.mxu0 0.0
        %3555 = vmatpush1.msra.mxu0 0.0
        %3556 = vmatprep.subr.mxu0 0.0
        %3557 = vmatpush1.msra.mxu0 0.0
        %3558 = vmatprep.subr.mxu0 0.0
        %3559 = vmatpush1.msra.mxu0 0.0
        %3560 = vmatprep.subr.mxu0 0.0
        %3561 = vmatpush1.msra.mxu0 0.0
        %3562 = vmatprep.subr.mxu0 0.0
        %3563 = vmatpush1.msra.mxu0 0.0
        %3564 = vmatprep.subr.mxu0 0.0
        %3565 = vmatpush1.msra.mxu0 0.0
        %3566 = vmatprep.subr.mxu0 0.0
        %3567 = vmatpush1.msra.mxu0 0.0
        %3568 = vmatprep.subr.mxu0 0.0
        %3569 = vmatpush1.msra.mxu0 0.0
        %3570 = vmatprep.subr.mxu0 0.0
        %3571 = vmatpush1.msra.mxu0 0.0
        %3572 = vmatprep.subr.mxu0 0.0
        %3573 = vmatpush1.msra.mxu0 0.0
        %3574 = vmatprep.subr.mxu0 0.0
        %3575 = vmatpush1.msra.mxu0 0.0
        %3576 = vmatprep.subr.mxu0 0.0
        %3577 = vmatpush1.msra.mxu0 0.0
        %3578 = vmatprep.subr.mxu0 0.0
        %3579 = vmatpush1.msra.mxu0 0.0
        %3580 = vmatprep.subr.mxu0 0.0
        %3581 = vmatpush1.msra.mxu0 0.0
        %3582 = vmatprep.mubr.f32.mxu0 0.0
        %3583 = vmatmul.mubr.f32.gmra.mrb[0].mxu0 %v3516
        %v3584 = vpop.f32.mrb[0].mxu0
        %v3585 = vadd.f32 0.0, %v3584
        %v3586 = vpop.f32.mrb[0].mxu0
        %3587 = vdwg.mxu0
        %v3588 = vadd.f32 %v3437, %v3585
        %v3589 = vld [vmem:[#allocation16] sm:$0xf]
        %v3590 = vld [vmem:[#allocation16 + $0x4] sm:$0xf]
        %v3591 = vld [vmem:[#allocation16 + $0x8] sm:$0xf]
        %v3592 = vld [vmem:[#allocation16 + $0xc] sm:$0xf]
        %v3593 = vld [vmem:[#allocation16 + $0x10] sm:$0xf]
        %v3594 = vld [vmem:[#allocation16 + $0x14] sm:$0xf]
        %v3595 = vld [vmem:[#allocation16 + $0x18] sm:$0xf]
        %v3596 = vld [vmem:[#allocation16 + $0x1c] sm:$0xf]
        %v3605 = vunpack.c.l.b16 %v3589
        %v3606 = vunpack.c.l.b16 %v3590
        %v3607 = vunpack.c.l.b16 %v3591
        %v3608 = vunpack.c.l.b16 %v3592
        %v3609 = vunpack.c.l.b16 %v3593
        %v3610 = vunpack.c.l.b16 %v3594
        %v3611 = vunpack.c.l.b16 %v3595
        %v3612 = vunpack.c.l.b16 %v3596
        %v3613 = vpack.c.b16 %v3606, %v3605
        %v3614 = vpack.c.b16 %v3608, %v3607
        %v3615 = vpack.c.b16 %v3610, %v3609
        %v3616 = vpack.c.b16 %v3612, %v3611
        %3621 = vmatprep.subr.bf16.mxu0 0
        %3622 = vmatpush1.bf16.msra.mxu0 %v3613
        %3623 = vmatprep.subr.bf16.mxu0 0
        %3624 = vmatpush1.bf16.msra.mxu0 %v3614
        %3625 = vmatprep.subr.bf16.mxu0 0
        %3626 = vmatpush1.bf16.msra.mxu0 %v3615
        %3627 = vmatprep.subr.bf16.mxu0 0
        %3628 = vmatpush1.bf16.msra.mxu0 %v3616
        %3629 = vmatprep.subr.bf16.mxu0 0
        %3630 = vmatpush1.bf16.msra.mxu0 0
        %3631 = vmatprep.subr.bf16.mxu0 0
        %3632 = vmatpush1.bf16.msra.mxu0 0
        %3633 = vmatprep.subr.bf16.mxu0 0
        %3634 = vmatpush1.bf16.msra.mxu0 0
        %3635 = vmatprep.subr.bf16.mxu0 0
        %3636 = vmatpush1.bf16.msra.mxu0 0
        %3637 = vmatprep.subr.bf16.mxu0 0
        %3638 = vmatpush1.bf16.msra.mxu0 0
        %3639 = vmatprep.subr.bf16.mxu0 0
        %3640 = vmatpush1.bf16.msra.mxu0 0
        %3641 = vmatprep.subr.bf16.mxu0 0
        %3642 = vmatpush1.bf16.msra.mxu0 0
        %3643 = vmatprep.subr.bf16.mxu0 0
        %3644 = vmatpush1.bf16.msra.mxu0 0
        %3645 = vmatprep.subr.bf16.mxu0 0
        %3646 = vmatpush1.bf16.msra.mxu0 0
        %3647 = vmatprep.subr.bf16.mxu0 0
        %3648 = vmatpush1.bf16.msra.mxu0 0
        %3649 = vmatprep.subr.bf16.mxu0 0
        %3650 = vmatpush1.bf16.msra.mxu0 0
        %3651 = vmatprep.subr.bf16.mxu0 0
        %3652 = vmatpush1.bf16.msra.mxu0 0
        %3653 = vmatprep.mubr.bf16.mxu0 0
        %3654 = vmatmul.mubr.bf16.gmra.mrb[0].mxu0 %v3250
        %v3655 = vpop.f32.mrb[0].mxu0
        %v3656 = vadd.f32 0.0, %v3655
        %v3657 = vpop.f32.mrb[0].mxu0
        %v3658 = vpop.f32.mrb[0].mxu0
        %v3659 = vpop.f32.mrb[0].mxu0
        %3660 = vdwg.mxu0
        %v3661 = vld [vmem:[#allocation15] sm:$0x1]
        %v3663 = vlaneseq
        %v3664 = vshrl.u32 %v3663, 7
        %v3665 = vsub.s32 0, %v3664
        %v3666 = vrot.slane %v3661, %v3665
        %v3668 = vadd.f32 %v3588, %v3666
        %v3669 = vmax.f32 %v3668, 0.0
        %v3670 = vpack.c.bf16 %v3669, %v3669
        %v3671 = vld [vmem:[#allocation18] sm:$0xf]
        %v3672 = vld [vmem:[#allocation18 + $0x4] sm:$0xf]
        %v3673 = vld [vmem:[#allocation18 + $0x8] sm:$0xf]
        %v3674 = vld [vmem:[#allocation18 + $0xc] sm:$0xf]
        %v3675 = vld [vmem:[#allocation18 + $0x10] sm:$0xf]
        %v3676 = vld [vmem:[#allocation18 + $0x14] sm:$0xf]
        %v3677 = vld [vmem:[#allocation18 + $0x18] sm:$0xf]
        %v3678 = vld [vmem:[#allocation18 + $0x1c] sm:$0xf]
        %v3679 = vld [vmem:[#allocation18 + $0x20] sm:$0xf]
        %v3680 = vld [vmem:[#allocation18 + $0x24] sm:$0xf]
        %v3681 = vld [vmem:[#allocation18 + $0x28] sm:$0xf]
        %v3682 = vld [vmem:[#allocation18 + $0x2c] sm:$0xf]
        %v3683 = vld [vmem:[#allocation18 + $0x30] sm:$0xf]
        %v3684 = vld [vmem:[#allocation18 + $0x34] sm:$0xf]
        %v3685 = vld [vmem:[#allocation18 + $0x38] sm:$0xf]
        %v3686 = vld [vmem:[#allocation18 + $0x3c] sm:$0xf]
        %v3703 = vunpack.c.l.b16 %v3671
        %v3704 = vunpack.c.l.b16 %v3672
        %v3705 = vunpack.c.l.b16 %v3673
        %v3706 = vunpack.c.l.b16 %v3674
        %v3707 = vunpack.c.l.b16 %v3675
        %v3708 = vunpack.c.l.b16 %v3676
        %v3709 = vunpack.c.l.b16 %v3677
        %v3710 = vunpack.c.l.b16 %v3678
        %v3711 = vunpack.c.l.b16 %v3679
        %v3712 = vunpack.c.l.b16 %v3680
        %v3713 = vunpack.c.l.b16 %v3681
        %v3714 = vunpack.c.l.b16 %v3682
        %v3715 = vunpack.c.l.b16 %v3683
        %v3716 = vunpack.c.l.b16 %v3684
        %v3717 = vunpack.c.l.b16 %v3685
        %v3718 = vunpack.c.l.b16 %v3686
        %v3719 = vpack.c.b16 %v3704, %v3703
        %v3720 = vpack.c.b16 %v3706, %v3705
        %v3721 = vpack.c.b16 %v3708, %v3707
        %v3722 = vpack.c.b16 %v3710, %v3709
        %v3723 = vpack.c.b16 %v3712, %v3711
        %v3724 = vpack.c.b16 %v3714, %v3713
        %v3725 = vpack.c.b16 %v3716, %v3715
        %v3726 = vpack.c.b16 %v3718, %v3717
        %3735 = vmatprep.subr.bf16.mxu0 0
        %3736 = vmatpush1.bf16.msra.mxu0 %v3719
        %3737 = vmatprep.subr.bf16.mxu0 0
        %3738 = vmatpush1.bf16.msra.mxu0 %v3720
        %3739 = vmatprep.subr.bf16.mxu0 0
        %3740 = vmatpush1.bf16.msra.mxu0 %v3721
        %3741 = vmatprep.subr.bf16.mxu0 0
        %3742 = vmatpush1.bf16.msra.mxu0 %v3722
        %3743 = vmatprep.subr.bf16.mxu0 0
        %3744 = vmatpush1.bf16.msra.mxu0 %v3723
        %3745 = vmatprep.subr.bf16.mxu0 0
        %3746 = vmatpush1.bf16.msra.mxu0 %v3724
        %3747 = vmatprep.subr.bf16.mxu0 0
        %3748 = vmatpush1.bf16.msra.mxu0 %v3725
        %3749 = vmatprep.subr.bf16.mxu0 0
        %3750 = vmatpush1.bf16.msra.mxu0 %v3726
        %3751 = vmatprep.subr.bf16.mxu0 0
        %3752 = vmatpush1.bf16.msra.mxu0 0
        %3753 = vmatprep.subr.bf16.mxu0 0
        %3754 = vmatpush1.bf16.msra.mxu0 0
        %3755 = vmatprep.subr.bf16.mxu0 0
        %3756 = vmatpush1.bf16.msra.mxu0 0
        %3757 = vmatprep.subr.bf16.mxu0 0
        %3758 = vmatpush1.bf16.msra.mxu0 0
        %3759 = vmatprep.subr.bf16.mxu0 0
        %3760 = vmatpush1.bf16.msra.mxu0 0
        %3761 = vmatprep.subr.bf16.mxu0 0
        %3762 = vmatpush1.bf16.msra.mxu0 0
        %3763 = vmatprep.subr.bf16.mxu0 0
        %3764 = vmatpush1.bf16.msra.mxu0 0
        %3765 = vmatprep.subr.bf16.mxu0 0
        %3766 = vmatpush1.bf16.msra.mxu0 0
        %3767 = vmatprep.mubr.bf16.mxu0 0
        %3768 = vmatmul.mubr.bf16.gmra.mrb[0].mxu0 %v3670
        %v3769 = vpop.f32.mrb[0].mxu0
        %v3770 = vadd.f32 0.0, %v3769
        %v3771 = vpop.f32.mrb[0].mxu0
        %v3772 = vpop.f32.mrb[0].mxu0
        %v3773 = vpop.f32.mrb[0].mxu0
        %3774 = vdwg.mxu0
        %s3775 = scalar_lea.vmem [#allocation18], 64
        %v3776 = vld [vmem:[%s3775] sm:$0xf]
        %v3777 = vld [vmem:[%s3775 + $0x4] sm:$0xf]
        %v3778 = vld [vmem:[%s3775 + $0x8] sm:$0xf]
        %v3779 = vld [vmem:[%s3775 + $0xc] sm:$0xf]
        %v3780 = vld [vmem:[%s3775 + $0x10] sm:$0xf]
        %v3781 = vld [vmem:[%s3775 + $0x14] sm:$0xf]
        %v3782 = vld [vmem:[%s3775 + $0x18] sm:$0xf]
        %v3783 = vld [vmem:[%s3775 + $0x1c] sm:$0xf]
        %v3784 = vld [vmem:[%s3775 + $0x20] sm:$0xf]
        %v3785 = vld [vmem:[%s3775 + $0x24] sm:$0xf]
        %v3786 = vld [vmem:[%s3775 + $0x28] sm:$0xf]
        %v3787 = vld [vmem:[%s3775 + $0x2c] sm:$0xf]
        %v3788 = vld [vmem:[%s3775 + $0x30] sm:$0xf]
        %v3789 = vld [vmem:[%s3775 + $0x34] sm:$0xf]
        %v3790 = vld [vmem:[%s3775 + $0x38] sm:$0xf]
        %v3791 = vld [vmem:[%s3775 + $0x3c] sm:$0xf]
        %v3808 = vunpack.c.l.b16 %v3776
        %v3809 = vunpack.c.l.b16 %v3777
        %v3810 = vunpack.c.l.b16 %v3778
        %v3811 = vunpack.c.l.b16 %v3779
        %v3812 = vunpack.c.l.b16 %v3780
        %v3813 = vunpack.c.l.b16 %v3781
        %v3814 = vunpack.c.l.b16 %v3782
        %v3815 = vunpack.c.l.b16 %v3783
        %v3816 = vunpack.c.l.b16 %v3784
        %v3817 = vunpack.c.l.b16 %v3785
        %v3818 = vunpack.c.l.b16 %v3786
        %v3819 = vunpack.c.l.b16 %v3787
        %v3820 = vunpack.c.l.b16 %v3788
        %v3821 = vunpack.c.l.b16 %v3789
        %v3822 = vunpack.c.l.b16 %v3790
        %v3823 = vunpack.c.l.b16 %v3791
        %v3824 = vpack.c.b16 %v3809, %v3808
        %v3825 = vpack.c.b16 %v3811, %v3810
        %v3826 = vpack.c.b16 %v3813, %v3812
        %v3827 = vpack.c.b16 %v3815, %v3814
        %v3828 = vpack.c.b16 %v3817, %v3816
        %v3829 = vpack.c.b16 %v3819, %v3818
        %v3830 = vpack.c.b16 %v3821, %v3820
        %v3831 = vpack.c.b16 %v3823, %v3822
        %3840 = vmatprep.subr.bf16.mxu0 0
        %3841 = vmatpush1.bf16.msra.mxu0 %v3824
        %3842 = vmatprep.subr.bf16.mxu0 0
        %3843 = vmatpush1.bf16.msra.mxu0 %v3825
        %3844 = vmatprep.subr.bf16.mxu0 0
        %3845 = vmatpush1.bf16.msra.mxu0 %v3826
        %3846 = vmatprep.subr.bf16.mxu0 0
        %3847 = vmatpush1.bf16.msra.mxu0 %v3827
        %3848 = vmatprep.subr.bf16.mxu0 0
        %3849 = vmatpush1.bf16.msra.mxu0 %v3828
        %3850 = vmatprep.subr.bf16.mxu0 0
        %3851 = vmatpush1.bf16.msra.mxu0 %v3829
        %3852 = vmatprep.subr.bf16.mxu0 0
        %3853 = vmatpush1.bf16.msra.mxu0 %v3830
        %3854 = vmatprep.subr.bf16.mxu0 0
        %3855 = vmatpush1.bf16.msra.mxu0 %v3831
        %3856 = vmatprep.subr.bf16.mxu0 0
        %3857 = vmatpush1.bf16.msra.mxu0 0
        %3858 = vmatprep.subr.bf16.mxu0 0
        %3859 = vmatpush1.bf16.msra.mxu0 0
        %3860 = vmatprep.subr.bf16.mxu0 0
        %3861 = vmatpush1.bf16.msra.mxu0 0
        %3862 = vmatprep.subr.bf16.mxu0 0
        %3863 = vmatpush1.bf16.msra.mxu0 0
        %3864 = vmatprep.subr.bf16.mxu0 0
        %3865 = vmatpush1.bf16.msra.mxu0 0
        %3866 = vmatprep.subr.bf16.mxu0 0
        %3867 = vmatpush1.bf16.msra.mxu0 0
        %3868 = vmatprep.subr.bf16.mxu0 0
        %3869 = vmatpush1.bf16.msra.mxu0 0
        %3870 = vmatprep.subr.bf16.mxu0 0
        %3871 = vmatpush1.bf16.msra.mxu0 0
        %3872 = vmatprep.mubr.bf16.mxu0 0
        %3873 = vmatmul.mubr.bf16.gmra.mrb[0].mxu0 %v3670
        %v3874 = vpop.f32.mrb[0].mxu0
        %v3875 = vadd.f32 0.0, %v3874
        %v3876 = vpop.f32.mrb[0].mxu0
        %v3877 = vpop.f32.mrb[0].mxu0
        %v3878 = vpop.f32.mrb[0].mxu0
        %3879 = vdwg.mxu0
        %3880 = vmatprep.subr.mxu0 0.0
        %3881 = vmatpush1.msra.mxu0 %v3770
        %3882 = vmatprep.subr.mxu0 0.0
        %3883 = vmatpush1.msra.mxu0 0.0
        %3884 = vmatprep.subr.mxu0 0.0
        %3885 = vmatpush1.msra.mxu0 0.0
        %3886 = vmatprep.subr.mxu0 0.0
        %3887 = vmatpush1.msra.mxu0 0.0
        %3888 = vmatprep.subr.mxu0 0.0
        %3889 = vmatpush1.msra.mxu0 0.0
        %3890 = vmatprep.subr.mxu0 0.0
        %3891 = vmatpush1.msra.mxu0 0.0
        %3892 = vmatprep.subr.mxu0 0.0
        %3893 = vmatpush1.msra.mxu0 0.0
        %3894 = vmatprep.subr.mxu0 0.0
        %3895 = vmatpush1.msra.mxu0 0.0
        %3896 = vmatprep.subr.mxu0 0.0
        %3897 = vmatpush1.msra.mxu0 0.0
        %3898 = vmatprep.subr.mxu0 0.0
        %3899 = vmatpush1.msra.mxu0 0.0
        %3900 = vmatprep.subr.mxu0 0.0
        %3901 = vmatpush1.msra.mxu0 0.0
        %3902 = vmatprep.subr.mxu0 0.0
        %3903 = vmatpush1.msra.mxu0 0.0
        %3904 = vmatprep.subr.mxu0 0.0
        %3905 = vmatpush1.msra.mxu0 0.0
        %3906 = vmatprep.subr.mxu0 0.0
        %3907 = vmatpush1.msra.mxu0 0.0
        %3908 = vmatprep.subr.mxu0 0.0
        %3909 = vmatpush1.msra.mxu0 0.0
        %3910 = vmatprep.subr.mxu0 0.0
        %3911 = vmatpush1.msra.mxu0 0.0
        %3912 = vmatprep.subr.mxu0 0.0
        %3913 = vmatpush1.msra.mxu0 0.0
        %3914 = vmatprep.subr.mxu0 0.0
        %3915 = vmatpush1.msra.mxu0 0.0
        %3916 = vmatprep.subr.mxu0 0.0
        %3917 = vmatpush1.msra.mxu0 0.0
        %3918 = vmatprep.subr.mxu0 0.0
        %3919 = vmatpush1.msra.mxu0 0.0
        %3920 = vmatprep.subr.mxu0 0.0
        %3921 = vmatpush1.msra.mxu0 0.0
        %3922 = vmatprep.subr.mxu0 0.0
        %3923 = vmatpush1.msra.mxu0 0.0
        %3924 = vmatprep.subr.mxu0 0.0
        %3925 = vmatpush1.msra.mxu0 0.0
        %3926 = vmatprep.subr.mxu0 0.0
        %3927 = vmatpush1.msra.mxu0 0.0
        %3928 = vmatprep.subr.mxu0 0.0
        %3929 = vmatpush1.msra.mxu0 0.0
        %3930 = vmatprep.subr.mxu0 0.0
        %3931 = vmatpush1.msra.mxu0 0.0
        %3932 = vmatprep.subr.mxu0 0.0
        %3933 = vmatpush1.msra.mxu0 0.0
        %3934 = vmatprep.subr.mxu0 0.0
        %3935 = vmatpush1.msra.mxu0 0.0
        %3936 = vmatprep.subr.mxu0 0.0
        %3937 = vmatpush1.msra.mxu0 0.0
        %3938 = vmatprep.subr.mxu0 0.0
        %3939 = vmatpush1.msra.mxu0 0.0
        %3940 = vmatprep.subr.mxu0 0.0
        %3941 = vmatpush1.msra.mxu0 0.0
        %3942 = vmatprep.subr.mxu0 0.0
        %3943 = vmatpush1.msra.mxu0 0.0
        %3944 = vmatprep.mubr.f32.mxu0 0.0
        %3945 = vmatmul.mubr.f32.gmra.mrb[0].mxu0 %v3368
        %v3946 = vpop.f32.mrb[0].mxu0
        %v3947 = vadd.f32 %v3875, %v3946
        %v3948 = vpop.f32.mrb[0].mxu0
        %3949 = vdwg.mxu0
        %s3950 = scalar_lea.vmem [#allocation18], 128
        %v3951 = vld [vmem:[%s3950] sm:$0xf]
        %v3952 = vld [vmem:[%s3950 + $0x4] sm:$0xf]
        %v3953 = vld [vmem:[%s3950 + $0x8] sm:$0xf]
        %v3954 = vld [vmem:[%s3950 + $0xc] sm:$0xf]
        %v3955 = vld [vmem:[%s3950 + $0x10] sm:$0xf]
        %v3956 = vld [vmem:[%s3950 + $0x14] sm:$0xf]
        %v3957 = vld [vmem:[%s3950 + $0x18] sm:$0xf]
        %v3958 = vld [vmem:[%s3950 + $0x1c] sm:$0xf]
        %v3959 = vld [vmem:[%s3950 + $0x20] sm:$0xf]
        %v3960 = vld [vmem:[%s3950 + $0x24] sm:$0xf]
        %v3961 = vld [vmem:[%s3950 + $0x28] sm:$0xf]
        %v3962 = vld [vmem:[%s3950 + $0x2c] sm:$0xf]
        %v3963 = vld [vmem:[%s3950 + $0x30] sm:$0xf]
        %v3964 = vld [vmem:[%s3950 + $0x34] sm:$0xf]
        %v3965 = vld [vmem:[%s3950 + $0x38] sm:$0xf]
        %v3966 = vld [vmem:[%s3950 + $0x3c] sm:$0xf]
        %v3983 = vunpack.c.l.b16 %v3951
        %v3984 = vunpack.c.l.b16 %v3952
        %v3985 = vunpack.c.l.b16 %v3953
        %v3986 = vunpack.c.l.b16 %v3954
        %v3987 = vunpack.c.l.b16 %v3955
        %v3988 = vunpack.c.l.b16 %v3956
        %v3989 = vunpack.c.l.b16 %v3957
        %v3990 = vunpack.c.l.b16 %v3958
        %v3991 = vunpack.c.l.b16 %v3959
        %v3992 = vunpack.c.l.b16 %v3960
        %v3993 = vunpack.c.l.b16 %v3961
        %v3994 = vunpack.c.l.b16 %v3962
        %v3995 = vunpack.c.l.b16 %v3963
        %v3996 = vunpack.c.l.b16 %v3964
        %v3997 = vunpack.c.l.b16 %v3965
        %v3998 = vunpack.c.l.b16 %v3966
        %v3999 = vpack.c.b16 %v3984, %v3983
        %v4000 = vpack.c.b16 %v3986, %v3985
        %v4001 = vpack.c.b16 %v3988, %v3987
        %v4002 = vpack.c.b16 %v3990, %v3989
        %v4003 = vpack.c.b16 %v3992, %v3991
        %v4004 = vpack.c.b16 %v3994, %v3993
        %v4005 = vpack.c.b16 %v3996, %v3995
        %v4006 = vpack.c.b16 %v3998, %v3997
        %4015 = vmatprep.subr.bf16.mxu0 0
        %4016 = vmatpush1.bf16.msra.mxu0 %v3999
        %4017 = vmatprep.subr.bf16.mxu0 0
        %4018 = vmatpush1.bf16.msra.mxu0 %v4000
        %4019 = vmatprep.subr.bf16.mxu0 0
        %4020 = vmatpush1.bf16.msra.mxu0 %v4001
        %4021 = vmatprep.subr.bf16.mxu0 0
        %4022 = vmatpush1.bf16.msra.mxu0 %v4002
        %4023 = vmatprep.subr.bf16.mxu0 0
        %4024 = vmatpush1.bf16.msra.mxu0 %v4003
        %4025 = vmatprep.subr.bf16.mxu0 0
        %4026 = vmatpush1.bf16.msra.mxu0 %v4004
        %4027 = vmatprep.subr.bf16.mxu0 0
        %4028 = vmatpush1.bf16.msra.mxu0 %v4005
        %4029 = vmatprep.subr.bf16.mxu0 0
        %4030 = vmatpush1.bf16.msra.mxu0 %v4006
        %4031 = vmatprep.subr.bf16.mxu0 0
        %4032 = vmatpush1.bf16.msra.mxu0 0
        %4033 = vmatprep.subr.bf16.mxu0 0
        %4034 = vmatpush1.bf16.msra.mxu0 0
        %4035 = vmatprep.subr.bf16.mxu0 0
        %4036 = vmatpush1.bf16.msra.mxu0 0
        %4037 = vmatprep.subr.bf16.mxu0 0
        %4038 = vmatpush1.bf16.msra.mxu0 0
        %4039 = vmatprep.subr.bf16.mxu0 0
        %4040 = vmatpush1.bf16.msra.mxu0 0
        %4041 = vmatprep.subr.bf16.mxu0 0
        %4042 = vmatpush1.bf16.msra.mxu0 0
        %4043 = vmatprep.subr.bf16.mxu0 0
        %4044 = vmatpush1.bf16.msra.mxu0 0
        %4045 = vmatprep.subr.bf16.mxu0 0
        %4046 = vmatpush1.bf16.msra.mxu0 0
        %4047 = vmatprep.mubr.bf16.mxu0 0
        %4048 = vmatmul.mubr.bf16.gmra.mrb[0].mxu0 %v3670
        %v4049 = vpop.f32.mrb[0].mxu0
        %v4050 = vadd.f32 0.0, %v4049
        %v4051 = vpop.f32.mrb[0].mxu0
        %v4052 = vpop.f32.mrb[0].mxu0
        %v4053 = vpop.f32.mrb[0].mxu0
        %4054 = vdwg.mxu0
        %4055 = vmatprep.subr.mxu0 0.0
        %4056 = vmatpush1.msra.mxu0 %v4050
        %4057 = vmatprep.subr.mxu0 0.0
        %4058 = vmatpush1.msra.mxu0 0.0
        %4059 = vmatprep.subr.mxu0 0.0
        %4060 = vmatpush1.msra.mxu0 0.0
        %4061 = vmatprep.subr.mxu0 0.0
        %4062 = vmatpush1.msra.mxu0 0.0
        %4063 = vmatprep.subr.mxu0 0.0
        %4064 = vmatpush1.msra.mxu0 0.0
        %4065 = vmatprep.subr.mxu0 0.0
        %4066 = vmatpush1.msra.mxu0 0.0
        %4067 = vmatprep.subr.mxu0 0.0
        %4068 = vmatpush1.msra.mxu0 0.0
        %4069 = vmatprep.subr.mxu0 0.0
        %4070 = vmatpush1.msra.mxu0 0.0
        %4071 = vmatprep.subr.mxu0 0.0
        %4072 = vmatpush1.msra.mxu0 0.0
        %4073 = vmatprep.subr.mxu0 0.0
        %4074 = vmatpush1.msra.mxu0 0.0
        %4075 = vmatprep.subr.mxu0 0.0
        %4076 = vmatpush1.msra.mxu0 0.0
        %4077 = vmatprep.subr.mxu0 0.0
        %4078 = vmatpush1.msra.mxu0 0.0
        %4079 = vmatprep.subr.mxu0 0.0
        %4080 = vmatpush1.msra.mxu0 0.0
        %4081 = vmatprep.subr.mxu0 0.0
        %4082 = vmatpush1.msra.mxu0 0.0
        %4083 = vmatprep.subr.mxu0 0.0
        %4084 = vmatpush1.msra.mxu0 0.0
        %4085 = vmatprep.subr.mxu0 0.0
        %4086 = vmatpush1.msra.mxu0 0.0
        %4087 = vmatprep.subr.mxu0 0.0
        %4088 = vmatpush1.msra.mxu0 0.0
        %4089 = vmatprep.subr.mxu0 0.0
        %4090 = vmatpush1.msra.mxu0 0.0
        %4091 = vmatprep.subr.mxu0 0.0
        %4092 = vmatpush1.msra.mxu0 0.0
        %4093 = vmatprep.subr.mxu0 0.0
        %4094 = vmatpush1.msra.mxu0 0.0
        %4095 = vmatprep.subr.mxu0 0.0
        %4096 = vmatpush1.msra.mxu0 0.0
        %4097 = vmatprep.subr.mxu0 0.0
        %4098 = vmatpush1.msra.mxu0 0.0
        %4099 = vmatprep.subr.mxu0 0.0
        %4100 = vmatpush1.msra.mxu0 0.0
        %4101 = vmatprep.subr.mxu0 0.0
        %4102 = vmatpush1.msra.mxu0 0.0
        %4103 = vmatprep.subr.mxu0 0.0
        %4104 = vmatpush1.msra.mxu0 0.0
        %4105 = vmatprep.subr.mxu0 0.0
        %4106 = vmatpush1.msra.mxu0 0.0
        %4107 = vmatprep.subr.mxu0 0.0
        %4108 = vmatpush1.msra.mxu0 0.0
        %4109 = vmatprep.subr.mxu0 0.0
        %4110 = vmatpush1.msra.mxu0 0.0
        %4111 = vmatprep.subr.mxu0 0.0
        %4112 = vmatpush1.msra.mxu0 0.0
        %4113 = vmatprep.subr.mxu0 0.0
        %4114 = vmatpush1.msra.mxu0 0.0
        %4115 = vmatprep.subr.mxu0 0.0
        %4116 = vmatpush1.msra.mxu0 0.0
        %4117 = vmatprep.subr.mxu0 0.0
        %4118 = vmatpush1.msra.mxu0 0.0
        %4119 = vmatprep.mubr.f32.mxu0 0.0
        %4120 = vmatmul.mubr.f32.gmra.mrb[0].mxu0 %v3516
        %v4121 = vpop.f32.mrb[0].mxu0
        %v4122 = vadd.f32 0.0, %v4121
        %v4123 = vpop.f32.mrb[0].mxu0
        %4124 = vdwg.mxu0
        %v4125 = vadd.f32 %v3947, %v4122
        %v4126 = vld [vmem:[#allocation19] sm:$0x1]
        %v4128 = vlaneseq
        %v4129 = vshrl.u32 %v4128, 7
        %v4130 = vsub.s32 0, %v4129
        %v4131 = vrot.slane %v4126, %v4130
        %v4133 = vadd.f32 %v4125, %v4131
        %v4134 = vadd.f32 %v4133, %v3656
        %v4135 = vmax.f32 %v4134, 0.0
        %v4136 = vpack.c.bf16 %v4135, %v4135
        %v4137 = vld [vmem:[%s31] sm:$0xff]
        %v4138 = vld [vmem:[%s31 + $0x8] sm:$0xff]
        %v4139 = vld [vmem:[%s31 + $0x10] sm:$0xff]
        %v4140 = vld [vmem:[%s31 + $0x18] sm:$0xff]
        %v4141 = vld [vmem:[%s31 + $0x20] sm:$0xff]
        %v4142 = vld [vmem:[%s31 + $0x28] sm:$0xff]
        %v4143 = vld [vmem:[%s31 + $0x30] sm:$0xff]
        %v4144 = vld [vmem:[%s31 + $0x38] sm:$0xff]
        %v4145 = vld [vmem:[%s31 + $0x40] sm:$0xff]
        %v4146 = vld [vmem:[%s31 + $0x48] sm:$0xff]
        %v4147 = vld [vmem:[%s31 + $0x50] sm:$0xff]
        %v4148 = vld [vmem:[%s31 + $0x58] sm:$0xff]
        %v4149 = vld [vmem:[%s31 + $0x60] sm:$0xff]
        %v4150 = vld [vmem:[%s31 + $0x68] sm:$0xff]
        %v4151 = vld [vmem:[%s31 + $0x70] sm:$0xff]
        %v4152 = vld [vmem:[%s31 + $0x78] sm:$0xff]
        %4153 = vmatprep.subr.mxu0 0.0
        %4154 = vmatpush1.msra.mxu0 %v4137
        %4155 = vmatprep.subr.mxu0 0.0
        %4156 = vmatpush1.msra.mxu0 %v4138
        %4157 = vmatprep.subr.mxu0 0.0
        %4158 = vmatpush1.msra.mxu0 %v4139
        %4159 = vmatprep.subr.mxu0 0.0
        %4160 = vmatpush1.msra.mxu0 %v4140
        %4161 = vmatprep.subr.mxu0 0.0
        %4162 = vmatpush1.msra.mxu0 %v4141
        %4163 = vmatprep.subr.mxu0 0.0
        %4164 = vmatpush1.msra.mxu0 %v4142
        %4165 = vmatprep.subr.mxu0 0.0
        %4166 = vmatpush1.msra.mxu0 %v4143
        %4167 = vmatprep.subr.mxu0 0.0
        %4168 = vmatpush1.msra.mxu0 %v4144
        %4169 = vmatprep.subr.mxu0 0.0
        %4170 = vmatpush1.msra.mxu0 %v4145
        %4171 = vmatprep.subr.mxu0 0.0
        %4172 = vmatpush1.msra.mxu0 %v4146
        %4173 = vmatprep.subr.mxu0 0.0
        %4174 = vmatpush1.msra.mxu0 %v4147
        %4175 = vmatprep.subr.mxu0 0.0
        %4176 = vmatpush1.msra.mxu0 %v4148
        %4177 = vmatprep.subr.mxu0 0.0
        %4178 = vmatpush1.msra.mxu0 %v4149
        %4179 = vmatprep.subr.mxu0 0.0
        %4180 = vmatpush1.msra.mxu0 %v4150
        %4181 = vmatprep.subr.mxu0 0.0
        %4182 = vmatpush1.msra.mxu0 %v4151
        %4183 = vmatprep.subr.mxu0 0.0
        %4184 = vmatpush1.msra.mxu0 %v4152
        %4185 = vmatprep.subr.mxu0 0.0
        %4186 = vmatpush1.msra.mxu0 0.0
        %4187 = vmatprep.subr.mxu0 0.0
        %4188 = vmatpush1.msra.mxu0 0.0
        %4189 = vmatprep.subr.mxu0 0.0
        %4190 = vmatpush1.msra.mxu0 0.0
        %4191 = vmatprep.subr.mxu0 0.0
        %4192 = vmatpush1.msra.mxu0 0.0
        %4193 = vmatprep.subr.mxu0 0.0
        %4194 = vmatpush1.msra.mxu0 0.0
        %4195 = vmatprep.subr.mxu0 0.0
        %4196 = vmatpush1.msra.mxu0 0.0
        %4197 = vmatprep.subr.mxu0 0.0
        %4198 = vmatpush1.msra.mxu0 0.0
        %4199 = vmatprep.subr.mxu0 0.0
        %4200 = vmatpush1.msra.mxu0 0.0
        %4201 = vmatprep.subr.mxu0 0.0
        %4202 = vmatpush1.msra.mxu0 0.0
        %4203 = vmatprep.subr.mxu0 0.0
        %4204 = vmatpush1.msra.mxu0 0.0
        %4205 = vmatprep.subr.mxu0 0.0
        %4206 = vmatpush1.msra.mxu0 0.0
        %4207 = vmatprep.subr.mxu0 0.0
        %4208 = vmatpush1.msra.mxu0 0.0
        %4209 = vmatprep.subr.mxu0 0.0
        %4210 = vmatpush1.msra.mxu0 0.0
        %4211 = vmatprep.subr.mxu0 0.0
        %4212 = vmatpush1.msra.mxu0 0.0
        %4213 = vmatprep.subr.mxu0 0.0
        %4214 = vmatpush1.msra.mxu0 0.0
        %4215 = vmatprep.subr.mxu0 0.0
        %4216 = vmatpush1.msra.mxu0 0.0
        %4217 = vmatprep.mubr.f32.mxu0 0.0
        %4218 = vmatmul.mubr.f32.gmra.mrb[0].mxu0 %v4135
        %v4219 = vpop.f32.mrb[0].mxu0
        %v4220 = vadd.f32 0.0, %v4219
        %v4221 = vpop.f32.mrb[0].mxu0
        %4222 = vdwg.mxu0
        %s4223 = scalar_lea.vmem %s31, 128
        %v4224 = vld [vmem:[%s4223] sm:$0xff]
        %v4225 = vld [vmem:[%s4223 + $0x8] sm:$0xff]
        %v4226 = vld [vmem:[%s4223 + $0x10] sm:$0xff]
        %v4227 = vld [vmem:[%s4223 + $0x18] sm:$0xff]
        %v4228 = vld [vmem:[%s4223 + $0x20] sm:$0xff]
        %v4229 = vld [vmem:[%s4223 + $0x28] sm:$0xff]
        %v4230 = vld [vmem:[%s4223 + $0x30] sm:$0xff]
        %v4231 = vld [vmem:[%s4223 + $0x38] sm:$0xff]
        %v4232 = vld [vmem:[%s4223 + $0x40] sm:$0xff]
        %v4233 = vld [vmem:[%s4223 + $0x48] sm:$0xff]
        %v4234 = vld [vmem:[%s4223 + $0x50] sm:$0xff]
        %v4235 = vld [vmem:[%s4223 + $0x58] sm:$0xff]
        %v4236 = vld [vmem:[%s4223 + $0x60] sm:$0xff]
        %v4237 = vld [vmem:[%s4223 + $0x68] sm:$0xff]
        %v4238 = vld [vmem:[%s4223 + $0x70] sm:$0xff]
        %v4239 = vld [vmem:[%s4223 + $0x78] sm:$0xff]
        %4240 = vmatprep.subr.mxu0 0.0
        %4241 = vmatpush1.msra.mxu0 %v4224
        %4242 = vmatprep.subr.mxu0 0.0
        %4243 = vmatpush1.msra.mxu0 %v4225
        %4244 = vmatprep.subr.mxu0 0.0
        %4245 = vmatpush1.msra.mxu0 %v4226
        %4246 = vmatprep.subr.mxu0 0.0
        %4247 = vmatpush1.msra.mxu0 %v4227
        %4248 = vmatprep.subr.mxu0 0.0
        %4249 = vmatpush1.msra.mxu0 %v4228
        %4250 = vmatprep.subr.mxu0 0.0
        %4251 = vmatpush1.msra.mxu0 %v4229
        %4252 = vmatprep.subr.mxu0 0.0
        %4253 = vmatpush1.msra.mxu0 %v4230
        %4254 = vmatprep.subr.mxu0 0.0
        %4255 = vmatpush1.msra.mxu0 %v4231
        %4256 = vmatprep.subr.mxu0 0.0
        %4257 = vmatpush1.msra.mxu0 %v4232
        %4258 = vmatprep.subr.mxu0 0.0
        %4259 = vmatpush1.msra.mxu0 %v4233
        %4260 = vmatprep.subr.mxu0 0.0
        %4261 = vmatpush1.msra.mxu0 %v4234
        %4262 = vmatprep.subr.mxu0 0.0
        %4263 = vmatpush1.msra.mxu0 %v4235
        %4264 = vmatprep.subr.mxu0 0.0
        %4265 = vmatpush1.msra.mxu0 %v4236
        %4266 = vmatprep.subr.mxu0 0.0
        %4267 = vmatpush1.msra.mxu0 %v4237
        %4268 = vmatprep.subr.mxu0 0.0
        %4269 = vmatpush1.msra.mxu0 %v4238
        %4270 = vmatprep.subr.mxu0 0.0
        %4271 = vmatpush1.msra.mxu0 %v4239
        %4272 = vmatprep.subr.mxu0 0.0
        %4273 = vmatpush1.msra.mxu0 0.0
        %4274 = vmatprep.subr.mxu0 0.0
        %4275 = vmatpush1.msra.mxu0 0.0
        %4276 = vmatprep.subr.mxu0 0.0
        %4277 = vmatpush1.msra.mxu0 0.0
        %4278 = vmatprep.subr.mxu0 0.0
        %4279 = vmatpush1.msra.mxu0 0.0
        %4280 = vmatprep.subr.mxu0 0.0
        %4281 = vmatpush1.msra.mxu0 0.0
        %4282 = vmatprep.subr.mxu0 0.0
        %4283 = vmatpush1.msra.mxu0 0.0
        %4284 = vmatprep.subr.mxu0 0.0
        %4285 = vmatpush1.msra.mxu0 0.0
        %4286 = vmatprep.subr.mxu0 0.0
        %4287 = vmatpush1.msra.mxu0 0.0
        %4288 = vmatprep.subr.mxu0 0.0
        %4289 = vmatpush1.msra.mxu0 0.0
        %4290 = vmatprep.subr.mxu0 0.0
        %4291 = vmatpush1.msra.mxu0 0.0
        %4292 = vmatprep.subr.mxu0 0.0
        %4293 = vmatpush1.msra.mxu0 0.0
        %4294 = vmatprep.subr.mxu0 0.0
        %4295 = vmatpush1.msra.mxu0 0.0
        %4296 = vmatprep.subr.mxu0 0.0
        %4297 = vmatpush1.msra.mxu0 0.0
        %4298 = vmatprep.subr.mxu0 0.0
        %4299 = vmatpush1.msra.mxu0 0.0
        %4300 = vmatprep.subr.mxu0 0.0
        %4301 = vmatpush1.msra.mxu0 0.0
        %4302 = vmatprep.subr.mxu0 0.0
        %4303 = vmatpush1.msra.mxu0 0.0
        %4304 = vmatprep.mubr.f32.mxu0 0.0
        %4305 = vmatmul.mubr.f32.gmra.mrb[0].mxu0 %v4135
        %v4306 = vpop.f32.mrb[0].mxu0
        %v4307 = vadd.f32 0.0, %v4306
        %v4308 = vpop.f32.mrb[0].mxu0
        %4309 = vdwg.mxu0
        %v4310 = vmax.f32 %v4220, %v4307
        %v4311 = vld [vmem:[#allocation22] sm:$0xf]
        %v4313 = vsel %vm3366, %v4311, 0
        %4315 = vmatprep.subr.mxu0 0.0
        %4316 = vmatpush1.msra.mxu0 %v4310
        %4317 = vmatprep.subr.mxu0 0.0
        %4318 = vmatpush1.msra.mxu0 0.0
        %4319 = vmatprep.subr.mxu0 0.0
        %4320 = vmatpush1.msra.mxu0 0.0
        %4321 = vmatprep.subr.mxu0 0.0
        %4322 = vmatpush1.msra.mxu0 0.0
        %4323 = vmatprep.subr.mxu0 0.0
        %4324 = vmatpush1.msra.mxu0 0.0
        %4325 = vmatprep.subr.mxu0 0.0
        %4326 = vmatpush1.msra.mxu0 0.0
        %4327 = vmatprep.subr.mxu0 0.0
        %4328 = vmatpush1.msra.mxu0 0.0
        %4329 = vmatprep.subr.mxu0 0.0
        %4330 = vmatpush1.msra.mxu0 0.0
        %4331 = vmatprep.subr.mxu0 0.0
        %4332 = vmatpush1.msra.mxu0 0.0
        %4333 = vmatprep.subr.mxu0 0.0
        %4334 = vmatpush1.msra.mxu0 0.0
        %4335 = vmatprep.subr.mxu0 0.0
        %4336 = vmatpush1.msra.mxu0 0.0
        %4337 = vmatprep.subr.mxu0 0.0
        %4338 = vmatpush1.msra.mxu0 0.0
        %4339 = vmatprep.subr.mxu0 0.0
        %4340 = vmatpush1.msra.mxu0 0.0
        %4341 = vmatprep.subr.mxu0 0.0
        %4342 = vmatpush1.msra.mxu0 0.0
        %4343 = vmatprep.subr.mxu0 0.0
        %4344 = vmatpush1.msra.mxu0 0.0
        %4345 = vmatprep.subr.mxu0 0.0
        %4346 = vmatpush1.msra.mxu0 0.0
        %4347 = vmatprep.subr.mxu0 0.0
        %4348 = vmatpush1.msra.mxu0 0.0
        %4349 = vmatprep.subr.mxu0 0.0
        %4350 = vmatpush1.msra.mxu0 0.0
        %4351 = vmatprep.subr.mxu0 0.0
        %4352 = vmatpush1.msra.mxu0 0.0
        %4353 = vmatprep.subr.mxu0 0.0
        %4354 = vmatpush1.msra.mxu0 0.0
        %4355 = vmatprep.subr.mxu0 0.0
        %4356 = vmatpush1.msra.mxu0 0.0
        %4357 = vmatprep.subr.mxu0 0.0
        %4358 = vmatpush1.msra.mxu0 0.0
        %4359 = vmatprep.subr.mxu0 0.0
        %4360 = vmatpush1.msra.mxu0 0.0
        %4361 = vmatprep.subr.mxu0 0.0
        %4362 = vmatpush1.msra.mxu0 0.0
        %4363 = vmatprep.subr.mxu0 0.0
        %4364 = vmatpush1.msra.mxu0 0.0
        %4365 = vmatprep.subr.mxu0 0.0
        %4366 = vmatpush1.msra.mxu0 0.0
        %4367 = vmatprep.subr.mxu0 0.0
        %4368 = vmatpush1.msra.mxu0 0.0
        %4369 = vmatprep.subr.mxu0 0.0
        %4370 = vmatpush1.msra.mxu0 0.0
        %4371 = vmatprep.subr.mxu0 0.0
        %4372 = vmatpush1.msra.mxu0 0.0
        %4373 = vmatprep.subr.mxu0 0.0
        %4374 = vmatpush1.msra.mxu0 0.0
        %4375 = vmatprep.subr.mxu0 0.0
        %4376 = vmatpush1.msra.mxu0 0.0
        %4377 = vmatprep.subr.mxu0 0.0
        %4378 = vmatpush1.msra.mxu0 0.0
        %4379 = vmatprep.mubr.f32.mxu0 0.0
        %4380 = vmatmul.mubr.f32.gmra.mrb[0].mxu0 %v4313
        %v4381 = vpop.f32.mrb[0].mxu0
        %v4382 = vadd.f32 0.0, %v4381
        %v4383 = vpop.f32.mrb[0].mxu0
        %4384 = vdwg.mxu0
        %s4385 = scalar_lea.vmem [#allocation22], 4
        %v4386 = vld [vmem:[%s4385] sm:$0xf]
        %v4388 = vsel %vm3366, %v4386, 0
        %4390 = vmatprep.subr.mxu0 0.0
        %4391 = vmatpush1.msra.mxu0 %v4310
        %4392 = vmatprep.subr.mxu0 0.0
        %4393 = vmatpush1.msra.mxu0 0.0
        %4394 = vmatprep.subr.mxu0 0.0
        %4395 = vmatpush1.msra.mxu0 0.0
        %4396 = vmatprep.subr.mxu0 0.0
        %4397 = vmatpush1.msra.mxu0 0.0
        %4398 = vmatprep.subr.mxu0 0.0
        %4399 = vmatpush1.msra.mxu0 0.0
        %4400 = vmatprep.subr.mxu0 0.0
        %4401 = vmatpush1.msra.mxu0 0.0
        %4402 = vmatprep.subr.mxu0 0.0
        %4403 = vmatpush1.msra.mxu0 0.0
        %4404 = vmatprep.subr.mxu0 0.0
        %4405 = vmatpush1.msra.mxu0 0.0
        %4406 = vmatprep.subr.mxu0 0.0
        %4407 = vmatpush1.msra.mxu0 0.0
        %4408 = vmatprep.subr.mxu0 0.0
        %4409 = vmatpush1.msra.mxu0 0.0
        %4410 = vmatprep.subr.mxu0 0.0
        %4411 = vmatpush1.msra.mxu0 0.0
        %4412 = vmatprep.subr.mxu0 0.0
        %4413 = vmatpush1.msra.mxu0 0.0
        %4414 = vmatprep.subr.mxu0 0.0
        %4415 = vmatpush1.msra.mxu0 0.0
        %4416 = vmatprep.subr.mxu0 0.0
        %4417 = vmatpush1.msra.mxu0 0.0
        %4418 = vmatprep.subr.mxu0 0.0
        %4419 = vmatpush1.msra.mxu0 0.0
        %4420 = vmatprep.subr.mxu0 0.0
        %4421 = vmatpush1.msra.mxu0 0.0
        %4422 = vmatprep.subr.mxu0 0.0
        %4423 = vmatpush1.msra.mxu0 0.0
        %4424 = vmatprep.subr.mxu0 0.0
        %4425 = vmatpush1.msra.mxu0 0.0
        %4426 = vmatprep.subr.mxu0 0.0
        %4427 = vmatpush1.msra.mxu0 0.0
        %4428 = vmatprep.subr.mxu0 0.0
        %4429 = vmatpush1.msra.mxu0 0.0
        %4430 = vmatprep.subr.mxu0 0.0
        %4431 = vmatpush1.msra.mxu0 0.0
        %4432 = vmatprep.subr.mxu0 0.0
        %4433 = vmatpush1.msra.mxu0 0.0
        %4434 = vmatprep.subr.mxu0 0.0
        %4435 = vmatpush1.msra.mxu0 0.0
        %4436 = vmatprep.subr.mxu0 0.0
        %4437 = vmatpush1.msra.mxu0 0.0
        %4438 = vmatprep.subr.mxu0 0.0
        %4439 = vmatpush1.msra.mxu0 0.0
        %4440 = vmatprep.subr.mxu0 0.0
        %4441 = vmatpush1.msra.mxu0 0.0
        %4442 = vmatprep.subr.mxu0 0.0
        %4443 = vmatpush1.msra.mxu0 0.0
        %4444 = vmatprep.subr.mxu0 0.0
        %4445 = vmatpush1.msra.mxu0 0.0
        %4446 = vmatprep.subr.mxu0 0.0
        %4447 = vmatpush1.msra.mxu0 0.0
        %4448 = vmatprep.subr.mxu0 0.0
        %4449 = vmatpush1.msra.mxu0 0.0
        %4450 = vmatprep.subr.mxu0 0.0
        %4451 = vmatpush1.msra.mxu0 0.0
        %4452 = vmatprep.subr.mxu0 0.0
        %4453 = vmatpush1.msra.mxu0 0.0
        %4454 = vmatprep.mubr.f32.mxu0 0.0
        %4455 = vmatmul.mubr.f32.gmra.mrb[0].mxu0 %v4388
        %v4456 = vpop.f32.mrb[0].mxu0
        %v4457 = vadd.f32 0.0, %v4456
        %v4458 = vpop.f32.mrb[0].mxu0
        %4459 = vdwg.mxu0
        %v4460 = vmax.f32 %v4382, %v4457
        %v4461 = vpack.c.bf16 %v4460, %v4460
        %v4462 = vld [vmem:[#allocation24] sm:$0xf]
        %v4463 = vld [vmem:[#allocation24 + $0x4] sm:$0xf]
        %v4464 = vld [vmem:[#allocation24 + $0x8] sm:$0xf]
        %v4465 = vld [vmem:[#allocation24 + $0xc] sm:$0xf]
        %v4466 = vld [vmem:[#allocation24 + $0x10] sm:$0xf]
        %v4467 = vld [vmem:[#allocation24 + $0x14] sm:$0xf]
        %v4468 = vld [vmem:[#allocation24 + $0x18] sm:$0xf]
        %v4469 = vld [vmem:[#allocation24 + $0x1c] sm:$0xf]
        %v4478 = vunpack.c.l.b16 %v4462
        %v4479 = vunpack.c.l.b16 %v4463
        %v4480 = vunpack.c.l.b16 %v4464
        %v4481 = vunpack.c.l.b16 %v4465
        %v4482 = vunpack.c.l.b16 %v4466
        %v4483 = vunpack.c.l.b16 %v4467
        %v4484 = vunpack.c.l.b16 %v4468
        %v4485 = vunpack.c.l.b16 %v4469
        %v4486 = vpack.c.b16 %v4479, %v4478
        %v4487 = vpack.c.b16 %v4481, %v4480
        %v4488 = vpack.c.b16 %v4483, %v4482
        %v4489 = vpack.c.b16 %v4485, %v4484
        %v4495 = vsel %vm1950, %v4461, 0
        %4497 = vmatprep.subr.bf16.mxu0 0
        %4498 = vmatpush1.bf16.msra.mxu0 %v4486
        %4499 = vmatprep.subr.bf16.mxu0 0
        %4500 = vmatpush1.bf16.msra.mxu0 %v4487
        %4501 = vmatprep.subr.bf16.mxu0 0
        %4502 = vmatpush1.bf16.msra.mxu0 %v4488
        %4503 = vmatprep.subr.bf16.mxu0 0
        %4504 = vmatpush1.bf16.msra.mxu0 %v4489
        %4505 = vmatprep.subr.bf16.mxu0 0
        %4506 = vmatpush1.bf16.msra.mxu0 0
        %4507 = vmatprep.subr.bf16.mxu0 0
        %4508 = vmatpush1.bf16.msra.mxu0 0
        %4509 = vmatprep.subr.bf16.mxu0 0
        %4510 = vmatpush1.bf16.msra.mxu0 0
        %4511 = vmatprep.subr.bf16.mxu0 0
        %4512 = vmatpush1.bf16.msra.mxu0 0
        %4513 = vmatprep.subr.bf16.mxu0 0
        %4514 = vmatpush1.bf16.msra.mxu0 0
        %4515 = vmatprep.subr.bf16.mxu0 0
        %4516 = vmatpush1.bf16.msra.mxu0 0
        %4517 = vmatprep.subr.bf16.mxu0 0
        %4518 = vmatpush1.bf16.msra.mxu0 0
        %4519 = vmatprep.subr.bf16.mxu0 0
        %4520 = vmatpush1.bf16.msra.mxu0 0
        %4521 = vmatprep.subr.bf16.mxu0 0
        %4522 = vmatpush1.bf16.msra.mxu0 0
        %4523 = vmatprep.subr.bf16.mxu0 0
        %4524 = vmatpush1.bf16.msra.mxu0 0
        %4525 = vmatprep.subr.bf16.mxu0 0
        %4526 = vmatpush1.bf16.msra.mxu0 0
        %4527 = vmatprep.subr.bf16.mxu0 0
        %4528 = vmatpush1.bf16.msra.mxu0 0
        %4529 = vmatprep.mubr.bf16.mxu0 0
        %4530 = vmatmul.mubr.bf16.gmra.mrb[0].mxu0 %v4495
        %v4531 = vpop.f32.mrb[0].mxu0
        %v4532 = vadd.f32 0.0, %v4531
        %v4533 = vpop.f32.mrb[0].mxu0
        %v4534 = vpop.f32.mrb[0].mxu0
        %v4535 = vpop.f32.mrb[0].mxu0
        %4536 = vdwg.mxu0
        %v4537 = vld [vmem:[#allocation31] sm:$0xf]
        %s4538 = scalar_lea.vmem [#allocation24], 32
        %v4539 = vld [vmem:[%s4538] sm:$0xf]
        %v4540 = vld [vmem:[%s4538 + $0x4] sm:$0xf]
        %v4541 = vld [vmem:[%s4538 + $0x8] sm:$0xf]
        %v4542 = vld [vmem:[%s4538 + $0xc] sm:$0xf]
        %v4543 = vld [vmem:[%s4538 + $0x10] sm:$0xf]
        %v4544 = vld [vmem:[%s4538 + $0x14] sm:$0xf]
        %v4545 = vld [vmem:[%s4538 + $0x18] sm:$0xf]
        %v4546 = vld [vmem:[%s4538 + $0x1c] sm:$0xf]
        %v4555 = vunpack.c.l.b16 %v4539
        %v4556 = vunpack.c.l.b16 %v4540
        %v4557 = vunpack.c.l.b16 %v4541
        %v4558 = vunpack.c.l.b16 %v4542
        %v4559 = vunpack.c.l.b16 %v4543
        %v4560 = vunpack.c.l.b16 %v4544
        %v4561 = vunpack.c.l.b16 %v4545
        %v4562 = vunpack.c.l.b16 %v4546
        %v4563 = vpack.c.b16 %v4556, %v4555
        %v4564 = vpack.c.b16 %v4558, %v4557
        %v4565 = vpack.c.b16 %v4560, %v4559
        %v4566 = vpack.c.b16 %v4562, %v4561
        %4571 = vmatprep.subr.bf16.mxu0 0
        %4572 = vmatpush1.bf16.msra.mxu0 %v4563
        %4573 = vmatprep.subr.bf16.mxu0 0
        %4574 = vmatpush1.bf16.msra.mxu0 %v4564
        %4575 = vmatprep.subr.bf16.mxu0 0
        %4576 = vmatpush1.bf16.msra.mxu0 %v4565
        %4577 = vmatprep.subr.bf16.mxu0 0
        %4578 = vmatpush1.bf16.msra.mxu0 %v4566
        %4579 = vmatprep.subr.bf16.mxu0 0
        %4580 = vmatpush1.bf16.msra.mxu0 0
        %4581 = vmatprep.subr.bf16.mxu0 0
        %4582 = vmatpush1.bf16.msra.mxu0 0
        %4583 = vmatprep.subr.bf16.mxu0 0
        %4584 = vmatpush1.bf16.msra.mxu0 0
        %4585 = vmatprep.subr.bf16.mxu0 0
        %4586 = vmatpush1.bf16.msra.mxu0 0
        %4587 = vmatprep.subr.bf16.mxu0 0
        %4588 = vmatpush1.bf16.msra.mxu0 0
        %4589 = vmatprep.subr.bf16.mxu0 0
        %4590 = vmatpush1.bf16.msra.mxu0 0
        %4591 = vmatprep.subr.bf16.mxu0 0
        %4592 = vmatpush1.bf16.msra.mxu0 0
        %4593 = vmatprep.subr.bf16.mxu0 0
        %4594 = vmatpush1.bf16.msra.mxu0 0
        %4595 = vmatprep.subr.bf16.mxu0 0
        %4596 = vmatpush1.bf16.msra.mxu0 0
        %4597 = vmatprep.subr.bf16.mxu0 0
        %4598 = vmatpush1.bf16.msra.mxu0 0
        %4599 = vmatprep.subr.bf16.mxu0 0
        %4600 = vmatpush1.bf16.msra.mxu0 0
        %4601 = vmatprep.subr.bf16.mxu0 0
        %4602 = vmatpush1.bf16.msra.mxu0 0
        %4603 = vmatprep.mubr.bf16.mxu0 0
        %4604 = vmatmul.mubr.bf16.gmra.mrb[0].mxu0 %v4495
        %v4605 = vpop.f32.mrb[0].mxu0
        %v4606 = vadd.f32 0.0, %v4605
        %v4607 = vpop.f32.mrb[0].mxu0
        %v4608 = vpop.f32.mrb[0].mxu0
        %v4609 = vpop.f32.mrb[0].mxu0
        %4610 = vdwg.mxu0
        %vm4611 = vcmask 31744
        %v4613 = vsel %vm4611, %v4537, 0
        %vm4615 = vcmask 1043456
        %v4617 = vsel %vm4615, %v4532, 0
        %4619 = vmatprep.subr.mxu0 0.0
        %4620 = vmatpush1.msra.mxu0 %v4617
        %4621 = vmatprep.subr.mxu0 0.0
        %4622 = vmatpush1.msra.mxu0 0.0
        %4623 = vmatprep.subr.mxu0 0.0
        %4624 = vmatpush1.msra.mxu0 0.0
        %4625 = vmatprep.subr.mxu0 0.0
        %4626 = vmatpush1.msra.mxu0 0.0
        %4627 = vmatprep.subr.mxu0 0.0
        %4628 = vmatpush1.msra.mxu0 0.0
        %4629 = vmatprep.subr.mxu0 0.0
        %4630 = vmatpush1.msra.mxu0 0.0
        %4631 = vmatprep.subr.mxu0 0.0
        %4632 = vmatpush1.msra.mxu0 0.0
        %4633 = vmatprep.subr.mxu0 0.0
        %4634 = vmatpush1.msra.mxu0 0.0
        %4635 = vmatprep.subr.mxu0 0.0
        %4636 = vmatpush1.msra.mxu0 0.0
        %4637 = vmatprep.subr.mxu0 0.0
        %4638 = vmatpush1.msra.mxu0 0.0
        %4639 = vmatprep.subr.mxu0 0.0
        %4640 = vmatpush1.msra.mxu0 0.0
        %4641 = vmatprep.subr.mxu0 0.0
        %4642 = vmatpush1.msra.mxu0 0.0
        %4643 = vmatprep.subr.mxu0 0.0
        %4644 = vmatpush1.msra.mxu0 0.0
        %4645 = vmatprep.subr.mxu0 0.0
        %4646 = vmatpush1.msra.mxu0 0.0
        %4647 = vmatprep.subr.mxu0 0.0
        %4648 = vmatpush1.msra.mxu0 0.0
        %4649 = vmatprep.subr.mxu0 0.0
        %4650 = vmatpush1.msra.mxu0 0.0
        %4651 = vmatprep.subr.mxu0 0.0
        %4652 = vmatpush1.msra.mxu0 0.0
        %4653 = vmatprep.subr.mxu0 0.0
        %4654 = vmatpush1.msra.mxu0 0.0
        %4655 = vmatprep.subr.mxu0 0.0
        %4656 = vmatpush1.msra.mxu0 0.0
        %4657 = vmatprep.subr.mxu0 0.0
        %4658 = vmatpush1.msra.mxu0 0.0
        %4659 = vmatprep.subr.mxu0 0.0
        %4660 = vmatpush1.msra.mxu0 0.0
        %4661 = vmatprep.subr.mxu0 0.0
        %4662 = vmatpush1.msra.mxu0 0.0
        %4663 = vmatprep.subr.mxu0 0.0
        %4664 = vmatpush1.msra.mxu0 0.0
        %4665 = vmatprep.subr.mxu0 0.0
        %4666 = vmatpush1.msra.mxu0 0.0
        %4667 = vmatprep.subr.mxu0 0.0
        %4668 = vmatpush1.msra.mxu0 0.0
        %4669 = vmatprep.subr.mxu0 0.0
        %4670 = vmatpush1.msra.mxu0 0.0
        %4671 = vmatprep.subr.mxu0 0.0
        %4672 = vmatpush1.msra.mxu0 0.0
        %4673 = vmatprep.subr.mxu0 0.0
        %4674 = vmatpush1.msra.mxu0 0.0
        %4675 = vmatprep.subr.mxu0 0.0
        %4676 = vmatpush1.msra.mxu0 0.0
        %4677 = vmatprep.subr.mxu0 0.0
        %4678 = vmatpush1.msra.mxu0 0.0
        %4679 = vmatprep.subr.mxu0 0.0
        %4680 = vmatpush1.msra.mxu0 0.0
        %4681 = vmatprep.subr.mxu0 0.0
        %4682 = vmatpush1.msra.mxu0 0.0
        %4683 = vmatprep.mubr.f32.mxu0 0.0
        %4684 = vmatmul.mubr.f32.gmra.mrb[0].mxu0 %v4613
        %v4685 = vpop.f32.mrb[0].mxu0
        %v4686 = vadd.f32 %v4606, %v4685
        %v4687 = vpop.f32.mrb[0].mxu0
        %4688 = vdwg.mxu0
        %s4689 = scalar_lea.vmem [#allocation24], 64
        %v4690 = vld [vmem:[%s4689] sm:$0xf]
        %v4691 = vld [vmem:[%s4689 + $0x4] sm:$0xf]
        %v4692 = vld [vmem:[%s4689 + $0x8] sm:$0xf]
        %v4693 = vld [vmem:[%s4689 + $0xc] sm:$0xf]
        %v4694 = vld [vmem:[%s4689 + $0x10] sm:$0xf]
        %v4695 = vld [vmem:[%s4689 + $0x14] sm:$0xf]
        %v4696 = vld [vmem:[%s4689 + $0x18] sm:$0xf]
        %v4697 = vld [vmem:[%s4689 + $0x1c] sm:$0xf]
        %v4706 = vunpack.c.l.b16 %v4690
        %v4707 = vunpack.c.l.b16 %v4691
        %v4708 = vunpack.c.l.b16 %v4692
        %v4709 = vunpack.c.l.b16 %v4693
        %v4710 = vunpack.c.l.b16 %v4694
        %v4711 = vunpack.c.l.b16 %v4695
        %v4712 = vunpack.c.l.b16 %v4696
        %v4713 = vunpack.c.l.b16 %v4697
        %v4714 = vpack.c.b16 %v4707, %v4706
        %v4715 = vpack.c.b16 %v4709, %v4708
        %v4716 = vpack.c.b16 %v4711, %v4710
        %v4717 = vpack.c.b16 %v4713, %v4712
        %4722 = vmatprep.subr.bf16.mxu0 0
        %4723 = vmatpush1.bf16.msra.mxu0 %v4714
        %4724 = vmatprep.subr.bf16.mxu0 0
        %4725 = vmatpush1.bf16.msra.mxu0 %v4715
        %4726 = vmatprep.subr.bf16.mxu0 0
        %4727 = vmatpush1.bf16.msra.mxu0 %v4716
        %4728 = vmatprep.subr.bf16.mxu0 0
        %4729 = vmatpush1.bf16.msra.mxu0 %v4717
        %4730 = vmatprep.subr.bf16.mxu0 0
        %4731 = vmatpush1.bf16.msra.mxu0 0
        %4732 = vmatprep.subr.bf16.mxu0 0
        %4733 = vmatpush1.bf16.msra.mxu0 0
        %4734 = vmatprep.subr.bf16.mxu0 0
        %4735 = vmatpush1.bf16.msra.mxu0 0
        %4736 = vmatprep.subr.bf16.mxu0 0
        %4737 = vmatpush1.bf16.msra.mxu0 0
        %4738 = vmatprep.subr.bf16.mxu0 0
        %4739 = vmatpush1.bf16.msra.mxu0 0
        %4740 = vmatprep.subr.bf16.mxu0 0
        %4741 = vmatpush1.bf16.msra.mxu0 0
        %4742 = vmatprep.subr.bf16.mxu0 0
        %4743 = vmatpush1.bf16.msra.mxu0 0
        %4744 = vmatprep.subr.bf16.mxu0 0
        %4745 = vmatpush1.bf16.msra.mxu0 0
        %4746 = vmatprep.subr.bf16.mxu0 0
        %4747 = vmatpush1.bf16.msra.mxu0 0
        %4748 = vmatprep.subr.bf16.mxu0 0
        %4749 = vmatpush1.bf16.msra.mxu0 0
        %4750 = vmatprep.subr.bf16.mxu0 0
        %4751 = vmatpush1.bf16.msra.mxu0 0
        %4752 = vmatprep.subr.bf16.mxu0 0
        %4753 = vmatpush1.bf16.msra.mxu0 0
        %4754 = vmatprep.mubr.bf16.mxu0 0
        %4755 = vmatmul.mubr.bf16.gmra.mrb[0].mxu0 %v4495
        %v4756 = vpop.f32.mrb[0].mxu0
        %v4757 = vadd.f32 0.0, %v4756
        %v4758 = vpop.f32.mrb[0].mxu0
        %v4759 = vpop.f32.mrb[0].mxu0
        %v4760 = vpop.f32.mrb[0].mxu0
        %4761 = vdwg.mxu0
        %s4762 = scalar_lea.vmem [#allocation31], 8
        %v4763 = vld [vmem:[%s4762] sm:$0xf]
        %v4765 = vsel %vm4611, %v4763, 0
        %v4768 = vsel %vm4615, %v4757, 0
        %4770 = vmatprep.subr.mxu0 0.0
        %4771 = vmatpush1.msra.mxu0 %v4768
        %4772 = vmatprep.subr.mxu0 0.0
        %4773 = vmatpush1.msra.mxu0 0.0
        %4774 = vmatprep.subr.mxu0 0.0
        %4775 = vmatpush1.msra.mxu0 0.0
        %4776 = vmatprep.subr.mxu0 0.0
        %4777 = vmatpush1.msra.mxu0 0.0
        %4778 = vmatprep.subr.mxu0 0.0
        %4779 = vmatpush1.msra.mxu0 0.0
        %4780 = vmatprep.subr.mxu0 0.0
        %4781 = vmatpush1.msra.mxu0 0.0
        %4782 = vmatprep.subr.mxu0 0.0
        %4783 = vmatpush1.msra.mxu0 0.0
        %4784 = vmatprep.subr.mxu0 0.0
        %4785 = vmatpush1.msra.mxu0 0.0
        %4786 = vmatprep.subr.mxu0 0.0
        %4787 = vmatpush1.msra.mxu0 0.0
        %4788 = vmatprep.subr.mxu0 0.0
        %4789 = vmatpush1.msra.mxu0 0.0
        %4790 = vmatprep.subr.mxu0 0.0
        %4791 = vmatpush1.msra.mxu0 0.0
        %4792 = vmatprep.subr.mxu0 0.0
        %4793 = vmatpush1.msra.mxu0 0.0
        %4794 = vmatprep.subr.mxu0 0.0
        %4795 = vmatpush1.msra.mxu0 0.0
        %4796 = vmatprep.subr.mxu0 0.0
        %4797 = vmatpush1.msra.mxu0 0.0
        %4798 = vmatprep.subr.mxu0 0.0
        %4799 = vmatpush1.msra.mxu0 0.0
        %4800 = vmatprep.subr.mxu0 0.0
        %4801 = vmatpush1.msra.mxu0 0.0
        %4802 = vmatprep.subr.mxu0 0.0
        %4803 = vmatpush1.msra.mxu0 0.0
        %4804 = vmatprep.subr.mxu0 0.0
        %4805 = vmatpush1.msra.mxu0 0.0
        %4806 = vmatprep.subr.mxu0 0.0
        %4807 = vmatpush1.msra.mxu0 0.0
        %4808 = vmatprep.subr.mxu0 0.0
        %4809 = vmatpush1.msra.mxu0 0.0
        %4810 = vmatprep.subr.mxu0 0.0
        %4811 = vmatpush1.msra.mxu0 0.0
        %4812 = vmatprep.subr.mxu0 0.0
        %4813 = vmatpush1.msra.mxu0 0.0
        %4814 = vmatprep.subr.mxu0 0.0
        %4815 = vmatpush1.msra.mxu0 0.0
        %4816 = vmatprep.subr.mxu0 0.0
        %4817 = vmatpush1.msra.mxu0 0.0
        %4818 = vmatprep.subr.mxu0 0.0
        %4819 = vmatpush1.msra.mxu0 0.0
        %4820 = vmatprep.subr.mxu0 0.0
        %4821 = vmatpush1.msra.mxu0 0.0
        %4822 = vmatprep.subr.mxu0 0.0
        %4823 = vmatpush1.msra.mxu0 0.0
        %4824 = vmatprep.subr.mxu0 0.0
        %4825 = vmatpush1.msra.mxu0 0.0
        %4826 = vmatprep.subr.mxu0 0.0
        %4827 = vmatpush1.msra.mxu0 0.0
        %4828 = vmatprep.subr.mxu0 0.0
        %4829 = vmatpush1.msra.mxu0 0.0
        %4830 = vmatprep.subr.mxu0 0.0
        %4831 = vmatpush1.msra.mxu0 0.0
        %4832 = vmatprep.subr.mxu0 0.0
        %4833 = vmatpush1.msra.mxu0 0.0
        %4834 = vmatprep.mubr.f32.mxu0 0.0
        %4835 = vmatmul.mubr.f32.gmra.mrb[0].mxu0 %v4765
        %v4836 = vpop.f32.mrb[0].mxu0
        %v4837 = vadd.f32 0.0, %v4836
        %v4838 = vpop.f32.mrb[0].mxu0
        %4839 = vdwg.mxu0
        %v4840 = vadd.f32 %v4686, %v4837
        %v4841 = vld [vmem:[#allocation27] sm:$0xf]
        %v4842 = vld [vmem:[#allocation27 + $0x4] sm:$0xf]
        %v4843 = vld [vmem:[#allocation27 + $0x8] sm:$0xf]
        %v4844 = vld [vmem:[#allocation27 + $0xc] sm:$0xf]
        %v4845 = vld [vmem:[#allocation27 + $0x10] sm:$0xf]
        %v4846 = vld [vmem:[#allocation27 + $0x14] sm:$0xf]
        %v4847 = vld [vmem:[#allocation27 + $0x18] sm:$0xf]
        %v4848 = vld [vmem:[#allocation27 + $0x1c] sm:$0xf]
        %v4857 = vunpack.c.l.b16 %v4841
        %v4858 = vunpack.c.l.b16 %v4842
        %v4859 = vunpack.c.l.b16 %v4843
        %v4860 = vunpack.c.l.b16 %v4844
        %v4861 = vunpack.c.l.b16 %v4845
        %v4862 = vunpack.c.l.b16 %v4846
        %v4863 = vunpack.c.l.b16 %v4847
        %v4864 = vunpack.c.l.b16 %v4848
        %v4865 = vpack.c.b16 %v4858, %v4857
        %v4866 = vpack.c.b16 %v4860, %v4859
        %v4867 = vpack.c.b16 %v4862, %v4861
        %v4868 = vpack.c.b16 %v4864, %v4863
        %4873 = vmatprep.subr.bf16.mxu0 0
        %4874 = vmatpush1.bf16.msra.mxu0 %v4865
        %4875 = vmatprep.subr.bf16.mxu0 0
        %4876 = vmatpush1.bf16.msra.mxu0 %v4866
        %4877 = vmatprep.subr.bf16.mxu0 0
        %4878 = vmatpush1.bf16.msra.mxu0 %v4867
        %4879 = vmatprep.subr.bf16.mxu0 0
        %4880 = vmatpush1.bf16.msra.mxu0 %v4868
        %4881 = vmatprep.subr.bf16.mxu0 0
        %4882 = vmatpush1.bf16.msra.mxu0 0
        %4883 = vmatprep.subr.bf16.mxu0 0
        %4884 = vmatpush1.bf16.msra.mxu0 0
        %4885 = vmatprep.subr.bf16.mxu0 0
        %4886 = vmatpush1.bf16.msra.mxu0 0
        %4887 = vmatprep.subr.bf16.mxu0 0
        %4888 = vmatpush1.bf16.msra.mxu0 0
        %4889 = vmatprep.subr.bf16.mxu0 0
        %4890 = vmatpush1.bf16.msra.mxu0 0
        %4891 = vmatprep.subr.bf16.mxu0 0
        %4892 = vmatpush1.bf16.msra.mxu0 0
        %4893 = vmatprep.subr.bf16.mxu0 0
        %4894 = vmatpush1.bf16.msra.mxu0 0
        %4895 = vmatprep.subr.bf16.mxu0 0
        %4896 = vmatpush1.bf16.msra.mxu0 0
        %4897 = vmatprep.subr.bf16.mxu0 0
        %4898 = vmatpush1.bf16.msra.mxu0 0
        %4899 = vmatprep.subr.bf16.mxu0 0
        %4900 = vmatpush1.bf16.msra.mxu0 0
        %4901 = vmatprep.subr.bf16.mxu0 0
        %4902 = vmatpush1.bf16.msra.mxu0 0
        %4903 = vmatprep.subr.bf16.mxu0 0
        %4904 = vmatpush1.bf16.msra.mxu0 0
        %4905 = vmatprep.mubr.bf16.mxu0 0
        %4906 = vmatmul.mubr.bf16.gmra.mrb[0].mxu0 %v4495
        %v4907 = vpop.f32.mrb[0].mxu0
        %v4908 = vadd.f32 0.0, %v4907
        %v4909 = vpop.f32.mrb[0].mxu0
        %v4910 = vpop.f32.mrb[0].mxu0
        %v4911 = vpop.f32.mrb[0].mxu0
        %4912 = vdwg.mxu0
        %v4913 = vld [vmem:[#allocation25] sm:$0x1]
        %v4915 = vlaneseq
        %v4916 = vshrl.u32 %v4915, 7
        %v4917 = vsub.s32 0, %v4916
        %v4918 = vrot.slane %v4913, %v4917
        %v4920 = vadd.f32 %v4840, %v4918
        %v4921 = vmax.f32 %v4920, 0.0
        %v4922 = vpack.c.bf16 %v4921, %v4921
        %v4923 = vld [vmem:[#allocation28] sm:$0xf]
        %v4924 = vld [vmem:[#allocation28 + $0x4] sm:$0xf]
        %v4925 = vld [vmem:[#allocation28 + $0x8] sm:$0xf]
        %v4926 = vld [vmem:[#allocation28 + $0xc] sm:$0xf]
        %v4927 = vld [vmem:[#allocation28 + $0x10] sm:$0xf]
        %v4928 = vld [vmem:[#allocation28 + $0x14] sm:$0xf]
        %v4929 = vld [vmem:[#allocation28 + $0x18] sm:$0xf]
        %v4930 = vld [vmem:[#allocation28 + $0x1c] sm:$0xf]
        %v4931 = vld [vmem:[#allocation28 + $0x20] sm:$0xf]
        %v4932 = vld [vmem:[#allocation28 + $0x24] sm:$0xf]
        %v4933 = vld [vmem:[#allocation28 + $0x28] sm:$0xf]
        %v4934 = vld [vmem:[#allocation28 + $0x2c] sm:$0xf]
        %v4935 = vld [vmem:[#allocation28 + $0x30] sm:$0xf]
        %v4936 = vld [vmem:[#allocation28 + $0x34] sm:$0xf]
        %v4937 = vld [vmem:[#allocation28 + $0x38] sm:$0xf]
        %v4938 = vld [vmem:[#allocation28 + $0x3c] sm:$0xf]
        %v4955 = vunpack.c.l.b16 %v4923
        %v4956 = vunpack.c.l.b16 %v4924
        %v4957 = vunpack.c.l.b16 %v4925
        %v4958 = vunpack.c.l.b16 %v4926
        %v4959 = vunpack.c.l.b16 %v4927
        %v4960 = vunpack.c.l.b16 %v4928
        %v4961 = vunpack.c.l.b16 %v4929
        %v4962 = vunpack.c.l.b16 %v4930
        %v4963 = vunpack.c.l.b16 %v4931
        %v4964 = vunpack.c.l.b16 %v4932
        %v4965 = vunpack.c.l.b16 %v4933
        %v4966 = vunpack.c.l.b16 %v4934
        %v4967 = vunpack.c.l.b16 %v4935
        %v4968 = vunpack.c.l.b16 %v4936
        %v4969 = vunpack.c.l.b16 %v4937
        %v4970 = vunpack.c.l.b16 %v4938
        %v4971 = vpack.c.b16 %v4956, %v4955
        %v4972 = vpack.c.b16 %v4958, %v4957
        %v4973 = vpack.c.b16 %v4960, %v4959
        %v4974 = vpack.c.b16 %v4962, %v4961
        %v4975 = vpack.c.b16 %v4964, %v4963
        %v4976 = vpack.c.b16 %v4966, %v4965
        %v4977 = vpack.c.b16 %v4968, %v4967
        %v4978 = vpack.c.b16 %v4970, %v4969
        %4987 = vmatprep.subr.bf16.mxu0 0
        %4988 = vmatpush1.bf16.msra.mxu0 %v4971
        %4989 = vmatprep.subr.bf16.mxu0 0
        %4990 = vmatpush1.bf16.msra.mxu0 %v4972
        %4991 = vmatprep.subr.bf16.mxu0 0
        %4992 = vmatpush1.bf16.msra.mxu0 %v4973
        %4993 = vmatprep.subr.bf16.mxu0 0
        %4994 = vmatpush1.bf16.msra.mxu0 %v4974
        %4995 = vmatprep.subr.bf16.mxu0 0
        %4996 = vmatpush1.bf16.msra.mxu0 %v4975
        %4997 = vmatprep.subr.bf16.mxu0 0
        %4998 = vmatpush1.bf16.msra.mxu0 %v4976
        %4999 = vmatprep.subr.bf16.mxu0 0
        %5000 = vmatpush1.bf16.msra.mxu0 %v4977
        %5001 = vmatprep.subr.bf16.mxu0 0
        %5002 = vmatpush1.bf16.msra.mxu0 %v4978
        %5003 = vmatprep.subr.bf16.mxu0 0
        %5004 = vmatpush1.bf16.msra.mxu0 0
        %5005 = vmatprep.subr.bf16.mxu0 0
        %5006 = vmatpush1.bf16.msra.mxu0 0
        %5007 = vmatprep.subr.bf16.mxu0 0
        %5008 = vmatpush1.bf16.msra.mxu0 0
        %5009 = vmatprep.subr.bf16.mxu0 0
        %5010 = vmatpush1.bf16.msra.mxu0 0
        %5011 = vmatprep.subr.bf16.mxu0 0
        %5012 = vmatpush1.bf16.msra.mxu0 0
        %5013 = vmatprep.subr.bf16.mxu0 0
        %5014 = vmatpush1.bf16.msra.mxu0 0
        %5015 = vmatprep.subr.bf16.mxu0 0
        %5016 = vmatpush1.bf16.msra.mxu0 0
        %5017 = vmatprep.subr.bf16.mxu0 0
        %5018 = vmatpush1.bf16.msra.mxu0 0
        %5019 = vmatprep.mubr.bf16.mxu0 0
        %5020 = vmatmul.mubr.bf16.gmra.mrb[0].mxu0 %v4922
        %v5021 = vpop.f32.mrb[0].mxu0
        %v5022 = vadd.f32 0.0, %v5021
        %v5023 = vpop.f32.mrb[0].mxu0
        %v5024 = vpop.f32.mrb[0].mxu0
        %v5025 = vpop.f32.mrb[0].mxu0
        %5026 = vdwg.mxu0
        %s5027 = scalar_lea.vmem [#allocation28], 64
        %v5028 = vld [vmem:[%s5027] sm:$0xf]
        %v5029 = vld [vmem:[%s5027 + $0x4] sm:$0xf]
        %v5030 = vld [vmem:[%s5027 + $0x8] sm:$0xf]
        %v5031 = vld [vmem:[%s5027 + $0xc] sm:$0xf]
        %v5032 = vld [vmem:[%s5027 + $0x10] sm:$0xf]
        %v5033 = vld [vmem:[%s5027 + $0x14] sm:$0xf]
        %v5034 = vld [vmem:[%s5027 + $0x18] sm:$0xf]
        %v5035 = vld [vmem:[%s5027 + $0x1c] sm:$0xf]
        %v5036 = vld [vmem:[%s5027 + $0x20] sm:$0xf]
        %v5037 = vld [vmem:[%s5027 + $0x24] sm:$0xf]
        %v5038 = vld [vmem:[%s5027 + $0x28] sm:$0xf]
        %v5039 = vld [vmem:[%s5027 + $0x2c] sm:$0xf]
        %v5040 = vld [vmem:[%s5027 + $0x30] sm:$0xf]
        %v5041 = vld [vmem:[%s5027 + $0x34] sm:$0xf]
        %v5042 = vld [vmem:[%s5027 + $0x38] sm:$0xf]
        %v5043 = vld [vmem:[%s5027 + $0x3c] sm:$0xf]
        %v5060 = vunpack.c.l.b16 %v5028
        %v5061 = vunpack.c.l.b16 %v5029
        %v5062 = vunpack.c.l.b16 %v5030
        %v5063 = vunpack.c.l.b16 %v5031
        %v5064 = vunpack.c.l.b16 %v5032
        %v5065 = vunpack.c.l.b16 %v5033
        %v5066 = vunpack.c.l.b16 %v5034
        %v5067 = vunpack.c.l.b16 %v5035
        %v5068 = vunpack.c.l.b16 %v5036
        %v5069 = vunpack.c.l.b16 %v5037
        %v5070 = vunpack.c.l.b16 %v5038
        %v5071 = vunpack.c.l.b16 %v5039
        %v5072 = vunpack.c.l.b16 %v5040
        %v5073 = vunpack.c.l.b16 %v5041
        %v5074 = vunpack.c.l.b16 %v5042
        %v5075 = vunpack.c.l.b16 %v5043
        %v5076 = vpack.c.b16 %v5061, %v5060
        %v5077 = vpack.c.b16 %v5063, %v5062
        %v5078 = vpack.c.b16 %v5065, %v5064
        %v5079 = vpack.c.b16 %v5067, %v5066
        %v5080 = vpack.c.b16 %v5069, %v5068
        %v5081 = vpack.c.b16 %v5071, %v5070
        %v5082 = vpack.c.b16 %v5073, %v5072
        %v5083 = vpack.c.b16 %v5075, %v5074
        %5092 = vmatprep.subr.bf16.mxu0 0
        %5093 = vmatpush1.bf16.msra.mxu0 %v5076
        %5094 = vmatprep.subr.bf16.mxu0 0
        %5095 = vmatpush1.bf16.msra.mxu0 %v5077
        %5096 = vmatprep.subr.bf16.mxu0 0
        %5097 = vmatpush1.bf16.msra.mxu0 %v5078
        %5098 = vmatprep.subr.bf16.mxu0 0
        %5099 = vmatpush1.bf16.msra.mxu0 %v5079
        %5100 = vmatprep.subr.bf16.mxu0 0
        %5101 = vmatpush1.bf16.msra.mxu0 %v5080
        %5102 = vmatprep.subr.bf16.mxu0 0
        %5103 = vmatpush1.bf16.msra.mxu0 %v5081
        %5104 = vmatprep.subr.bf16.mxu0 0
        %5105 = vmatpush1.bf16.msra.mxu0 %v5082
        %5106 = vmatprep.subr.bf16.mxu0 0
        %5107 = vmatpush1.bf16.msra.mxu0 %v5083
        %5108 = vmatprep.subr.bf16.mxu0 0
        %5109 = vmatpush1.bf16.msra.mxu0 0
        %5110 = vmatprep.subr.bf16.mxu0 0
        %5111 = vmatpush1.bf16.msra.mxu0 0
        %5112 = vmatprep.subr.bf16.mxu0 0
        %5113 = vmatpush1.bf16.msra.mxu0 0
        %5114 = vmatprep.subr.bf16.mxu0 0
        %5115 = vmatpush1.bf16.msra.mxu0 0
        %5116 = vmatprep.subr.bf16.mxu0 0
        %5117 = vmatpush1.bf16.msra.mxu0 0
        %5118 = vmatprep.subr.bf16.mxu0 0
        %5119 = vmatpush1.bf16.msra.mxu0 0
        %5120 = vmatprep.subr.bf16.mxu0 0
        %5121 = vmatpush1.bf16.msra.mxu0 0
        %5122 = vmatprep.subr.bf16.mxu0 0
        %5123 = vmatpush1.bf16.msra.mxu0 0
        %5124 = vmatprep.mubr.bf16.mxu0 0
        %5125 = vmatmul.mubr.bf16.gmra.mrb[0].mxu0 %v4922
        %v5126 = vpop.f32.mrb[0].mxu0
        %v5127 = vadd.f32 0.0, %v5126
        %v5128 = vpop.f32.mrb[0].mxu0
        %v5129 = vpop.f32.mrb[0].mxu0
        %v5130 = vpop.f32.mrb[0].mxu0
        %5131 = vdwg.mxu0
        %v5133 = vsel %vm4615, %v5022, 0
        %5135 = vmatprep.subr.mxu0 0.0
        %5136 = vmatpush1.msra.mxu0 %v5133
        %5137 = vmatprep.subr.mxu0 0.0
        %5138 = vmatpush1.msra.mxu0 0.0
        %5139 = vmatprep.subr.mxu0 0.0
        %5140 = vmatpush1.msra.mxu0 0.0
        %5141 = vmatprep.subr.mxu0 0.0
        %5142 = vmatpush1.msra.mxu0 0.0
        %5143 = vmatprep.subr.mxu0 0.0
        %5144 = vmatpush1.msra.mxu0 0.0
        %5145 = vmatprep.subr.mxu0 0.0
        %5146 = vmatpush1.msra.mxu0 0.0
        %5147 = vmatprep.subr.mxu0 0.0
        %5148 = vmatpush1.msra.mxu0 0.0
        %5149 = vmatprep.subr.mxu0 0.0
        %5150 = vmatpush1.msra.mxu0 0.0
        %5151 = vmatprep.subr.mxu0 0.0
        %5152 = vmatpush1.msra.mxu0 0.0
        %5153 = vmatprep.subr.mxu0 0.0
        %5154 = vmatpush1.msra.mxu0 0.0
        %5155 = vmatprep.subr.mxu0 0.0
        %5156 = vmatpush1.msra.mxu0 0.0
        %5157 = vmatprep.subr.mxu0 0.0
        %5158 = vmatpush1.msra.mxu0 0.0
        %5159 = vmatprep.subr.mxu0 0.0
        %5160 = vmatpush1.msra.mxu0 0.0
        %5161 = vmatprep.subr.mxu0 0.0
        %5162 = vmatpush1.msra.mxu0 0.0
        %5163 = vmatprep.subr.mxu0 0.0
        %5164 = vmatpush1.msra.mxu0 0.0
        %5165 = vmatprep.subr.mxu0 0.0
        %5166 = vmatpush1.msra.mxu0 0.0
        %5167 = vmatprep.subr.mxu0 0.0
        %5168 = vmatpush1.msra.mxu0 0.0
        %5169 = vmatprep.subr.mxu0 0.0
        %5170 = vmatpush1.msra.mxu0 0.0
        %5171 = vmatprep.subr.mxu0 0.0
        %5172 = vmatpush1.msra.mxu0 0.0
        %5173 = vmatprep.subr.mxu0 0.0
        %5174 = vmatpush1.msra.mxu0 0.0
        %5175 = vmatprep.subr.mxu0 0.0
        %5176 = vmatpush1.msra.mxu0 0.0
        %5177 = vmatprep.subr.mxu0 0.0
        %5178 = vmatpush1.msra.mxu0 0.0
        %5179 = vmatprep.subr.mxu0 0.0
        %5180 = vmatpush1.msra.mxu0 0.0
        %5181 = vmatprep.subr.mxu0 0.0
        %5182 = vmatpush1.msra.mxu0 0.0
        %5183 = vmatprep.subr.mxu0 0.0
        %5184 = vmatpush1.msra.mxu0 0.0
        %5185 = vmatprep.subr.mxu0 0.0
        %5186 = vmatpush1.msra.mxu0 0.0
        %5187 = vmatprep.subr.mxu0 0.0
        %5188 = vmatpush1.msra.mxu0 0.0
        %5189 = vmatprep.subr.mxu0 0.0
        %5190 = vmatpush1.msra.mxu0 0.0
        %5191 = vmatprep.subr.mxu0 0.0
        %5192 = vmatpush1.msra.mxu0 0.0
        %5193 = vmatprep.subr.mxu0 0.0
        %5194 = vmatpush1.msra.mxu0 0.0
        %5195 = vmatprep.subr.mxu0 0.0
        %5196 = vmatpush1.msra.mxu0 0.0
        %5197 = vmatprep.subr.mxu0 0.0
        %5198 = vmatpush1.msra.mxu0 0.0
        %5199 = vmatprep.mubr.f32.mxu0 0.0
        %5200 = vmatmul.mubr.f32.gmra.mrb[0].mxu0 %v4613
        %v5201 = vpop.f32.mrb[0].mxu0
        %v5202 = vadd.f32 %v5127, %v5201
        %v5203 = vpop.f32.mrb[0].mxu0
        %5204 = vdwg.mxu0
        %s5205 = scalar_lea.vmem [#allocation28], 128
        %v5206 = vld [vmem:[%s5205] sm:$0xf]
        %v5207 = vld [vmem:[%s5205 + $0x4] sm:$0xf]
        %v5208 = vld [vmem:[%s5205 + $0x8] sm:$0xf]
        %v5209 = vld [vmem:[%s5205 + $0xc] sm:$0xf]
        %v5210 = vld [vmem:[%s5205 + $0x10] sm:$0xf]
        %v5211 = vld [vmem:[%s5205 + $0x14] sm:$0xf]
        %v5212 = vld [vmem:[%s5205 + $0x18] sm:$0xf]
        %v5213 = vld [vmem:[%s5205 + $0x1c] sm:$0xf]
        %v5214 = vld [vmem:[%s5205 + $0x20] sm:$0xf]
        %v5215 = vld [vmem:[%s5205 + $0x24] sm:$0xf]
        %v5216 = vld [vmem:[%s5205 + $0x28] sm:$0xf]
        %v5217 = vld [vmem:[%s5205 + $0x2c] sm:$0xf]
        %v5218 = vld [vmem:[%s5205 + $0x30] sm:$0xf]
        %v5219 = vld [vmem:[%s5205 + $0x34] sm:$0xf]
        %v5220 = vld [vmem:[%s5205 + $0x38] sm:$0xf]
        %v5221 = vld [vmem:[%s5205 + $0x3c] sm:$0xf]
        %v5238 = vunpack.c.l.b16 %v5206
        %v5239 = vunpack.c.l.b16 %v5207
        %v5240 = vunpack.c.l.b16 %v5208
        %v5241 = vunpack.c.l.b16 %v5209
        %v5242 = vunpack.c.l.b16 %v5210
        %v5243 = vunpack.c.l.b16 %v5211
        %v5244 = vunpack.c.l.b16 %v5212
        %v5245 = vunpack.c.l.b16 %v5213
        %v5246 = vunpack.c.l.b16 %v5214
        %v5247 = vunpack.c.l.b16 %v5215
        %v5248 = vunpack.c.l.b16 %v5216
        %v5249 = vunpack.c.l.b16 %v5217
        %v5250 = vunpack.c.l.b16 %v5218
        %v5251 = vunpack.c.l.b16 %v5219
        %v5252 = vunpack.c.l.b16 %v5220
        %v5253 = vunpack.c.l.b16 %v5221
        %v5254 = vpack.c.b16 %v5239, %v5238
        %v5255 = vpack.c.b16 %v5241, %v5240
        %v5256 = vpack.c.b16 %v5243, %v5242
        %v5257 = vpack.c.b16 %v5245, %v5244
        %v5258 = vpack.c.b16 %v5247, %v5246
        %v5259 = vpack.c.b16 %v5249, %v5248
        %v5260 = vpack.c.b16 %v5251, %v5250
        %v5261 = vpack.c.b16 %v5253, %v5252
        %5270 = vmatprep.subr.bf16.mxu0 0
        %5271 = vmatpush1.bf16.msra.mxu0 %v5254
        %5272 = vmatprep.subr.bf16.mxu0 0
        %5273 = vmatpush1.bf16.msra.mxu0 %v5255
        %5274 = vmatprep.subr.bf16.mxu0 0
        %5275 = vmatpush1.bf16.msra.mxu0 %v5256
        %5276 = vmatprep.subr.bf16.mxu0 0
        %5277 = vmatpush1.bf16.msra.mxu0 %v5257
        %5278 = vmatprep.subr.bf16.mxu0 0
        %5279 = vmatpush1.bf16.msra.mxu0 %v5258
        %5280 = vmatprep.subr.bf16.mxu0 0
        %5281 = vmatpush1.bf16.msra.mxu0 %v5259
        %5282 = vmatprep.subr.bf16.mxu0 0
        %5283 = vmatpush1.bf16.msra.mxu0 %v5260
        %5284 = vmatprep.subr.bf16.mxu0 0
        %5285 = vmatpush1.bf16.msra.mxu0 %v5261
        %5286 = vmatprep.subr.bf16.mxu0 0
        %5287 = vmatpush1.bf16.msra.mxu0 0
        %5288 = vmatprep.subr.bf16.mxu0 0
        %5289 = vmatpush1.bf16.msra.mxu0 0
        %5290 = vmatprep.subr.bf16.mxu0 0
        %5291 = vmatpush1.bf16.msra.mxu0 0
        %5292 = vmatprep.subr.bf16.mxu0 0
        %5293 = vmatpush1.bf16.msra.mxu0 0
        %5294 = vmatprep.subr.bf16.mxu0 0
        %5295 = vmatpush1.bf16.msra.mxu0 0
        %5296 = vmatprep.subr.bf16.mxu0 0
        %5297 = vmatpush1.bf16.msra.mxu0 0
        %5298 = vmatprep.subr.bf16.mxu0 0
        %5299 = vmatpush1.bf16.msra.mxu0 0
        %5300 = vmatprep.subr.bf16.mxu0 0
        %5301 = vmatpush1.bf16.msra.mxu0 0
        %5302 = vmatprep.mubr.bf16.mxu0 0
        %5303 = vmatmul.mubr.bf16.gmra.mrb[0].mxu0 %v4922
        %v5304 = vpop.f32.mrb[0].mxu0
        %v5305 = vadd.f32 0.0, %v5304
        %v5306 = vpop.f32.mrb[0].mxu0
        %v5307 = vpop.f32.mrb[0].mxu0
        %v5308 = vpop.f32.mrb[0].mxu0
        %5309 = vdwg.mxu0
        %v5311 = vsel %vm4615, %v5305, 0
        %5313 = vmatprep.subr.mxu0 0.0
        %5314 = vmatpush1.msra.mxu0 %v5311
        %5315 = vmatprep.subr.mxu0 0.0
        %5316 = vmatpush1.msra.mxu0 0.0
        %5317 = vmatprep.subr.mxu0 0.0
        %5318 = vmatpush1.msra.mxu0 0.0
        %5319 = vmatprep.subr.mxu0 0.0
        %5320 = vmatpush1.msra.mxu0 0.0
        %5321 = vmatprep.subr.mxu0 0.0
        %5322 = vmatpush1.msra.mxu0 0.0
        %5323 = vmatprep.subr.mxu0 0.0
        %5324 = vmatpush1.msra.mxu0 0.0
        %5325 = vmatprep.subr.mxu0 0.0
        %5326 = vmatpush1.msra.mxu0 0.0
        %5327 = vmatprep.subr.mxu0 0.0
        %5328 = vmatpush1.msra.mxu0 0.0
        %5329 = vmatprep.subr.mxu0 0.0
        %5330 = vmatpush1.msra.mxu0 0.0
        %5331 = vmatprep.subr.mxu0 0.0
        %5332 = vmatpush1.msra.mxu0 0.0
        %5333 = vmatprep.subr.mxu0 0.0
        %5334 = vmatpush1.msra.mxu0 0.0
        %5335 = vmatprep.subr.mxu0 0.0
        %5336 = vmatpush1.msra.mxu0 0.0
        %5337 = vmatprep.subr.mxu0 0.0
        %5338 = vmatpush1.msra.mxu0 0.0
        %5339 = vmatprep.subr.mxu0 0.0
        %5340 = vmatpush1.msra.mxu0 0.0
        %5341 = vmatprep.subr.mxu0 0.0
        %5342 = vmatpush1.msra.mxu0 0.0
        %5343 = vmatprep.subr.mxu0 0.0
        %5344 = vmatpush1.msra.mxu0 0.0
        %5345 = vmatprep.subr.mxu0 0.0
        %5346 = vmatpush1.msra.mxu0 0.0
        %5347 = vmatprep.subr.mxu0 0.0
        %5348 = vmatpush1.msra.mxu0 0.0
        %5349 = vmatprep.subr.mxu0 0.0
        %5350 = vmatpush1.msra.mxu0 0.0
        %5351 = vmatprep.subr.mxu0 0.0
        %5352 = vmatpush1.msra.mxu0 0.0
        %5353 = vmatprep.subr.mxu0 0.0
        %5354 = vmatpush1.msra.mxu0 0.0
        %5355 = vmatprep.subr.mxu0 0.0
        %5356 = vmatpush1.msra.mxu0 0.0
        %5357 = vmatprep.subr.mxu0 0.0
        %5358 = vmatpush1.msra.mxu0 0.0
        %5359 = vmatprep.subr.mxu0 0.0
        %5360 = vmatpush1.msra.mxu0 0.0
        %5361 = vmatprep.subr.mxu0 0.0
        %5362 = vmatpush1.msra.mxu0 0.0
        %5363 = vmatprep.subr.mxu0 0.0
        %5364 = vmatpush1.msra.mxu0 0.0
        %5365 = vmatprep.subr.mxu0 0.0
        %5366 = vmatpush1.msra.mxu0 0.0
        %5367 = vmatprep.subr.mxu0 0.0
        %5368 = vmatpush1.msra.mxu0 0.0
        %5369 = vmatprep.subr.mxu0 0.0
        %5370 = vmatpush1.msra.mxu0 0.0
        %5371 = vmatprep.subr.mxu0 0.0
        %5372 = vmatpush1.msra.mxu0 0.0
        %5373 = vmatprep.subr.mxu0 0.0
        %5374 = vmatpush1.msra.mxu0 0.0
        %5375 = vmatprep.subr.mxu0 0.0
        %5376 = vmatpush1.msra.mxu0 0.0
        %5377 = vmatprep.mubr.f32.mxu0 0.0
        %5378 = vmatmul.mubr.f32.gmra.mrb[0].mxu0 %v4765
        %v5379 = vpop.f32.mrb[0].mxu0
        %v5380 = vadd.f32 0.0, %v5379
        %v5381 = vpop.f32.mrb[0].mxu0
        %5382 = vdwg.mxu0
        %v5383 = vadd.f32 %v5202, %v5380
        %v5384 = vld [vmem:[#allocation30] sm:$0x1]
        %v5386 = vlaneseq
        %v5387 = vshrl.u32 %v5386, 7
        %v5388 = vsub.s32 0, %v5387
        %v5389 = vrot.slane %v5384, %v5388
        %v5391 = vadd.f32 %v5383, %v5389
        %v5392 = vadd.f32 %v5391, %v4908
        %v5393 = vmax.f32 %v5392, 0.0
        %v5394 = vpack.c.bf16 %v5393, %v5393
        %v5395 = vld [vmem:[#allocation33] sm:$0xf]
        %v5396 = vld [vmem:[#allocation33 + $0x4] sm:$0xf]
        %v5397 = vld [vmem:[#allocation33 + $0x8] sm:$0xf]
        %v5398 = vld [vmem:[#allocation33 + $0xc] sm:$0xf]
        %v5399 = vld [vmem:[#allocation33 + $0x10] sm:$0xf]
        %v5400 = vld [vmem:[#allocation33 + $0x14] sm:$0xf]
        %v5401 = vld [vmem:[#allocation33 + $0x18] sm:$0xf]
        %v5402 = vld [vmem:[#allocation33 + $0x1c] sm:$0xf]
        %v5403 = vld [vmem:[#allocation33 + $0x20] sm:$0xf]
        %v5404 = vld [vmem:[#allocation33 + $0x24] sm:$0xf]
        %v5405 = vld [vmem:[#allocation33 + $0x28] sm:$0xf]
        %v5406 = vld [vmem:[#allocation33 + $0x2c] sm:$0xf]
        %v5407 = vld [vmem:[#allocation33 + $0x30] sm:$0xf]
        %v5408 = vld [vmem:[#allocation33 + $0x34] sm:$0xf]
        %v5409 = vld [vmem:[#allocation33 + $0x38] sm:$0xf]
        %v5410 = vld [vmem:[#allocation33 + $0x3c] sm:$0xf]
        %v5427 = vunpack.c.l.b16 %v5395
        %v5428 = vunpack.c.l.b16 %v5396
        %v5429 = vunpack.c.l.b16 %v5397
        %v5430 = vunpack.c.l.b16 %v5398
        %v5431 = vunpack.c.l.b16 %v5399
        %v5432 = vunpack.c.l.b16 %v5400
        %v5433 = vunpack.c.l.b16 %v5401
        %v5434 = vunpack.c.l.b16 %v5402
        %v5435 = vunpack.c.l.b16 %v5403
        %v5436 = vunpack.c.l.b16 %v5404
        %v5437 = vunpack.c.l.b16 %v5405
        %v5438 = vunpack.c.l.b16 %v5406
        %v5439 = vunpack.c.l.b16 %v5407
        %v5440 = vunpack.c.l.b16 %v5408
        %v5441 = vunpack.c.l.b16 %v5409
        %v5442 = vunpack.c.l.b16 %v5410
        %v5443 = vpack.c.b16 %v5428, %v5427
        %v5444 = vpack.c.b16 %v5430, %v5429
        %v5445 = vpack.c.b16 %v5432, %v5431
        %v5446 = vpack.c.b16 %v5434, %v5433
        %v5447 = vpack.c.b16 %v5436, %v5435
        %v5448 = vpack.c.b16 %v5438, %v5437
        %v5449 = vpack.c.b16 %v5440, %v5439
        %v5450 = vpack.c.b16 %v5442, %v5441
        %5459 = vmatprep.subr.bf16.mxu0 0
        %5460 = vmatpush1.bf16.msra.mxu0 %v5443
        %5461 = vmatprep.subr.bf16.mxu0 0
        %5462 = vmatpush1.bf16.msra.mxu0 %v5444
        %5463 = vmatprep.subr.bf16.mxu0 0
        %5464 = vmatpush1.bf16.msra.mxu0 %v5445
        %5465 = vmatprep.subr.bf16.mxu0 0
        %5466 = vmatpush1.bf16.msra.mxu0 %v5446
        %5467 = vmatprep.subr.bf16.mxu0 0
        %5468 = vmatpush1.bf16.msra.mxu0 %v5447
        %5469 = vmatprep.subr.bf16.mxu0 0
        %5470 = vmatpush1.bf16.msra.mxu0 %v5448
        %5471 = vmatprep.subr.bf16.mxu0 0
        %5472 = vmatpush1.bf16.msra.mxu0 %v5449
        %5473 = vmatprep.subr.bf16.mxu0 0
        %5474 = vmatpush1.bf16.msra.mxu0 %v5450
        %5475 = vmatprep.subr.bf16.mxu0 0
        %5476 = vmatpush1.bf16.msra.mxu0 0
        %5477 = vmatprep.subr.bf16.mxu0 0
        %5478 = vmatpush1.bf16.msra.mxu0 0
        %5479 = vmatprep.subr.bf16.mxu0 0
        %5480 = vmatpush1.bf16.msra.mxu0 0
        %5481 = vmatprep.subr.bf16.mxu0 0
        %5482 = vmatpush1.bf16.msra.mxu0 0
        %5483 = vmatprep.subr.bf16.mxu0 0
        %5484 = vmatpush1.bf16.msra.mxu0 0
        %5485 = vmatprep.subr.bf16.mxu0 0
        %5486 = vmatpush1.bf16.msra.mxu0 0
        %5487 = vmatprep.subr.bf16.mxu0 0
        %5488 = vmatpush1.bf16.msra.mxu0 0
        %5489 = vmatprep.subr.bf16.mxu0 0
        %5490 = vmatpush1.bf16.msra.mxu0 0
        %5491 = vmatprep.mubr.bf16.mxu0 0
        %5492 = vmatmul.mubr.bf16.gmra.mrb[0].mxu0 %v5394
        %v5493 = vpop.f32.mrb[0].mxu0
        %v5494 = vadd.f32 0.0, %v5493
        %v5495 = vpop.f32.mrb[0].mxu0
        %v5496 = vpop.f32.mrb[0].mxu0
        %v5497 = vpop.f32.mrb[0].mxu0
        %5498 = vdwg.mxu0
        %s5499 = scalar_lea.vmem [#allocation33], 64
        %v5500 = vld [vmem:[%s5499] sm:$0xf]
        %v5501 = vld [vmem:[%s5499 + $0x4] sm:$0xf]
        %v5502 = vld [vmem:[%s5499 + $0x8] sm:$0xf]
        %v5503 = vld [vmem:[%s5499 + $0xc] sm:$0xf]
        %v5504 = vld [vmem:[%s5499 + $0x10] sm:$0xf]
        %v5505 = vld [vmem:[%s5499 + $0x14] sm:$0xf]
        %v5506 = vld [vmem:[%s5499 + $0x18] sm:$0xf]
        %v5507 = vld [vmem:[%s5499 + $0x1c] sm:$0xf]
        %v5508 = vld [vmem:[%s5499 + $0x20] sm:$0xf]
        %v5509 = vld [vmem:[%s5499 + $0x24] sm:$0xf]
        %v5510 = vld [vmem:[%s5499 + $0x28] sm:$0xf]
        %v5511 = vld [vmem:[%s5499 + $0x2c] sm:$0xf]
        %v5512 = vld [vmem:[%s5499 + $0x30] sm:$0xf]
        %v5513 = vld [vmem:[%s5499 + $0x34] sm:$0xf]
        %v5514 = vld [vmem:[%s5499 + $0x38] sm:$0xf]
        %v5515 = vld [vmem:[%s5499 + $0x3c] sm:$0xf]
        %v5532 = vunpack.c.l.b16 %v5500
        %v5533 = vunpack.c.l.b16 %v5501
        %v5534 = vunpack.c.l.b16 %v5502
        %v5535 = vunpack.c.l.b16 %v5503
        %v5536 = vunpack.c.l.b16 %v5504
        %v5537 = vunpack.c.l.b16 %v5505
        %v5538 = vunpack.c.l.b16 %v5506
        %v5539 = vunpack.c.l.b16 %v5507
        %v5540 = vunpack.c.l.b16 %v5508
        %v5541 = vunpack.c.l.b16 %v5509
        %v5542 = vunpack.c.l.b16 %v5510
        %v5543 = vunpack.c.l.b16 %v5511
        %v5544 = vunpack.c.l.b16 %v5512
        %v5545 = vunpack.c.l.b16 %v5513
        %v5546 = vunpack.c.l.b16 %v5514
        %v5547 = vunpack.c.l.b16 %v5515
        %v5548 = vpack.c.b16 %v5533, %v5532
        %v5549 = vpack.c.b16 %v5535, %v5534
        %v5550 = vpack.c.b16 %v5537, %v5536
        %v5551 = vpack.c.b16 %v5539, %v5538
        %v5552 = vpack.c.b16 %v5541, %v5540
        %v5553 = vpack.c.b16 %v5543, %v5542
        %v5554 = vpack.c.b16 %v5545, %v5544
        %v5555 = vpack.c.b16 %v5547, %v5546
        %5564 = vmatprep.subr.bf16.mxu0 0
        %5565 = vmatpush1.bf16.msra.mxu0 %v5548
        %5566 = vmatprep.subr.bf16.mxu0 0
        %5567 = vmatpush1.bf16.msra.mxu0 %v5549
        %5568 = vmatprep.subr.bf16.mxu0 0
        %5569 = vmatpush1.bf16.msra.mxu0 %v5550
        %5570 = vmatprep.subr.bf16.mxu0 0
        %5571 = vmatpush1.bf16.msra.mxu0 %v5551
        %5572 = vmatprep.subr.bf16.mxu0 0
        %5573 = vmatpush1.bf16.msra.mxu0 %v5552
        %5574 = vmatprep.subr.bf16.mxu0 0
        %5575 = vmatpush1.bf16.msra.mxu0 %v5553
        %5576 = vmatprep.subr.bf16.mxu0 0
        %5577 = vmatpush1.bf16.msra.mxu0 %v5554
        %5578 = vmatprep.subr.bf16.mxu0 0
        %5579 = vmatpush1.bf16.msra.mxu0 %v5555
        %5580 = vmatprep.subr.bf16.mxu0 0
        %5581 = vmatpush1.bf16.msra.mxu0 0
        %5582 = vmatprep.subr.bf16.mxu0 0
        %5583 = vmatpush1.bf16.msra.mxu0 0
        %5584 = vmatprep.subr.bf16.mxu0 0
        %5585 = vmatpush1.bf16.msra.mxu0 0
        %5586 = vmatprep.subr.bf16.mxu0 0
        %5587 = vmatpush1.bf16.msra.mxu0 0
        %5588 = vmatprep.subr.bf16.mxu0 0
        %5589 = vmatpush1.bf16.msra.mxu0 0
        %5590 = vmatprep.subr.bf16.mxu0 0
        %5591 = vmatpush1.bf16.msra.mxu0 0
        %5592 = vmatprep.subr.bf16.mxu0 0
        %5593 = vmatpush1.bf16.msra.mxu0 0
        %5594 = vmatprep.subr.bf16.mxu0 0
        %5595 = vmatpush1.bf16.msra.mxu0 0
        %5596 = vmatprep.mubr.bf16.mxu0 0
        %5597 = vmatmul.mubr.bf16.gmra.mrb[0].mxu0 %v5394
        %v5598 = vpop.f32.mrb[0].mxu0
        %v5599 = vadd.f32 0.0, %v5598
        %v5600 = vpop.f32.mrb[0].mxu0
        %v5601 = vpop.f32.mrb[0].mxu0
        %v5602 = vpop.f32.mrb[0].mxu0
        %5603 = vdwg.mxu0
        %v5604 = vld [vmem:[#allocation36] sm:$0xff]
        %s5605 = scalar_lea.vmem [#allocation36], 8
        %v5606 = vld [vmem:[%s5605] sm:$0xff]
        %v5608 = vsel %vm4611, %v5606, 0
        %v5611 = vsel %vm4615, %v5599, 0
        %5613 = vmatprep.subr.mxu0 0.0
        %5614 = vmatpush1.msra.mxu0 %v5611
        %5615 = vmatprep.subr.mxu0 0.0
        %5616 = vmatpush1.msra.mxu0 0.0
        %5617 = vmatprep.subr.mxu0 0.0
        %5618 = vmatpush1.msra.mxu0 0.0
        %5619 = vmatprep.subr.mxu0 0.0
        %5620 = vmatpush1.msra.mxu0 0.0
        %5621 = vmatprep.subr.mxu0 0.0
        %5622 = vmatpush1.msra.mxu0 0.0
        %5623 = vmatprep.subr.mxu0 0.0
        %5624 = vmatpush1.msra.mxu0 0.0
        %5625 = vmatprep.subr.mxu0 0.0
        %5626 = vmatpush1.msra.mxu0 0.0
        %5627 = vmatprep.subr.mxu0 0.0
        %5628 = vmatpush1.msra.mxu0 0.0
        %5629 = vmatprep.subr.mxu0 0.0
        %5630 = vmatpush1.msra.mxu0 0.0
        %5631 = vmatprep.subr.mxu0 0.0
        %5632 = vmatpush1.msra.mxu0 0.0
        %5633 = vmatprep.subr.mxu0 0.0
        %5634 = vmatpush1.msra.mxu0 0.0
        %5635 = vmatprep.subr.mxu0 0.0
        %5636 = vmatpush1.msra.mxu0 0.0
        %5637 = vmatprep.subr.mxu0 0.0
        %5638 = vmatpush1.msra.mxu0 0.0
        %5639 = vmatprep.subr.mxu0 0.0
        %5640 = vmatpush1.msra.mxu0 0.0
        %5641 = vmatprep.subr.mxu0 0.0
        %5642 = vmatpush1.msra.mxu0 0.0
        %5643 = vmatprep.subr.mxu0 0.0
        %5644 = vmatpush1.msra.mxu0 0.0
        %5645 = vmatprep.subr.mxu0 0.0
        %5646 = vmatpush1.msra.mxu0 0.0
        %5647 = vmatprep.subr.mxu0 0.0
        %5648 = vmatpush1.msra.mxu0 0.0
        %5649 = vmatprep.subr.mxu0 0.0
        %5650 = vmatpush1.msra.mxu0 0.0
        %5651 = vmatprep.subr.mxu0 0.0
        %5652 = vmatpush1.msra.mxu0 0.0
        %5653 = vmatprep.subr.mxu0 0.0
        %5654 = vmatpush1.msra.mxu0 0.0
        %5655 = vmatprep.subr.mxu0 0.0
        %5656 = vmatpush1.msra.mxu0 0.0
        %5657 = vmatprep.subr.mxu0 0.0
        %5658 = vmatpush1.msra.mxu0 0.0
        %5659 = vmatprep.subr.mxu0 0.0
        %5660 = vmatpush1.msra.mxu0 0.0
        %5661 = vmatprep.subr.mxu0 0.0
        %5662 = vmatpush1.msra.mxu0 0.0
        %5663 = vmatprep.subr.mxu0 0.0
        %5664 = vmatpush1.msra.mxu0 0.0
        %5665 = vmatprep.subr.mxu0 0.0
        %5666 = vmatpush1.msra.mxu0 0.0
        %5667 = vmatprep.subr.mxu0 0.0
        %5668 = vmatpush1.msra.mxu0 0.0
        %5669 = vmatprep.subr.mxu0 0.0
        %5670 = vmatpush1.msra.mxu0 0.0
        %5671 = vmatprep.subr.mxu0 0.0
        %5672 = vmatpush1.msra.mxu0 0.0
        %5673 = vmatprep.subr.mxu0 0.0
        %5674 = vmatpush1.msra.mxu0 0.0
        %5675 = vmatprep.subr.mxu0 0.0
        %5676 = vmatpush1.msra.mxu0 0.0
        %5677 = vmatprep.mubr.f32.mxu0 0.0
        %5678 = vmatmul.mubr.f32.gmra.mrb[0].mxu0 %v5608
        %v5679 = vpop.f32.mrb[0].mxu0
        %v5680 = vadd.f32 0.0, %v5679
        %v5681 = vpop.f32.mrb[0].mxu0
        %5682 = vdwg.mxu0
        %v5684 = vsel %vm4611, %v5604, 0
        %v5687 = vsel %vm4615, %v5494, 0
        %5689 = vmatprep.subr.mxu0 0.0
        %5690 = vmatpush1.msra.mxu0 %v5687
        %5691 = vmatprep.subr.mxu0 0.0
        %5692 = vmatpush1.msra.mxu0 0.0
        %5693 = vmatprep.subr.mxu0 0.0
        %5694 = vmatpush1.msra.mxu0 0.0
        %5695 = vmatprep.subr.mxu0 0.0
        %5696 = vmatpush1.msra.mxu0 0.0
        %5697 = vmatprep.subr.mxu0 0.0
        %5698 = vmatpush1.msra.mxu0 0.0
        %5699 = vmatprep.subr.mxu0 0.0
        %5700 = vmatpush1.msra.mxu0 0.0
        %5701 = vmatprep.subr.mxu0 0.0
        %5702 = vmatpush1.msra.mxu0 0.0
        %5703 = vmatprep.subr.mxu0 0.0
        %5704 = vmatpush1.msra.mxu0 0.0
        %5705 = vmatprep.subr.mxu0 0.0
        %5706 = vmatpush1.msra.mxu0 0.0
        %5707 = vmatprep.subr.mxu0 0.0
        %5708 = vmatpush1.msra.mxu0 0.0
        %5709 = vmatprep.subr.mxu0 0.0
        %5710 = vmatpush1.msra.mxu0 0.0
        %5711 = vmatprep.subr.mxu0 0.0
        %5712 = vmatpush1.msra.mxu0 0.0
        %5713 = vmatprep.subr.mxu0 0.0
        %5714 = vmatpush1.msra.mxu0 0.0
        %5715 = vmatprep.subr.mxu0 0.0
        %5716 = vmatpush1.msra.mxu0 0.0
        %5717 = vmatprep.subr.mxu0 0.0
        %5718 = vmatpush1.msra.mxu0 0.0
        %5719 = vmatprep.subr.mxu0 0.0
        %5720 = vmatpush1.msra.mxu0 0.0
        %5721 = vmatprep.subr.mxu0 0.0
        %5722 = vmatpush1.msra.mxu0 0.0
        %5723 = vmatprep.subr.mxu0 0.0
        %5724 = vmatpush1.msra.mxu0 0.0
        %5725 = vmatprep.subr.mxu0 0.0
        %5726 = vmatpush1.msra.mxu0 0.0
        %5727 = vmatprep.subr.mxu0 0.0
        %5728 = vmatpush1.msra.mxu0 0.0
        %5729 = vmatprep.subr.mxu0 0.0
        %5730 = vmatpush1.msra.mxu0 0.0
        %5731 = vmatprep.subr.mxu0 0.0
        %5732 = vmatpush1.msra.mxu0 0.0
        %5733 = vmatprep.subr.mxu0 0.0
        %5734 = vmatpush1.msra.mxu0 0.0
        %5735 = vmatprep.subr.mxu0 0.0
        %5736 = vmatpush1.msra.mxu0 0.0
        %5737 = vmatprep.subr.mxu0 0.0
        %5738 = vmatpush1.msra.mxu0 0.0
        %5739 = vmatprep.subr.mxu0 0.0
        %5740 = vmatpush1.msra.mxu0 0.0
        %5741 = vmatprep.subr.mxu0 0.0
        %5742 = vmatpush1.msra.mxu0 0.0
        %5743 = vmatprep.subr.mxu0 0.0
        %5744 = vmatpush1.msra.mxu0 0.0
        %5745 = vmatprep.subr.mxu0 0.0
        %5746 = vmatpush1.msra.mxu0 0.0
        %5747 = vmatprep.subr.mxu0 0.0
        %5748 = vmatpush1.msra.mxu0 0.0
        %5749 = vmatprep.subr.mxu0 0.0
        %5750 = vmatpush1.msra.mxu0 0.0
        %5751 = vmatprep.subr.mxu0 0.0
        %5752 = vmatpush1.msra.mxu0 0.0
        %5753 = vmatprep.mubr.f32.mxu0 0.0
        %5754 = vmatmul.mubr.f32.gmra.mrb[0].mxu0 %v5684
        %v5755 = vpop.f32.mrb[0].mxu0
        %v5756 = vadd.f32 %v5680, %v5755
        %v5757 = vpop.f32.mrb[0].mxu0
        %5758 = vdwg.mxu0
        %v5759 = vld [vmem:[#allocation34] sm:$0x1]
        %v5761 = vlaneseq
        %v5762 = vshrl.u32 %v5761, 7
        %v5763 = vsub.s32 0, %v5762
        %v5764 = vrot.slane %v5759, %v5763
        %v5766 = vadd.f32 %v5756, %v5764
        %v5767 = vpack.c.bf16 %v5766, %v5766
        %v5768 = vld [vmem:[#allocation37] sm:$0xf]
        %v5769 = vld [vmem:[#allocation37 + $0x4] sm:$0xf]
        %v5770 = vld [vmem:[#allocation37 + $0x8] sm:$0xf]
        %v5771 = vld [vmem:[#allocation37 + $0xc] sm:$0xf]
        %v5772 = vld [vmem:[#allocation37 + $0x10] sm:$0xf]
        %v5773 = vld [vmem:[#allocation37 + $0x14] sm:$0xf]
        %v5774 = vld [vmem:[#allocation37 + $0x18] sm:$0xf]
        %v5775 = vld [vmem:[#allocation37 + $0x1c] sm:$0xf]
        %v5776 = vld [vmem:[#allocation37 + $0x20] sm:$0xf]
        %v5777 = vld [vmem:[#allocation37 + $0x24] sm:$0xf]
        %v5778 = vld [vmem:[#allocation37 + $0x28] sm:$0xf]
        %v5779 = vld [vmem:[#allocation37 + $0x2c] sm:$0xf]
        %v5780 = vld [vmem:[#allocation37 + $0x30] sm:$0xf]
        %v5781 = vld [vmem:[#allocation37 + $0x34] sm:$0xf]
        %v5782 = vld [vmem:[#allocation37 + $0x38] sm:$0xf]
        %v5783 = vld [vmem:[#allocation37 + $0x3c] sm:$0xf]
        %v5800 = vunpack.c.l.b16 %v5768
        %v5801 = vunpack.c.l.b16 %v5769
        %v5802 = vunpack.c.l.b16 %v5770
        %v5803 = vunpack.c.l.b16 %v5771
        %v5804 = vunpack.c.l.b16 %v5772
        %v5805 = vunpack.c.l.b16 %v5773
        %v5806 = vunpack.c.l.b16 %v5774
        %v5807 = vunpack.c.l.b16 %v5775
        %v5808 = vunpack.c.l.b16 %v5776
        %v5809 = vunpack.c.l.b16 %v5777
        %v5810 = vunpack.c.l.b16 %v5778
        %v5811 = vunpack.c.l.b16 %v5779
        %v5812 = vunpack.c.l.b16 %v5780
        %v5813 = vunpack.c.l.b16 %v5781
        %v5814 = vunpack.c.l.b16 %v5782
        %v5815 = vunpack.c.l.b16 %v5783
        %v5816 = vpack.c.b16 %v5801, %v5800
        %v5817 = vpack.c.b16 %v5803, %v5802
        %v5818 = vpack.c.b16 %v5805, %v5804
        %v5819 = vpack.c.b16 %v5807, %v5806
        %v5820 = vpack.c.b16 %v5809, %v5808
        %v5821 = vpack.c.b16 %v5811, %v5810
        %v5822 = vpack.c.b16 %v5813, %v5812
        %v5823 = vpack.c.b16 %v5815, %v5814
        %5832 = vmatprep.subr.bf16.mxu0 0
        %5833 = vmatpush1.bf16.msra.mxu0 %v5816
        %5834 = vmatprep.subr.bf16.mxu0 0
        %5835 = vmatpush1.bf16.msra.mxu0 %v5817
        %5836 = vmatprep.subr.bf16.mxu0 0
        %5837 = vmatpush1.bf16.msra.mxu0 %v5818
        %5838 = vmatprep.subr.bf16.mxu0 0
        %5839 = vmatpush1.bf16.msra.mxu0 %v5819
        %5840 = vmatprep.subr.bf16.mxu0 0
        %5841 = vmatpush1.bf16.msra.mxu0 %v5820
        %5842 = vmatprep.subr.bf16.mxu0 0
        %5843 = vmatpush1.bf16.msra.mxu0 %v5821
        %5844 = vmatprep.subr.bf16.mxu0 0
        %5845 = vmatpush1.bf16.msra.mxu0 %v5822
        %5846 = vmatprep.subr.bf16.mxu0 0
        %5847 = vmatpush1.bf16.msra.mxu0 %v5823
        %5848 = vmatprep.subr.bf16.mxu0 0
        %5849 = vmatpush1.bf16.msra.mxu0 0
        %5850 = vmatprep.subr.bf16.mxu0 0
        %5851 = vmatpush1.bf16.msra.mxu0 0
        %5852 = vmatprep.subr.bf16.mxu0 0
        %5853 = vmatpush1.bf16.msra.mxu0 0
        %5854 = vmatprep.subr.bf16.mxu0 0
        %5855 = vmatpush1.bf16.msra.mxu0 0
        %5856 = vmatprep.subr.bf16.mxu0 0
        %5857 = vmatpush1.bf16.msra.mxu0 0
        %5858 = vmatprep.subr.bf16.mxu0 0
        %5859 = vmatpush1.bf16.msra.mxu0 0
        %5860 = vmatprep.subr.bf16.mxu0 0
        %5861 = vmatpush1.bf16.msra.mxu0 0
        %5862 = vmatprep.subr.bf16.mxu0 0
        %5863 = vmatpush1.bf16.msra.mxu0 0
        %5864 = vmatprep.mubr.bf16.mxu0 0
        %5865 = vmatmul.mubr.bf16.gmra.mrb[0].mxu0 %v5767
        %v5866 = vpop.f32.mrb[0].mxu0
        %v5867 = vadd.f32 0.0, %v5866
        %v5868 = vpop.f32.mrb[0].mxu0
        %v5869 = vpop.f32.mrb[0].mxu0
        %v5870 = vpop.f32.mrb[0].mxu0
        %5871 = vdwg.mxu0
        %v5872 = vld [vmem:[#allocation48] sm:$0xff]
        %s5873 = scalar_lea.vmem [#allocation37], 64
        %v5874 = vld [vmem:[%s5873] sm:$0xf]
        %v5875 = vld [vmem:[%s5873 + $0x4] sm:$0xf]
        %v5876 = vld [vmem:[%s5873 + $0x8] sm:$0xf]
        %v5877 = vld [vmem:[%s5873 + $0xc] sm:$0xf]
        %v5878 = vld [vmem:[%s5873 + $0x10] sm:$0xf]
        %v5879 = vld [vmem:[%s5873 + $0x14] sm:$0xf]
        %v5880 = vld [vmem:[%s5873 + $0x18] sm:$0xf]
        %v5881 = vld [vmem:[%s5873 + $0x1c] sm:$0xf]
        %v5882 = vld [vmem:[%s5873 + $0x20] sm:$0xf]
        %v5883 = vld [vmem:[%s5873 + $0x24] sm:$0xf]
        %v5884 = vld [vmem:[%s5873 + $0x28] sm:$0xf]
        %v5885 = vld [vmem:[%s5873 + $0x2c] sm:$0xf]
        %v5886 = vld [vmem:[%s5873 + $0x30] sm:$0xf]
        %v5887 = vld [vmem:[%s5873 + $0x34] sm:$0xf]
        %v5888 = vld [vmem:[%s5873 + $0x38] sm:$0xf]
        %v5889 = vld [vmem:[%s5873 + $0x3c] sm:$0xf]
        %v5906 = vunpack.c.l.b16 %v5874
        %v5907 = vunpack.c.l.b16 %v5875
        %v5908 = vunpack.c.l.b16 %v5876
        %v5909 = vunpack.c.l.b16 %v5877
        %v5910 = vunpack.c.l.b16 %v5878
        %v5911 = vunpack.c.l.b16 %v5879
        %v5912 = vunpack.c.l.b16 %v5880
        %v5913 = vunpack.c.l.b16 %v5881
        %v5914 = vunpack.c.l.b16 %v5882
        %v5915 = vunpack.c.l.b16 %v5883
        %v5916 = vunpack.c.l.b16 %v5884
        %v5917 = vunpack.c.l.b16 %v5885
        %v5918 = vunpack.c.l.b16 %v5886
        %v5919 = vunpack.c.l.b16 %v5887
        %v5920 = vunpack.c.l.b16 %v5888
        %v5921 = vunpack.c.l.b16 %v5889
        %v5922 = vpack.c.b16 %v5907, %v5906
        %v5923 = vpack.c.b16 %v5909, %v5908
        %v5924 = vpack.c.b16 %v5911, %v5910
        %v5925 = vpack.c.b16 %v5913, %v5912
        %v5926 = vpack.c.b16 %v5915, %v5914
        %v5927 = vpack.c.b16 %v5917, %v5916
        %v5928 = vpack.c.b16 %v5919, %v5918
        %v5929 = vpack.c.b16 %v5921, %v5920
        %5938 = vmatprep.subr.bf16.mxu0 0
        %5939 = vmatpush1.bf16.msra.mxu0 %v5922
        %5940 = vmatprep.subr.bf16.mxu0 0
        %5941 = vmatpush1.bf16.msra.mxu0 %v5923
        %5942 = vmatprep.subr.bf16.mxu0 0
        %5943 = vmatpush1.bf16.msra.mxu0 %v5924
        %5944 = vmatprep.subr.bf16.mxu0 0
        %5945 = vmatpush1.bf16.msra.mxu0 %v5925
        %5946 = vmatprep.subr.bf16.mxu0 0
        %5947 = vmatpush1.bf16.msra.mxu0 %v5926
        %5948 = vmatprep.subr.bf16.mxu0 0
        %5949 = vmatpush1.bf16.msra.mxu0 %v5927
        %5950 = vmatprep.subr.bf16.mxu0 0
        %5951 = vmatpush1.bf16.msra.mxu0 %v5928
        %5952 = vmatprep.subr.bf16.mxu0 0
        %5953 = vmatpush1.bf16.msra.mxu0 %v5929
        %5954 = vmatprep.subr.bf16.mxu0 0
        %5955 = vmatpush1.bf16.msra.mxu0 0
        %5956 = vmatprep.subr.bf16.mxu0 0
        %5957 = vmatpush1.bf16.msra.mxu0 0
        %5958 = vmatprep.subr.bf16.mxu0 0
        %5959 = vmatpush1.bf16.msra.mxu0 0
        %5960 = vmatprep.subr.bf16.mxu0 0
        %5961 = vmatpush1.bf16.msra.mxu0 0
        %5962 = vmatprep.subr.bf16.mxu0 0
        %5963 = vmatpush1.bf16.msra.mxu0 0
        %5964 = vmatprep.subr.bf16.mxu0 0
        %5965 = vmatpush1.bf16.msra.mxu0 0
        %5966 = vmatprep.subr.bf16.mxu0 0
        %5967 = vmatpush1.bf16.msra.mxu0 0
        %5968 = vmatprep.subr.bf16.mxu0 0
        %5969 = vmatpush1.bf16.msra.mxu0 0
        %5970 = vmatprep.mubr.bf16.mxu0 0
        %5971 = vmatmul.mubr.bf16.gmra.mrb[0].mxu0 %v5767
        %v5972 = vpop.f32.mrb[0].mxu0
        %v5973 = vadd.f32 0.0, %v5972
        %v5974 = vpop.f32.mrb[0].mxu0
        %v5975 = vpop.f32.mrb[0].mxu0
        %v5976 = vpop.f32.mrb[0].mxu0
        %5977 = vdwg.mxu0
        %v5979 = vsel %vm3366, %v5872, 0
        %5981 = vmatprep.subr.mxu0 0.0
        %5982 = vmatpush1.msra.mxu0 %v5867
        %5983 = vmatprep.subr.mxu0 0.0
        %5984 = vmatpush1.msra.mxu0 0.0
        %5985 = vmatprep.subr.mxu0 0.0
        %5986 = vmatpush1.msra.mxu0 0.0
        %5987 = vmatprep.subr.mxu0 0.0
        %5988 = vmatpush1.msra.mxu0 0.0
        %5989 = vmatprep.subr.mxu0 0.0
        %5990 = vmatpush1.msra.mxu0 0.0
        %5991 = vmatprep.subr.mxu0 0.0
        %5992 = vmatpush1.msra.mxu0 0.0
        %5993 = vmatprep.subr.mxu0 0.0
        %5994 = vmatpush1.msra.mxu0 0.0
        %5995 = vmatprep.subr.mxu0 0.0
        %5996 = vmatpush1.msra.mxu0 0.0
        %5997 = vmatprep.subr.mxu0 0.0
        %5998 = vmatpush1.msra.mxu0 0.0
        %5999 = vmatprep.subr.mxu0 0.0
        %6000 = vmatpush1.msra.mxu0 0.0
        %6001 = vmatprep.subr.mxu0 0.0
        %6002 = vmatpush1.msra.mxu0 0.0
        %6003 = vmatprep.subr.mxu0 0.0
        %6004 = vmatpush1.msra.mxu0 0.0
        %6005 = vmatprep.subr.mxu0 0.0
        %6006 = vmatpush1.msra.mxu0 0.0
        %6007 = vmatprep.subr.mxu0 0.0
        %6008 = vmatpush1.msra.mxu0 0.0
        %6009 = vmatprep.subr.mxu0 0.0
        %6010 = vmatpush1.msra.mxu0 0.0
        %6011 = vmatprep.subr.mxu0 0.0
        %6012 = vmatpush1.msra.mxu0 0.0
        %6013 = vmatprep.subr.mxu0 0.0
        %6014 = vmatpush1.msra.mxu0 0.0
        %6015 = vmatprep.subr.mxu0 0.0
        %6016 = vmatpush1.msra.mxu0 0.0
        %6017 = vmatprep.subr.mxu0 0.0
        %6018 = vmatpush1.msra.mxu0 0.0
        %6019 = vmatprep.subr.mxu0 0.0
        %6020 = vmatpush1.msra.mxu0 0.0
        %6021 = vmatprep.subr.mxu0 0.0
        %6022 = vmatpush1.msra.mxu0 0.0
        %6023 = vmatprep.subr.mxu0 0.0
        %6024 = vmatpush1.msra.mxu0 0.0
        %6025 = vmatprep.subr.mxu0 0.0
        %6026 = vmatpush1.msra.mxu0 0.0
        %6027 = vmatprep.subr.mxu0 0.0
        %6028 = vmatpush1.msra.mxu0 0.0
        %6029 = vmatprep.subr.mxu0 0.0
        %6030 = vmatpush1.msra.mxu0 0.0
        %6031 = vmatprep.subr.mxu0 0.0
        %6032 = vmatpush1.msra.mxu0 0.0
        %6033 = vmatprep.subr.mxu0 0.0
        %6034 = vmatpush1.msra.mxu0 0.0
        %6035 = vmatprep.subr.mxu0 0.0
        %6036 = vmatpush1.msra.mxu0 0.0
        %6037 = vmatprep.subr.mxu0 0.0
        %6038 = vmatpush1.msra.mxu0 0.0
        %6039 = vmatprep.subr.mxu0 0.0
        %6040 = vmatpush1.msra.mxu0 0.0
        %6041 = vmatprep.subr.mxu0 0.0
        %6042 = vmatpush1.msra.mxu0 0.0
        %6043 = vmatprep.subr.mxu0 0.0
        %6044 = vmatpush1.msra.mxu0 0.0
        %6045 = vmatprep.mubr.f32.mxu0 0.0
        %6046 = vmatmul.mubr.f32.gmra.mrb[0].mxu0 %v5979
        %v6047 = vpop.f32.mrb[0].mxu0
        %v6048 = vadd.f32 %v5973, %v6047
        %v6049 = vpop.f32.mrb[0].mxu0
        %6050 = vdwg.mxu0
        %s6051 = scalar_lea.vmem [#allocation37], 128
        %v6052 = vld [vmem:[%s6051] sm:$0xf]
        %v6053 = vld [vmem:[%s6051 + $0x4] sm:$0xf]
        %v6054 = vld [vmem:[%s6051 + $0x8] sm:$0xf]
        %v6055 = vld [vmem:[%s6051 + $0xc] sm:$0xf]
        %v6056 = vld [vmem:[%s6051 + $0x10] sm:$0xf]
        %v6057 = vld [vmem:[%s6051 + $0x14] sm:$0xf]
        %v6058 = vld [vmem:[%s6051 + $0x18] sm:$0xf]
        %v6059 = vld [vmem:[%s6051 + $0x1c] sm:$0xf]
        %v6060 = vld [vmem:[%s6051 + $0x20] sm:$0xf]
        %v6061 = vld [vmem:[%s6051 + $0x24] sm:$0xf]
        %v6062 = vld [vmem:[%s6051 + $0x28] sm:$0xf]
        %v6063 = vld [vmem:[%s6051 + $0x2c] sm:$0xf]
        %v6064 = vld [vmem:[%s6051 + $0x30] sm:$0xf]
        %v6065 = vld [vmem:[%s6051 + $0x34] sm:$0xf]
        %v6066 = vld [vmem:[%s6051 + $0x38] sm:$0xf]
        %v6067 = vld [vmem:[%s6051 + $0x3c] sm:$0xf]
        %v6084 = vunpack.c.l.b16 %v6052
        %v6085 = vunpack.c.l.b16 %v6053
        %v6086 = vunpack.c.l.b16 %v6054
        %v6087 = vunpack.c.l.b16 %v6055
        %v6088 = vunpack.c.l.b16 %v6056
        %v6089 = vunpack.c.l.b16 %v6057
        %v6090 = vunpack.c.l.b16 %v6058
        %v6091 = vunpack.c.l.b16 %v6059
        %v6092 = vunpack.c.l.b16 %v6060
        %v6093 = vunpack.c.l.b16 %v6061
        %v6094 = vunpack.c.l.b16 %v6062
        %v6095 = vunpack.c.l.b16 %v6063
        %v6096 = vunpack.c.l.b16 %v6064
        %v6097 = vunpack.c.l.b16 %v6065
        %v6098 = vunpack.c.l.b16 %v6066
        %v6099 = vunpack.c.l.b16 %v6067
        %v6100 = vpack.c.b16 %v6085, %v6084
        %v6101 = vpack.c.b16 %v6087, %v6086
        %v6102 = vpack.c.b16 %v6089, %v6088
        %v6103 = vpack.c.b16 %v6091, %v6090
        %v6104 = vpack.c.b16 %v6093, %v6092
        %v6105 = vpack.c.b16 %v6095, %v6094
        %v6106 = vpack.c.b16 %v6097, %v6096
        %v6107 = vpack.c.b16 %v6099, %v6098
        %6116 = vmatprep.subr.bf16.mxu0 0
        %6117 = vmatpush1.bf16.msra.mxu0 %v6100
        %6118 = vmatprep.subr.bf16.mxu0 0
        %6119 = vmatpush1.bf16.msra.mxu0 %v6101
        %6120 = vmatprep.subr.bf16.mxu0 0
        %6121 = vmatpush1.bf16.msra.mxu0 %v6102
        %6122 = vmatprep.subr.bf16.mxu0 0
        %6123 = vmatpush1.bf16.msra.mxu0 %v6103
        %6124 = vmatprep.subr.bf16.mxu0 0
        %6125 = vmatpush1.bf16.msra.mxu0 %v6104
        %6126 = vmatprep.subr.bf16.mxu0 0
        %6127 = vmatpush1.bf16.msra.mxu0 %v6105
        %6128 = vmatprep.subr.bf16.mxu0 0
        %6129 = vmatpush1.bf16.msra.mxu0 %v6106
        %6130 = vmatprep.subr.bf16.mxu0 0
        %6131 = vmatpush1.bf16.msra.mxu0 %v6107
        %6132 = vmatprep.subr.bf16.mxu0 0
        %6133 = vmatpush1.bf16.msra.mxu0 0
        %6134 = vmatprep.subr.bf16.mxu0 0
        %6135 = vmatpush1.bf16.msra.mxu0 0
        %6136 = vmatprep.subr.bf16.mxu0 0
        %6137 = vmatpush1.bf16.msra.mxu0 0
        %6138 = vmatprep.subr.bf16.mxu0 0
        %6139 = vmatpush1.bf16.msra.mxu0 0
        %6140 = vmatprep.subr.bf16.mxu0 0
        %6141 = vmatpush1.bf16.msra.mxu0 0
        %6142 = vmatprep.subr.bf16.mxu0 0
        %6143 = vmatpush1.bf16.msra.mxu0 0
        %6144 = vmatprep.subr.bf16.mxu0 0
        %6145 = vmatpush1.bf16.msra.mxu0 0
        %6146 = vmatprep.subr.bf16.mxu0 0
        %6147 = vmatpush1.bf16.msra.mxu0 0
        %6148 = vmatprep.mubr.bf16.mxu0 0
        %6149 = vmatmul.mubr.bf16.gmra.mrb[0].mxu0 %v5767
        %v6150 = vpop.f32.mrb[0].mxu0
        %v6151 = vadd.f32 0.0, %v6150
        %v6152 = vpop.f32.mrb[0].mxu0
        %v6153 = vpop.f32.mrb[0].mxu0
        %v6154 = vpop.f32.mrb[0].mxu0
        %6155 = vdwg.mxu0
        %s6156 = scalar_lea.vmem [#allocation48], 16
        %v6157 = vld [vmem:[%s6156] sm:$0xff]
        %v6159 = vsel %vm3366, %v6157, 0
        %6161 = vmatprep.subr.mxu0 0.0
        %6162 = vmatpush1.msra.mxu0 %v6151
        %6163 = vmatprep.subr.mxu0 0.0
        %6164 = vmatpush1.msra.mxu0 0.0
        %6165 = vmatprep.subr.mxu0 0.0
        %6166 = vmatpush1.msra.mxu0 0.0
        %6167 = vmatprep.subr.mxu0 0.0
        %6168 = vmatpush1.msra.mxu0 0.0
        %6169 = vmatprep.subr.mxu0 0.0
        %6170 = vmatpush1.msra.mxu0 0.0
        %6171 = vmatprep.subr.mxu0 0.0
        %6172 = vmatpush1.msra.mxu0 0.0
        %6173 = vmatprep.subr.mxu0 0.0
        %6174 = vmatpush1.msra.mxu0 0.0
        %6175 = vmatprep.subr.mxu0 0.0
        %6176 = vmatpush1.msra.mxu0 0.0
        %6177 = vmatprep.subr.mxu0 0.0
        %6178 = vmatpush1.msra.mxu0 0.0
        %6179 = vmatprep.subr.mxu0 0.0
        %6180 = vmatpush1.msra.mxu0 0.0
        %6181 = vmatprep.subr.mxu0 0.0
        %6182 = vmatpush1.msra.mxu0 0.0
        %6183 = vmatprep.subr.mxu0 0.0
        %6184 = vmatpush1.msra.mxu0 0.0
        %6185 = vmatprep.subr.mxu0 0.0
        %6186 = vmatpush1.msra.mxu0 0.0
        %6187 = vmatprep.subr.mxu0 0.0
        %6188 = vmatpush1.msra.mxu0 0.0
        %6189 = vmatprep.subr.mxu0 0.0
        %6190 = vmatpush1.msra.mxu0 0.0
        %6191 = vmatprep.subr.mxu0 0.0
        %6192 = vmatpush1.msra.mxu0 0.0
        %6193 = vmatprep.subr.mxu0 0.0
        %6194 = vmatpush1.msra.mxu0 0.0
        %6195 = vmatprep.subr.mxu0 0.0
        %6196 = vmatpush1.msra.mxu0 0.0
        %6197 = vmatprep.subr.mxu0 0.0
        %6198 = vmatpush1.msra.mxu0 0.0
        %6199 = vmatprep.subr.mxu0 0.0
        %6200 = vmatpush1.msra.mxu0 0.0
        %6201 = vmatprep.subr.mxu0 0.0
        %6202 = vmatpush1.msra.mxu0 0.0
        %6203 = vmatprep.subr.mxu0 0.0
        %6204 = vmatpush1.msra.mxu0 0.0
        %6205 = vmatprep.subr.mxu0 0.0
        %6206 = vmatpush1.msra.mxu0 0.0
        %6207 = vmatprep.subr.mxu0 0.0
        %6208 = vmatpush1.msra.mxu0 0.0
        %6209 = vmatprep.subr.mxu0 0.0
        %6210 = vmatpush1.msra.mxu0 0.0
        %6211 = vmatprep.subr.mxu0 0.0
        %6212 = vmatpush1.msra.mxu0 0.0
        %6213 = vmatprep.subr.mxu0 0.0
        %6214 = vmatpush1.msra.mxu0 0.0
        %6215 = vmatprep.subr.mxu0 0.0
        %6216 = vmatpush1.msra.mxu0 0.0
        %6217 = vmatprep.subr.mxu0 0.0
        %6218 = vmatpush1.msra.mxu0 0.0
        %6219 = vmatprep.subr.mxu0 0.0
        %6220 = vmatpush1.msra.mxu0 0.0
        %6221 = vmatprep.subr.mxu0 0.0
        %6222 = vmatpush1.msra.mxu0 0.0
        %6223 = vmatprep.subr.mxu0 0.0
        %6224 = vmatpush1.msra.mxu0 0.0
        %6225 = vmatprep.mubr.f32.mxu0 0.0
        %6226 = vmatmul.mubr.f32.gmra.mrb[0].mxu0 %v6159
        %v6227 = vpop.f32.mrb[0].mxu0
        %v6228 = vadd.f32 0.0, %v6227
        %v6229 = vpop.f32.mrb[0].mxu0
        %6230 = vdwg.mxu0
        %v6231 = vadd.f32 %v6048, %v6228
        %v6232 = vld [vmem:[#allocation42] sm:$0xf]
        %v6233 = vld [vmem:[#allocation42 + $0x4] sm:$0xf]
        %v6234 = vld [vmem:[#allocation42 + $0x8] sm:$0xf]
        %v6235 = vld [vmem:[#allocation42 + $0xc] sm:$0xf]
        %v6236 = vld [vmem:[#allocation42 + $0x10] sm:$0xf]
        %v6237 = vld [vmem:[#allocation42 + $0x14] sm:$0xf]
        %v6238 = vld [vmem:[#allocation42 + $0x18] sm:$0xf]
        %v6239 = vld [vmem:[#allocation42 + $0x1c] sm:$0xf]
        %v6240 = vld [vmem:[#allocation42 + $0x20] sm:$0xf]
        %v6241 = vld [vmem:[#allocation42 + $0x24] sm:$0xf]
        %v6242 = vld [vmem:[#allocation42 + $0x28] sm:$0xf]
        %v6243 = vld [vmem:[#allocation42 + $0x2c] sm:$0xf]
        %v6244 = vld [vmem:[#allocation42 + $0x30] sm:$0xf]
        %v6245 = vld [vmem:[#allocation42 + $0x34] sm:$0xf]
        %v6246 = vld [vmem:[#allocation42 + $0x38] sm:$0xf]
        %v6247 = vld [vmem:[#allocation42 + $0x3c] sm:$0xf]
        %v6248 = vld [vmem:[#allocation39] sm:$0xf]
        %v6249 = vld [vmem:[#allocation39 + $0x4] sm:$0xf]
        %v6250 = vld [vmem:[#allocation39 + $0x8] sm:$0xf]
        %v6251 = vld [vmem:[#allocation39 + $0xc] sm:$0xf]
        %v6252 = vld [vmem:[#allocation39 + $0x10] sm:$0xf]
        %v6253 = vld [vmem:[#allocation39 + $0x14] sm:$0xf]
        %v6254 = vld [vmem:[#allocation39 + $0x18] sm:$0xf]
        %v6255 = vld [vmem:[#allocation39 + $0x1c] sm:$0xf]
        %v6256 = vld [vmem:[#allocation39 + $0x20] sm:$0xf]
        %v6257 = vld [vmem:[#allocation39 + $0x24] sm:$0xf]
        %v6258 = vld [vmem:[#allocation39 + $0x28] sm:$0xf]
        %v6259 = vld [vmem:[#allocation39 + $0x2c] sm:$0xf]
        %v6260 = vld [vmem:[#allocation39 + $0x30] sm:$0xf]
        %v6261 = vld [vmem:[#allocation39 + $0x34] sm:$0xf]
        %v6262 = vld [vmem:[#allocation39 + $0x38] sm:$0xf]
        %v6263 = vld [vmem:[#allocation39 + $0x3c] sm:$0xf]
        %v6280 = vunpack.c.l.b16 %v6248
        %v6281 = vunpack.c.l.b16 %v6249
        %v6282 = vunpack.c.l.b16 %v6250
        %v6283 = vunpack.c.l.b16 %v6251
        %v6284 = vunpack.c.l.b16 %v6252
        %v6285 = vunpack.c.l.b16 %v6253
        %v6286 = vunpack.c.l.b16 %v6254
        %v6287 = vunpack.c.l.b16 %v6255
        %v6288 = vunpack.c.l.b16 %v6256
        %v6289 = vunpack.c.l.b16 %v6257
        %v6290 = vunpack.c.l.b16 %v6258
        %v6291 = vunpack.c.l.b16 %v6259
        %v6292 = vunpack.c.l.b16 %v6260
        %v6293 = vunpack.c.l.b16 %v6261
        %v6294 = vunpack.c.l.b16 %v6262
        %v6295 = vunpack.c.l.b16 %v6263
        %v6296 = vpack.c.b16 %v6281, %v6280
        %v6297 = vpack.c.b16 %v6283, %v6282
        %v6298 = vpack.c.b16 %v6285, %v6284
        %v6299 = vpack.c.b16 %v6287, %v6286
        %v6300 = vpack.c.b16 %v6289, %v6288
        %v6301 = vpack.c.b16 %v6291, %v6290
        %v6302 = vpack.c.b16 %v6293, %v6292
        %v6303 = vpack.c.b16 %v6295, %v6294
        %6312 = vmatprep.subr.bf16.mxu0 0
        %6313 = vmatpush1.bf16.msra.mxu0 %v6296
        %6314 = vmatprep.subr.bf16.mxu0 0
        %6315 = vmatpush1.bf16.msra.mxu0 %v6297
        %6316 = vmatprep.subr.bf16.mxu0 0
        %6317 = vmatpush1.bf16.msra.mxu0 %v6298
        %6318 = vmatprep.subr.bf16.mxu0 0
        %6319 = vmatpush1.bf16.msra.mxu0 %v6299
        %6320 = vmatprep.subr.bf16.mxu0 0
        %6321 = vmatpush1.bf16.msra.mxu0 %v6300
        %6322 = vmatprep.subr.bf16.mxu0 0
        %6323 = vmatpush1.bf16.msra.mxu0 %v6301
        %6324 = vmatprep.subr.bf16.mxu0 0
        %6325 = vmatpush1.bf16.msra.mxu0 %v6302
        %6326 = vmatprep.subr.bf16.mxu0 0
        %6327 = vmatpush1.bf16.msra.mxu0 %v6303
        %6328 = vmatprep.subr.bf16.mxu0 0
        %6329 = vmatpush1.bf16.msra.mxu0 0
        %6330 = vmatprep.subr.bf16.mxu0 0
        %6331 = vmatpush1.bf16.msra.mxu0 0
        %6332 = vmatprep.subr.bf16.mxu0 0
        %6333 = vmatpush1.bf16.msra.mxu0 0
        %6334 = vmatprep.subr.bf16.mxu0 0
        %6335 = vmatpush1.bf16.msra.mxu0 0
        %6336 = vmatprep.subr.bf16.mxu0 0
        %6337 = vmatpush1.bf16.msra.mxu0 0
        %6338 = vmatprep.subr.bf16.mxu0 0
        %6339 = vmatpush1.bf16.msra.mxu0 0
        %6340 = vmatprep.subr.bf16.mxu0 0
        %6341 = vmatpush1.bf16.msra.mxu0 0
        %6342 = vmatprep.subr.bf16.mxu0 0
        %6343 = vmatpush1.bf16.msra.mxu0 0
        %6344 = vmatprep.mubr.bf16.mxu0 0
        %6345 = vmatmul.mubr.bf16.gmra.mrb[0].mxu0 %v4136
        %v6346 = vpop.f32.mrb[0].mxu0
        %v6347 = vadd.f32 0.0, %v6346
        %v6348 = vpop.f32.mrb[0].mxu0
        %v6349 = vpop.f32.mrb[0].mxu0
        %v6350 = vpop.f32.mrb[0].mxu0
        %6351 = vdwg.mxu0
        %s6352 = scalar_lea.vmem [#allocation39], 64
        %v6353 = vld [vmem:[%s6352] sm:$0xf]
        %v6354 = vld [vmem:[%s6352 + $0x4] sm:$0xf]
        %v6355 = vld [vmem:[%s6352 + $0x8] sm:$0xf]
        %v6356 = vld [vmem:[%s6352 + $0xc] sm:$0xf]
        %v6357 = vld [vmem:[%s6352 + $0x10] sm:$0xf]
        %v6358 = vld [vmem:[%s6352 + $0x14] sm:$0xf]
        %v6359 = vld [vmem:[%s6352 + $0x18] sm:$0xf]
        %v6360 = vld [vmem:[%s6352 + $0x1c] sm:$0xf]
        %v6361 = vld [vmem:[%s6352 + $0x20] sm:$0xf]
        %v6362 = vld [vmem:[%s6352 + $0x24] sm:$0xf]
        %v6363 = vld [vmem:[%s6352 + $0x28] sm:$0xf]
        %v6364 = vld [vmem:[%s6352 + $0x2c] sm:$0xf]
        %v6365 = vld [vmem:[%s6352 + $0x30] sm:$0xf]
        %v6366 = vld [vmem:[%s6352 + $0x34] sm:$0xf]
        %v6367 = vld [vmem:[%s6352 + $0x38] sm:$0xf]
        %v6368 = vld [vmem:[%s6352 + $0x3c] sm:$0xf]
        %v6385 = vunpack.c.l.b16 %v6353
        %v6386 = vunpack.c.l.b16 %v6354
        %v6387 = vunpack.c.l.b16 %v6355
        %v6388 = vunpack.c.l.b16 %v6356
        %v6389 = vunpack.c.l.b16 %v6357
        %v6390 = vunpack.c.l.b16 %v6358
        %v6391 = vunpack.c.l.b16 %v6359
        %v6392 = vunpack.c.l.b16 %v6360
        %v6393 = vunpack.c.l.b16 %v6361
        %v6394 = vunpack.c.l.b16 %v6362
        %v6395 = vunpack.c.l.b16 %v6363
        %v6396 = vunpack.c.l.b16 %v6364
        %v6397 = vunpack.c.l.b16 %v6365
        %v6398 = vunpack.c.l.b16 %v6366
        %v6399 = vunpack.c.l.b16 %v6367
        %v6400 = vunpack.c.l.b16 %v6368
        %v6401 = vpack.c.b16 %v6386, %v6385
        %v6402 = vpack.c.b16 %v6388, %v6387
        %v6403 = vpack.c.b16 %v6390, %v6389
        %v6404 = vpack.c.b16 %v6392, %v6391
        %v6405 = vpack.c.b16 %v6394, %v6393
        %v6406 = vpack.c.b16 %v6396, %v6395
        %v6407 = vpack.c.b16 %v6398, %v6397
        %v6408 = vpack.c.b16 %v6400, %v6399
        %6417 = vmatprep.subr.bf16.mxu0 0
        %6418 = vmatpush1.bf16.msra.mxu0 %v6401
        %6419 = vmatprep.subr.bf16.mxu0 0
        %6420 = vmatpush1.bf16.msra.mxu0 %v6402
        %6421 = vmatprep.subr.bf16.mxu0 0
        %6422 = vmatpush1.bf16.msra.mxu0 %v6403
        %6423 = vmatprep.subr.bf16.mxu0 0
        %6424 = vmatpush1.bf16.msra.mxu0 %v6404
        %6425 = vmatprep.subr.bf16.mxu0 0
        %6426 = vmatpush1.bf16.msra.mxu0 %v6405
        %6427 = vmatprep.subr.bf16.mxu0 0
        %6428 = vmatpush1.bf16.msra.mxu0 %v6406
        %6429 = vmatprep.subr.bf16.mxu0 0
        %6430 = vmatpush1.bf16.msra.mxu0 %v6407
        %6431 = vmatprep.subr.bf16.mxu0 0
        %6432 = vmatpush1.bf16.msra.mxu0 %v6408
        %6433 = vmatprep.subr.bf16.mxu0 0
        %6434 = vmatpush1.bf16.msra.mxu0 0
        %6435 = vmatprep.subr.bf16.mxu0 0
        %6436 = vmatpush1.bf16.msra.mxu0 0
        %6437 = vmatprep.subr.bf16.mxu0 0
        %6438 = vmatpush1.bf16.msra.mxu0 0
        %6439 = vmatprep.subr.bf16.mxu0 0
        %6440 = vmatpush1.bf16.msra.mxu0 0
        %6441 = vmatprep.subr.bf16.mxu0 0
        %6442 = vmatpush1.bf16.msra.mxu0 0
        %6443 = vmatprep.subr.bf16.mxu0 0
        %6444 = vmatpush1.bf16.msra.mxu0 0
        %6445 = vmatprep.subr.bf16.mxu0 0
        %6446 = vmatpush1.bf16.msra.mxu0 0
        %6447 = vmatprep.subr.bf16.mxu0 0
        %6448 = vmatpush1.bf16.msra.mxu0 0
        %6449 = vmatprep.mubr.bf16.mxu0 0
        %6450 = vmatmul.mubr.bf16.gmra.mrb[0].mxu0 %v4136
        %v6451 = vpop.f32.mrb[0].mxu0
        %v6452 = vadd.f32 0.0, %v6451
        %v6453 = vpop.f32.mrb[0].mxu0
        %v6454 = vpop.f32.mrb[0].mxu0
        %v6455 = vpop.f32.mrb[0].mxu0
        %6456 = vdwg.mxu0
        %6457 = vmatprep.subr.mxu0 0.0
        %6458 = vmatpush1.msra.mxu0 %v6347
        %6459 = vmatprep.subr.mxu0 0.0
        %6460 = vmatpush1.msra.mxu0 0.0
        %6461 = vmatprep.subr.mxu0 0.0
        %6462 = vmatpush1.msra.mxu0 0.0
        %6463 = vmatprep.subr.mxu0 0.0
        %6464 = vmatpush1.msra.mxu0 0.0
        %6465 = vmatprep.subr.mxu0 0.0
        %6466 = vmatpush1.msra.mxu0 0.0
        %6467 = vmatprep.subr.mxu0 0.0
        %6468 = vmatpush1.msra.mxu0 0.0
        %6469 = vmatprep.subr.mxu0 0.0
        %6470 = vmatpush1.msra.mxu0 0.0
        %6471 = vmatprep.subr.mxu0 0.0
        %6472 = vmatpush1.msra.mxu0 0.0
        %6473 = vmatprep.subr.mxu0 0.0
        %6474 = vmatpush1.msra.mxu0 0.0
        %6475 = vmatprep.subr.mxu0 0.0
        %6476 = vmatpush1.msra.mxu0 0.0
        %6477 = vmatprep.subr.mxu0 0.0
        %6478 = vmatpush1.msra.mxu0 0.0
        %6479 = vmatprep.subr.mxu0 0.0
        %6480 = vmatpush1.msra.mxu0 0.0
        %6481 = vmatprep.subr.mxu0 0.0
        %6482 = vmatpush1.msra.mxu0 0.0
        %6483 = vmatprep.subr.mxu0 0.0
        %6484 = vmatpush1.msra.mxu0 0.0
        %6485 = vmatprep.subr.mxu0 0.0
        %6486 = vmatpush1.msra.mxu0 0.0
        %6487 = vmatprep.subr.mxu0 0.0
        %6488 = vmatpush1.msra.mxu0 0.0
        %6489 = vmatprep.subr.mxu0 0.0
        %6490 = vmatpush1.msra.mxu0 0.0
        %6491 = vmatprep.subr.mxu0 0.0
        %6492 = vmatpush1.msra.mxu0 0.0
        %6493 = vmatprep.subr.mxu0 0.0
        %6494 = vmatpush1.msra.mxu0 0.0
        %6495 = vmatprep.subr.mxu0 0.0
        %6496 = vmatpush1.msra.mxu0 0.0
        %6497 = vmatprep.subr.mxu0 0.0
        %6498 = vmatpush1.msra.mxu0 0.0
        %6499 = vmatprep.subr.mxu0 0.0
        %6500 = vmatpush1.msra.mxu0 0.0
        %6501 = vmatprep.subr.mxu0 0.0
        %6502 = vmatpush1.msra.mxu0 0.0
        %6503 = vmatprep.subr.mxu0 0.0
        %6504 = vmatpush1.msra.mxu0 0.0
        %6505 = vmatprep.subr.mxu0 0.0
        %6506 = vmatpush1.msra.mxu0 0.0
        %6507 = vmatprep.subr.mxu0 0.0
        %6508 = vmatpush1.msra.mxu0 0.0
        %6509 = vmatprep.subr.mxu0 0.0
        %6510 = vmatpush1.msra.mxu0 0.0
        %6511 = vmatprep.subr.mxu0 0.0
        %6512 = vmatpush1.msra.mxu0 0.0
        %6513 = vmatprep.subr.mxu0 0.0
        %6514 = vmatpush1.msra.mxu0 0.0
        %6515 = vmatprep.subr.mxu0 0.0
        %6516 = vmatpush1.msra.mxu0 0.0
        %6517 = vmatprep.subr.mxu0 0.0
        %6518 = vmatpush1.msra.mxu0 0.0
        %6519 = vmatprep.subr.mxu0 0.0
        %6520 = vmatpush1.msra.mxu0 0.0
        %6521 = vmatprep.mubr.f32.mxu0 0.0
        %6522 = vmatmul.mubr.f32.gmra.mrb[0].mxu0 %v5979
        %v6523 = vpop.f32.mrb[0].mxu0
        %v6524 = vadd.f32 %v6452, %v6523
        %v6525 = vpop.f32.mrb[0].mxu0
        %6526 = vdwg.mxu0
        %s6527 = scalar_lea.vmem [#allocation39], 128
        %v6528 = vld [vmem:[%s6527] sm:$0xf]
        %v6529 = vld [vmem:[%s6527 + $0x4] sm:$0xf]
        %v6530 = vld [vmem:[%s6527 + $0x8] sm:$0xf]
        %v6531 = vld [vmem:[%s6527 + $0xc] sm:$0xf]
        %v6532 = vld [vmem:[%s6527 + $0x10] sm:$0xf]
        %v6533 = vld [vmem:[%s6527 + $0x14] sm:$0xf]
        %v6534 = vld [vmem:[%s6527 + $0x18] sm:$0xf]
        %v6535 = vld [vmem:[%s6527 + $0x1c] sm:$0xf]
        %v6536 = vld [vmem:[%s6527 + $0x20] sm:$0xf]
        %v6537 = vld [vmem:[%s6527 + $0x24] sm:$0xf]
        %v6538 = vld [vmem:[%s6527 + $0x28] sm:$0xf]
        %v6539 = vld [vmem:[%s6527 + $0x2c] sm:$0xf]
        %v6540 = vld [vmem:[%s6527 + $0x30] sm:$0xf]
        %v6541 = vld [vmem:[%s6527 + $0x34] sm:$0xf]
        %v6542 = vld [vmem:[%s6527 + $0x38] sm:$0xf]
        %v6543 = vld [vmem:[%s6527 + $0x3c] sm:$0xf]
        %v6560 = vunpack.c.l.b16 %v6528
        %v6561 = vunpack.c.l.b16 %v6529
        %v6562 = vunpack.c.l.b16 %v6530
        %v6563 = vunpack.c.l.b16 %v6531
        %v6564 = vunpack.c.l.b16 %v6532
        %v6565 = vunpack.c.l.b16 %v6533
        %v6566 = vunpack.c.l.b16 %v6534
        %v6567 = vunpack.c.l.b16 %v6535
        %v6568 = vunpack.c.l.b16 %v6536
        %v6569 = vunpack.c.l.b16 %v6537
        %v6570 = vunpack.c.l.b16 %v6538
        %v6571 = vunpack.c.l.b16 %v6539
        %v6572 = vunpack.c.l.b16 %v6540
        %v6573 = vunpack.c.l.b16 %v6541
        %v6574 = vunpack.c.l.b16 %v6542
        %v6575 = vunpack.c.l.b16 %v6543
        %v6576 = vpack.c.b16 %v6561, %v6560
        %v6577 = vpack.c.b16 %v6563, %v6562
        %v6578 = vpack.c.b16 %v6565, %v6564
        %v6579 = vpack.c.b16 %v6567, %v6566
        %v6580 = vpack.c.b16 %v6569, %v6568
        %v6581 = vpack.c.b16 %v6571, %v6570
        %v6582 = vpack.c.b16 %v6573, %v6572
        %v6583 = vpack.c.b16 %v6575, %v6574
        %6592 = vmatprep.subr.bf16.mxu0 0
        %6593 = vmatpush1.bf16.msra.mxu0 %v6576
        %6594 = vmatprep.subr.bf16.mxu0 0
        %6595 = vmatpush1.bf16.msra.mxu0 %v6577
        %6596 = vmatprep.subr.bf16.mxu0 0
        %6597 = vmatpush1.bf16.msra.mxu0 %v6578
        %6598 = vmatprep.subr.bf16.mxu0 0
        %6599 = vmatpush1.bf16.msra.mxu0 %v6579
        %6600 = vmatprep.subr.bf16.mxu0 0
        %6601 = vmatpush1.bf16.msra.mxu0 %v6580
        %6602 = vmatprep.subr.bf16.mxu0 0
        %6603 = vmatpush1.bf16.msra.mxu0 %v6581
        %6604 = vmatprep.subr.bf16.mxu0 0
        %6605 = vmatpush1.bf16.msra.mxu0 %v6582
        %6606 = vmatprep.subr.bf16.mxu0 0
        %6607 = vmatpush1.bf16.msra.mxu0 %v6583
        %6608 = vmatprep.subr.bf16.mxu0 0
        %6609 = vmatpush1.bf16.msra.mxu0 0
        %6610 = vmatprep.subr.bf16.mxu0 0
        %6611 = vmatpush1.bf16.msra.mxu0 0
        %6612 = vmatprep.subr.bf16.mxu0 0
        %6613 = vmatpush1.bf16.msra.mxu0 0
        %6614 = vmatprep.subr.bf16.mxu0 0
        %6615 = vmatpush1.bf16.msra.mxu0 0
        %6616 = vmatprep.subr.bf16.mxu0 0
        %6617 = vmatpush1.bf16.msra.mxu0 0
        %6618 = vmatprep.subr.bf16.mxu0 0
        %6619 = vmatpush1.bf16.msra.mxu0 0
        %6620 = vmatprep.subr.bf16.mxu0 0
        %6621 = vmatpush1.bf16.msra.mxu0 0
        %6622 = vmatprep.subr.bf16.mxu0 0
        %6623 = vmatpush1.bf16.msra.mxu0 0
        %6624 = vmatprep.mubr.bf16.mxu0 0
        %6625 = vmatmul.mubr.bf16.gmra.mrb[0].mxu0 %v4136
        %v6626 = vpop.f32.mrb[0].mxu0
        %v6627 = vadd.f32 0.0, %v6626
        %v6628 = vpop.f32.mrb[0].mxu0
        %v6629 = vpop.f32.mrb[0].mxu0
        %v6630 = vpop.f32.mrb[0].mxu0
        %6631 = vdwg.mxu0
        %6632 = vmatprep.subr.mxu0 0.0
        %6633 = vmatpush1.msra.mxu0 %v6627
        %6634 = vmatprep.subr.mxu0 0.0
        %6635 = vmatpush1.msra.mxu0 0.0
        %6636 = vmatprep.subr.mxu0 0.0
        %6637 = vmatpush1.msra.mxu0 0.0
        %6638 = vmatprep.subr.mxu0 0.0
        %6639 = vmatpush1.msra.mxu0 0.0
        %6640 = vmatprep.subr.mxu0 0.0
        %6641 = vmatpush1.msra.mxu0 0.0
        %6642 = vmatprep.subr.mxu0 0.0
        %6643 = vmatpush1.msra.mxu0 0.0
        %6644 = vmatprep.subr.mxu0 0.0
        %6645 = vmatpush1.msra.mxu0 0.0
        %6646 = vmatprep.subr.mxu0 0.0
        %6647 = vmatpush1.msra.mxu0 0.0
        %6648 = vmatprep.subr.mxu0 0.0
        %6649 = vmatpush1.msra.mxu0 0.0
        %6650 = vmatprep.subr.mxu0 0.0
        %6651 = vmatpush1.msra.mxu0 0.0
        %6652 = vmatprep.subr.mxu0 0.0
        %6653 = vmatpush1.msra.mxu0 0.0
        %6654 = vmatprep.subr.mxu0 0.0
        %6655 = vmatpush1.msra.mxu0 0.0
        %6656 = vmatprep.subr.mxu0 0.0
        %6657 = vmatpush1.msra.mxu0 0.0
        %6658 = vmatprep.subr.mxu0 0.0
        %6659 = vmatpush1.msra.mxu0 0.0
        %6660 = vmatprep.subr.mxu0 0.0
        %6661 = vmatpush1.msra.mxu0 0.0
        %6662 = vmatprep.subr.mxu0 0.0
        %6663 = vmatpush1.msra.mxu0 0.0
        %6664 = vmatprep.subr.mxu0 0.0
        %6665 = vmatpush1.msra.mxu0 0.0
        %6666 = vmatprep.subr.mxu0 0.0
        %6667 = vmatpush1.msra.mxu0 0.0
        %6668 = vmatprep.subr.mxu0 0.0
        %6669 = vmatpush1.msra.mxu0 0.0
        %6670 = vmatprep.subr.mxu0 0.0
        %6671 = vmatpush1.msra.mxu0 0.0
        %6672 = vmatprep.subr.mxu0 0.0
        %6673 = vmatpush1.msra.mxu0 0.0
        %6674 = vmatprep.subr.mxu0 0.0
        %6675 = vmatpush1.msra.mxu0 0.0
        %6676 = vmatprep.subr.mxu0 0.0
        %6677 = vmatpush1.msra.mxu0 0.0
        %6678 = vmatprep.subr.mxu0 0.0
        %6679 = vmatpush1.msra.mxu0 0.0
        %6680 = vmatprep.subr.mxu0 0.0
        %6681 = vmatpush1.msra.mxu0 0.0
        %6682 = vmatprep.subr.mxu0 0.0
        %6683 = vmatpush1.msra.mxu0 0.0
        %6684 = vmatprep.subr.mxu0 0.0
        %6685 = vmatpush1.msra.mxu0 0.0
        %6686 = vmatprep.subr.mxu0 0.0
        %6687 = vmatpush1.msra.mxu0 0.0
        %6688 = vmatprep.subr.mxu0 0.0
        %6689 = vmatpush1.msra.mxu0 0.0
        %6690 = vmatprep.subr.mxu0 0.0
        %6691 = vmatpush1.msra.mxu0 0.0
        %6692 = vmatprep.subr.mxu0 0.0
        %6693 = vmatpush1.msra.mxu0 0.0
        %6694 = vmatprep.subr.mxu0 0.0
        %6695 = vmatpush1.msra.mxu0 0.0
        %6696 = vmatprep.mubr.f32.mxu0 0.0
        %6697 = vmatmul.mubr.f32.gmra.mrb[0].mxu0 %v6159
        %v6698 = vpop.f32.mrb[0].mxu0
        %v6699 = vadd.f32 0.0, %v6698
        %v6700 = vpop.f32.mrb[0].mxu0
        %6701 = vdwg.mxu0
        %v6702 = vadd.f32 %v6524, %v6699
        %v6703 = vadd.f32 %v6231, %v6702
        %v6704 = vld [vmem:[#allocation43] sm:$0xf]
        %v6705 = vld [vmem:[#allocation43 + $0x4] sm:$0xf]
        %v6706 = vld [vmem:[#allocation43 + $0x8] sm:$0xf]
        %v6707 = vld [vmem:[#allocation43 + $0xc] sm:$0xf]
        %v6708 = vld [vmem:[#allocation43 + $0x10] sm:$0xf]
        %v6709 = vld [vmem:[#allocation43 + $0x14] sm:$0xf]
        %v6710 = vld [vmem:[#allocation43 + $0x18] sm:$0xf]
        %v6711 = vld [vmem:[#allocation43 + $0x1c] sm:$0xf]
        %v6712 = vld [vmem:[#allocation43 + $0x20] sm:$0xf]
        %v6713 = vld [vmem:[#allocation43 + $0x24] sm:$0xf]
        %v6714 = vld [vmem:[#allocation43 + $0x28] sm:$0xf]
        %v6715 = vld [vmem:[#allocation43 + $0x2c] sm:$0xf]
        %v6716 = vld [vmem:[#allocation43 + $0x30] sm:$0xf]
        %v6717 = vld [vmem:[#allocation43 + $0x34] sm:$0xf]
        %v6718 = vld [vmem:[#allocation43 + $0x38] sm:$0xf]
        %v6719 = vld [vmem:[#allocation43 + $0x3c] sm:$0xf]
        %v6736 = vunpack.c.l.b16 %v6704
        %v6737 = vunpack.c.l.b16 %v6705
        %v6738 = vunpack.c.l.b16 %v6706
        %v6739 = vunpack.c.l.b16 %v6707
        %v6740 = vunpack.c.l.b16 %v6708
        %v6741 = vunpack.c.l.b16 %v6709
        %v6742 = vunpack.c.l.b16 %v6710
        %v6743 = vunpack.c.l.b16 %v6711
        %v6744 = vunpack.c.l.b16 %v6712
        %v6745 = vunpack.c.l.b16 %v6713
        %v6746 = vunpack.c.l.b16 %v6714
        %v6747 = vunpack.c.l.b16 %v6715
        %v6748 = vunpack.c.l.b16 %v6716
        %v6749 = vunpack.c.l.b16 %v6717
        %v6750 = vunpack.c.l.b16 %v6718
        %v6751 = vunpack.c.l.b16 %v6719
        %v6752 = vpack.c.b16 %v6737, %v6736
        %v6753 = vpack.c.b16 %v6739, %v6738
        %v6754 = vpack.c.b16 %v6741, %v6740
        %v6755 = vpack.c.b16 %v6743, %v6742
        %v6756 = vpack.c.b16 %v6745, %v6744
        %v6757 = vpack.c.b16 %v6747, %v6746
        %v6758 = vpack.c.b16 %v6749, %v6748
        %v6759 = vpack.c.b16 %v6751, %v6750
        %6768 = vmatprep.subr.bf16.mxu0 0
        %6769 = vmatpush1.bf16.msra.mxu0 %v6752
        %6770 = vmatprep.subr.bf16.mxu0 0
        %6771 = vmatpush1.bf16.msra.mxu0 %v6753
        %6772 = vmatprep.subr.bf16.mxu0 0
        %6773 = vmatpush1.bf16.msra.mxu0 %v6754
        %6774 = vmatprep.subr.bf16.mxu0 0
        %6775 = vmatpush1.bf16.msra.mxu0 %v6755
        %6776 = vmatprep.subr.bf16.mxu0 0
        %6777 = vmatpush1.bf16.msra.mxu0 %v6756
        %6778 = vmatprep.subr.bf16.mxu0 0
        %6779 = vmatpush1.bf16.msra.mxu0 %v6757
        %6780 = vmatprep.subr.bf16.mxu0 0
        %6781 = vmatpush1.bf16.msra.mxu0 %v6758
        %6782 = vmatprep.subr.bf16.mxu0 0
        %6783 = vmatpush1.bf16.msra.mxu0 %v6759
        %6784 = vmatprep.subr.bf16.mxu0 0
        %6785 = vmatpush1.bf16.msra.mxu0 0
        %6786 = vmatprep.subr.bf16.mxu0 0
        %6787 = vmatpush1.bf16.msra.mxu0 0
        %6788 = vmatprep.subr.bf16.mxu0 0
        %6789 = vmatpush1.bf16.msra.mxu0 0
        %6790 = vmatprep.subr.bf16.mxu0 0
        %6791 = vmatpush1.bf16.msra.mxu0 0
        %6792 = vmatprep.subr.bf16.mxu0 0
        %6793 = vmatpush1.bf16.msra.mxu0 0
        %6794 = vmatprep.subr.bf16.mxu0 0
        %6795 = vmatpush1.bf16.msra.mxu0 0
        %6796 = vmatprep.subr.bf16.mxu0 0
        %6797 = vmatpush1.bf16.msra.mxu0 0
        %6798 = vmatprep.subr.bf16.mxu0 0
        %6799 = vmatpush1.bf16.msra.mxu0 0
        %6800 = vmatprep.mubr.bf16.mxu0 0
        %6801 = vmatmul.mubr.bf16.gmra.mrb[0].mxu0 %v4136
        %v6802 = vpop.f32.mrb[0].mxu0
        %v6803 = vadd.f32 0.0, %v6802
        %v6804 = vpop.f32.mrb[0].mxu0
        %v6805 = vpop.f32.mrb[0].mxu0
        %v6806 = vpop.f32.mrb[0].mxu0
        %6807 = vdwg.mxu0
        %v6824 = vunpack.c.l.b16 %v6232
        %v6825 = vunpack.c.l.b16 %v6233
        %v6826 = vunpack.c.l.b16 %v6234
        %v6827 = vunpack.c.l.b16 %v6235
        %v6828 = vunpack.c.l.b16 %v6236
        %v6829 = vunpack.c.l.b16 %v6237
        %v6830 = vunpack.c.l.b16 %v6238
        %v6831 = vunpack.c.l.b16 %v6239
        %v6832 = vunpack.c.l.b16 %v6240
        %v6833 = vunpack.c.l.b16 %v6241
        %v6834 = vunpack.c.l.b16 %v6242
        %v6835 = vunpack.c.l.b16 %v6243
        %v6836 = vunpack.c.l.b16 %v6244
        %v6837 = vunpack.c.l.b16 %v6245
        %v6838 = vunpack.c.l.b16 %v6246
        %v6839 = vunpack.c.l.b16 %v6247
        %v6840 = vpack.c.b16 %v6825, %v6824
        %v6841 = vpack.c.b16 %v6827, %v6826
        %v6842 = vpack.c.b16 %v6829, %v6828
        %v6843 = vpack.c.b16 %v6831, %v6830
        %v6844 = vpack.c.b16 %v6833, %v6832
        %v6845 = vpack.c.b16 %v6835, %v6834
        %v6846 = vpack.c.b16 %v6837, %v6836
        %v6847 = vpack.c.b16 %v6839, %v6838
        %6856 = vmatprep.subr.bf16.mxu0 0
        %6857 = vmatpush1.bf16.msra.mxu0 %v6840
        %6858 = vmatprep.subr.bf16.mxu0 0
        %6859 = vmatpush1.bf16.msra.mxu0 %v6841
        %6860 = vmatprep.subr.bf16.mxu0 0
        %6861 = vmatpush1.bf16.msra.mxu0 %v6842
        %6862 = vmatprep.subr.bf16.mxu0 0
        %6863 = vmatpush1.bf16.msra.mxu0 %v6843
        %6864 = vmatprep.subr.bf16.mxu0 0
        %6865 = vmatpush1.bf16.msra.mxu0 %v6844
        %6866 = vmatprep.subr.bf16.mxu0 0
        %6867 = vmatpush1.bf16.msra.mxu0 %v6845
        %6868 = vmatprep.subr.bf16.mxu0 0
        %6869 = vmatpush1.bf16.msra.mxu0 %v6846
        %6870 = vmatprep.subr.bf16.mxu0 0
        %6871 = vmatpush1.bf16.msra.mxu0 %v6847
        %6872 = vmatprep.subr.bf16.mxu0 0
        %6873 = vmatpush1.bf16.msra.mxu0 0
        %6874 = vmatprep.subr.bf16.mxu0 0
        %6875 = vmatpush1.bf16.msra.mxu0 0
        %6876 = vmatprep.subr.bf16.mxu0 0
        %6877 = vmatpush1.bf16.msra.mxu0 0
        %6878 = vmatprep.subr.bf16.mxu0 0
        %6879 = vmatpush1.bf16.msra.mxu0 0
        %6880 = vmatprep.subr.bf16.mxu0 0
        %6881 = vmatpush1.bf16.msra.mxu0 0
        %6882 = vmatprep.subr.bf16.mxu0 0
        %6883 = vmatpush1.bf16.msra.mxu0 0
        %6884 = vmatprep.subr.bf16.mxu0 0
        %6885 = vmatpush1.bf16.msra.mxu0 0
        %6886 = vmatprep.subr.bf16.mxu0 0
        %6887 = vmatpush1.bf16.msra.mxu0 0
        %6888 = vmatprep.mubr.bf16.mxu0 0
        %6889 = vmatmul.mubr.bf16.gmra.mrb[0].mxu0 %v5767
        %v6890 = vpop.f32.mrb[0].mxu0
        %v6891 = vadd.f32 %v6803, %v6890
        %v6892 = vpop.f32.mrb[0].mxu0
        %v6893 = vpop.f32.mrb[0].mxu0
        %v6894 = vpop.f32.mrb[0].mxu0
        %6895 = vdwg.mxu0
        %v6896 = vld [vmem:[#allocation40] sm:$0x1]
        %v6898 = vlaneseq
        %v6899 = vshrl.u32 %v6898, 7
        %v6900 = vsub.s32 0, %v6899
        %v6901 = vrot.slane %v6896, %v6900
        %v6903 = vadd.f32 %v6703, %v6901
        %v6904 = vmax.f32 %v6903, 0.0
        %v6905 = vpack.c.bf16 %v6904, %v6904
        %v6906 = vld [vmem:[#allocation45] sm:$0xf]
        %v6907 = vld [vmem:[#allocation45 + $0x4] sm:$0xf]
        %v6908 = vld [vmem:[#allocation45 + $0x8] sm:$0xf]
        %v6909 = vld [vmem:[#allocation45 + $0xc] sm:$0xf]
        %v6910 = vld [vmem:[#allocation45 + $0x10] sm:$0xf]
        %v6911 = vld [vmem:[#allocation45 + $0x14] sm:$0xf]
        %v6912 = vld [vmem:[#allocation45 + $0x18] sm:$0xf]
        %v6913 = vld [vmem:[#allocation45 + $0x1c] sm:$0xf]
        %v6914 = vld [vmem:[#allocation45 + $0x20] sm:$0xf]
        %v6915 = vld [vmem:[#allocation45 + $0x24] sm:$0xf]
        %v6916 = vld [vmem:[#allocation45 + $0x28] sm:$0xf]
        %v6917 = vld [vmem:[#allocation45 + $0x2c] sm:$0xf]
        %v6918 = vld [vmem:[#allocation45 + $0x30] sm:$0xf]
        %v6919 = vld [vmem:[#allocation45 + $0x34] sm:$0xf]
        %v6920 = vld [vmem:[#allocation45 + $0x38] sm:$0xf]
        %v6921 = vld [vmem:[#allocation45 + $0x3c] sm:$0xf]
        %v6938 = vunpack.c.l.b16 %v6906
        %v6939 = vunpack.c.l.b16 %v6907
        %v6940 = vunpack.c.l.b16 %v6908
        %v6941 = vunpack.c.l.b16 %v6909
        %v6942 = vunpack.c.l.b16 %v6910
        %v6943 = vunpack.c.l.b16 %v6911
        %v6944 = vunpack.c.l.b16 %v6912
        %v6945 = vunpack.c.l.b16 %v6913
        %v6946 = vunpack.c.l.b16 %v6914
        %v6947 = vunpack.c.l.b16 %v6915
        %v6948 = vunpack.c.l.b16 %v6916
        %v6949 = vunpack.c.l.b16 %v6917
        %v6950 = vunpack.c.l.b16 %v6918
        %v6951 = vunpack.c.l.b16 %v6919
        %v6952 = vunpack.c.l.b16 %v6920
        %v6953 = vunpack.c.l.b16 %v6921
        %v6954 = vpack.c.b16 %v6939, %v6938
        %v6955 = vpack.c.b16 %v6941, %v6940
        %v6956 = vpack.c.b16 %v6943, %v6942
        %v6957 = vpack.c.b16 %v6945, %v6944
        %v6958 = vpack.c.b16 %v6947, %v6946
        %v6959 = vpack.c.b16 %v6949, %v6948
        %v6960 = vpack.c.b16 %v6951, %v6950
        %v6961 = vpack.c.b16 %v6953, %v6952
        %6970 = vmatprep.subr.bf16.mxu0 0
        %6971 = vmatpush1.bf16.msra.mxu0 %v6954
        %6972 = vmatprep.subr.bf16.mxu0 0
        %6973 = vmatpush1.bf16.msra.mxu0 %v6955
        %6974 = vmatprep.subr.bf16.mxu0 0
        %6975 = vmatpush1.bf16.msra.mxu0 %v6956
        %6976 = vmatprep.subr.bf16.mxu0 0
        %6977 = vmatpush1.bf16.msra.mxu0 %v6957
        %6978 = vmatprep.subr.bf16.mxu0 0
        %6979 = vmatpush1.bf16.msra.mxu0 %v6958
        %6980 = vmatprep.subr.bf16.mxu0 0
        %6981 = vmatpush1.bf16.msra.mxu0 %v6959
        %6982 = vmatprep.subr.bf16.mxu0 0
        %6983 = vmatpush1.bf16.msra.mxu0 %v6960
        %6984 = vmatprep.subr.bf16.mxu0 0
        %6985 = vmatpush1.bf16.msra.mxu0 %v6961
        %6986 = vmatprep.subr.bf16.mxu0 0
        %6987 = vmatpush1.bf16.msra.mxu0 0
        %6988 = vmatprep.subr.bf16.mxu0 0
        %6989 = vmatpush1.bf16.msra.mxu0 0
        %6990 = vmatprep.subr.bf16.mxu0 0
        %6991 = vmatpush1.bf16.msra.mxu0 0
        %6992 = vmatprep.subr.bf16.mxu0 0
        %6993 = vmatpush1.bf16.msra.mxu0 0
        %6994 = vmatprep.subr.bf16.mxu0 0
        %6995 = vmatpush1.bf16.msra.mxu0 0
        %6996 = vmatprep.subr.bf16.mxu0 0
        %6997 = vmatpush1.bf16.msra.mxu0 0
        %6998 = vmatprep.subr.bf16.mxu0 0
        %6999 = vmatpush1.bf16.msra.mxu0 0
        %7000 = vmatprep.subr.bf16.mxu0 0
        %7001 = vmatpush1.bf16.msra.mxu0 0
        %7002 = vmatprep.mubr.bf16.mxu0 0
        %7003 = vmatmul.mubr.bf16.gmra.mrb[0].mxu0 %v6905
        %v7004 = vpop.f32.mrb[0].mxu0
        %v7005 = vadd.f32 0.0, %v7004
        %v7006 = vpop.f32.mrb[0].mxu0
        %v7007 = vpop.f32.mrb[0].mxu0
        %v7008 = vpop.f32.mrb[0].mxu0
        %7009 = vdwg.mxu0
        %s7010 = scalar_lea.vmem [#allocation45], 64
        %v7011 = vld [vmem:[%s7010] sm:$0xf]
        %v7012 = vld [vmem:[%s7010 + $0x4] sm:$0xf]
        %v7013 = vld [vmem:[%s7010 + $0x8] sm:$0xf]
        %v7014 = vld [vmem:[%s7010 + $0xc] sm:$0xf]
        %v7015 = vld [vmem:[%s7010 + $0x10] sm:$0xf]
        %v7016 = vld [vmem:[%s7010 + $0x14] sm:$0xf]
        %v7017 = vld [vmem:[%s7010 + $0x18] sm:$0xf]
        %v7018 = vld [vmem:[%s7010 + $0x1c] sm:$0xf]
        %v7019 = vld [vmem:[%s7010 + $0x20] sm:$0xf]
        %v7020 = vld [vmem:[%s7010 + $0x24] sm:$0xf]
        %v7021 = vld [vmem:[%s7010 + $0x28] sm:$0xf]
        %v7022 = vld [vmem:[%s7010 + $0x2c] sm:$0xf]
        %v7023 = vld [vmem:[%s7010 + $0x30] sm:$0xf]
        %v7024 = vld [vmem:[%s7010 + $0x34] sm:$0xf]
        %v7025 = vld [vmem:[%s7010 + $0x38] sm:$0xf]
        %v7026 = vld [vmem:[%s7010 + $0x3c] sm:$0xf]
        %v7043 = vunpack.c.l.b16 %v7011
        %v7044 = vunpack.c.l.b16 %v7012
        %v7045 = vunpack.c.l.b16 %v7013
        %v7046 = vunpack.c.l.b16 %v7014
        %v7047 = vunpack.c.l.b16 %v7015
        %v7048 = vunpack.c.l.b16 %v7016
        %v7049 = vunpack.c.l.b16 %v7017
        %v7050 = vunpack.c.l.b16 %v7018
        %v7051 = vunpack.c.l.b16 %v7019
        %v7052 = vunpack.c.l.b16 %v7020
        %v7053 = vunpack.c.l.b16 %v7021
        %v7054 = vunpack.c.l.b16 %v7022
        %v7055 = vunpack.c.l.b16 %v7023
        %v7056 = vunpack.c.l.b16 %v7024
        %v7057 = vunpack.c.l.b16 %v7025
        %v7058 = vunpack.c.l.b16 %v7026
        %v7059 = vpack.c.b16 %v7044, %v7043
        %v7060 = vpack.c.b16 %v7046, %v7045
        %v7061 = vpack.c.b16 %v7048, %v7047
        %v7062 = vpack.c.b16 %v7050, %v7049
        %v7063 = vpack.c.b16 %v7052, %v7051
        %v7064 = vpack.c.b16 %v7054, %v7053
        %v7065 = vpack.c.b16 %v7056, %v7055
        %v7066 = vpack.c.b16 %v7058, %v7057
        %7075 = vmatprep.subr.bf16.mxu0 0
        %7076 = vmatpush1.bf16.msra.mxu0 %v7059
        %7077 = vmatprep.subr.bf16.mxu0 0
        %7078 = vmatpush1.bf16.msra.mxu0 %v7060
        %7079 = vmatprep.subr.bf16.mxu0 0
        %7080 = vmatpush1.bf16.msra.mxu0 %v7061
        %7081 = vmatprep.subr.bf16.mxu0 0
        %7082 = vmatpush1.bf16.msra.mxu0 %v7062
        %7083 = vmatprep.subr.bf16.mxu0 0
        %7084 = vmatpush1.bf16.msra.mxu0 %v7063
        %7085 = vmatprep.subr.bf16.mxu0 0
        %7086 = vmatpush1.bf16.msra.mxu0 %v7064
        %7087 = vmatprep.subr.bf16.mxu0 0
        %7088 = vmatpush1.bf16.msra.mxu0 %v7065
        %7089 = vmatprep.subr.bf16.mxu0 0
        %7090 = vmatpush1.bf16.msra.mxu0 %v7066
        %7091 = vmatprep.subr.bf16.mxu0 0
        %7092 = vmatpush1.bf16.msra.mxu0 0
        %7093 = vmatprep.subr.bf16.mxu0 0
        %7094 = vmatpush1.bf16.msra.mxu0 0
        %7095 = vmatprep.subr.bf16.mxu0 0
        %7096 = vmatpush1.bf16.msra.mxu0 0
        %7097 = vmatprep.subr.bf16.mxu0 0
        %7098 = vmatpush1.bf16.msra.mxu0 0
        %7099 = vmatprep.subr.bf16.mxu0 0
        %7100 = vmatpush1.bf16.msra.mxu0 0
        %7101 = vmatprep.subr.bf16.mxu0 0
        %7102 = vmatpush1.bf16.msra.mxu0 0
        %7103 = vmatprep.subr.bf16.mxu0 0
        %7104 = vmatpush1.bf16.msra.mxu0 0
        %7105 = vmatprep.subr.bf16.mxu0 0
        %7106 = vmatpush1.bf16.msra.mxu0 0
        %7107 = vmatprep.mubr.bf16.mxu0 0
        %7108 = vmatmul.mubr.bf16.gmra.mrb[0].mxu0 %v6905
        %v7109 = vpop.f32.mrb[0].mxu0
        %v7110 = vadd.f32 0.0, %v7109
        %v7111 = vpop.f32.mrb[0].mxu0
        %v7112 = vpop.f32.mrb[0].mxu0
        %v7113 = vpop.f32.mrb[0].mxu0
        %7114 = vdwg.mxu0
        %7115 = vmatprep.subr.mxu0 0.0
        %7116 = vmatpush1.msra.mxu0 %v7005
        %7117 = vmatprep.subr.mxu0 0.0
        %7118 = vmatpush1.msra.mxu0 0.0
        %7119 = vmatprep.subr.mxu0 0.0
        %7120 = vmatpush1.msra.mxu0 0.0
        %7121 = vmatprep.subr.mxu0 0.0
        %7122 = vmatpush1.msra.mxu0 0.0
        %7123 = vmatprep.subr.mxu0 0.0
        %7124 = vmatpush1.msra.mxu0 0.0
        %7125 = vmatprep.subr.mxu0 0.0
        %7126 = vmatpush1.msra.mxu0 0.0
        %7127 = vmatprep.subr.mxu0 0.0
        %7128 = vmatpush1.msra.mxu0 0.0
        %7129 = vmatprep.subr.mxu0 0.0
        %7130 = vmatpush1.msra.mxu0 0.0
        %7131 = vmatprep.subr.mxu0 0.0
        %7132 = vmatpush1.msra.mxu0 0.0
        %7133 = vmatprep.subr.mxu0 0.0
        %7134 = vmatpush1.msra.mxu0 0.0
        %7135 = vmatprep.subr.mxu0 0.0
        %7136 = vmatpush1.msra.mxu0 0.0
        %7137 = vmatprep.subr.mxu0 0.0
        %7138 = vmatpush1.msra.mxu0 0.0
        %7139 = vmatprep.subr.mxu0 0.0
        %7140 = vmatpush1.msra.mxu0 0.0
        %7141 = vmatprep.subr.mxu0 0.0
        %7142 = vmatpush1.msra.mxu0 0.0
        %7143 = vmatprep.subr.mxu0 0.0
        %7144 = vmatpush1.msra.mxu0 0.0
        %7145 = vmatprep.subr.mxu0 0.0
        %7146 = vmatpush1.msra.mxu0 0.0
        %7147 = vmatprep.subr.mxu0 0.0
        %7148 = vmatpush1.msra.mxu0 0.0
        %7149 = vmatprep.subr.mxu0 0.0
        %7150 = vmatpush1.msra.mxu0 0.0
        %7151 = vmatprep.subr.mxu0 0.0
        %7152 = vmatpush1.msra.mxu0 0.0
        %7153 = vmatprep.subr.mxu0 0.0
        %7154 = vmatpush1.msra.mxu0 0.0
        %7155 = vmatprep.subr.mxu0 0.0
        %7156 = vmatpush1.msra.mxu0 0.0
        %7157 = vmatprep.subr.mxu0 0.0
        %7158 = vmatpush1.msra.mxu0 0.0
        %7159 = vmatprep.subr.mxu0 0.0
        %7160 = vmatpush1.msra.mxu0 0.0
        %7161 = vmatprep.subr.mxu0 0.0
        %7162 = vmatpush1.msra.mxu0 0.0
        %7163 = vmatprep.subr.mxu0 0.0
        %7164 = vmatpush1.msra.mxu0 0.0
        %7165 = vmatprep.subr.mxu0 0.0
        %7166 = vmatpush1.msra.mxu0 0.0
        %7167 = vmatprep.subr.mxu0 0.0
        %7168 = vmatpush1.msra.mxu0 0.0
        %7169 = vmatprep.subr.mxu0 0.0
        %7170 = vmatpush1.msra.mxu0 0.0
        %7171 = vmatprep.subr.mxu0 0.0
        %7172 = vmatpush1.msra.mxu0 0.0
        %7173 = vmatprep.subr.mxu0 0.0
        %7174 = vmatpush1.msra.mxu0 0.0
        %7175 = vmatprep.subr.mxu0 0.0
        %7176 = vmatpush1.msra.mxu0 0.0
        %7177 = vmatprep.subr.mxu0 0.0
        %7178 = vmatpush1.msra.mxu0 0.0
        %7179 = vmatprep.mubr.f32.mxu0 0.0
        %7180 = vmatmul.mubr.f32.gmra.mrb[0].mxu0 %v5979
        %v7181 = vpop.f32.mrb[0].mxu0
        %v7182 = vadd.f32 %v7110, %v7181
        %v7183 = vpop.f32.mrb[0].mxu0
        %7184 = vdwg.mxu0
        %s7185 = scalar_lea.vmem [#allocation45], 128
        %v7186 = vld [vmem:[%s7185] sm:$0xf]
        %v7187 = vld [vmem:[%s7185 + $0x4] sm:$0xf]
        %v7188 = vld [vmem:[%s7185 + $0x8] sm:$0xf]
        %v7189 = vld [vmem:[%s7185 + $0xc] sm:$0xf]
        %v7190 = vld [vmem:[%s7185 + $0x10] sm:$0xf]
        %v7191 = vld [vmem:[%s7185 + $0x14] sm:$0xf]
        %v7192 = vld [vmem:[%s7185 + $0x18] sm:$0xf]
        %v7193 = vld [vmem:[%s7185 + $0x1c] sm:$0xf]
        %v7194 = vld [vmem:[%s7185 + $0x20] sm:$0xf]
        %v7195 = vld [vmem:[%s7185 + $0x24] sm:$0xf]
        %v7196 = vld [vmem:[%s7185 + $0x28] sm:$0xf]
        %v7197 = vld [vmem:[%s7185 + $0x2c] sm:$0xf]
        %v7198 = vld [vmem:[%s7185 + $0x30] sm:$0xf]
        %v7199 = vld [vmem:[%s7185 + $0x34] sm:$0xf]
        %v7200 = vld [vmem:[%s7185 + $0x38] sm:$0xf]
        %v7201 = vld [vmem:[%s7185 + $0x3c] sm:$0xf]
        %v7218 = vunpack.c.l.b16 %v7186
        %v7219 = vunpack.c.l.b16 %v7187
        %v7220 = vunpack.c.l.b16 %v7188
        %v7221 = vunpack.c.l.b16 %v7189
        %v7222 = vunpack.c.l.b16 %v7190
        %v7223 = vunpack.c.l.b16 %v7191
        %v7224 = vunpack.c.l.b16 %v7192
        %v7225 = vunpack.c.l.b16 %v7193
        %v7226 = vunpack.c.l.b16 %v7194
        %v7227 = vunpack.c.l.b16 %v7195
        %v7228 = vunpack.c.l.b16 %v7196
        %v7229 = vunpack.c.l.b16 %v7197
        %v7230 = vunpack.c.l.b16 %v7198
        %v7231 = vunpack.c.l.b16 %v7199
        %v7232 = vunpack.c.l.b16 %v7200
        %v7233 = vunpack.c.l.b16 %v7201
        %v7234 = vpack.c.b16 %v7219, %v7218
        %v7235 = vpack.c.b16 %v7221, %v7220
        %v7236 = vpack.c.b16 %v7223, %v7222
        %v7237 = vpack.c.b16 %v7225, %v7224
        %v7238 = vpack.c.b16 %v7227, %v7226
        %v7239 = vpack.c.b16 %v7229, %v7228
        %v7240 = vpack.c.b16 %v7231, %v7230
        %v7241 = vpack.c.b16 %v7233, %v7232
        %7250 = vmatprep.subr.bf16.mxu0 0
        %7251 = vmatpush1.bf16.msra.mxu0 %v7234
        %7252 = vmatprep.subr.bf16.mxu0 0
        %7253 = vmatpush1.bf16.msra.mxu0 %v7235
        %7254 = vmatprep.subr.bf16.mxu0 0
        %7255 = vmatpush1.bf16.msra.mxu0 %v7236
        %7256 = vmatprep.subr.bf16.mxu0 0
        %7257 = vmatpush1.bf16.msra.mxu0 %v7237
        %7258 = vmatprep.subr.bf16.mxu0 0
        %7259 = vmatpush1.bf16.msra.mxu0 %v7238
        %7260 = vmatprep.subr.bf16.mxu0 0
        %7261 = vmatpush1.bf16.msra.mxu0 %v7239
        %7262 = vmatprep.subr.bf16.mxu0 0
        %7263 = vmatpush1.bf16.msra.mxu0 %v7240
        %7264 = vmatprep.subr.bf16.mxu0 0
        %7265 = vmatpush1.bf16.msra.mxu0 %v7241
        %7266 = vmatprep.subr.bf16.mxu0 0
        %7267 = vmatpush1.bf16.msra.mxu0 0
        %7268 = vmatprep.subr.bf16.mxu0 0
        %7269 = vmatpush1.bf16.msra.mxu0 0
        %7270 = vmatprep.subr.bf16.mxu0 0
        %7271 = vmatpush1.bf16.msra.mxu0 0
        %7272 = vmatprep.subr.bf16.mxu0 0
        %7273 = vmatpush1.bf16.msra.mxu0 0
        %7274 = vmatprep.subr.bf16.mxu0 0
        %7275 = vmatpush1.bf16.msra.mxu0 0
        %7276 = vmatprep.subr.bf16.mxu0 0
        %7277 = vmatpush1.bf16.msra.mxu0 0
        %7278 = vmatprep.subr.bf16.mxu0 0
        %7279 = vmatpush1.bf16.msra.mxu0 0
        %7280 = vmatprep.subr.bf16.mxu0 0
        %7281 = vmatpush1.bf16.msra.mxu0 0
        %7282 = vmatprep.mubr.bf16.mxu0 0
        %7283 = vmatmul.mubr.bf16.gmra.mrb[0].mxu0 %v6905
        %v7284 = vpop.f32.mrb[0].mxu0
        %v7285 = vadd.f32 0.0, %v7284
        %v7286 = vpop.f32.mrb[0].mxu0
        %v7287 = vpop.f32.mrb[0].mxu0
        %v7288 = vpop.f32.mrb[0].mxu0
        %7289 = vdwg.mxu0
        %7290 = vmatprep.subr.mxu0 0.0
        %7291 = vmatpush1.msra.mxu0 %v7285
        %7292 = vmatprep.subr.mxu0 0.0
        %7293 = vmatpush1.msra.mxu0 0.0
        %7294 = vmatprep.subr.mxu0 0.0
        %7295 = vmatpush1.msra.mxu0 0.0
        %7296 = vmatprep.subr.mxu0 0.0
        %7297 = vmatpush1.msra.mxu0 0.0
        %7298 = vmatprep.subr.mxu0 0.0
        %7299 = vmatpush1.msra.mxu0 0.0
        %7300 = vmatprep.subr.mxu0 0.0
        %7301 = vmatpush1.msra.mxu0 0.0
        %7302 = vmatprep.subr.mxu0 0.0
        %7303 = vmatpush1.msra.mxu0 0.0
        %7304 = vmatprep.subr.mxu0 0.0
        %7305 = vmatpush1.msra.mxu0 0.0
        %7306 = vmatprep.subr.mxu0 0.0
        %7307 = vmatpush1.msra.mxu0 0.0
        %7308 = vmatprep.subr.mxu0 0.0
        %7309 = vmatpush1.msra.mxu0 0.0
        %7310 = vmatprep.subr.mxu0 0.0
        %7311 = vmatpush1.msra.mxu0 0.0
        %7312 = vmatprep.subr.mxu0 0.0
        %7313 = vmatpush1.msra.mxu0 0.0
        %7314 = vmatprep.subr.mxu0 0.0
        %7315 = vmatpush1.msra.mxu0 0.0
        %7316 = vmatprep.subr.mxu0 0.0
        %7317 = vmatpush1.msra.mxu0 0.0
        %7318 = vmatprep.subr.mxu0 0.0
        %7319 = vmatpush1.msra.mxu0 0.0
        %7320 = vmatprep.subr.mxu0 0.0
        %7321 = vmatpush1.msra.mxu0 0.0
        %7322 = vmatprep.subr.mxu0 0.0
        %7323 = vmatpush1.msra.mxu0 0.0
        %7324 = vmatprep.subr.mxu0 0.0
        %7325 = vmatpush1.msra.mxu0 0.0
        %7326 = vmatprep.subr.mxu0 0.0
        %7327 = vmatpush1.msra.mxu0 0.0
        %7328 = vmatprep.subr.mxu0 0.0
        %7329 = vmatpush1.msra.mxu0 0.0
        %7330 = vmatprep.subr.mxu0 0.0
        %7331 = vmatpush1.msra.mxu0 0.0
        %7332 = vmatprep.subr.mxu0 0.0
        %7333 = vmatpush1.msra.mxu0 0.0
        %7334 = vmatprep.subr.mxu0 0.0
        %7335 = vmatpush1.msra.mxu0 0.0
        %7336 = vmatprep.subr.mxu0 0.0
        %7337 = vmatpush1.msra.mxu0 0.0
        %7338 = vmatprep.subr.mxu0 0.0
        %7339 = vmatpush1.msra.mxu0 0.0
        %7340 = vmatprep.subr.mxu0 0.0
        %7341 = vmatpush1.msra.mxu0 0.0
        %7342 = vmatprep.subr.mxu0 0.0
        %7343 = vmatpush1.msra.mxu0 0.0
        %7344 = vmatprep.subr.mxu0 0.0
        %7345 = vmatpush1.msra.mxu0 0.0
        %7346 = vmatprep.subr.mxu0 0.0
        %7347 = vmatpush1.msra.mxu0 0.0
        %7348 = vmatprep.subr.mxu0 0.0
        %7349 = vmatpush1.msra.mxu0 0.0
        %7350 = vmatprep.subr.mxu0 0.0
        %7351 = vmatpush1.msra.mxu0 0.0
        %7352 = vmatprep.subr.mxu0 0.0
        %7353 = vmatpush1.msra.mxu0 0.0
        %7354 = vmatprep.mubr.f32.mxu0 0.0
        %7355 = vmatmul.mubr.f32.gmra.mrb[0].mxu0 %v6159
        %v7356 = vpop.f32.mrb[0].mxu0
        %v7357 = vadd.f32 0.0, %v7356
        %v7358 = vpop.f32.mrb[0].mxu0
        %7359 = vdwg.mxu0
        %v7360 = vadd.f32 %v7182, %v7357
        %v7361 = vld [vmem:[#allocation46] sm:$0x1]
        %v7363 = vlaneseq
        %v7364 = vshrl.u32 %v7363, 7
        %v7365 = vsub.s32 0, %v7364
        %v7366 = vrot.slane %v7361, %v7365
        %v7368 = vadd.f32 %v7360, %v7366
        %v7369 = vadd.f32 %v7368, %v6891
        %v7370 = vmax.f32 %v7369, 0.0
        %v7371 = vpack.c.bf16 %v7370, %v7370
        %v7372 = vld [vmem:[#allocation49] sm:$0xf]
        %v7373 = vld [vmem:[#allocation49 + $0x4] sm:$0xf]
        %v7374 = vld [vmem:[#allocation49 + $0x8] sm:$0xf]
        %v7375 = vld [vmem:[#allocation49 + $0xc] sm:$0xf]
        %v7376 = vld [vmem:[#allocation49 + $0x10] sm:$0xf]
        %v7377 = vld [vmem:[#allocation49 + $0x14] sm:$0xf]
        %v7378 = vld [vmem:[#allocation49 + $0x18] sm:$0xf]
        %v7379 = vld [vmem:[#allocation49 + $0x1c] sm:$0xf]
        %v7380 = vld [vmem:[#allocation49 + $0x20] sm:$0xf]
        %v7381 = vld [vmem:[#allocation49 + $0x24] sm:$0xf]
        %v7382 = vld [vmem:[#allocation49 + $0x28] sm:$0xf]
        %v7383 = vld [vmem:[#allocation49 + $0x2c] sm:$0xf]
        %v7384 = vld [vmem:[#allocation49 + $0x30] sm:$0xf]
        %v7385 = vld [vmem:[#allocation49 + $0x34] sm:$0xf]
        %v7386 = vld [vmem:[#allocation49 + $0x38] sm:$0xf]
        %v7387 = vld [vmem:[#allocation49 + $0x3c] sm:$0xf]
        %v7404 = vunpack.c.l.b16 %v7372
        %v7405 = vunpack.c.l.b16 %v7373
        %v7406 = vunpack.c.l.b16 %v7374
        %v7407 = vunpack.c.l.b16 %v7375
        %v7408 = vunpack.c.l.b16 %v7376
        %v7409 = vunpack.c.l.b16 %v7377
        %v7410 = vunpack.c.l.b16 %v7378
        %v7411 = vunpack.c.l.b16 %v7379
        %v7412 = vunpack.c.l.b16 %v7380
        %v7413 = vunpack.c.l.b16 %v7381
        %v7414 = vunpack.c.l.b16 %v7382
        %v7415 = vunpack.c.l.b16 %v7383
        %v7416 = vunpack.c.l.b16 %v7384
        %v7417 = vunpack.c.l.b16 %v7385
        %v7418 = vunpack.c.l.b16 %v7386
        %v7419 = vunpack.c.l.b16 %v7387
        %v7420 = vpack.c.b16 %v7405, %v7404
        %v7421 = vpack.c.b16 %v7407, %v7406
        %v7422 = vpack.c.b16 %v7409, %v7408
        %v7423 = vpack.c.b16 %v7411, %v7410
        %v7424 = vpack.c.b16 %v7413, %v7412
        %v7425 = vpack.c.b16 %v7415, %v7414
        %v7426 = vpack.c.b16 %v7417, %v7416
        %v7427 = vpack.c.b16 %v7419, %v7418
        %7436 = vmatprep.subr.bf16.mxu0 0
        %7437 = vmatpush1.bf16.msra.mxu0 %v7420
        %7438 = vmatprep.subr.bf16.mxu0 0
        %7439 = vmatpush1.bf16.msra.mxu0 %v7421
        %7440 = vmatprep.subr.bf16.mxu0 0
        %7441 = vmatpush1.bf16.msra.mxu0 %v7422
        %7442 = vmatprep.subr.bf16.mxu0 0
        %7443 = vmatpush1.bf16.msra.mxu0 %v7423
        %7444 = vmatprep.subr.bf16.mxu0 0
        %7445 = vmatpush1.bf16.msra.mxu0 %v7424
        %7446 = vmatprep.subr.bf16.mxu0 0
        %7447 = vmatpush1.bf16.msra.mxu0 %v7425
        %7448 = vmatprep.subr.bf16.mxu0 0
        %7449 = vmatpush1.bf16.msra.mxu0 %v7426
        %7450 = vmatprep.subr.bf16.mxu0 0
        %7451 = vmatpush1.bf16.msra.mxu0 %v7427
        %7452 = vmatprep.subr.bf16.mxu0 0
        %7453 = vmatpush1.bf16.msra.mxu0 0
        %7454 = vmatprep.subr.bf16.mxu0 0
        %7455 = vmatpush1.bf16.msra.mxu0 0
        %7456 = vmatprep.subr.bf16.mxu0 0
        %7457 = vmatpush1.bf16.msra.mxu0 0
        %7458 = vmatprep.subr.bf16.mxu0 0
        %7459 = vmatpush1.bf16.msra.mxu0 0
        %7460 = vmatprep.subr.bf16.mxu0 0
        %7461 = vmatpush1.bf16.msra.mxu0 0
        %7462 = vmatprep.subr.bf16.mxu0 0
        %7463 = vmatpush1.bf16.msra.mxu0 0
        %7464 = vmatprep.subr.bf16.mxu0 0
        %7465 = vmatpush1.bf16.msra.mxu0 0
        %7466 = vmatprep.subr.bf16.mxu0 0
        %7467 = vmatpush1.bf16.msra.mxu0 0
        %7468 = vmatprep.mubr.bf16.mxu0 0
        %7469 = vmatmul.mubr.bf16.gmra.mrb[0].mxu0 %v7371
        %v7470 = vpop.f32.mrb[0].mxu0
        %v7471 = vadd.f32 0.0, %v7470
        %v7472 = vpop.f32.mrb[0].mxu0
        %v7473 = vpop.f32.mrb[0].mxu0
        %v7474 = vpop.f32.mrb[0].mxu0
        %7475 = vdwg.mxu0
        %s7476 = scalar_lea.vmem [#allocation49], 64
        %v7477 = vld [vmem:[%s7476] sm:$0xf]
        %v7478 = vld [vmem:[%s7476 + $0x4] sm:$0xf]
        %v7479 = vld [vmem:[%s7476 + $0x8] sm:$0xf]
        %v7480 = vld [vmem:[%s7476 + $0xc] sm:$0xf]
        %v7481 = vld [vmem:[%s7476 + $0x10] sm:$0xf]
        %v7482 = vld [vmem:[%s7476 + $0x14] sm:$0xf]
        %v7483 = vld [vmem:[%s7476 + $0x18] sm:$0xf]
        %v7484 = vld [vmem:[%s7476 + $0x1c] sm:$0xf]
        %v7485 = vld [vmem:[%s7476 + $0x20] sm:$0xf]
        %v7486 = vld [vmem:[%s7476 + $0x24] sm:$0xf]
        %v7487 = vld [vmem:[%s7476 + $0x28] sm:$0xf]
        %v7488 = vld [vmem:[%s7476 + $0x2c] sm:$0xf]
        %v7489 = vld [vmem:[%s7476 + $0x30] sm:$0xf]
        %v7490 = vld [vmem:[%s7476 + $0x34] sm:$0xf]
        %v7491 = vld [vmem:[%s7476 + $0x38] sm:$0xf]
        %v7492 = vld [vmem:[%s7476 + $0x3c] sm:$0xf]
        %v7509 = vunpack.c.l.b16 %v7477
        %v7510 = vunpack.c.l.b16 %v7478
        %v7511 = vunpack.c.l.b16 %v7479
        %v7512 = vunpack.c.l.b16 %v7480
        %v7513 = vunpack.c.l.b16 %v7481
        %v7514 = vunpack.c.l.b16 %v7482
        %v7515 = vunpack.c.l.b16 %v7483
        %v7516 = vunpack.c.l.b16 %v7484
        %v7517 = vunpack.c.l.b16 %v7485
        %v7518 = vunpack.c.l.b16 %v7486
        %v7519 = vunpack.c.l.b16 %v7487
        %v7520 = vunpack.c.l.b16 %v7488
        %v7521 = vunpack.c.l.b16 %v7489
        %v7522 = vunpack.c.l.b16 %v7490
        %v7523 = vunpack.c.l.b16 %v7491
        %v7524 = vunpack.c.l.b16 %v7492
        %v7525 = vpack.c.b16 %v7510, %v7509
        %v7526 = vpack.c.b16 %v7512, %v7511
        %v7527 = vpack.c.b16 %v7514, %v7513
        %v7528 = vpack.c.b16 %v7516, %v7515
        %v7529 = vpack.c.b16 %v7518, %v7517
        %v7530 = vpack.c.b16 %v7520, %v7519
        %v7531 = vpack.c.b16 %v7522, %v7521
        %v7532 = vpack.c.b16 %v7524, %v7523
        %7541 = vmatprep.subr.bf16.mxu0 0
        %7542 = vmatpush1.bf16.msra.mxu0 %v7525
        %7543 = vmatprep.subr.bf16.mxu0 0
        %7544 = vmatpush1.bf16.msra.mxu0 %v7526
        %7545 = vmatprep.subr.bf16.mxu0 0
        %7546 = vmatpush1.bf16.msra.mxu0 %v7527
        %7547 = vmatprep.subr.bf16.mxu0 0
        %7548 = vmatpush1.bf16.msra.mxu0 %v7528
        %7549 = vmatprep.subr.bf16.mxu0 0
        %7550 = vmatpush1.bf16.msra.mxu0 %v7529
        %7551 = vmatprep.subr.bf16.mxu0 0
        %7552 = vmatpush1.bf16.msra.mxu0 %v7530
        %7553 = vmatprep.subr.bf16.mxu0 0
        %7554 = vmatpush1.bf16.msra.mxu0 %v7531
        %7555 = vmatprep.subr.bf16.mxu0 0
        %7556 = vmatpush1.bf16.msra.mxu0 %v7532
        %7557 = vmatprep.subr.bf16.mxu0 0
        %7558 = vmatpush1.bf16.msra.mxu0 0
        %7559 = vmatprep.subr.bf16.mxu0 0
        %7560 = vmatpush1.bf16.msra.mxu0 0
        %7561 = vmatprep.subr.bf16.mxu0 0
        %7562 = vmatpush1.bf16.msra.mxu0 0
        %7563 = vmatprep.subr.bf16.mxu0 0
        %7564 = vmatpush1.bf16.msra.mxu0 0
        %7565 = vmatprep.subr.bf16.mxu0 0
        %7566 = vmatpush1.bf16.msra.mxu0 0
        %7567 = vmatprep.subr.bf16.mxu0 0
        %7568 = vmatpush1.bf16.msra.mxu0 0
        %7569 = vmatprep.subr.bf16.mxu0 0
        %7570 = vmatpush1.bf16.msra.mxu0 0
        %7571 = vmatprep.subr.bf16.mxu0 0
        %7572 = vmatpush1.bf16.msra.mxu0 0
        %7573 = vmatprep.mubr.bf16.mxu0 0
        %7574 = vmatmul.mubr.bf16.gmra.mrb[0].mxu0 %v7371
        %v7575 = vpop.f32.mrb[0].mxu0
        %v7576 = vadd.f32 0.0, %v7575
        %v7577 = vpop.f32.mrb[0].mxu0
        %v7578 = vpop.f32.mrb[0].mxu0
        %v7579 = vpop.f32.mrb[0].mxu0
        %7580 = vdwg.mxu0
        %v7581 = vld [vmem:[#allocation52] sm:$0xff]
        %v7582 = vld [vmem:[#allocation52 + $0x8] sm:$0xff]
        %s7583 = scalar_lea.vmem [#allocation52], 16
        %v7584 = vld [vmem:[%s7583] sm:$0xff]
        %v7585 = vld [vmem:[%s7583 + $0x8] sm:$0xff]
        %v7587 = vsel %vm3366, %v7584, 0
        %v7590 = vsel %vm3366, %v7585, 0
        %7592 = vmatprep.subr.mxu0 0.0
        %7593 = vmatpush1.msra.mxu0 %v7576
        %7594 = vmatprep.subr.mxu0 0.0
        %7595 = vmatpush1.msra.mxu0 0.0
        %7596 = vmatprep.subr.mxu0 0.0
        %7597 = vmatpush1.msra.mxu0 0.0
        %7598 = vmatprep.subr.mxu0 0.0
        %7599 = vmatpush1.msra.mxu0 0.0
        %7600 = vmatprep.subr.mxu0 0.0
        %7601 = vmatpush1.msra.mxu0 0.0
        %7602 = vmatprep.subr.mxu0 0.0
        %7603 = vmatpush1.msra.mxu0 0.0
        %7604 = vmatprep.subr.mxu0 0.0
        %7605 = vmatpush1.msra.mxu0 0.0
        %7606 = vmatprep.subr.mxu0 0.0
        %7607 = vmatpush1.msra.mxu0 0.0
        %7608 = vmatprep.subr.mxu0 0.0
        %7609 = vmatpush1.msra.mxu0 0.0
        %7610 = vmatprep.subr.mxu0 0.0
        %7611 = vmatpush1.msra.mxu0 0.0
        %7612 = vmatprep.subr.mxu0 0.0
        %7613 = vmatpush1.msra.mxu0 0.0
        %7614 = vmatprep.subr.mxu0 0.0
        %7615 = vmatpush1.msra.mxu0 0.0
        %7616 = vmatprep.subr.mxu0 0.0
        %7617 = vmatpush1.msra.mxu0 0.0
        %7618 = vmatprep.subr.mxu0 0.0
        %7619 = vmatpush1.msra.mxu0 0.0
        %7620 = vmatprep.subr.mxu0 0.0
        %7621 = vmatpush1.msra.mxu0 0.0
        %7622 = vmatprep.subr.mxu0 0.0
        %7623 = vmatpush1.msra.mxu0 0.0
        %7624 = vmatprep.subr.mxu0 0.0
        %7625 = vmatpush1.msra.mxu0 0.0
        %7626 = vmatprep.subr.mxu0 0.0
        %7627 = vmatpush1.msra.mxu0 0.0
        %7628 = vmatprep.subr.mxu0 0.0
        %7629 = vmatpush1.msra.mxu0 0.0
        %7630 = vmatprep.subr.mxu0 0.0
        %7631 = vmatpush1.msra.mxu0 0.0
        %7632 = vmatprep.subr.mxu0 0.0
        %7633 = vmatpush1.msra.mxu0 0.0
        %7634 = vmatprep.subr.mxu0 0.0
        %7635 = vmatpush1.msra.mxu0 0.0
        %7636 = vmatprep.subr.mxu0 0.0
        %7637 = vmatpush1.msra.mxu0 0.0
        %7638 = vmatprep.subr.mxu0 0.0
        %7639 = vmatpush1.msra.mxu0 0.0
        %7640 = vmatprep.subr.mxu0 0.0
        %7641 = vmatpush1.msra.mxu0 0.0
        %7642 = vmatprep.subr.mxu0 0.0
        %7643 = vmatpush1.msra.mxu0 0.0
        %7644 = vmatprep.subr.mxu0 0.0
        %7645 = vmatpush1.msra.mxu0 0.0
        %7646 = vmatprep.subr.mxu0 0.0
        %7647 = vmatpush1.msra.mxu0 0.0
        %7648 = vmatprep.subr.mxu0 0.0
        %7649 = vmatpush1.msra.mxu0 0.0
        %7650 = vmatprep.subr.mxu0 0.0
        %7651 = vmatpush1.msra.mxu0 0.0
        %7652 = vmatprep.subr.mxu0 0.0
        %7653 = vmatpush1.msra.mxu0 0.0
        %7654 = vmatprep.subr.mxu0 0.0
        %7655 = vmatpush1.msra.mxu0 0.0
        %7656 = vmatprep.mubr.f32.mxu0 0.0
        %7657 = vmatmul.mubr.f32.gmra.mrb[0].mxu0 %v7587
        %v7658 = vpop.f32.mrb[0].mxu0
        %v7659 = vadd.f32 0.0, %v7658
        %v7660 = vpop.f32.mrb[0].mxu0
        %7661 = vmatprep.mubr.f32.mxu0 0.0
        %7662 = vmatmul.mubr.f32.gmra.mrb[0].mxu0 %v7590
        %v7663 = vpop.f32.mrb[0].mxu0
        %v7664 = vadd.f32 0.0, %v7663
        %v7665 = vpop.f32.mrb[0].mxu0
        %7666 = vdwg.mxu0
        %v7668 = vsel %vm3366, %v7581, 0
        %v7671 = vsel %vm3366, %v7582, 0
        %7673 = vmatprep.subr.mxu0 0.0
        %7674 = vmatpush1.msra.mxu0 %v7471
        %7675 = vmatprep.subr.mxu0 0.0
        %7676 = vmatpush1.msra.mxu0 0.0
        %7677 = vmatprep.subr.mxu0 0.0
        %7678 = vmatpush1.msra.mxu0 0.0
        %7679 = vmatprep.subr.mxu0 0.0
        %7680 = vmatpush1.msra.mxu0 0.0
        %7681 = vmatprep.subr.mxu0 0.0
        %7682 = vmatpush1.msra.mxu0 0.0
        %7683 = vmatprep.subr.mxu0 0.0
        %7684 = vmatpush1.msra.mxu0 0.0
        %7685 = vmatprep.subr.mxu0 0.0
        %7686 = vmatpush1.msra.mxu0 0.0
        %7687 = vmatprep.subr.mxu0 0.0
        %7688 = vmatpush1.msra.mxu0 0.0
        %7689 = vmatprep.subr.mxu0 0.0
        %7690 = vmatpush1.msra.mxu0 0.0
        %7691 = vmatprep.subr.mxu0 0.0
        %7692 = vmatpush1.msra.mxu0 0.0
        %7693 = vmatprep.subr.mxu0 0.0
        %7694 = vmatpush1.msra.mxu0 0.0
        %7695 = vmatprep.subr.mxu0 0.0
        %7696 = vmatpush1.msra.mxu0 0.0
        %7697 = vmatprep.subr.mxu0 0.0
        %7698 = vmatpush1.msra.mxu0 0.0
        %7699 = vmatprep.subr.mxu0 0.0
        %7700 = vmatpush1.msra.mxu0 0.0
        %7701 = vmatprep.subr.mxu0 0.0
        %7702 = vmatpush1.msra.mxu0 0.0
        %7703 = vmatprep.subr.mxu0 0.0
        %7704 = vmatpush1.msra.mxu0 0.0
        %7705 = vmatprep.subr.mxu0 0.0
        %7706 = vmatpush1.msra.mxu0 0.0
        %7707 = vmatprep.subr.mxu0 0.0
        %7708 = vmatpush1.msra.mxu0 0.0
        %7709 = vmatprep.subr.mxu0 0.0
        %7710 = vmatpush1.msra.mxu0 0.0
        %7711 = vmatprep.subr.mxu0 0.0
        %7712 = vmatpush1.msra.mxu0 0.0
        %7713 = vmatprep.subr.mxu0 0.0
        %7714 = vmatpush1.msra.mxu0 0.0
        %7715 = vmatprep.subr.mxu0 0.0
        %7716 = vmatpush1.msra.mxu0 0.0
        %7717 = vmatprep.subr.mxu0 0.0
        %7718 = vmatpush1.msra.mxu0 0.0
        %7719 = vmatprep.subr.mxu0 0.0
        %7720 = vmatpush1.msra.mxu0 0.0
        %7721 = vmatprep.subr.mxu0 0.0
        %7722 = vmatpush1.msra.mxu0 0.0
        %7723 = vmatprep.subr.mxu0 0.0
        %7724 = vmatpush1.msra.mxu0 0.0
        %7725 = vmatprep.subr.mxu0 0.0
        %7726 = vmatpush1.msra.mxu0 0.0
        %7727 = vmatprep.subr.mxu0 0.0
        %7728 = vmatpush1.msra.mxu0 0.0
        %7729 = vmatprep.subr.mxu0 0.0
        %7730 = vmatpush1.msra.mxu0 0.0
        %7731 = vmatprep.subr.mxu0 0.0
        %7732 = vmatpush1.msra.mxu0 0.0
        %7733 = vmatprep.subr.mxu0 0.0
        %7734 = vmatpush1.msra.mxu0 0.0
        %7735 = vmatprep.subr.mxu0 0.0
        %7736 = vmatpush1.msra.mxu0 0.0
        %7737 = vmatprep.mubr.f32.mxu0 0.0
        %7738 = vmatmul.mubr.f32.gmra.mrb[0].mxu0 %v7668
        %v7739 = vpop.f32.mrb[0].mxu0
        %v7740 = vadd.f32 %v7659, %v7739
        %v7741 = vpop.f32.mrb[0].mxu0
        %7742 = vmatprep.mubr.f32.mxu0 0.0
        %7743 = vmatmul.mubr.f32.gmra.mrb[0].mxu0 %v7671
        %v7744 = vpop.f32.mrb[0].mxu0
        %v7745 = vadd.f32 %v7664, %v7744
        %v7746 = vpop.f32.mrb[0].mxu0
        %7747 = vdwg.mxu0
        %v7748 = vld [vmem:[#allocation51] sm:$0x1]
        %v7750 = vlaneseq
        %v7751 = vshrl.u32 %v7750, 7
        %v7752 = vsub.s32 0, %v7751
        %v7753 = vrot.slane %v7748, %v7752
        %v7755 = vadd.f32 %v7740, %v7753
        %v7756 = vadd.f32 %v7745, %v7753
        %v7757 = vpack.c.bf16 %v7756, %v7755
        %v7758 = vld [vmem:[#allocation54] sm:$0xf]
        %v7759 = vld [vmem:[#allocation54 + $0x4] sm:$0xf]
        %v7760 = vld [vmem:[#allocation54 + $0x8] sm:$0xf]
        %v7761 = vld [vmem:[#allocation54 + $0xc] sm:$0xf]
        %v7762 = vld [vmem:[#allocation54 + $0x10] sm:$0xf]
        %v7763 = vld [vmem:[#allocation54 + $0x14] sm:$0xf]
        %v7764 = vld [vmem:[#allocation54 + $0x18] sm:$0xf]
        %v7765 = vld [vmem:[#allocation54 + $0x1c] sm:$0xf]
        %v7766 = vld [vmem:[#allocation54 + $0x20] sm:$0xf]
        %v7767 = vld [vmem:[#allocation54 + $0x24] sm:$0xf]
        %v7768 = vld [vmem:[#allocation54 + $0x28] sm:$0xf]
        %v7769 = vld [vmem:[#allocation54 + $0x2c] sm:$0xf]
        %v7770 = vld [vmem:[#allocation54 + $0x30] sm:$0xf]
        %v7771 = vld [vmem:[#allocation54 + $0x34] sm:$0xf]
        %v7772 = vld [vmem:[#allocation54 + $0x38] sm:$0xf]
        %v7773 = vld [vmem:[#allocation54 + $0x3c] sm:$0xf]
        %v7790 = vunpack.c.l.b16 %v7758
        %v7791 = vunpack.c.l.b16 %v7759
        %v7792 = vunpack.c.l.b16 %v7760
        %v7793 = vunpack.c.l.b16 %v7761
        %v7794 = vunpack.c.l.b16 %v7762
        %v7795 = vunpack.c.l.b16 %v7763
        %v7796 = vunpack.c.l.b16 %v7764
        %v7797 = vunpack.c.l.b16 %v7765
        %v7798 = vunpack.c.l.b16 %v7766
        %v7799 = vunpack.c.l.b16 %v7767
        %v7800 = vunpack.c.l.b16 %v7768
        %v7801 = vunpack.c.l.b16 %v7769
        %v7802 = vunpack.c.l.b16 %v7770
        %v7803 = vunpack.c.l.b16 %v7771
        %v7804 = vunpack.c.l.b16 %v7772
        %v7805 = vunpack.c.l.b16 %v7773
        %v7806 = vpack.c.b16 %v7791, %v7790
        %v7807 = vpack.c.b16 %v7793, %v7792
        %v7808 = vpack.c.b16 %v7795, %v7794
        %v7809 = vpack.c.b16 %v7797, %v7796
        %v7810 = vpack.c.b16 %v7799, %v7798
        %v7811 = vpack.c.b16 %v7801, %v7800
        %v7812 = vpack.c.b16 %v7803, %v7802
        %v7813 = vpack.c.b16 %v7805, %v7804
        %7822 = vmatprep.subr.bf16.mxu0 0
        %7823 = vmatpush1.bf16.msra.mxu0 %v7806
        %7824 = vmatprep.subr.bf16.mxu0 0
        %7825 = vmatpush1.bf16.msra.mxu0 %v7807
        %7826 = vmatprep.subr.bf16.mxu0 0
        %7827 = vmatpush1.bf16.msra.mxu0 %v7808
        %7828 = vmatprep.subr.bf16.mxu0 0
        %7829 = vmatpush1.bf16.msra.mxu0 %v7809
        %7830 = vmatprep.subr.bf16.mxu0 0
        %7831 = vmatpush1.bf16.msra.mxu0 %v7810
        %7832 = vmatprep.subr.bf16.mxu0 0
        %7833 = vmatpush1.bf16.msra.mxu0 %v7811
        %7834 = vmatprep.subr.bf16.mxu0 0
        %7835 = vmatpush1.bf16.msra.mxu0 %v7812
        %7836 = vmatprep.subr.bf16.mxu0 0
        %7837 = vmatpush1.bf16.msra.mxu0 %v7813
        %7838 = vmatprep.subr.bf16.mxu0 0
        %7839 = vmatpush1.bf16.msra.mxu0 0
        %7840 = vmatprep.subr.bf16.mxu0 0
        %7841 = vmatpush1.bf16.msra.mxu0 0
        %7842 = vmatprep.subr.bf16.mxu0 0
        %7843 = vmatpush1.bf16.msra.mxu0 0
        %7844 = vmatprep.subr.bf16.mxu0 0
        %7845 = vmatpush1.bf16.msra.mxu0 0
        %7846 = vmatprep.subr.bf16.mxu0 0
        %7847 = vmatpush1.bf16.msra.mxu0 0
        %7848 = vmatprep.subr.bf16.mxu0 0
        %7849 = vmatpush1.bf16.msra.mxu0 0
        %7850 = vmatprep.subr.bf16.mxu0 0
        %7851 = vmatpush1.bf16.msra.mxu0 0
        %7852 = vmatprep.subr.bf16.mxu0 0
        %7853 = vmatpush1.bf16.msra.mxu0 0
        %7854 = vmatprep.mubr.bf16.mxu0 0
        %7855 = vmatmul.mubr.bf16.gmra.mrb[0].mxu0 %v7757
        %v7856 = vpop.f32.mrb[0].mxu0
        %v7857 = vadd.f32 0.0, %v7856
        %v7858 = vpop.f32.mrb[0].mxu0
        %v7859 = vpop.f32.mrb[0].mxu0
        %v7860 = vadd.f32 0.0, %v7859
        %v7861 = vpop.f32.mrb[0].mxu0
        %7862 = vdwg.mxu0
        %v7863 = vld [vmem:[#allocation61] sm:$0xff]
        %v7864 = vld [vmem:[#allocation61 + $0x8] sm:$0xff]
        %s7865 = scalar_lea.vmem [#allocation54], 64
        %v7866 = vld [vmem:[%s7865] sm:$0xf]
        %v7867 = vld [vmem:[%s7865 + $0x4] sm:$0xf]
        %v7868 = vld [vmem:[%s7865 + $0x8] sm:$0xf]
        %v7869 = vld [vmem:[%s7865 + $0xc] sm:$0xf]
        %v7870 = vld [vmem:[%s7865 + $0x10] sm:$0xf]
        %v7871 = vld [vmem:[%s7865 + $0x14] sm:$0xf]
        %v7872 = vld [vmem:[%s7865 + $0x18] sm:$0xf]
        %v7873 = vld [vmem:[%s7865 + $0x1c] sm:$0xf]
        %v7874 = vld [vmem:[%s7865 + $0x20] sm:$0xf]
        %v7875 = vld [vmem:[%s7865 + $0x24] sm:$0xf]
        %v7876 = vld [vmem:[%s7865 + $0x28] sm:$0xf]
        %v7877 = vld [vmem:[%s7865 + $0x2c] sm:$0xf]
        %v7878 = vld [vmem:[%s7865 + $0x30] sm:$0xf]
        %v7879 = vld [vmem:[%s7865 + $0x34] sm:$0xf]
        %v7880 = vld [vmem:[%s7865 + $0x38] sm:$0xf]
        %v7881 = vld [vmem:[%s7865 + $0x3c] sm:$0xf]
        %v7898 = vunpack.c.l.b16 %v7866
        %v7899 = vunpack.c.l.b16 %v7867
        %v7900 = vunpack.c.l.b16 %v7868
        %v7901 = vunpack.c.l.b16 %v7869
        %v7902 = vunpack.c.l.b16 %v7870
        %v7903 = vunpack.c.l.b16 %v7871
        %v7904 = vunpack.c.l.b16 %v7872
        %v7905 = vunpack.c.l.b16 %v7873
        %v7906 = vunpack.c.l.b16 %v7874
        %v7907 = vunpack.c.l.b16 %v7875
        %v7908 = vunpack.c.l.b16 %v7876
        %v7909 = vunpack.c.l.b16 %v7877
        %v7910 = vunpack.c.l.b16 %v7878
        %v7911 = vunpack.c.l.b16 %v7879
        %v7912 = vunpack.c.l.b16 %v7880
        %v7913 = vunpack.c.l.b16 %v7881
        %v7914 = vpack.c.b16 %v7899, %v7898
        %v7915 = vpack.c.b16 %v7901, %v7900
        %v7916 = vpack.c.b16 %v7903, %v7902
        %v7917 = vpack.c.b16 %v7905, %v7904
        %v7918 = vpack.c.b16 %v7907, %v7906
        %v7919 = vpack.c.b16 %v7909, %v7908
        %v7920 = vpack.c.b16 %v7911, %v7910
        %v7921 = vpack.c.b16 %v7913, %v7912
        %7930 = vmatprep.subr.bf16.mxu0 0
        %7931 = vmatpush1.bf16.msra.mxu0 %v7914
        %7932 = vmatprep.subr.bf16.mxu0 0
        %7933 = vmatpush1.bf16.msra.mxu0 %v7915
        %7934 = vmatprep.subr.bf16.mxu0 0
        %7935 = vmatpush1.bf16.msra.mxu0 %v7916
        %7936 = vmatprep.subr.bf16.mxu0 0
        %7937 = vmatpush1.bf16.msra.mxu0 %v7917
        %7938 = vmatprep.subr.bf16.mxu0 0
        %7939 = vmatpush1.bf16.msra.mxu0 %v7918
        %7940 = vmatprep.subr.bf16.mxu0 0
        %7941 = vmatpush1.bf16.msra.mxu0 %v7919
        %7942 = vmatprep.subr.bf16.mxu0 0
        %7943 = vmatpush1.bf16.msra.mxu0 %v7920
        %7944 = vmatprep.subr.bf16.mxu0 0
        %7945 = vmatpush1.bf16.msra.mxu0 %v7921
        %7946 = vmatprep.subr.bf16.mxu0 0
        %7947 = vmatpush1.bf16.msra.mxu0 0
        %7948 = vmatprep.subr.bf16.mxu0 0
        %7949 = vmatpush1.bf16.msra.mxu0 0
        %7950 = vmatprep.subr.bf16.mxu0 0
        %7951 = vmatpush1.bf16.msra.mxu0 0
        %7952 = vmatprep.subr.bf16.mxu0 0
        %7953 = vmatpush1.bf16.msra.mxu0 0
        %7954 = vmatprep.subr.bf16.mxu0 0
        %7955 = vmatpush1.bf16.msra.mxu0 0
        %7956 = vmatprep.subr.bf16.mxu0 0
        %7957 = vmatpush1.bf16.msra.mxu0 0
        %7958 = vmatprep.subr.bf16.mxu0 0
        %7959 = vmatpush1.bf16.msra.mxu0 0
        %7960 = vmatprep.subr.bf16.mxu0 0
        %7961 = vmatpush1.bf16.msra.mxu0 0
        %7962 = vmatprep.mubr.bf16.mxu0 0
        %7963 = vmatmul.mubr.bf16.gmra.mrb[0].mxu0 %v7757
        %v7964 = vpop.f32.mrb[0].mxu0
        %v7965 = vadd.f32 0.0, %v7964
        %v7966 = vpop.f32.mrb[0].mxu0
        %v7967 = vpop.f32.mrb[0].mxu0
        %v7968 = vadd.f32 0.0, %v7967
        %v7969 = vpop.f32.mrb[0].mxu0
        %7970 = vdwg.mxu0
        %v7972 = vsel %vm2071, %v7863, 0
        %v7975 = vsel %vm2071, %v7864, 0
        %7977 = vmatprep.subr.mxu0 0.0
        %7978 = vmatpush1.msra.mxu0 %v7857
        %7979 = vmatprep.subr.mxu0 0.0
        %7980 = vmatpush1.msra.mxu0 %v7860
        %7981 = vmatprep.subr.mxu0 0.0
        %7982 = vmatpush1.msra.mxu0 0.0
        %7983 = vmatprep.subr.mxu0 0.0
        %7984 = vmatpush1.msra.mxu0 0.0
        %7985 = vmatprep.subr.mxu0 0.0
        %7986 = vmatpush1.msra.mxu0 0.0
        %7987 = vmatprep.subr.mxu0 0.0
        %7988 = vmatpush1.msra.mxu0 0.0
        %7989 = vmatprep.subr.mxu0 0.0
        %7990 = vmatpush1.msra.mxu0 0.0
        %7991 = vmatprep.subr.mxu0 0.0
        %7992 = vmatpush1.msra.mxu0 0.0
        %7993 = vmatprep.subr.mxu0 0.0
        %7994 = vmatpush1.msra.mxu0 0.0
        %7995 = vmatprep.subr.mxu0 0.0
        %7996 = vmatpush1.msra.mxu0 0.0
        %7997 = vmatprep.subr.mxu0 0.0
        %7998 = vmatpush1.msra.mxu0 0.0
        %7999 = vmatprep.subr.mxu0 0.0
        %8000 = vmatpush1.msra.mxu0 0.0
        %8001 = vmatprep.subr.mxu0 0.0
        %8002 = vmatpush1.msra.mxu0 0.0
        %8003 = vmatprep.subr.mxu0 0.0
        %8004 = vmatpush1.msra.mxu0 0.0
        %8005 = vmatprep.subr.mxu0 0.0
        %8006 = vmatpush1.msra.mxu0 0.0
        %8007 = vmatprep.subr.mxu0 0.0
        %8008 = vmatpush1.msra.mxu0 0.0
        %8009 = vmatprep.subr.mxu0 0.0
        %8010 = vmatpush1.msra.mxu0 0.0
        %8011 = vmatprep.subr.mxu0 0.0
        %8012 = vmatpush1.msra.mxu0 0.0
        %8013 = vmatprep.subr.mxu0 0.0
        %8014 = vmatpush1.msra.mxu0 0.0
        %8015 = vmatprep.subr.mxu0 0.0
        %8016 = vmatpush1.msra.mxu0 0.0
        %8017 = vmatprep.subr.mxu0 0.0
        %8018 = vmatpush1.msra.mxu0 0.0
        %8019 = vmatprep.subr.mxu0 0.0
        %8020 = vmatpush1.msra.mxu0 0.0
        %8021 = vmatprep.subr.mxu0 0.0
        %8022 = vmatpush1.msra.mxu0 0.0
        %8023 = vmatprep.subr.mxu0 0.0
        %8024 = vmatpush1.msra.mxu0 0.0
        %8025 = vmatprep.subr.mxu0 0.0
        %8026 = vmatpush1.msra.mxu0 0.0
        %8027 = vmatprep.subr.mxu0 0.0
        %8028 = vmatpush1.msra.mxu0 0.0
        %8029 = vmatprep.subr.mxu0 0.0
        %8030 = vmatpush1.msra.mxu0 0.0
        %8031 = vmatprep.subr.mxu0 0.0
        %8032 = vmatpush1.msra.mxu0 0.0
        %8033 = vmatprep.subr.mxu0 0.0
        %8034 = vmatpush1.msra.mxu0 0.0
        %8035 = vmatprep.subr.mxu0 0.0
        %8036 = vmatpush1.msra.mxu0 0.0
        %8037 = vmatprep.subr.mxu0 0.0
        %8038 = vmatpush1.msra.mxu0 0.0
        %8039 = vmatprep.subr.mxu0 0.0
        %8040 = vmatpush1.msra.mxu0 0.0
        %8041 = vmatprep.mubr.f32.mxu0 0.0
        %8042 = vmatmul.mubr.f32.gmra.mrb[0].mxu0 %v7972
        %v8043 = vpop.f32.mrb[0].mxu0
        %v8044 = vadd.f32 %v7965, %v8043
        %v8045 = vpop.f32.mrb[0].mxu0
        %8046 = vmatprep.mubr.f32.mxu0 0.0
        %8047 = vmatmul.mubr.f32.gmra.mrb[0].mxu0 %v7975
        %v8048 = vpop.f32.mrb[0].mxu0
        %v8049 = vadd.f32 %v7968, %v8048
        %v8050 = vpop.f32.mrb[0].mxu0
        %8051 = vdwg.mxu0
        %s8052 = scalar_lea.vmem [#allocation54], 128
        %v8053 = vld [vmem:[%s8052] sm:$0xf]
        %v8054 = vld [vmem:[%s8052 + $0x4] sm:$0xf]
        %v8055 = vld [vmem:[%s8052 + $0x8] sm:$0xf]
        %v8056 = vld [vmem:[%s8052 + $0xc] sm:$0xf]
        %v8057 = vld [vmem:[%s8052 + $0x10] sm:$0xf]
        %v8058 = vld [vmem:[%s8052 + $0x14] sm:$0xf]
        %v8059 = vld [vmem:[%s8052 + $0x18] sm:$0xf]
        %v8060 = vld [vmem:[%s8052 + $0x1c] sm:$0xf]
        %v8061 = vld [vmem:[%s8052 + $0x20] sm:$0xf]
        %v8062 = vld [vmem:[%s8052 + $0x24] sm:$0xf]
        %v8063 = vld [vmem:[%s8052 + $0x28] sm:$0xf]
        %v8064 = vld [vmem:[%s8052 + $0x2c] sm:$0xf]
        %v8065 = vld [vmem:[%s8052 + $0x30] sm:$0xf]
        %v8066 = vld [vmem:[%s8052 + $0x34] sm:$0xf]
        %v8067 = vld [vmem:[%s8052 + $0x38] sm:$0xf]
        %v8068 = vld [vmem:[%s8052 + $0x3c] sm:$0xf]
        %v8085 = vunpack.c.l.b16 %v8053
        %v8086 = vunpack.c.l.b16 %v8054
        %v8087 = vunpack.c.l.b16 %v8055
        %v8088 = vunpack.c.l.b16 %v8056
        %v8089 = vunpack.c.l.b16 %v8057
        %v8090 = vunpack.c.l.b16 %v8058
        %v8091 = vunpack.c.l.b16 %v8059
        %v8092 = vunpack.c.l.b16 %v8060
        %v8093 = vunpack.c.l.b16 %v8061
        %v8094 = vunpack.c.l.b16 %v8062
        %v8095 = vunpack.c.l.b16 %v8063
        %v8096 = vunpack.c.l.b16 %v8064
        %v8097 = vunpack.c.l.b16 %v8065
        %v8098 = vunpack.c.l.b16 %v8066
        %v8099 = vunpack.c.l.b16 %v8067
        %v8100 = vunpack.c.l.b16 %v8068
        %v8101 = vpack.c.b16 %v8086, %v8085
        %v8102 = vpack.c.b16 %v8088, %v8087
        %v8103 = vpack.c.b16 %v8090, %v8089
        %v8104 = vpack.c.b16 %v8092, %v8091
        %v8105 = vpack.c.b16 %v8094, %v8093
        %v8106 = vpack.c.b16 %v8096, %v8095
        %v8107 = vpack.c.b16 %v8098, %v8097
        %v8108 = vpack.c.b16 %v8100, %v8099
        %8117 = vmatprep.subr.bf16.mxu0 0
        %8118 = vmatpush1.bf16.msra.mxu0 %v8101
        %8119 = vmatprep.subr.bf16.mxu0 0
        %8120 = vmatpush1.bf16.msra.mxu0 %v8102
        %8121 = vmatprep.subr.bf16.mxu0 0
        %8122 = vmatpush1.bf16.msra.mxu0 %v8103
        %8123 = vmatprep.subr.bf16.mxu0 0
        %8124 = vmatpush1.bf16.msra.mxu0 %v8104
        %8125 = vmatprep.subr.bf16.mxu0 0
        %8126 = vmatpush1.bf16.msra.mxu0 %v8105
        %8127 = vmatprep.subr.bf16.mxu0 0
        %8128 = vmatpush1.bf16.msra.mxu0 %v8106
        %8129 = vmatprep.subr.bf16.mxu0 0
        %8130 = vmatpush1.bf16.msra.mxu0 %v8107
        %8131 = vmatprep.subr.bf16.mxu0 0
        %8132 = vmatpush1.bf16.msra.mxu0 %v8108
        %8133 = vmatprep.subr.bf16.mxu0 0
        %8134 = vmatpush1.bf16.msra.mxu0 0
        %8135 = vmatprep.subr.bf16.mxu0 0
        %8136 = vmatpush1.bf16.msra.mxu0 0
        %8137 = vmatprep.subr.bf16.mxu0 0
        %8138 = vmatpush1.bf16.msra.mxu0 0
        %8139 = vmatprep.subr.bf16.mxu0 0
        %8140 = vmatpush1.bf16.msra.mxu0 0
        %8141 = vmatprep.subr.bf16.mxu0 0
        %8142 = vmatpush1.bf16.msra.mxu0 0
        %8143 = vmatprep.subr.bf16.mxu0 0
        %8144 = vmatpush1.bf16.msra.mxu0 0
        %8145 = vmatprep.subr.bf16.mxu0 0
        %8146 = vmatpush1.bf16.msra.mxu0 0
        %8147 = vmatprep.subr.bf16.mxu0 0
        %8148 = vmatpush1.bf16.msra.mxu0 0
        %8149 = vmatprep.mubr.bf16.mxu0 0
        %8150 = vmatmul.mubr.bf16.gmra.mrb[0].mxu0 %v7757
        %v8151 = vpop.f32.mrb[0].mxu0
        %v8152 = vadd.f32 0.0, %v8151
        %v8153 = vpop.f32.mrb[0].mxu0
        %v8154 = vpop.f32.mrb[0].mxu0
        %v8155 = vadd.f32 0.0, %v8154
        %v8156 = vpop.f32.mrb[0].mxu0
        %8157 = vdwg.mxu0
        %s8158 = scalar_lea.vmem [#allocation61], 32
        %v8159 = vld [vmem:[%s8158] sm:$0xff]
        %v8160 = vld [vmem:[%s8158 + $0x8] sm:$0xff]
        %v8162 = vsel %vm2071, %v8159, 0
        %v8165 = vsel %vm2071, %v8160, 0
        %8167 = vmatprep.subr.mxu0 0.0
        %8168 = vmatpush1.msra.mxu0 %v8152
        %8169 = vmatprep.subr.mxu0 0.0
        %8170 = vmatpush1.msra.mxu0 %v8155
        %8171 = vmatprep.subr.mxu0 0.0
        %8172 = vmatpush1.msra.mxu0 0.0
        %8173 = vmatprep.subr.mxu0 0.0
        %8174 = vmatpush1.msra.mxu0 0.0
        %8175 = vmatprep.subr.mxu0 0.0
        %8176 = vmatpush1.msra.mxu0 0.0
        %8177 = vmatprep.subr.mxu0 0.0
        %8178 = vmatpush1.msra.mxu0 0.0
        %8179 = vmatprep.subr.mxu0 0.0
        %8180 = vmatpush1.msra.mxu0 0.0
        %8181 = vmatprep.subr.mxu0 0.0
        %8182 = vmatpush1.msra.mxu0 0.0
        %8183 = vmatprep.subr.mxu0 0.0
        %8184 = vmatpush1.msra.mxu0 0.0
        %8185 = vmatprep.subr.mxu0 0.0
        %8186 = vmatpush1.msra.mxu0 0.0
        %8187 = vmatprep.subr.mxu0 0.0
        %8188 = vmatpush1.msra.mxu0 0.0
        %8189 = vmatprep.subr.mxu0 0.0
        %8190 = vmatpush1.msra.mxu0 0.0
        %8191 = vmatprep.subr.mxu0 0.0
        %8192 = vmatpush1.msra.mxu0 0.0
        %8193 = vmatprep.subr.mxu0 0.0
        %8194 = vmatpush1.msra.mxu0 0.0
        %8195 = vmatprep.subr.mxu0 0.0
        %8196 = vmatpush1.msra.mxu0 0.0
        %8197 = vmatprep.subr.mxu0 0.0
        %8198 = vmatpush1.msra.mxu0 0.0
        %8199 = vmatprep.subr.mxu0 0.0
        %8200 = vmatpush1.msra.mxu0 0.0
        %8201 = vmatprep.subr.mxu0 0.0
        %8202 = vmatpush1.msra.mxu0 0.0
        %8203 = vmatprep.subr.mxu0 0.0
        %8204 = vmatpush1.msra.mxu0 0.0
        %8205 = vmatprep.subr.mxu0 0.0
        %8206 = vmatpush1.msra.mxu0 0.0
        %8207 = vmatprep.subr.mxu0 0.0
        %8208 = vmatpush1.msra.mxu0 0.0
        %8209 = vmatprep.subr.mxu0 0.0
        %8210 = vmatpush1.msra.mxu0 0.0
        %8211 = vmatprep.subr.mxu0 0.0
        %8212 = vmatpush1.msra.mxu0 0.0
        %8213 = vmatprep.subr.mxu0 0.0
        %8214 = vmatpush1.msra.mxu0 0.0
        %8215 = vmatprep.subr.mxu0 0.0
        %8216 = vmatpush1.msra.mxu0 0.0
        %8217 = vmatprep.subr.mxu0 0.0
        %8218 = vmatpush1.msra.mxu0 0.0
        %8219 = vmatprep.subr.mxu0 0.0
        %8220 = vmatpush1.msra.mxu0 0.0
        %8221 = vmatprep.subr.mxu0 0.0
        %8222 = vmatpush1.msra.mxu0 0.0
        %8223 = vmatprep.subr.mxu0 0.0
        %8224 = vmatpush1.msra.mxu0 0.0
        %8225 = vmatprep.subr.mxu0 0.0
        %8226 = vmatpush1.msra.mxu0 0.0
        %8227 = vmatprep.subr.mxu0 0.0
        %8228 = vmatpush1.msra.mxu0 0.0
        %8229 = vmatprep.subr.mxu0 0.0
        %8230 = vmatpush1.msra.mxu0 0.0
        %8231 = vmatprep.mubr.f32.mxu0 0.0
        %8232 = vmatmul.mubr.f32.gmra.mrb[0].mxu0 %v8162
        %v8233 = vpop.f32.mrb[0].mxu0
        %v8234 = vadd.f32 0.0, %v8233
        %v8235 = vpop.f32.mrb[0].mxu0
        %8236 = vmatprep.mubr.f32.mxu0 0.0
        %8237 = vmatmul.mubr.f32.gmra.mrb[0].mxu0 %v8165
        %v8238 = vpop.f32.mrb[0].mxu0
        %v8239 = vadd.f32 0.0, %v8238
        %v8240 = vpop.f32.mrb[0].mxu0
        %8241 = vdwg.mxu0
        %v8242 = vadd.f32 %v8044, %v8234
        %v8243 = vadd.f32 %v8049, %v8239
        %v8244 = vld [vmem:[#allocation58] sm:$0xf]
        %v8245 = vld [vmem:[#allocation58 + $0x4] sm:$0xf]
        %v8246 = vld [vmem:[#allocation58 + $0x8] sm:$0xf]
        %v8247 = vld [vmem:[#allocation58 + $0xc] sm:$0xf]
        %v8248 = vld [vmem:[#allocation58 + $0x10] sm:$0xf]
        %v8249 = vld [vmem:[#allocation58 + $0x14] sm:$0xf]
        %v8250 = vld [vmem:[#allocation58 + $0x18] sm:$0xf]
        %v8251 = vld [vmem:[#allocation58 + $0x1c] sm:$0xf]
        %v8252 = vld [vmem:[#allocation58 + $0x20] sm:$0xf]
        %v8253 = vld [vmem:[#allocation58 + $0x24] sm:$0xf]
        %v8254 = vld [vmem:[#allocation58 + $0x28] sm:$0xf]
        %v8255 = vld [vmem:[#allocation58 + $0x2c] sm:$0xf]
        %v8256 = vld [vmem:[#allocation58 + $0x30] sm:$0xf]
        %v8257 = vld [vmem:[#allocation58 + $0x34] sm:$0xf]
        %v8258 = vld [vmem:[#allocation58 + $0x38] sm:$0xf]
        %v8259 = vld [vmem:[#allocation58 + $0x3c] sm:$0xf]
        %v8260 = vld [vmem:[#allocation55] sm:$0xf]
        %v8261 = vld [vmem:[#allocation55 + $0x4] sm:$0xf]
        %v8262 = vld [vmem:[#allocation55 + $0x8] sm:$0xf]
        %v8263 = vld [vmem:[#allocation55 + $0xc] sm:$0xf]
        %v8264 = vld [vmem:[#allocation55 + $0x10] sm:$0xf]
        %v8265 = vld [vmem:[#allocation55 + $0x14] sm:$0xf]
        %v8266 = vld [vmem:[#allocation55 + $0x18] sm:$0xf]
        %v8267 = vld [vmem:[#allocation55 + $0x1c] sm:$0xf]
        %v8268 = vld [vmem:[#allocation55 + $0x20] sm:$0xf]
        %v8269 = vld [vmem:[#allocation55 + $0x24] sm:$0xf]
        %v8270 = vld [vmem:[#allocation55 + $0x28] sm:$0xf]
        %v8271 = vld [vmem:[#allocation55 + $0x2c] sm:$0xf]
        %v8272 = vld [vmem:[#allocation55 + $0x30] sm:$0xf]
        %v8273 = vld [vmem:[#allocation55 + $0x34] sm:$0xf]
        %v8274 = vld [vmem:[#allocation55 + $0x38] sm:$0xf]
        %v8275 = vld [vmem:[#allocation55 + $0x3c] sm:$0xf]
        %v8292 = vunpack.c.l.b16 %v8260
        %v8293 = vunpack.c.l.b16 %v8261
        %v8294 = vunpack.c.l.b16 %v8262
        %v8295 = vunpack.c.l.b16 %v8263
        %v8296 = vunpack.c.l.b16 %v8264
        %v8297 = vunpack.c.l.b16 %v8265
        %v8298 = vunpack.c.l.b16 %v8266
        %v8299 = vunpack.c.l.b16 %v8267
        %v8300 = vunpack.c.l.b16 %v8268
        %v8301 = vunpack.c.l.b16 %v8269
        %v8302 = vunpack.c.l.b16 %v8270
        %v8303 = vunpack.c.l.b16 %v8271
        %v8304 = vunpack.c.l.b16 %v8272
        %v8305 = vunpack.c.l.b16 %v8273
        %v8306 = vunpack.c.l.b16 %v8274
        %v8307 = vunpack.c.l.b16 %v8275
        %v8308 = vpack.c.b16 %v8293, %v8292
        %v8309 = vpack.c.b16 %v8295, %v8294
        %v8310 = vpack.c.b16 %v8297, %v8296
        %v8311 = vpack.c.b16 %v8299, %v8298
        %v8312 = vpack.c.b16 %v8301, %v8300
        %v8313 = vpack.c.b16 %v8303, %v8302
        %v8314 = vpack.c.b16 %v8305, %v8304
        %v8315 = vpack.c.b16 %v8307, %v8306
        %8324 = vmatprep.subr.bf16.mxu0 0
        %8325 = vmatpush1.bf16.msra.mxu0 %v8308
        %8326 = vmatprep.subr.bf16.mxu0 0
        %8327 = vmatpush1.bf16.msra.mxu0 %v8309
        %8328 = vmatprep.subr.bf16.mxu0 0
        %8329 = vmatpush1.bf16.msra.mxu0 %v8310
        %8330 = vmatprep.subr.bf16.mxu0 0
        %8331 = vmatpush1.bf16.msra.mxu0 %v8311
        %8332 = vmatprep.subr.bf16.mxu0 0
        %8333 = vmatpush1.bf16.msra.mxu0 %v8312
        %8334 = vmatprep.subr.bf16.mxu0 0
        %8335 = vmatpush1.bf16.msra.mxu0 %v8313
        %8336 = vmatprep.subr.bf16.mxu0 0
        %8337 = vmatpush1.bf16.msra.mxu0 %v8314
        %8338 = vmatprep.subr.bf16.mxu0 0
        %8339 = vmatpush1.bf16.msra.mxu0 %v8315
        %8340 = vmatprep.subr.bf16.mxu0 0
        %8341 = vmatpush1.bf16.msra.mxu0 0
        %8342 = vmatprep.subr.bf16.mxu0 0
        %8343 = vmatpush1.bf16.msra.mxu0 0
        %8344 = vmatprep.subr.bf16.mxu0 0
        %8345 = vmatpush1.bf16.msra.mxu0 0
        %8346 = vmatprep.subr.bf16.mxu0 0
        %8347 = vmatpush1.bf16.msra.mxu0 0
        %8348 = vmatprep.subr.bf16.mxu0 0
        %8349 = vmatpush1.bf16.msra.mxu0 0
        %8350 = vmatprep.subr.bf16.mxu0 0
        %8351 = vmatpush1.bf16.msra.mxu0 0
        %8352 = vmatprep.subr.bf16.mxu0 0
        %8353 = vmatpush1.bf16.msra.mxu0 0
        %8354 = vmatprep.subr.bf16.mxu0 0
        %8355 = vmatpush1.bf16.msra.mxu0 0
        %8356 = vmatprep.mubr.bf16.mxu0 0
        %8357 = vmatmul.mubr.bf16.gmra.mrb[0].mxu0 %v2880
        %v8358 = vpop.f32.mrb[0].mxu0
        %v8359 = vadd.f32 0.0, %v8358
        %v8360 = vpop.f32.mrb[0].mxu0
        %v8361 = vpop.f32.mrb[0].mxu0
        %v8362 = vadd.f32 0.0, %v8361
        %v8363 = vpop.f32.mrb[0].mxu0
        %8364 = vdwg.mxu0
        %s8365 = scalar_lea.vmem [#allocation55], 64
        %v8366 = vld [vmem:[%s8365] sm:$0xf]
        %v8367 = vld [vmem:[%s8365 + $0x4] sm:$0xf]
        %v8368 = vld [vmem:[%s8365 + $0x8] sm:$0xf]
        %v8369 = vld [vmem:[%s8365 + $0xc] sm:$0xf]
        %v8370 = vld [vmem:[%s8365 + $0x10] sm:$0xf]
        %v8371 = vld [vmem:[%s8365 + $0x14] sm:$0xf]
        %v8372 = vld [vmem:[%s8365 + $0x18] sm:$0xf]
        %v8373 = vld [vmem:[%s8365 + $0x1c] sm:$0xf]
        %v8374 = vld [vmem:[%s8365 + $0x20] sm:$0xf]
        %v8375 = vld [vmem:[%s8365 + $0x24] sm:$0xf]
        %v8376 = vld [vmem:[%s8365 + $0x28] sm:$0xf]
        %v8377 = vld [vmem:[%s8365 + $0x2c] sm:$0xf]
        %v8378 = vld [vmem:[%s8365 + $0x30] sm:$0xf]
        %v8379 = vld [vmem:[%s8365 + $0x34] sm:$0xf]
        %v8380 = vld [vmem:[%s8365 + $0x38] sm:$0xf]
        %v8381 = vld [vmem:[%s8365 + $0x3c] sm:$0xf]
        %v8398 = vunpack.c.l.b16 %v8366
        %v8399 = vunpack.c.l.b16 %v8367
        %v8400 = vunpack.c.l.b16 %v8368
        %v8401 = vunpack.c.l.b16 %v8369
        %v8402 = vunpack.c.l.b16 %v8370
        %v8403 = vunpack.c.l.b16 %v8371
        %v8404 = vunpack.c.l.b16 %v8372
        %v8405 = vunpack.c.l.b16 %v8373
        %v8406 = vunpack.c.l.b16 %v8374
        %v8407 = vunpack.c.l.b16 %v8375
        %v8408 = vunpack.c.l.b16 %v8376
        %v8409 = vunpack.c.l.b16 %v8377
        %v8410 = vunpack.c.l.b16 %v8378
        %v8411 = vunpack.c.l.b16 %v8379
        %v8412 = vunpack.c.l.b16 %v8380
        %v8413 = vunpack.c.l.b16 %v8381
        %v8414 = vpack.c.b16 %v8399, %v8398
        %v8415 = vpack.c.b16 %v8401, %v8400
        %v8416 = vpack.c.b16 %v8403, %v8402
        %v8417 = vpack.c.b16 %v8405, %v8404
        %v8418 = vpack.c.b16 %v8407, %v8406
        %v8419 = vpack.c.b16 %v8409, %v8408
        %v8420 = vpack.c.b16 %v8411, %v8410
        %v8421 = vpack.c.b16 %v8413, %v8412
        %8430 = vmatprep.subr.bf16.mxu0 0
        %8431 = vmatpush1.bf16.msra.mxu0 %v8414
        %8432 = vmatprep.subr.bf16.mxu0 0
        %8433 = vmatpush1.bf16.msra.mxu0 %v8415
        %8434 = vmatprep.subr.bf16.mxu0 0
        %8435 = vmatpush1.bf16.msra.mxu0 %v8416
        %8436 = vmatprep.subr.bf16.mxu0 0
        %8437 = vmatpush1.bf16.msra.mxu0 %v8417
        %8438 = vmatprep.subr.bf16.mxu0 0
        %8439 = vmatpush1.bf16.msra.mxu0 %v8418
        %8440 = vmatprep.subr.bf16.mxu0 0
        %8441 = vmatpush1.bf16.msra.mxu0 %v8419
        %8442 = vmatprep.subr.bf16.mxu0 0
        %8443 = vmatpush1.bf16.msra.mxu0 %v8420
        %8444 = vmatprep.subr.bf16.mxu0 0
        %8445 = vmatpush1.bf16.msra.mxu0 %v8421
        %8446 = vmatprep.subr.bf16.mxu0 0
        %8447 = vmatpush1.bf16.msra.mxu0 0
        %8448 = vmatprep.subr.bf16.mxu0 0
        %8449 = vmatpush1.bf16.msra.mxu0 0
        %8450 = vmatprep.subr.bf16.mxu0 0
        %8451 = vmatpush1.bf16.msra.mxu0 0
        %8452 = vmatprep.subr.bf16.mxu0 0
        %8453 = vmatpush1.bf16.msra.mxu0 0
        %8454 = vmatprep.subr.bf16.mxu0 0
        %8455 = vmatpush1.bf16.msra.mxu0 0
        %8456 = vmatprep.subr.bf16.mxu0 0
        %8457 = vmatpush1.bf16.msra.mxu0 0
        %8458 = vmatprep.subr.bf16.mxu0 0
        %8459 = vmatpush1.bf16.msra.mxu0 0
        %8460 = vmatprep.subr.bf16.mxu0 0
        %8461 = vmatpush1.bf16.msra.mxu0 0
        %8462 = vmatprep.mubr.bf16.mxu0 0
        %8463 = vmatmul.mubr.bf16.gmra.mrb[0].mxu0 %v2880
        %v8464 = vpop.f32.mrb[0].mxu0
        %v8465 = vadd.f32 0.0, %v8464
        %v8466 = vpop.f32.mrb[0].mxu0
        %v8467 = vpop.f32.mrb[0].mxu0
        %v8468 = vadd.f32 0.0, %v8467
        %v8469 = vpop.f32.mrb[0].mxu0
        %8470 = vdwg.mxu0
        %8471 = vmatprep.subr.mxu0 0.0
        %8472 = vmatpush1.msra.mxu0 %v8359
        %8473 = vmatprep.subr.mxu0 0.0
        %8474 = vmatpush1.msra.mxu0 %v8362
        %8475 = vmatprep.subr.mxu0 0.0
        %8476 = vmatpush1.msra.mxu0 0.0
        %8477 = vmatprep.subr.mxu0 0.0
        %8478 = vmatpush1.msra.mxu0 0.0
        %8479 = vmatprep.subr.mxu0 0.0
        %8480 = vmatpush1.msra.mxu0 0.0
        %8481 = vmatprep.subr.mxu0 0.0
        %8482 = vmatpush1.msra.mxu0 0.0
        %8483 = vmatprep.subr.mxu0 0.0
        %8484 = vmatpush1.msra.mxu0 0.0
        %8485 = vmatprep.subr.mxu0 0.0
        %8486 = vmatpush1.msra.mxu0 0.0
        %8487 = vmatprep.subr.mxu0 0.0
        %8488 = vmatpush1.msra.mxu0 0.0
        %8489 = vmatprep.subr.mxu0 0.0
        %8490 = vmatpush1.msra.mxu0 0.0
        %8491 = vmatprep.subr.mxu0 0.0
        %8492 = vmatpush1.msra.mxu0 0.0
        %8493 = vmatprep.subr.mxu0 0.0
        %8494 = vmatpush1.msra.mxu0 0.0
        %8495 = vmatprep.subr.mxu0 0.0
        %8496 = vmatpush1.msra.mxu0 0.0
        %8497 = vmatprep.subr.mxu0 0.0
        %8498 = vmatpush1.msra.mxu0 0.0
        %8499 = vmatprep.subr.mxu0 0.0
        %8500 = vmatpush1.msra.mxu0 0.0
        %8501 = vmatprep.subr.mxu0 0.0
        %8502 = vmatpush1.msra.mxu0 0.0
        %8503 = vmatprep.subr.mxu0 0.0
        %8504 = vmatpush1.msra.mxu0 0.0
        %8505 = vmatprep.subr.mxu0 0.0
        %8506 = vmatpush1.msra.mxu0 0.0
        %8507 = vmatprep.subr.mxu0 0.0
        %8508 = vmatpush1.msra.mxu0 0.0
        %8509 = vmatprep.subr.mxu0 0.0
        %8510 = vmatpush1.msra.mxu0 0.0
        %8511 = vmatprep.subr.mxu0 0.0
        %8512 = vmatpush1.msra.mxu0 0.0
        %8513 = vmatprep.subr.mxu0 0.0
        %8514 = vmatpush1.msra.mxu0 0.0
        %8515 = vmatprep.subr.mxu0 0.0
        %8516 = vmatpush1.msra.mxu0 0.0
        %8517 = vmatprep.subr.mxu0 0.0
        %8518 = vmatpush1.msra.mxu0 0.0
        %8519 = vmatprep.subr.mxu0 0.0
        %8520 = vmatpush1.msra.mxu0 0.0
        %8521 = vmatprep.subr.mxu0 0.0
        %8522 = vmatpush1.msra.mxu0 0.0
        %8523 = vmatprep.subr.mxu0 0.0
        %8524 = vmatpush1.msra.mxu0 0.0
        %8525 = vmatprep.subr.mxu0 0.0
        %8526 = vmatpush1.msra.mxu0 0.0
        %8527 = vmatprep.subr.mxu0 0.0
        %8528 = vmatpush1.msra.mxu0 0.0
        %8529 = vmatprep.subr.mxu0 0.0
        %8530 = vmatpush1.msra.mxu0 0.0
        %8531 = vmatprep.subr.mxu0 0.0
        %8532 = vmatpush1.msra.mxu0 0.0
        %8533 = vmatprep.subr.mxu0 0.0
        %8534 = vmatpush1.msra.mxu0 0.0
        %8535 = vmatprep.mubr.f32.mxu0 0.0
        %8536 = vmatmul.mubr.f32.gmra.mrb[0].mxu0 %v7972
        %v8537 = vpop.f32.mrb[0].mxu0
        %v8538 = vadd.f32 %v8465, %v8537
        %v8539 = vpop.f32.mrb[0].mxu0
        %8540 = vmatprep.mubr.f32.mxu0 0.0
        %8541 = vmatmul.mubr.f32.gmra.mrb[0].mxu0 %v7975
        %v8542 = vpop.f32.mrb[0].mxu0
        %v8543 = vadd.f32 %v8468, %v8542
        %v8544 = vpop.f32.mrb[0].mxu0
        %8545 = vdwg.mxu0
        %s8546 = scalar_lea.vmem [#allocation55], 128
        %v8547 = vld [vmem:[%s8546] sm:$0xf]
        %v8548 = vld [vmem:[%s8546 + $0x4] sm:$0xf]
        %v8549 = vld [vmem:[%s8546 + $0x8] sm:$0xf]
        %v8550 = vld [vmem:[%s8546 + $0xc] sm:$0xf]
        %v8551 = vld [vmem:[%s8546 + $0x10] sm:$0xf]
        %v8552 = vld [vmem:[%s8546 + $0x14] sm:$0xf]
        %v8553 = vld [vmem:[%s8546 + $0x18] sm:$0xf]
        %v8554 = vld [vmem:[%s8546 + $0x1c] sm:$0xf]
        %v8555 = vld [vmem:[%s8546 + $0x20] sm:$0xf]
        %v8556 = vld [vmem:[%s8546 + $0x24] sm:$0xf]
        %v8557 = vld [vmem:[%s8546 + $0x28] sm:$0xf]
        %v8558 = vld [vmem:[%s8546 + $0x2c] sm:$0xf]
        %v8559 = vld [vmem:[%s8546 + $0x30] sm:$0xf]
        %v8560 = vld [vmem:[%s8546 + $0x34] sm:$0xf]
        %v8561 = vld [vmem:[%s8546 + $0x38] sm:$0xf]
        %v8562 = vld [vmem:[%s8546 + $0x3c] sm:$0xf]
        %v8579 = vunpack.c.l.b16 %v8547
        %v8580 = vunpack.c.l.b16 %v8548
        %v8581 = vunpack.c.l.b16 %v8549
        %v8582 = vunpack.c.l.b16 %v8550
        %v8583 = vunpack.c.l.b16 %v8551
        %v8584 = vunpack.c.l.b16 %v8552
        %v8585 = vunpack.c.l.b16 %v8553
        %v8586 = vunpack.c.l.b16 %v8554
        %v8587 = vunpack.c.l.b16 %v8555
        %v8588 = vunpack.c.l.b16 %v8556
        %v8589 = vunpack.c.l.b16 %v8557
        %v8590 = vunpack.c.l.b16 %v8558
        %v8591 = vunpack.c.l.b16 %v8559
        %v8592 = vunpack.c.l.b16 %v8560
        %v8593 = vunpack.c.l.b16 %v8561
        %v8594 = vunpack.c.l.b16 %v8562
        %v8595 = vpack.c.b16 %v8580, %v8579
        %v8596 = vpack.c.b16 %v8582, %v8581
        %v8597 = vpack.c.b16 %v8584, %v8583
        %v8598 = vpack.c.b16 %v8586, %v8585
        %v8599 = vpack.c.b16 %v8588, %v8587
        %v8600 = vpack.c.b16 %v8590, %v8589
        %v8601 = vpack.c.b16 %v8592, %v8591
        %v8602 = vpack.c.b16 %v8594, %v8593
        %8611 = vmatprep.subr.bf16.mxu0 0
        %8612 = vmatpush1.bf16.msra.mxu0 %v8595
        %8613 = vmatprep.subr.bf16.mxu0 0
        %8614 = vmatpush1.bf16.msra.mxu0 %v8596
        %8615 = vmatprep.subr.bf16.mxu0 0
        %8616 = vmatpush1.bf16.msra.mxu0 %v8597
        %8617 = vmatprep.subr.bf16.mxu0 0
        %8618 = vmatpush1.bf16.msra.mxu0 %v8598
        %8619 = vmatprep.subr.bf16.mxu0 0
        %8620 = vmatpush1.bf16.msra.mxu0 %v8599
        %8621 = vmatprep.subr.bf16.mxu0 0
        %8622 = vmatpush1.bf16.msra.mxu0 %v8600
        %8623 = vmatprep.subr.bf16.mxu0 0
        %8624 = vmatpush1.bf16.msra.mxu0 %v8601
        %8625 = vmatprep.subr.bf16.mxu0 0
        %8626 = vmatpush1.bf16.msra.mxu0 %v8602
        %8627 = vmatprep.subr.bf16.mxu0 0
        %8628 = vmatpush1.bf16.msra.mxu0 0
        %8629 = vmatprep.subr.bf16.mxu0 0
        %8630 = vmatpush1.bf16.msra.mxu0 0
        %8631 = vmatprep.subr.bf16.mxu0 0
        %8632 = vmatpush1.bf16.msra.mxu0 0
        %8633 = vmatprep.subr.bf16.mxu0 0
        %8634 = vmatpush1.bf16.msra.mxu0 0
        %8635 = vmatprep.subr.bf16.mxu0 0
        %8636 = vmatpush1.bf16.msra.mxu0 0
        %8637 = vmatprep.subr.bf16.mxu0 0
        %8638 = vmatpush1.bf16.msra.mxu0 0
        %8639 = vmatprep.subr.bf16.mxu0 0
        %8640 = vmatpush1.bf16.msra.mxu0 0
        %8641 = vmatprep.subr.bf16.mxu0 0
        %8642 = vmatpush1.bf16.msra.mxu0 0
        %8643 = vmatprep.mubr.bf16.mxu0 0
        %8644 = vmatmul.mubr.bf16.gmra.mrb[0].mxu0 %v2880
        %v8645 = vpop.f32.mrb[0].mxu0
        %v8646 = vadd.f32 0.0, %v8645
        %v8647 = vpop.f32.mrb[0].mxu0
        %v8648 = vpop.f32.mrb[0].mxu0
        %v8649 = vadd.f32 0.0, %v8648
        %v8650 = vpop.f32.mrb[0].mxu0
        %8651 = vdwg.mxu0
        %8652 = vmatprep.subr.mxu0 0.0
        %8653 = vmatpush1.msra.mxu0 %v8646
        %8654 = vmatprep.subr.mxu0 0.0
        %8655 = vmatpush1.msra.mxu0 %v8649
        %8656 = vmatprep.subr.mxu0 0.0
        %8657 = vmatpush1.msra.mxu0 0.0
        %8658 = vmatprep.subr.mxu0 0.0
        %8659 = vmatpush1.msra.mxu0 0.0
        %8660 = vmatprep.subr.mxu0 0.0
        %8661 = vmatpush1.msra.mxu0 0.0
        %8662 = vmatprep.subr.mxu0 0.0
        %8663 = vmatpush1.msra.mxu0 0.0
        %8664 = vmatprep.subr.mxu0 0.0
        %8665 = vmatpush1.msra.mxu0 0.0
        %8666 = vmatprep.subr.mxu0 0.0
        %8667 = vmatpush1.msra.mxu0 0.0
        %8668 = vmatprep.subr.mxu0 0.0
        %8669 = vmatpush1.msra.mxu0 0.0
        %8670 = vmatprep.subr.mxu0 0.0
        %8671 = vmatpush1.msra.mxu0 0.0
        %8672 = vmatprep.subr.mxu0 0.0
        %8673 = vmatpush1.msra.mxu0 0.0
        %8674 = vmatprep.subr.mxu0 0.0
        %8675 = vmatpush1.msra.mxu0 0.0
        %8676 = vmatprep.subr.mxu0 0.0
        %8677 = vmatpush1.msra.mxu0 0.0
        %8678 = vmatprep.subr.mxu0 0.0
        %8679 = vmatpush1.msra.mxu0 0.0
        %8680 = vmatprep.subr.mxu0 0.0
        %8681 = vmatpush1.msra.mxu0 0.0
        %8682 = vmatprep.subr.mxu0 0.0
        %8683 = vmatpush1.msra.mxu0 0.0
        %8684 = vmatprep.subr.mxu0 0.0
        %8685 = vmatpush1.msra.mxu0 0.0
        %8686 = vmatprep.subr.mxu0 0.0
        %8687 = vmatpush1.msra.mxu0 0.0
        %8688 = vmatprep.subr.mxu0 0.0
        %8689 = vmatpush1.msra.mxu0 0.0
        %8690 = vmatprep.subr.mxu0 0.0
        %8691 = vmatpush1.msra.mxu0 0.0
        %8692 = vmatprep.subr.mxu0 0.0
        %8693 = vmatpush1.msra.mxu0 0.0
        %8694 = vmatprep.subr.mxu0 0.0
        %8695 = vmatpush1.msra.mxu0 0.0
        %8696 = vmatprep.subr.mxu0 0.0
        %8697 = vmatpush1.msra.mxu0 0.0
        %8698 = vmatprep.subr.mxu0 0.0
        %8699 = vmatpush1.msra.mxu0 0.0
        %8700 = vmatprep.subr.mxu0 0.0
        %8701 = vmatpush1.msra.mxu0 0.0
        %8702 = vmatprep.subr.mxu0 0.0
        %8703 = vmatpush1.msra.mxu0 0.0
        %8704 = vmatprep.subr.mxu0 0.0
        %8705 = vmatpush1.msra.mxu0 0.0
        %8706 = vmatprep.subr.mxu0 0.0
        %8707 = vmatpush1.msra.mxu0 0.0
        %8708 = vmatprep.subr.mxu0 0.0
        %8709 = vmatpush1.msra.mxu0 0.0
        %8710 = vmatprep.subr.mxu0 0.0
        %8711 = vmatpush1.msra.mxu0 0.0
        %8712 = vmatprep.subr.mxu0 0.0
        %8713 = vmatpush1.msra.mxu0 0.0
        %8714 = vmatprep.subr.mxu0 0.0
        %8715 = vmatpush1.msra.mxu0 0.0
        %8716 = vmatprep.mubr.f32.mxu0 0.0
        %8717 = vmatmul.mubr.f32.gmra.mrb[0].mxu0 %v8162
        %v8718 = vpop.f32.mrb[0].mxu0
        %v8719 = vadd.f32 0.0, %v8718
        %v8720 = vpop.f32.mrb[0].mxu0
        %8721 = vmatprep.mubr.f32.mxu0 0.0
        %8722 = vmatmul.mubr.f32.gmra.mrb[0].mxu0 %v8165
        %v8723 = vpop.f32.mrb[0].mxu0
        %v8724 = vadd.f32 0.0, %v8723
        %v8725 = vpop.f32.mrb[0].mxu0
        %8726 = vdwg.mxu0
        %v8727 = vadd.f32 %v8538, %v8719
        %v8728 = vadd.f32 %v8543, %v8724
        %v8729 = vadd.f32 %v8242, %v8727
        %v8730 = vadd.f32 %v8243, %v8728
        %v8731 = vld [vmem:[%s83] sm:$0xf]
        %v8732 = vld [vmem:[%s83 + $0x4] sm:$0xf]
        %v8733 = vld [vmem:[%s83 + $0x8] sm:$0xf]
        %v8734 = vld [vmem:[%s83 + $0xc] sm:$0xf]
        %v8735 = vld [vmem:[%s83 + $0x10] sm:$0xf]
        %v8736 = vld [vmem:[%s83 + $0x14] sm:$0xf]
        %v8737 = vld [vmem:[%s83 + $0x18] sm:$0xf]
        %v8738 = vld [vmem:[%s83 + $0x1c] sm:$0xf]
        %v8739 = vld [vmem:[%s83 + $0x20] sm:$0xf]
        %v8740 = vld [vmem:[%s83 + $0x24] sm:$0xf]
        %v8741 = vld [vmem:[%s83 + $0x28] sm:$0xf]
        %v8742 = vld [vmem:[%s83 + $0x2c] sm:$0xf]
        %v8743 = vld [vmem:[%s83 + $0x30] sm:$0xf]
        %v8744 = vld [vmem:[%s83 + $0x34] sm:$0xf]
        %v8745 = vld [vmem:[%s83 + $0x38] sm:$0xf]
        %v8746 = vld [vmem:[%s83 + $0x3c] sm:$0xf]
        %v8763 = vunpack.c.l.b16 %v8731
        %v8764 = vunpack.c.l.b16 %v8732
        %v8765 = vunpack.c.l.b16 %v8733
        %v8766 = vunpack.c.l.b16 %v8734
        %v8767 = vunpack.c.l.b16 %v8735
        %v8768 = vunpack.c.l.b16 %v8736
        %v8769 = vunpack.c.l.b16 %v8737
        %v8770 = vunpack.c.l.b16 %v8738
        %v8771 = vunpack.c.l.b16 %v8739
        %v8772 = vunpack.c.l.b16 %v8740
        %v8773 = vunpack.c.l.b16 %v8741
        %v8774 = vunpack.c.l.b16 %v8742
        %v8775 = vunpack.c.l.b16 %v8743
        %v8776 = vunpack.c.l.b16 %v8744
        %v8777 = vunpack.c.l.b16 %v8745
        %v8778 = vunpack.c.l.b16 %v8746
        %v8779 = vpack.c.b16 %v8764, %v8763
        %v8780 = vpack.c.b16 %v8766, %v8765
        %v8781 = vpack.c.b16 %v8768, %v8767
        %v8782 = vpack.c.b16 %v8770, %v8769
        %v8783 = vpack.c.b16 %v8772, %v8771
        %v8784 = vpack.c.b16 %v8774, %v8773
        %v8785 = vpack.c.b16 %v8776, %v8775
        %v8786 = vpack.c.b16 %v8778, %v8777
        %8795 = vmatprep.subr.bf16.mxu0 0
        %8796 = vmatpush1.bf16.msra.mxu0 %v8779
        %8797 = vmatprep.subr.bf16.mxu0 0
        %8798 = vmatpush1.bf16.msra.mxu0 %v8780
        %8799 = vmatprep.subr.bf16.mxu0 0
        %8800 = vmatpush1.bf16.msra.mxu0 %v8781
        %8801 = vmatprep.subr.bf16.mxu0 0
        %8802 = vmatpush1.bf16.msra.mxu0 %v8782
        %8803 = vmatprep.subr.bf16.mxu0 0
        %8804 = vmatpush1.bf16.msra.mxu0 %v8783
        %8805 = vmatprep.subr.bf16.mxu0 0
        %8806 = vmatpush1.bf16.msra.mxu0 %v8784
        %8807 = vmatprep.subr.bf16.mxu0 0
        %8808 = vmatpush1.bf16.msra.mxu0 %v8785
        %8809 = vmatprep.subr.bf16.mxu0 0
        %8810 = vmatpush1.bf16.msra.mxu0 %v8786
        %8811 = vmatprep.subr.bf16.mxu0 0
        %8812 = vmatpush1.bf16.msra.mxu0 0
        %8813 = vmatprep.subr.bf16.mxu0 0
        %8814 = vmatpush1.bf16.msra.mxu0 0
        %8815 = vmatprep.subr.bf16.mxu0 0
        %8816 = vmatpush1.bf16.msra.mxu0 0
        %8817 = vmatprep.subr.bf16.mxu0 0
        %8818 = vmatpush1.bf16.msra.mxu0 0
        %8819 = vmatprep.subr.bf16.mxu0 0
        %8820 = vmatpush1.bf16.msra.mxu0 0
        %8821 = vmatprep.subr.bf16.mxu0 0
        %8822 = vmatpush1.bf16.msra.mxu0 0
        %8823 = vmatprep.subr.bf16.mxu0 0
        %8824 = vmatpush1.bf16.msra.mxu0 0
        %8825 = vmatprep.subr.bf16.mxu0 0
        %8826 = vmatpush1.bf16.msra.mxu0 0
        %8827 = vmatprep.mubr.bf16.mxu0 0
        %8828 = vmatmul.mubr.bf16.gmra.mrb[0].mxu0 %v2880
        %v8829 = vpop.f32.mrb[0].mxu0
        %v8830 = vadd.f32 0.0, %v8829
        %v8831 = vpop.f32.mrb[0].mxu0
        %v8832 = vpop.f32.mrb[0].mxu0
        %v8833 = vadd.f32 0.0, %v8832
        %v8834 = vpop.f32.mrb[0].mxu0
        %8835 = vdwg.mxu0
        %v8852 = vunpack.c.l.b16 %v8244
        %v8853 = vunpack.c.l.b16 %v8245
        %v8854 = vunpack.c.l.b16 %v8246
        %v8855 = vunpack.c.l.b16 %v8247
        %v8856 = vunpack.c.l.b16 %v8248
        %v8857 = vunpack.c.l.b16 %v8249
        %v8858 = vunpack.c.l.b16 %v8250
        %v8859 = vunpack.c.l.b16 %v8251
        %v8860 = vunpack.c.l.b16 %v8252
        %v8861 = vunpack.c.l.b16 %v8253
        %v8862 = vunpack.c.l.b16 %v8254
        %v8863 = vunpack.c.l.b16 %v8255
        %v8864 = vunpack.c.l.b16 %v8256
        %v8865 = vunpack.c.l.b16 %v8257
        %v8866 = vunpack.c.l.b16 %v8258
        %v8867 = vunpack.c.l.b16 %v8259
        %v8868 = vpack.c.b16 %v8853, %v8852
        %v8869 = vpack.c.b16 %v8855, %v8854
        %v8870 = vpack.c.b16 %v8857, %v8856
        %v8871 = vpack.c.b16 %v8859, %v8858
        %v8872 = vpack.c.b16 %v8861, %v8860
        %v8873 = vpack.c.b16 %v8863, %v8862
        %v8874 = vpack.c.b16 %v8865, %v8864
        %v8875 = vpack.c.b16 %v8867, %v8866
        %8884 = vmatprep.subr.bf16.mxu0 0
        %8885 = vmatpush1.bf16.msra.mxu0 %v8868
        %8886 = vmatprep.subr.bf16.mxu0 0
        %8887 = vmatpush1.bf16.msra.mxu0 %v8869
        %8888 = vmatprep.subr.bf16.mxu0 0
        %8889 = vmatpush1.bf16.msra.mxu0 %v8870
        %8890 = vmatprep.subr.bf16.mxu0 0
        %8891 = vmatpush1.bf16.msra.mxu0 %v8871
        %8892 = vmatprep.subr.bf16.mxu0 0
        %8893 = vmatpush1.bf16.msra.mxu0 %v8872
        %8894 = vmatprep.subr.bf16.mxu0 0
        %8895 = vmatpush1.bf16.msra.mxu0 %v8873
        %8896 = vmatprep.subr.bf16.mxu0 0
        %8897 = vmatpush1.bf16.msra.mxu0 %v8874
        %8898 = vmatprep.subr.bf16.mxu0 0
        %8899 = vmatpush1.bf16.msra.mxu0 %v8875
        %8900 = vmatprep.subr.bf16.mxu0 0
        %8901 = vmatpush1.bf16.msra.mxu0 0
        %8902 = vmatprep.subr.bf16.mxu0 0
        %8903 = vmatpush1.bf16.msra.mxu0 0
        %8904 = vmatprep.subr.bf16.mxu0 0
        %8905 = vmatpush1.bf16.msra.mxu0 0
        %8906 = vmatprep.subr.bf16.mxu0 0
        %8907 = vmatpush1.bf16.msra.mxu0 0
        %8908 = vmatprep.subr.bf16.mxu0 0
        %8909 = vmatpush1.bf16.msra.mxu0 0
        %8910 = vmatprep.subr.bf16.mxu0 0
        %8911 = vmatpush1.bf16.msra.mxu0 0
        %8912 = vmatprep.subr.bf16.mxu0 0
        %8913 = vmatpush1.bf16.msra.mxu0 0
        %8914 = vmatprep.subr.bf16.mxu0 0
        %8915 = vmatpush1.bf16.msra.mxu0 0
        %8916 = vmatprep.mubr.bf16.mxu0 0
        %8917 = vmatmul.mubr.bf16.gmra.mrb[0].mxu0 %v7757
        %v8918 = vpop.f32.mrb[0].mxu0
        %v8919 = vadd.f32 %v8830, %v8918
        %v8920 = vpop.f32.mrb[0].mxu0
        %v8921 = vpop.f32.mrb[0].mxu0
        %v8922 = vadd.f32 %v8833, %v8921
        %v8923 = vpop.f32.mrb[0].mxu0
        %8924 = vdwg.mxu0
        %v8925 = vld [vmem:[#allocation57] sm:$0x1]
        %v8927 = vlaneseq
        %v8928 = vshrl.u32 %v8927, 7
        %v8929 = vsub.s32 0, %v8928
        %v8930 = vrot.slane %v8925, %v8929
        %v8932 = vadd.f32 %v8729, %v8930
        %v8933 = vadd.f32 %v8730, %v8930
        %v8934 = vmax.f32 %v8932, 0.0
        %v8935 = vmax.f32 %v8933, 0.0
        %v8936 = vpack.c.bf16 %v8935, %v8934
        %v8937 = vld [vmem:[#allocation60] sm:$0xf]
        %v8938 = vld [vmem:[#allocation60 + $0x4] sm:$0xf]
        %v8939 = vld [vmem:[#allocation60 + $0x8] sm:$0xf]
        %v8940 = vld [vmem:[#allocation60 + $0xc] sm:$0xf]
        %v8941 = vld [vmem:[#allocation60 + $0x10] sm:$0xf]
        %v8942 = vld [vmem:[#allocation60 + $0x14] sm:$0xf]
        %v8943 = vld [vmem:[#allocation60 + $0x18] sm:$0xf]
        %v8944 = vld [vmem:[#allocation60 + $0x1c] sm:$0xf]
        %v8945 = vld [vmem:[#allocation60 + $0x20] sm:$0xf]
        %v8946 = vld [vmem:[#allocation60 + $0x24] sm:$0xf]
        %v8947 = vld [vmem:[#allocation60 + $0x28] sm:$0xf]
        %v8948 = vld [vmem:[#allocation60 + $0x2c] sm:$0xf]
        %v8949 = vld [vmem:[#allocation60 + $0x30] sm:$0xf]
        %v8950 = vld [vmem:[#allocation60 + $0x34] sm:$0xf]
        %v8951 = vld [vmem:[#allocation60 + $0x38] sm:$0xf]
        %v8952 = vld [vmem:[#allocation60 + $0x3c] sm:$0xf]
        %v8969 = vunpack.c.l.b16 %v8937
        %v8970 = vunpack.c.l.b16 %v8938
        %v8971 = vunpack.c.l.b16 %v8939
        %v8972 = vunpack.c.l.b16 %v8940
        %v8973 = vunpack.c.l.b16 %v8941
        %v8974 = vunpack.c.l.b16 %v8942
        %v8975 = vunpack.c.l.b16 %v8943
        %v8976 = vunpack.c.l.b16 %v8944
        %v8977 = vunpack.c.l.b16 %v8945
        %v8978 = vunpack.c.l.b16 %v8946
        %v8979 = vunpack.c.l.b16 %v8947
        %v8980 = vunpack.c.l.b16 %v8948
        %v8981 = vunpack.c.l.b16 %v8949
        %v8982 = vunpack.c.l.b16 %v8950
        %v8983 = vunpack.c.l.b16 %v8951
        %v8984 = vunpack.c.l.b16 %v8952
        %v8985 = vpack.c.b16 %v8970, %v8969
        %v8986 = vpack.c.b16 %v8972, %v8971
        %v8987 = vpack.c.b16 %v8974, %v8973
        %v8988 = vpack.c.b16 %v8976, %v8975
        %v8989 = vpack.c.b16 %v8978, %v8977
        %v8990 = vpack.c.b16 %v8980, %v8979
        %v8991 = vpack.c.b16 %v8982, %v8981
        %v8992 = vpack.c.b16 %v8984, %v8983
        %9001 = vmatprep.subr.bf16.mxu0 0
        %9002 = vmatpush1.bf16.msra.mxu0 %v8985
        %9003 = vmatprep.subr.bf16.mxu0 0
        %9004 = vmatpush1.bf16.msra.mxu0 %v8986
        %9005 = vmatprep.subr.bf16.mxu0 0
        %9006 = vmatpush1.bf16.msra.mxu0 %v8987
        %9007 = vmatprep.subr.bf16.mxu0 0
        %9008 = vmatpush1.bf16.msra.mxu0 %v8988
        %9009 = vmatprep.subr.bf16.mxu0 0
        %9010 = vmatpush1.bf16.msra.mxu0 %v8989
        %9011 = vmatprep.subr.bf16.mxu0 0
        %9012 = vmatpush1.bf16.msra.mxu0 %v8990
        %9013 = vmatprep.subr.bf16.mxu0 0
        %9014 = vmatpush1.bf16.msra.mxu0 %v8991
        %9015 = vmatprep.subr.bf16.mxu0 0
        %9016 = vmatpush1.bf16.msra.mxu0 %v8992
        %9017 = vmatprep.subr.bf16.mxu0 0
        %9018 = vmatpush1.bf16.msra.mxu0 0
        %9019 = vmatprep.subr.bf16.mxu0 0
        %9020 = vmatpush1.bf16.msra.mxu0 0
        %9021 = vmatprep.subr.bf16.mxu0 0
        %9022 = vmatpush1.bf16.msra.mxu0 0
        %9023 = vmatprep.subr.bf16.mxu0 0
        %9024 = vmatpush1.bf16.msra.mxu0 0
        %9025 = vmatprep.subr.bf16.mxu0 0
        %9026 = vmatpush1.bf16.msra.mxu0 0
        %9027 = vmatprep.subr.bf16.mxu0 0
        %9028 = vmatpush1.bf16.msra.mxu0 0
        %9029 = vmatprep.subr.bf16.mxu0 0
        %9030 = vmatpush1.bf16.msra.mxu0 0
        %9031 = vmatprep.subr.bf16.mxu0 0
        %9032 = vmatpush1.bf16.msra.mxu0 0
        %9033 = vmatprep.mubr.bf16.mxu0 0
        %9034 = vmatmul.mubr.bf16.gmra.mrb[0].mxu0 %v8936
        %v9035 = vpop.f32.mrb[0].mxu0
        %v9036 = vadd.f32 0.0, %v9035
        %v9037 = vpop.f32.mrb[0].mxu0
        %v9038 = vpop.f32.mrb[0].mxu0
        %v9039 = vadd.f32 0.0, %v9038
        %v9040 = vpop.f32.mrb[0].mxu0
        %9041 = vdwg.mxu0
        %s9042 = scalar_lea.vmem [#allocation60], 64
        %v9043 = vld [vmem:[%s9042] sm:$0xf]
        %v9044 = vld [vmem:[%s9042 + $0x4] sm:$0xf]
        %v9045 = vld [vmem:[%s9042 + $0x8] sm:$0xf]
        %v9046 = vld [vmem:[%s9042 + $0xc] sm:$0xf]
        %v9047 = vld [vmem:[%s9042 + $0x10] sm:$0xf]
        %v9048 = vld [vmem:[%s9042 + $0x14] sm:$0xf]
        %v9049 = vld [vmem:[%s9042 + $0x18] sm:$0xf]
        %v9050 = vld [vmem:[%s9042 + $0x1c] sm:$0xf]
        %v9051 = vld [vmem:[%s9042 + $0x20] sm:$0xf]
        %v9052 = vld [vmem:[%s9042 + $0x24] sm:$0xf]
        %v9053 = vld [vmem:[%s9042 + $0x28] sm:$0xf]
        %v9054 = vld [vmem:[%s9042 + $0x2c] sm:$0xf]
        %v9055 = vld [vmem:[%s9042 + $0x30] sm:$0xf]
        %v9056 = vld [vmem:[%s9042 + $0x34] sm:$0xf]
        %v9057 = vld [vmem:[%s9042 + $0x38] sm:$0xf]
        %v9058 = vld [vmem:[%s9042 + $0x3c] sm:$0xf]
        %v9075 = vunpack.c.l.b16 %v9043
        %v9076 = vunpack.c.l.b16 %v9044
        %v9077 = vunpack.c.l.b16 %v9045
        %v9078 = vunpack.c.l.b16 %v9046
        %v9079 = vunpack.c.l.b16 %v9047
        %v9080 = vunpack.c.l.b16 %v9048
        %v9081 = vunpack.c.l.b16 %v9049
        %v9082 = vunpack.c.l.b16 %v9050
        %v9083 = vunpack.c.l.b16 %v9051
        %v9084 = vunpack.c.l.b16 %v9052
        %v9085 = vunpack.c.l.b16 %v9053
        %v9086 = vunpack.c.l.b16 %v9054
        %v9087 = vunpack.c.l.b16 %v9055
        %v9088 = vunpack.c.l.b16 %v9056
        %v9089 = vunpack.c.l.b16 %v9057
        %v9090 = vunpack.c.l.b16 %v9058
        %v9091 = vpack.c.b16 %v9076, %v9075
        %v9092 = vpack.c.b16 %v9078, %v9077
        %v9093 = vpack.c.b16 %v9080, %v9079
        %v9094 = vpack.c.b16 %v9082, %v9081
        %v9095 = vpack.c.b16 %v9084, %v9083
        %v9096 = vpack.c.b16 %v9086, %v9085
        %v9097 = vpack.c.b16 %v9088, %v9087
        %v9098 = vpack.c.b16 %v9090, %v9089
        %9107 = vmatprep.subr.bf16.mxu0 0
        %9108 = vmatpush1.bf16.msra.mxu0 %v9091
        %9109 = vmatprep.subr.bf16.mxu0 0
        %9110 = vmatpush1.bf16.msra.mxu0 %v9092
        %9111 = vmatprep.subr.bf16.mxu0 0
        %9112 = vmatpush1.bf16.msra.mxu0 %v9093
        %9113 = vmatprep.subr.bf16.mxu0 0
        %9114 = vmatpush1.bf16.msra.mxu0 %v9094
        %9115 = vmatprep.subr.bf16.mxu0 0
        %9116 = vmatpush1.bf16.msra.mxu0 %v9095
        %9117 = vmatprep.subr.bf16.mxu0 0
        %9118 = vmatpush1.bf16.msra.mxu0 %v9096
        %9119 = vmatprep.subr.bf16.mxu0 0
        %9120 = vmatpush1.bf16.msra.mxu0 %v9097
        %9121 = vmatprep.subr.bf16.mxu0 0
        %9122 = vmatpush1.bf16.msra.mxu0 %v9098
        %9123 = vmatprep.subr.bf16.mxu0 0
        %9124 = vmatpush1.bf16.msra.mxu0 0
        %9125 = vmatprep.subr.bf16.mxu0 0
        %9126 = vmatpush1.bf16.msra.mxu0 0
        %9127 = vmatprep.subr.bf16.mxu0 0
        %9128 = vmatpush1.bf16.msra.mxu0 0
        %9129 = vmatprep.subr.bf16.mxu0 0
        %9130 = vmatpush1.bf16.msra.mxu0 0
        %9131 = vmatprep.subr.bf16.mxu0 0
        %9132 = vmatpush1.bf16.msra.mxu0 0
        %9133 = vmatprep.subr.bf16.mxu0 0
        %9134 = vmatpush1.bf16.msra.mxu0 0
        %9135 = vmatprep.subr.bf16.mxu0 0
        %9136 = vmatpush1.bf16.msra.mxu0 0
        %9137 = vmatprep.subr.bf16.mxu0 0
        %9138 = vmatpush1.bf16.msra.mxu0 0
        %9139 = vmatprep.mubr.bf16.mxu0 0
        %9140 = vmatmul.mubr.bf16.gmra.mrb[0].mxu0 %v8936
        %v9141 = vpop.f32.mrb[0].mxu0
        %v9142 = vadd.f32 0.0, %v9141
        %v9143 = vpop.f32.mrb[0].mxu0
        %v9144 = vpop.f32.mrb[0].mxu0
        %v9145 = vadd.f32 0.0, %v9144
        %v9146 = vpop.f32.mrb[0].mxu0
        %9147 = vdwg.mxu0
        %9148 = vmatprep.subr.mxu0 0.0
        %9149 = vmatpush1.msra.mxu0 %v9036
        %9150 = vmatprep.subr.mxu0 0.0
        %9151 = vmatpush1.msra.mxu0 %v9039
        %9152 = vmatprep.subr.mxu0 0.0
        %9153 = vmatpush1.msra.mxu0 0.0
        %9154 = vmatprep.subr.mxu0 0.0
        %9155 = vmatpush1.msra.mxu0 0.0
        %9156 = vmatprep.subr.mxu0 0.0
        %9157 = vmatpush1.msra.mxu0 0.0
        %9158 = vmatprep.subr.mxu0 0.0
        %9159 = vmatpush1.msra.mxu0 0.0
        %9160 = vmatprep.subr.mxu0 0.0
        %9161 = vmatpush1.msra.mxu0 0.0
        %9162 = vmatprep.subr.mxu0 0.0
        %9163 = vmatpush1.msra.mxu0 0.0
        %9164 = vmatprep.subr.mxu0 0.0
        %9165 = vmatpush1.msra.mxu0 0.0
        %9166 = vmatprep.subr.mxu0 0.0
        %9167 = vmatpush1.msra.mxu0 0.0
        %9168 = vmatprep.subr.mxu0 0.0
        %9169 = vmatpush1.msra.mxu0 0.0
        %9170 = vmatprep.subr.mxu0 0.0
        %9171 = vmatpush1.msra.mxu0 0.0
        %9172 = vmatprep.subr.mxu0 0.0
        %9173 = vmatpush1.msra.mxu0 0.0
        %9174 = vmatprep.subr.mxu0 0.0
        %9175 = vmatpush1.msra.mxu0 0.0
        %9176 = vmatprep.subr.mxu0 0.0
        %9177 = vmatpush1.msra.mxu0 0.0
        %9178 = vmatprep.subr.mxu0 0.0
        %9179 = vmatpush1.msra.mxu0 0.0
        %9180 = vmatprep.subr.mxu0 0.0
        %9181 = vmatpush1.msra.mxu0 0.0
        %9182 = vmatprep.subr.mxu0 0.0
        %9183 = vmatpush1.msra.mxu0 0.0
        %9184 = vmatprep.subr.mxu0 0.0
        %9185 = vmatpush1.msra.mxu0 0.0
        %9186 = vmatprep.subr.mxu0 0.0
        %9187 = vmatpush1.msra.mxu0 0.0
        %9188 = vmatprep.subr.mxu0 0.0
        %9189 = vmatpush1.msra.mxu0 0.0
        %9190 = vmatprep.subr.mxu0 0.0
        %9191 = vmatpush1.msra.mxu0 0.0
        %9192 = vmatprep.subr.mxu0 0.0
        %9193 = vmatpush1.msra.mxu0 0.0
        %9194 = vmatprep.subr.mxu0 0.0
        %9195 = vmatpush1.msra.mxu0 0.0
        %9196 = vmatprep.subr.mxu0 0.0
        %9197 = vmatpush1.msra.mxu0 0.0
        %9198 = vmatprep.subr.mxu0 0.0
        %9199 = vmatpush1.msra.mxu0 0.0
        %9200 = vmatprep.subr.mxu0 0.0
        %9201 = vmatpush1.msra.mxu0 0.0
        %9202 = vmatprep.subr.mxu0 0.0
        %9203 = vmatpush1.msra.mxu0 0.0
        %9204 = vmatprep.subr.mxu0 0.0
        %9205 = vmatpush1.msra.mxu0 0.0
        %9206 = vmatprep.subr.mxu0 0.0
        %9207 = vmatpush1.msra.mxu0 0.0
        %9208 = vmatprep.subr.mxu0 0.0
        %9209 = vmatpush1.msra.mxu0 0.0
        %9210 = vmatprep.subr.mxu0 0.0
        %9211 = vmatpush1.msra.mxu0 0.0
        %9212 = vmatprep.mubr.f32.mxu0 0.0
        %9213 = vmatmul.mubr.f32.gmra.mrb[0].mxu0 %v7972
        %v9214 = vpop.f32.mrb[0].mxu0
        %v9215 = vadd.f32 %v9142, %v9214
        %v9216 = vpop.f32.mrb[0].mxu0
        %9217 = vmatprep.mubr.f32.mxu0 0.0
        %9218 = vmatmul.mubr.f32.gmra.mrb[0].mxu0 %v7975
        %v9219 = vpop.f32.mrb[0].mxu0
        %v9220 = vadd.f32 %v9145, %v9219
        %v9221 = vpop.f32.mrb[0].mxu0
        %9222 = vdwg.mxu0
        %s9223 = scalar_lea.vmem [#allocation60], 128
        %v9224 = vld [vmem:[%s9223] sm:$0xf]
        %v9225 = vld [vmem:[%s9223 + $0x4] sm:$0xf]
        %v9226 = vld [vmem:[%s9223 + $0x8] sm:$0xf]
        %v9227 = vld [vmem:[%s9223 + $0xc] sm:$0xf]
        %v9228 = vld [vmem:[%s9223 + $0x10] sm:$0xf]
        %v9229 = vld [vmem:[%s9223 + $0x14] sm:$0xf]
        %v9230 = vld [vmem:[%s9223 + $0x18] sm:$0xf]
        %v9231 = vld [vmem:[%s9223 + $0x1c] sm:$0xf]
        %v9232 = vld [vmem:[%s9223 + $0x20] sm:$0xf]
        %v9233 = vld [vmem:[%s9223 + $0x24] sm:$0xf]
        %v9234 = vld [vmem:[%s9223 + $0x28] sm:$0xf]
        %v9235 = vld [vmem:[%s9223 + $0x2c] sm:$0xf]
        %v9236 = vld [vmem:[%s9223 + $0x30] sm:$0xf]
        %v9237 = vld [vmem:[%s9223 + $0x34] sm:$0xf]
        %v9238 = vld [vmem:[%s9223 + $0x38] sm:$0xf]
        %v9239 = vld [vmem:[%s9223 + $0x3c] sm:$0xf]
        %v9256 = vunpack.c.l.b16 %v9224
        %v9257 = vunpack.c.l.b16 %v9225
        %v9258 = vunpack.c.l.b16 %v9226
        %v9259 = vunpack.c.l.b16 %v9227
        %v9260 = vunpack.c.l.b16 %v9228
        %v9261 = vunpack.c.l.b16 %v9229
        %v9262 = vunpack.c.l.b16 %v9230
        %v9263 = vunpack.c.l.b16 %v9231
        %v9264 = vunpack.c.l.b16 %v9232
        %v9265 = vunpack.c.l.b16 %v9233
        %v9266 = vunpack.c.l.b16 %v9234
        %v9267 = vunpack.c.l.b16 %v9235
        %v9268 = vunpack.c.l.b16 %v9236
        %v9269 = vunpack.c.l.b16 %v9237
        %v9270 = vunpack.c.l.b16 %v9238
        %v9271 = vunpack.c.l.b16 %v9239
        %v9272 = vpack.c.b16 %v9257, %v9256
        %v9273 = vpack.c.b16 %v9259, %v9258
        %v9274 = vpack.c.b16 %v9261, %v9260
        %v9275 = vpack.c.b16 %v9263, %v9262
        %v9276 = vpack.c.b16 %v9265, %v9264
        %v9277 = vpack.c.b16 %v9267, %v9266
        %v9278 = vpack.c.b16 %v9269, %v9268
        %v9279 = vpack.c.b16 %v9271, %v9270
        %9288 = vmatprep.subr.bf16.mxu0 0
        %9289 = vmatpush1.bf16.msra.mxu0 %v9272
        %9290 = vmatprep.subr.bf16.mxu0 0
        %9291 = vmatpush1.bf16.msra.mxu0 %v9273
        %9292 = vmatprep.subr.bf16.mxu0 0
        %9293 = vmatpush1.bf16.msra.mxu0 %v9274
        %9294 = vmatprep.subr.bf16.mxu0 0
        %9295 = vmatpush1.bf16.msra.mxu0 %v9275
        %9296 = vmatprep.subr.bf16.mxu0 0
        %9297 = vmatpush1.bf16.msra.mxu0 %v9276
        %9298 = vmatprep.subr.bf16.mxu0 0
        %9299 = vmatpush1.bf16.msra.mxu0 %v9277
        %9300 = vmatprep.subr.bf16.mxu0 0
        %9301 = vmatpush1.bf16.msra.mxu0 %v9278
        %9302 = vmatprep.subr.bf16.mxu0 0
        %9303 = vmatpush1.bf16.msra.mxu0 %v9279
        %9304 = vmatprep.subr.bf16.mxu0 0
        %9305 = vmatpush1.bf16.msra.mxu0 0
        %9306 = vmatprep.subr.bf16.mxu0 0
        %9307 = vmatpush1.bf16.msra.mxu0 0
        %9308 = vmatprep.subr.bf16.mxu0 0
        %9309 = vmatpush1.bf16.msra.mxu0 0
        %9310 = vmatprep.subr.bf16.mxu0 0
        %9311 = vmatpush1.bf16.msra.mxu0 0
        %9312 = vmatprep.subr.bf16.mxu0 0
        %9313 = vmatpush1.bf16.msra.mxu0 0
        %9314 = vmatprep.subr.bf16.mxu0 0
        %9315 = vmatpush1.bf16.msra.mxu0 0
        %9316 = vmatprep.subr.bf16.mxu0 0
        %9317 = vmatpush1.bf16.msra.mxu0 0
        %9318 = vmatprep.subr.bf16.mxu0 0
        %9319 = vmatpush1.bf16.msra.mxu0 0
        %9320 = vmatprep.mubr.bf16.mxu0 0
        %9321 = vmatmul.mubr.bf16.gmra.mrb[0].mxu0 %v8936
        %v9322 = vpop.f32.mrb[0].mxu0
        %v9323 = vadd.f32 0.0, %v9322
        %v9324 = vpop.f32.mrb[0].mxu0
        %v9325 = vpop.f32.mrb[0].mxu0
        %v9326 = vadd.f32 0.0, %v9325
        %v9327 = vpop.f32.mrb[0].mxu0
        %9328 = vdwg.mxu0
        %9329 = vmatprep.subr.mxu0 0.0
        %9330 = vmatpush1.msra.mxu0 %v9323
        %9331 = vmatprep.subr.mxu0 0.0
        %9332 = vmatpush1.msra.mxu0 %v9326
        %9333 = vmatprep.subr.mxu0 0.0
        %9334 = vmatpush1.msra.mxu0 0.0
        %9335 = vmatprep.subr.mxu0 0.0
        %9336 = vmatpush1.msra.mxu0 0.0
        %9337 = vmatprep.subr.mxu0 0.0
        %9338 = vmatpush1.msra.mxu0 0.0
        %9339 = vmatprep.subr.mxu0 0.0
        %9340 = vmatpush1.msra.mxu0 0.0
        %9341 = vmatprep.subr.mxu0 0.0
        %9342 = vmatpush1.msra.mxu0 0.0
        %9343 = vmatprep.subr.mxu0 0.0
        %9344 = vmatpush1.msra.mxu0 0.0
        %9345 = vmatprep.subr.mxu0 0.0
        %9346 = vmatpush1.msra.mxu0 0.0
        %9347 = vmatprep.subr.mxu0 0.0
        %9348 = vmatpush1.msra.mxu0 0.0
        %9349 = vmatprep.subr.mxu0 0.0
        %9350 = vmatpush1.msra.mxu0 0.0
        %9351 = vmatprep.subr.mxu0 0.0
        %9352 = vmatpush1.msra.mxu0 0.0
        %9353 = vmatprep.subr.mxu0 0.0
        %9354 = vmatpush1.msra.mxu0 0.0
        %9355 = vmatprep.subr.mxu0 0.0
        %9356 = vmatpush1.msra.mxu0 0.0
        %9357 = vmatprep.subr.mxu0 0.0
        %9358 = vmatpush1.msra.mxu0 0.0
        %9359 = vmatprep.subr.mxu0 0.0
        %9360 = vmatpush1.msra.mxu0 0.0
        %9361 = vmatprep.subr.mxu0 0.0
        %9362 = vmatpush1.msra.mxu0 0.0
        %9363 = vmatprep.subr.mxu0 0.0
        %9364 = vmatpush1.msra.mxu0 0.0
        %9365 = vmatprep.subr.mxu0 0.0
        %9366 = vmatpush1.msra.mxu0 0.0
        %9367 = vmatprep.subr.mxu0 0.0
        %9368 = vmatpush1.msra.mxu0 0.0
        %9369 = vmatprep.subr.mxu0 0.0
        %9370 = vmatpush1.msra.mxu0 0.0
        %9371 = vmatprep.subr.mxu0 0.0
        %9372 = vmatpush1.msra.mxu0 0.0
        %9373 = vmatprep.subr.mxu0 0.0
        %9374 = vmatpush1.msra.mxu0 0.0
        %9375 = vmatprep.subr.mxu0 0.0
        %9376 = vmatpush1.msra.mxu0 0.0
        %9377 = vmatprep.subr.mxu0 0.0
        %9378 = vmatpush1.msra.mxu0 0.0
        %9379 = vmatprep.subr.mxu0 0.0
        %9380 = vmatpush1.msra.mxu0 0.0
        %9381 = vmatprep.subr.mxu0 0.0
        %9382 = vmatpush1.msra.mxu0 0.0
        %9383 = vmatprep.subr.mxu0 0.0
        %9384 = vmatpush1.msra.mxu0 0.0
        %9385 = vmatprep.subr.mxu0 0.0
        %9386 = vmatpush1.msra.mxu0 0.0
        %9387 = vmatprep.subr.mxu0 0.0
        %9388 = vmatpush1.msra.mxu0 0.0
        %9389 = vmatprep.subr.mxu0 0.0
        %9390 = vmatpush1.msra.mxu0 0.0
        %9391 = vmatprep.subr.mxu0 0.0
        %9392 = vmatpush1.msra.mxu0 0.0
        %9393 = vmatprep.mubr.f32.mxu0 0.0
        %9394 = vmatmul.mubr.f32.gmra.mrb[0].mxu0 %v8162
        %v9395 = vpop.f32.mrb[0].mxu0
        %v9396 = vadd.f32 0.0, %v9395
        %v9397 = vpop.f32.mrb[0].mxu0
        %9398 = vmatprep.mubr.f32.mxu0 0.0
        %9399 = vmatmul.mubr.f32.gmra.mrb[0].mxu0 %v8165
        %v9400 = vpop.f32.mrb[0].mxu0
        %v9401 = vadd.f32 0.0, %v9400
        %v9402 = vpop.f32.mrb[0].mxu0
        %9403 = vdwg.mxu0
        %v9404 = vadd.f32 %v9215, %v9396
        %v9405 = vadd.f32 %v9220, %v9401
        %v9406 = vld [vmem:[%s87] sm:$0x1]
        %v9408 = vlaneseq
        %v9409 = vshrl.u32 %v9408, 7
        %v9410 = vsub.s32 0, %v9409
        %v9411 = vrot.slane %v9406, %v9410
        %v9413 = vadd.f32 %v9404, %v9411
        %v9414 = vadd.f32 %v9405, %v9411
        %v9415 = vadd.f32 %v9413, %v8919
        %v9416 = vadd.f32 %v9414, %v8922
        %v9417 = vmax.f32 %v9415, 0.0
        %v9418 = vmax.f32 %v9416, 0.0
        %9419 = vst [vmem:[%s1909] sm:$0xff] %v9417
        %9420 = vst [vmem:[%s1909 + $0x8] sm:$0xff] %v9418
        %p9421 = scmp.lt.s32.totalorder %s123, 1
        %s9422 = scalar_select %p9421, %s123, 1
        %s9423 = smul.addr %s9422, 2
        %s9424 = smul.addr %s9423, 8
        %s9425 = scalar_lea.vmem %s91, %s9424
        // Predicated region
        $region361: #{_lambda_.1} parent=199 // pred_check
          %p9426 = pneg %p1091
        $region362: #{_lambda_.1} parent=199 // pred_check_branch
          %9428 = sbr.rel (%p9426) target = $region364
        $region363: #{_lambda_.1} parent=199 // pred_region
          _
        $region364: #{_lambda_.1} parent=199 // pred_fallthru
          _
      $region200: #{_lambda_.1} parent=5 // pred_fallthru
        _
      %p9429 = scmp.le.s32.totalorder 2, %s118
      // Predicated region
      $region365: #{_lambda_.1} parent=5 // pred_check
        %p9430 = pneg %p9429
      $region366: #{_lambda_.1} parent=5 // pred_check_branch
        %9432 = sbr.rel (%p9430) target = $region368
      $region367: #{_lambda_.1} parent=5 // pred_region
        %s9433 = ssub.s32 %s118, 2
        // Predicated region
        $region369: #{_lambda_.1} parent=367 // pred_check
          %p9434 = pneg %p1097
        $region370: #{_lambda_.1} parent=367 // pred_check_branch
          %9436 = sbr.rel (%p9434) target = $region372
        $region371: #{_lambda_.1} parent=367 // pred_region
          %p9437 = scmp.lt.s32.totalorder %s124, 1
          %s9438 = scalar_select %p9437, %s124, 1
          %s9439 = smul.addr %s9438, 2
          %s9440 = smul.addr %s9439, 8
          %s9441 = scalar_lea.vmem %s91, %s9440
        $region372: #{_lambda_.1} parent=367 // pred_fallthru
          _
      $region368: #{_lambda_.1} parent=5 // pred_fallthru
        _
    $region6: #{_lambda_.1} parent=1 // loop_footer
      %s122 = sadd.s32 1, %s118
    $region7: #{_lambda_.1} parent=1 // loop_footer_branch
      %117 = sbr.rel target = $region3
    $region8: #{_lambda_.1} parent=1 // loop_exit
      _
    %9442 = vsyncpa [#allocation3], 1
    %s9443 = scalar_lea.sflag [#allocation3], 1
    %9444 = vsyncpa %s9443, 1
    %9445 = vsyncpa [#allocation5], 1
    %9446 = vsyncpa [#allocation8], 1
    %9447 = vsyncpa [#allocation11], 1
    %9448 = vsyncpa [#allocation14], 1
    %9449 = vsyncpa [#allocation17], 1
    %9450 = vsyncpa [#allocation20], 1
    %9451 = vsyncpa [#allocation23], 1
    %9452 = vsyncpa [#allocation26], 1
    %9453 = vsyncpa [#allocation29], 1
    %9454 = vsyncpa [#allocation32], 1
    %9455 = vsyncpa [#allocation35], 1
    %9456 = vsyncpa [#allocation38], 1
    %9457 = vsyncpa [#allocation41], 1
    %9458 = vsyncpa [#allocation44], 1
    %9459 = vsyncpa [#allocation47], 1
    %9460 = vsyncpa [#allocation50], 1
    %9461 = vsyncpa [#allocation53], 1
    %9462 = vsyncpa [#allocation56], 1
    %9463 = vsyncpa [#allocation59], 1
    %9464 = vsyncpa [#allocation62], 1

</llo_original>
